<compile_context>
chip_gen: v7x
topology: tpu7x:2x2x1
jax: 0.10.0
libtpu: 0.0.40
codegen_flags: <defaults>
</compile_context>

<pallas_src>
import functools
import numpy as np
import jax
import jax.numpy as jnp
from jax import lax
from jax.experimental import pallas as pl
from jax.experimental.pallas import tpu as pltpu

# ----------------------------------------------------------------------------
# Synthetic BERT dims (deterministic init; stands in for AutoModel weights)
# ----------------------------------------------------------------------------
VOCAB, TYPES, MAX_POS = 100, 2, 64
H, N_HEADS, D_HEAD, FFN, N_LAYERS = 32, 4, 8, 64, 2
HEAD_SIZES = (2, 4, 3)        # task 0: seq_classification, 1: soft_label, 2: emotion_regression
PACK = 128                    # lane-dense packed output width: seq(32) | pooled(32) | heads(64)
HEAD_PAD = PACK - 2 * H       # fused task-head lane padding (64)
LN_EPS = 1e-12


# ----------------------------------------------------------------------------
# Fused encoder kernel
# ----------------------------------------------------------------------------
def _full_spec(shape):
    # whole array as a single VMEM block (everything is tiny, grid=())
    return pl.BlockSpec(shape, lambda: (0,) * len(shape))


def _layernorm(x, g, b):
    mu = jnp.mean(x, axis=-1, keepdims=True)
    var = jnp.mean(jnp.square(x - mu), axis=-1, keepdims=True)
    return (x - mu) * lax.rsqrt(var + LN_EPS) * g + b


def _gelu(x):
    # TODO(synk): HF BERT default "gelu" is the exact erf form; tanh approx used here.
    return 0.5 * x * (1.0 + jnp.tanh(0.7978845608028654 * (x + 0.044715 * x * x * x)))


def _encoder_kernel(emb_ref, row_code_ref, key_code_ref,
                    emb_ln_g_ref, emb_ln_b_ref,
                    wqkv_ref, bqkv_ref, wo_ref, bo_ref, ln1_g_ref, ln1_b_ref,
                    wi_ref, bi_ref, wf_ref, bf_ref, ln2_g_ref, ln2_b_ref,
                    pool_w_ref, pool_b_ref, head_w_ref, head_b_ref,
                    out_ref, *, n_layers, n_heads, d_head):
    f32 = jnp.float32
    bf16 = jnp.bfloat16
    hidden = n_heads * d_head
    m = emb_ref.shape[0]
    scale = 1.0 / float(np.sqrt(d_head))

    # Additive attention mask, hoisted once: rows attend only to keys of the same
    # batch element and only to non-padded keys (integer batch codes, exact compare).
    mask_add = jnp.where(row_code_ref[...] == key_code_ref[...], 0.0, -1e9).astype(f32)  # [M, M]
    mask_all = jnp.concatenate([mask_add] * n_heads, axis=0)                             # [nH*M, M]

    # Embedding LayerNorm (f32)
    x = _layernorm(emb_ref[...], emb_ln_g_ref[...], emb_ln_b_ref[...])

    # Statically unrolled layer loop: weight refs indexed with static l (free views).
    for l in range(n_layers):
        xb = x.astype(bf16)
        # Fused Q/K/V projection: one [M, H] x [H, 3H] bf16 matmul, f32 accumulate.
        qkv = jnp.dot(xb, wqkv_ref[l], preferred_element_type=f32) + bqkv_ref[l]
        qkvb = qkv.astype(bf16)

        # Per-head scores stacked along sublanes -> ONE batched softmax
        # (one max / exp / sum / reciprocal for all heads).
        s_parts = []
        for h in range(n_heads):
            qh = qkvb[:, h * d_head:(h + 1) * d_head]
            kh = qkvb[:, hidden + h * d_head: hidden + (h + 1) * d_head]
            s_parts.append(lax.dot_general(qh, kh, (((1,), (1,)), ((), ())),
                                           preferred_element_type=f32))
        s_all = jnp.concatenate(s_parts, axis=0) * scale + mask_all      # [nH*M, M]
        s_all = s_all - jnp.max(s_all, axis=-1, keepdims=True)
        p_all = jnp.exp(s_all)
        p_all = (p_all * pl.reciprocal(jnp.sum(p_all, axis=-1, keepdims=True),
                                       approx=True)).astype(bf16)

        # Per-head context, lane-concatenated once -> ONE K=hidden ctx @ Wo matmul.
        ctx_parts = []
        for h in range(n_heads):
            ph = p_all[h * m:(h + 1) * m, :]                              # sublane slice
            vh = qkvb[:, 2 * hidden + h * d_head: 2 * hidden + (h + 1) * d_head]
            ctx_parts.append(jnp.dot(ph, vh, preferred_element_type=f32))  # [M, dH]
        ctx = jnp.concatenate(ctx_parts, axis=-1).astype(bf16)            # [M, H]
        attn = jnp.dot(ctx, wo_ref[l], preferred_element_type=f32) + bo_ref[l]
        x = _layernorm(attn + x, ln1_g_ref[l], ln1_b_ref[l])

        xb = x.astype(bf16)
        ff = _gelu(jnp.dot(xb, wi_ref[l], preferred_element_type=f32) + bi_ref[l])
        ff = jnp.dot(ff.astype(bf16), wf_ref[l], preferred_element_type=f32) + bf_ref[l]
        x = _layernorm(ff + x, ln2_g_ref[l], ln2_b_ref[l])

    # Pooler (tanh dense) on all rows; wrapper selects the [CLS] rows.
    pooled = jnp.tanh(jnp.dot(x.astype(bf16), pool_w_ref[...],
                              preferred_element_type=f32) + pool_b_ref[...])
    # All three task heads fused into one lane-padded [H, HEAD_PAD] matmul.
    heads = jnp.dot(pooled.astype(bf16), head_w_ref[...],
                    preferred_element_type=f32) + head_b_ref[...]

    # Single lane-dense [M, 128] store: seq | pooled | heads (no masked partial stores).
    out_ref[...] = jnp.concatenate([x, pooled, heads], axis=-1)


# ----------------------------------------------------------------------------
# Parameters (deterministic synthetic init, mirrors _init_weights std=0.02)
# Matmul weights stored bf16 (MXU-native); biases / LayerNorm params stay f32.
# ----------------------------------------------------------------------------
def init_params(key):
    keys = iter(jax.random.split(key, 64))

    def norm(shape, std=0.02):
        return std * jax.random.normal(next(keys), shape, dtype=jnp.float32)

    bf16 = jnp.bfloat16
    p = {
        "word_emb": norm((VOCAB, H)),
        "pos_emb": norm((MAX_POS, H)),
        "type_emb": norm((TYPES, H)),
        "emb_ln_g": jnp.ones((1, H), jnp.float32),
        "emb_ln_b": jnp.zeros((1, H), jnp.float32),
        "pool_w": norm((H, H)).astype(bf16),
        "pool_b": jnp.zeros((1, H), jnp.float32),
    }
    wqkv, wo, wi, wf = [], [], [], []
    for _ in range(N_LAYERS):
        wq, wk, wv = norm((H, H)), norm((H, H)), norm((H, H))
        wqkv.append(jnp.concatenate([wq, wk, wv], axis=1))   # fused QKV weight [H, 3H]
        wo.append(norm((H, H)))
        wi.append(norm((H, FFN)))
        wf.append(norm((FFN, H)))
    p["wqkv"] = jnp.stack(wqkv).astype(bf16)
    p["bqkv"] = jnp.zeros((N_LAYERS, 1, 3 * H), jnp.float32)
    p["wo"] = jnp.stack(wo).astype(bf16)
    p["bo"] = jnp.zeros((N_LAYERS, 1, H), jnp.float32)
    p["ln1_g"] = jnp.ones((N_LAYERS, 1, H), jnp.float32)
    p["ln1_b"] = jnp.zeros((N_LAYERS, 1, H), jnp.float32)
    p["wi"] = jnp.stack(wi).astype(bf16)
    p["bi"] = jnp.zeros((N_LAYERS, 1, FFN), jnp.float32)
    p["wf"] = jnp.stack(wf).astype(bf16)
    p["bf"] = jnp.zeros((N_LAYERS, 1, H), jnp.float32)
    p["ln2_g"] = jnp.ones((N_LAYERS, 1, H), jnp.float32)
    p["ln2_b"] = jnp.zeros((N_LAYERS, 1, H), jnp.float32)

    # Task heads: classifier.weight ~ N(0, 0.02), bias 0 (as in _init_weights),
    # concatenated and zero-padded to HEAD_PAD lanes for one lane-dense matmul.
    head_w = jnp.zeros((H, HEAD_PAD), jnp.float32)
    off = 0
    for n in HEAD_SIZES:
        head_w = head_w.at[:, off:off + n].set(norm((H, n)))
        off += n
    p["head_w"] = head_w.astype(bf16)
    p["head_b"] = jnp.zeros((1, HEAD_PAD), jnp.float32)
    return p


# ----------------------------------------------------------------------------
# Jitted fused forward: embeddings + ONE pallas_call + head slicing
# ----------------------------------------------------------------------------
@jax.jit
def fused_forward(params, input_ids, attention_mask, token_type_ids):
    B, S = input_ids.shape
    M = B * S

    emb = (params["word_emb"][input_ids]
           + params["pos_emb"][:S][None, :, :]
           + params["type_emb"][token_type_ids]).astype(jnp.float32)
    emb2d = emb.reshape(M, H)

    # compact integer mask encoding: batch id per row / per key (-1 for padded keys)
    batch_ids = jnp.repeat(jnp.arange(B, dtype=jnp.int32), S)                  # [M]
    row_code = batch_ids.reshape(M, 1)
    key_code = jnp.where(attention_mask.reshape(-1) > 0, batch_ids,
                         jnp.int32(-1)).reshape(1, M)

    kern = functools.partial(_encoder_kernel, n_layers=N_LAYERS,
                             n_heads=N_HEADS, d_head=D_HEAD)
    packed = pl.pallas_call(
        kern,
        out_shape=jax.ShapeDtypeStruct((M, PACK), jnp.float32),
        in_specs=[
            _full_spec((M, H)), _full_spec((M, 1)), _full_spec((1, M)),
            _full_spec((1, H)), _full_spec((1, H)),
            _full_spec((N_LAYERS, H, 3 * H)), _full_spec((N_LAYERS, 1, 3 * H)),
            _full_spec((N_LAYERS, H, H)), _full_spec((N_LAYERS, 1, H)),
            _full_spec((N_LAYERS, 1, H)), _full_spec((N_LAYERS, 1, H)),
            _full_spec((N_LAYERS, H, FFN)), _full_spec((N_LAYERS, 1, FFN)),
            _full_spec((N_LAYERS, FFN, H)), _full_spec((N_LAYERS, 1, H)),
            _full_spec((N_LAYERS, 1, H)), _full_spec((N_LAYERS, 1, H)),
            _full_spec((H, H)), _full_spec((1, H)),
            _full_spec((H, HEAD_PAD)), _full_spec((1, HEAD_PAD)),
        ],
        out_specs=_full_spec((M, PACK)),
        compiler_params=pltpu.CompilerParams(vmem_limit_bytes=32 * 1024 * 1024),
    )(emb2d, row_code, key_code,
      params["emb_ln_g"], params["emb_ln_b"],
      params["wqkv"], params["bqkv"], params["wo"], params["bo"],
      params["ln1_g"], params["ln1_b"],
      params["wi"], params["bi"], params["wf"], params["bf"],
      params["ln2_g"], params["ln2_b"],
      params["pool_w"], params["pool_b"], params["head_w"], params["head_b"])

    packed3 = packed.reshape(B, S, PACK)
    sequence_output = packed3[..., :H]                                 # [B, S, H]
    pooled_output = packed3[:, 0, H:2 * H]                             # [CLS] rows -> [B, H]
    head_cls = packed3[:, 0, 2 * H:2 * H + sum(HEAD_SIZES)]            # [B, 9]

    o0, o1, o2 = HEAD_SIZES
    logits_seq = head_cls[:, 0:o0]                                     # linear
    logits_soft = jax.nn.softmax(head_cls[:, o0:o0 + o1], axis=-1)     # linear+softmax
    logits_emo = head_cls[:, o0 + o1:o0 + o1 + o2]                     # linear
    return sequence_output, pooled_output, (logits_seq, logits_soft, logits_emo)


def multitask_forward(params, input_ids, attention_mask, token_type_ids, task_ids):
    _seq, _pooled, per_task_logits = fused_forward(
        params, input_ids, attention_mask, token_type_ids)

    # torch.unique(task_ids).tolist() is sorted and the reference loop overwrites
    # `logits`, so only the LAST unique task id's row-filtered logits survive.
    # task_ids is host-side task metadata (numpy), so np.unique triggers no
    # device sync; the surviving rows are gathered on-device (no logits readback).
    # TODO(synk): the per-task boolean row filter has data-dependent output shape,
    # so this unique/nonzero step stays host-side glue rather than in-kernel.
    task_ids_np = np.asarray(task_ids)
    uid = int(np.unique(task_ids_np)[-1])
    rows = np.nonzero((task_ids_np == uid)[:, 0])[0]
    logits = jnp.take(per_task_logits[uid], jnp.asarray(rows, dtype=jnp.int32), axis=0)
    # labels is None -> no loss branch; encoder extra outputs are empty
    return (logits, ())


# ----------------------------------------------------------------------------
if __name__ == "__main__":
    key = jax.random.PRNGKey(0)
    pkey, ikey = jax.random.split(key)
    params = init_params(pkey)

    B, S = 16, 8          # M = B*S = 128 rows -> full sublanes, amortized launch overhead
    input_ids = jax.random.randint(ikey, (B, S), 0, VOCAB, dtype=jnp.int32)
    attention_mask = jnp.ones((B, S), dtype=jnp.int32)
    token_type_ids = jnp.zeros((B, S), dtype=jnp.int32)
    task_ids = np.tile(np.array([[0], [1], [2], [1]], dtype=np.int32), (4, 1))  # [16, 1]

    logits, _rest = multitask_forward(params, input_ids, attention_mask,
                                      token_type_ids, task_ids)
    jax.block_until_ready(logits)
    # last unique task id = 2 -> EmotionRegressionHead (3 outputs) on its 4 rows
    assert logits.shape == (4, 3)
    print("KERNEL_OK")
</pallas_src>

<mosaic_0001>
module attributes {stable_mosaic.version = 11 : i64} {
  func.func @_encoder_kernel(%arg0: memref<128x32xf32, #tpu.memory_space<vmem>>, %arg1: memref<128x1xi32, #tpu.memory_space<vmem>>, %arg2: memref<1x128xi32, #tpu.memory_space<vmem>>, %arg3: memref<1x32xf32, #tpu.memory_space<vmem>>, %arg4: memref<1x32xf32, #tpu.memory_space<vmem>>, %arg5: memref<2x32x96xbf16, #tpu.memory_space<vmem>>, %arg6: memref<2x1x96xf32, #tpu.memory_space<vmem>>, %arg7: memref<2x32x32xbf16, #tpu.memory_space<vmem>>, %arg8: memref<2x1x32xf32, #tpu.memory_space<vmem>>, %arg9: memref<2x1x32xf32, #tpu.memory_space<vmem>>, %arg10: memref<2x1x32xf32, #tpu.memory_space<vmem>>, %arg11: memref<2x32x64xbf16, #tpu.memory_space<vmem>>, %arg12: memref<2x1x64xf32, #tpu.memory_space<vmem>>, %arg13: memref<2x64x32xbf16, #tpu.memory_space<vmem>>, %arg14: memref<2x1x32xf32, #tpu.memory_space<vmem>>, %arg15: memref<2x1x32xf32, #tpu.memory_space<vmem>>, %arg16: memref<2x1x32xf32, #tpu.memory_space<vmem>>, %arg17: memref<32x32xbf16, #tpu.memory_space<vmem>>, %arg18: memref<1x32xf32, #tpu.memory_space<vmem>>, %arg19: memref<32x64xbf16, #tpu.memory_space<vmem>>, %arg20: memref<1x64xf32, #tpu.memory_space<vmem>>, %arg21: memref<128x128xf32, #tpu.memory_space<vmem>>) attributes {dimension_semantics = [], scalar_prefetch = 0 : i64, scratch_operands = 0 : i64, tpu.core_type = #tpu.core_type<tc>} {
    %c0 = arith.constant 0 : index
    %c0_0 = arith.constant 0 : index
    %0 = vector.load %arg1[%c0, %c0_0] : memref<128x1xi32, #tpu.memory_space<vmem>>, vector<128x1xi32>
    %c0_1 = arith.constant 0 : index
    %c0_2 = arith.constant 0 : index
    %1 = vector.load %arg2[%c0_1, %c0_2] : memref<1x128xi32, #tpu.memory_space<vmem>>, vector<1x128xi32>
    %2 = vector.broadcast %0 : vector<128x1xi32> to vector<128x128xi32>
    %3 = vector.broadcast %1 : vector<1x128xi32> to vector<128x128xi32>
    %4 = arith.cmpi eq, %2, %3 : vector<128x128xi32>
    %cst = arith.constant 0.000000e+00 : f32
    %cst_3 = arith.constant -1.000000e+09 : f32
    %5 = vector.broadcast %cst : f32 to vector<128x128xf32>
    %6 = vector.broadcast %cst_3 : f32 to vector<128x128xf32>
    %7 = arith.select %4, %5, %6 : vector<128x128xi1>, vector<128x128xf32>
    %8 = tpu.concatenate %7, %7, %7, %7 in 0 : vector<128x128xf32>, vector<128x128xf32>, vector<128x128xf32>, vector<128x128xf32> -> vector<512x128xf32>
    %c0_4 = arith.constant 0 : index
    %c0_5 = arith.constant 0 : index
    %9 = vector.load %arg0[%c0_4, %c0_5] : memref<128x32xf32, #tpu.memory_space<vmem>>, vector<128x32xf32>
    %c0_6 = arith.constant 0 : index
    %c0_7 = arith.constant 0 : index
    %10 = vector.load %arg3[%c0_6, %c0_7] : memref<1x32xf32, #tpu.memory_space<vmem>>, vector<1x32xf32>
    %c0_8 = arith.constant 0 : index
    %c0_9 = arith.constant 0 : index
    %11 = vector.load %arg4[%c0_8, %c0_9] : memref<1x32xf32, #tpu.memory_space<vmem>>, vector<1x32xf32>
    %cst_10 = arith.constant dense<0.000000e+00> : vector<128xf32>
    %12 = vector.multi_reduction <add>, %9, %cst_10 [1] : vector<128x32xf32> to vector<128xf32>
    %13 = vector.shape_cast %12 : vector<128xf32> to vector<128x1xf32>
    %cst_11 = arith.constant 3.200000e+01 : f32
    %14 = vector.broadcast %cst_11 : f32 to vector<128x1xf32>
    %15 = arith.divf %13, %14 : vector<128x1xf32>
    %16 = vector.broadcast %15 : vector<128x1xf32> to vector<128x32xf32>
    %17 = arith.subf %9, %16 : vector<128x32xf32>
    %18 = arith.mulf %17, %17 : vector<128x32xf32>
    %cst_12 = arith.constant dense<0.000000e+00> : vector<128xf32>
    %19 = vector.multi_reduction <add>, %18, %cst_12 [1] : vector<128x32xf32> to vector<128xf32>
    %20 = vector.shape_cast %19 : vector<128xf32> to vector<128x1xf32>
    %cst_13 = arith.constant 3.200000e+01 : f32
    %21 = vector.broadcast %cst_13 : f32 to vector<128x1xf32>
    %22 = arith.divf %20, %21 : vector<128x1xf32>
    %23 = vector.broadcast %15 : vector<128x1xf32> to vector<128x32xf32>
    %24 = arith.subf %9, %23 : vector<128x32xf32>
    %cst_14 = arith.constant 9.99999996E-13 : f32
    %25 = vector.broadcast %cst_14 : f32 to vector<128x1xf32>
    %26 = arith.addf %22, %25 : vector<128x1xf32>
    %27 = math.rsqrt %26 : vector<128x1xf32>
    %28 = vector.broadcast %27 : vector<128x1xf32> to vector<128x32xf32>
    %29 = arith.mulf %24, %28 : vector<128x32xf32>
    %30 = vector.broadcast %10 : vector<1x32xf32> to vector<128x32xf32>
    %31 = arith.mulf %29, %30 : vector<128x32xf32>
    %32 = vector.broadcast %11 : vector<1x32xf32> to vector<128x32xf32>
    %33 = arith.addf %31, %32 : vector<128x32xf32>
    %34 = arith.truncf %33 : vector<128x32xf32> to vector<128x32xbf16>
    %c0_15 = arith.constant 0 : index
    %c0_16 = arith.constant 0 : index
    %c0_17 = arith.constant 0 : index
    %35 = vector.load %arg5[%c0_15, %c0_16, %c0_17] : memref<2x32x96xbf16, #tpu.memory_space<vmem>>, vector<1x32x96xbf16>
    %36 = vector.shape_cast %35 : vector<1x32x96xbf16> to vector<32x96xbf16>
    %cst_18 = arith.constant dense<0.000000e+00> : vector<128x96xf32>
    %37 = tpu.matmul %34, %36, %cst_18 {dimension_numbers = #tpu.dot_dimension_numbers<[1], [0], [0], [1], [0, 0, 1, 1], [], []>} : vector<128x32xbf16>, vector<32x96xbf16>, vector<128x96xf32> -> vector<128x96xf32>
    %c0_19 = arith.constant 0 : index
    %c0_20 = arith.constant 0 : index
    %c0_21 = arith.constant 0 : index
    %38 = vector.load %arg6[%c0_19, %c0_20, %c0_21] : memref<2x1x96xf32, #tpu.memory_space<vmem>>, vector<1x1x96xf32>
    %39 = vector.shape_cast %38 : vector<1x1x96xf32> to vector<1x96xf32>
    %40 = vector.broadcast %39 : vector<1x96xf32> to vector<128x96xf32>
    %41 = arith.addf %37, %40 : vector<128x96xf32>
    %42 = arith.truncf %41 : vector<128x96xf32> to vector<128x96xbf16>
    %43 = vector.extract_strided_slice %42 {offsets = [0, 0], sizes = [128, 8], strides = [1, 1]} : vector<128x96xbf16> to vector<128x8xbf16>
    %44 = vector.extract_strided_slice %42 {offsets = [0, 32], sizes = [128, 8], strides = [1, 1]} : vector<128x96xbf16> to vector<128x8xbf16>
    %cst_22 = arith.constant dense<0.000000e+00> : vector<128x128xf32>
    %45 = tpu.matmul %43, %44, %cst_22 {dimension_numbers = #tpu.dot_dimension_numbers<[1], [1], [0], [0], [0, 0, 1, 0], [], []>} : vector<128x8xbf16>, vector<128x8xbf16>, vector<128x128xf32> -> vector<128x128xf32>
    %46 = vector.extract_strided_slice %42 {offsets = [0, 8], sizes = [128, 8], strides = [1, 1]} : vector<128x96xbf16> to vector<128x8xbf16>
    %47 = vector.extract_strided_slice %42 {offsets = [0, 40], sizes = [128, 8], strides = [1, 1]} : vector<128x96xbf16> to vector<128x8xbf16>
    %cst_23 = arith.constant dense<0.000000e+00> : vector<128x128xf32>
    %48 = tpu.matmul %46, %47, %cst_23 {dimension_numbers = #tpu.dot_dimension_numbers<[1], [1], [0], [0], [0, 0, 1, 0], [], []>} : vector<128x8xbf16>, vector<128x8xbf16>, vector<128x128xf32> -> vector<128x128xf32>
    %49 = vector.extract_strided_slice %42 {offsets = [0, 16], sizes = [128, 8], strides = [1, 1]} : vector<128x96xbf16> to vector<128x8xbf16>
    %50 = vector.extract_strided_slice %42 {offsets = [0, 48], sizes = [128, 8], strides = [1, 1]} : vector<128x96xbf16> to vector<128x8xbf16>
    %cst_24 = arith.constant dense<0.000000e+00> : vector<128x128xf32>
    %51 = tpu.matmul %49, %50, %cst_24 {dimension_numbers = #tpu.dot_dimension_numbers<[1], [1], [0], [0], [0, 0, 1, 0], [], []>} : vector<128x8xbf16>, vector<128x8xbf16>, vector<128x128xf32> -> vector<128x128xf32>
    %52 = vector.extract_strided_slice %42 {offsets = [0, 24], sizes = [128, 8], strides = [1, 1]} : vector<128x96xbf16> to vector<128x8xbf16>
    %53 = vector.extract_strided_slice %42 {offsets = [0, 56], sizes = [128, 8], strides = [1, 1]} : vector<128x96xbf16> to vector<128x8xbf16>
    %cst_25 = arith.constant dense<0.000000e+00> : vector<128x128xf32>
    %54 = tpu.matmul %52, %53, %cst_25 {dimension_numbers = #tpu.dot_dimension_numbers<[1], [1], [0], [0], [0, 0, 1, 0], [], []>} : vector<128x8xbf16>, vector<128x8xbf16>, vector<128x128xf32> -> vector<128x128xf32>
    %55 = tpu.concatenate %45, %48, %51, %54 in 0 : vector<128x128xf32>, vector<128x128xf32>, vector<128x128xf32>, vector<128x128xf32> -> vector<512x128xf32>
    %cst_26 = arith.constant 0.353553385 : f32
    %56 = vector.broadcast %cst_26 : f32 to vector<512x128xf32>
    %57 = arith.mulf %55, %56 : vector<512x128xf32>
    %58 = arith.addf %57, %8 : vector<512x128xf32>
    %cst_27 = arith.constant dense<0xFF800000> : vector<512xf32>
    %59 = vector.multi_reduction <maximumf>, %58, %cst_27 [1] : vector<512x128xf32> to vector<512xf32>
    %60 = vector.shape_cast %59 : vector<512xf32> to vector<512x1xf32>
    %61 = vector.broadcast %60 : vector<512x1xf32> to vector<512x128xf32>
    %62 = arith.subf %58, %61 : vector<512x128xf32>
    %63 = math.exp %62 : vector<512x128xf32>
    %cst_28 = arith.constant dense<0.000000e+00> : vector<512xf32>
    %64 = vector.multi_reduction <add>, %63, %cst_28 [1] : vector<512x128xf32> to vector<512xf32>
    %65 = vector.shape_cast %64 : vector<512xf32> to vector<512x1xf32>
    %66 = tpu.reciprocal %65 {approx = true} : vector<512x1xf32> -> vector<512x1xf32>
    %67 = vector.broadcast %66 : vector<512x1xf32> to vector<512x128xf32>
    %68 = arith.mulf %63, %67 : vector<512x128xf32>
    %69 = arith.truncf %68 : vector<512x128xf32> to vector<512x128xbf16>
    %70 = vector.extract_strided_slice %69 {offsets = [0, 0], sizes = [128, 128], strides = [1, 1]} : vector<512x128xbf16> to vector<128x128xbf16>
    %71 = vector.extract_strided_slice %42 {offsets = [0, 64], sizes = [128, 8], strides = [1, 1]} : vector<128x96xbf16> to vector<128x8xbf16>
    %cst_29 = arith.constant dense<0.000000e+00> : vector<128x8xf32>
    %72 = tpu.matmul %70, %71, %cst_29 {dimension_numbers = #tpu.dot_dimension_numbers<[1], [0], [0], [1], [0, 0, 1, 1], [], []>} : vector<128x128xbf16>, vector<128x8xbf16>, vector<128x8xf32> -> vector<128x8xf32>
    %73 = vector.extract_strided_slice %69 {offsets = [128, 0], sizes = [128, 128], strides = [1, 1]} : vector<512x128xbf16> to vector<128x128xbf16>
    %74 = vector.extract_strided_slice %42 {offsets = [0, 72], sizes = [128, 8], strides = [1, 1]} : vector<128x96xbf16> to vector<128x8xbf16>
    %cst_30 = arith.constant dense<0.000000e+00> : vector<128x8xf32>
    %75 = tpu.matmul %73, %74, %cst_30 {dimension_numbers = #tpu.dot_dimension_numbers<[1], [0], [0], [1], [0, 0, 1, 1], [], []>} : vector<128x128xbf16>, vector<128x8xbf16>, vector<128x8xf32> -> vector<128x8xf32>
    %76 = vector.extract_strided_slice %69 {offsets = [256, 0], sizes = [128, 128], strides = [1, 1]} : vector<512x128xbf16> to vector<128x128xbf16>
    %77 = vector.extract_strided_slice %42 {offsets = [0, 80], sizes = [128, 8], strides = [1, 1]} : vector<128x96xbf16> to vector<128x8xbf16>
    %cst_31 = arith.constant dense<0.000000e+00> : vector<128x8xf32>
    %78 = tpu.matmul %76, %77, %cst_31 {dimension_numbers = #tpu.dot_dimension_numbers<[1], [0], [0], [1], [0, 0, 1, 1], [], []>} : vector<128x128xbf16>, vector<128x8xbf16>, vector<128x8xf32> -> vector<128x8xf32>
    %79 = vector.extract_strided_slice %69 {offsets = [384, 0], sizes = [128, 128], strides = [1, 1]} : vector<512x128xbf16> to vector<128x128xbf16>
    %80 = vector.extract_strided_slice %42 {offsets = [0, 88], sizes = [128, 8], strides = [1, 1]} : vector<128x96xbf16> to vector<128x8xbf16>
    %cst_32 = arith.constant dense<0.000000e+00> : vector<128x8xf32>
    %81 = tpu.matmul %79, %80, %cst_32 {dimension_numbers = #tpu.dot_dimension_numbers<[1], [0], [0], [1], [0, 0, 1, 1], [], []>} : vector<128x128xbf16>, vector<128x8xbf16>, vector<128x8xf32> -> vector<128x8xf32>
    %82 = tpu.concatenate %72, %75, %78, %81 in 1 : vector<128x8xf32>, vector<128x8xf32>, vector<128x8xf32>, vector<128x8xf32> -> vector<128x32xf32>
    %83 = arith.truncf %82 : vector<128x32xf32> to vector<128x32xbf16>
    %c0_33 = arith.constant 0 : index
    %c0_34 = arith.constant 0 : index
    %c0_35 = arith.constant 0 : index
    %84 = vector.load %arg7[%c0_33, %c0_34, %c0_35] : memref<2x32x32xbf16, #tpu.memory_space<vmem>>, vector<1x32x32xbf16>
    %85 = vector.shape_cast %84 : vector<1x32x32xbf16> to vector<32x32xbf16>
    %cst_36 = arith.constant dense<0.000000e+00> : vector<128x32xf32>
    %86 = tpu.matmul %83, %85, %cst_36 {dimension_numbers = #tpu.dot_dimension_numbers<[1], [0], [0], [1], [0, 0, 1, 1], [], []>} : vector<128x32xbf16>, vector<32x32xbf16>, vector<128x32xf32> -> vector<128x32xf32>
    %c0_37 = arith.constant 0 : index
    %c0_38 = arith.constant 0 : index
    %c0_39 = arith.constant 0 : index
    %87 = vector.load %arg8[%c0_37, %c0_38, %c0_39] : memref<2x1x32xf32, #tpu.memory_space<vmem>>, vector<1x1x32xf32>
    %88 = vector.shape_cast %87 : vector<1x1x32xf32> to vector<1x32xf32>
    %89 = vector.broadcast %88 : vector<1x32xf32> to vector<128x32xf32>
    %90 = arith.addf %86, %89 : vector<128x32xf32>
    %91 = arith.addf %90, %33 : vector<128x32xf32>
    %c0_40 = arith.constant 0 : index
    %c0_41 = arith.constant 0 : index
    %c0_42 = arith.constant 0 : index
    %92 = vector.load %arg9[%c0_40, %c0_41, %c0_42] : memref<2x1x32xf32, #tpu.memory_space<vmem>>, vector<1x1x32xf32>
    %93 = vector.shape_cast %92 : vector<1x1x32xf32> to vector<1x32xf32>
    %c0_43 = arith.constant 0 : index
    %c0_44 = arith.constant 0 : index
    %c0_45 = arith.constant 0 : index
    %94 = vector.load %arg10[%c0_43, %c0_44, %c0_45] : memref<2x1x32xf32, #tpu.memory_space<vmem>>, vector<1x1x32xf32>
    %95 = vector.shape_cast %94 : vector<1x1x32xf32> to vector<1x32xf32>
    %cst_46 = arith.constant dense<0.000000e+00> : vector<128xf32>
    %96 = vector.multi_reduction <add>, %91, %cst_46 [1] : vector<128x32xf32> to vector<128xf32>
    %97 = vector.shape_cast %96 : vector<128xf32> to vector<128x1xf32>
    %cst_47 = arith.constant 3.200000e+01 : f32
    %98 = vector.broadcast %cst_47 : f32 to vector<128x1xf32>
    %99 = arith.divf %97, %98 : vector<128x1xf32>
    %100 = vector.broadcast %99 : vector<128x1xf32> to vector<128x32xf32>
    %101 = arith.subf %91, %100 : vector<128x32xf32>
    %102 = arith.mulf %101, %101 : vector<128x32xf32>
    %cst_48 = arith.constant dense<0.000000e+00> : vector<128xf32>
    %103 = vector.multi_reduction <add>, %102, %cst_48 [1] : vector<128x32xf32> to vector<128xf32>
    %104 = vector.shape_cast %103 : vector<128xf32> to vector<128x1xf32>
    %cst_49 = arith.constant 3.200000e+01 : f32
    %105 = vector.broadcast %cst_49 : f32 to vector<128x1xf32>
    %106 = arith.divf %104, %105 : vector<128x1xf32>
    %107 = vector.broadcast %99 : vector<128x1xf32> to vector<128x32xf32>
    %108 = arith.subf %91, %107 : vector<128x32xf32>
    %cst_50 = arith.constant 9.99999996E-13 : f32
    %109 = vector.broadcast %cst_50 : f32 to vector<128x1xf32>
    %110 = arith.addf %106, %109 : vector<128x1xf32>
    %111 = math.rsqrt %110 : vector<128x1xf32>
    %112 = vector.broadcast %111 : vector<128x1xf32> to vector<128x32xf32>
    %113 = arith.mulf %108, %112 : vector<128x32xf32>
    %114 = vector.broadcast %93 : vector<1x32xf32> to vector<128x32xf32>
    %115 = arith.mulf %113, %114 : vector<128x32xf32>
    %116 = vector.broadcast %95 : vector<1x32xf32> to vector<128x32xf32>
    %117 = arith.addf %115, %116 : vector<128x32xf32>
    %118 = arith.truncf %117 : vector<128x32xf32> to vector<128x32xbf16>
    %c0_51 = arith.constant 0 : index
    %c0_52 = arith.constant 0 : index
    %c0_53 = arith.constant 0 : index
    %119 = vector.load %arg11[%c0_51, %c0_52, %c0_53] : memref<2x32x64xbf16, #tpu.memory_space<vmem>>, vector<1x32x64xbf16>
    %120 = vector.shape_cast %119 : vector<1x32x64xbf16> to vector<32x64xbf16>
    %cst_54 = arith.constant dense<0.000000e+00> : vector<128x64xf32>
    %121 = tpu.matmul %118, %120, %cst_54 {dimension_numbers = #tpu.dot_dimension_numbers<[1], [0], [0], [1], [0, 0, 1, 1], [], []>} : vector<128x32xbf16>, vector<32x64xbf16>, vector<128x64xf32> -> vector<128x64xf32>
    %c0_55 = arith.constant 0 : index
    %c0_56 = arith.constant 0 : index
    %c0_57 = arith.constant 0 : index
    %122 = vector.load %arg12[%c0_55, %c0_56, %c0_57] : memref<2x1x64xf32, #tpu.memory_space<vmem>>, vector<1x1x64xf32>
    %123 = vector.shape_cast %122 : vector<1x1x64xf32> to vector<1x64xf32>
    %124 = vector.broadcast %123 : vector<1x64xf32> to vector<128x64xf32>
    %125 = arith.addf %121, %124 : vector<128x64xf32>
    %cst_58 = arith.constant 5.000000e-01 : f32
    %126 = vector.broadcast %cst_58 : f32 to vector<128x64xf32>
    %127 = arith.mulf %126, %125 : vector<128x64xf32>
    %cst_59 = arith.constant 4.471500e-02 : f32
    %128 = vector.broadcast %cst_59 : f32 to vector<128x64xf32>
    %129 = arith.mulf %128, %125 : vector<128x64xf32>
    %130 = arith.mulf %129, %125 : vector<128x64xf32>
    %131 = arith.mulf %130, %125 : vector<128x64xf32>
    %132 = arith.addf %125, %131 : vector<128x64xf32>
    %cst_60 = arith.constant 0.797884583 : f32
    %133 = vector.broadcast %cst_60 : f32 to vector<128x64xf32>
    %134 = arith.mulf %133, %132 : vector<128x64xf32>
    %135 = math.tanh %134 : vector<128x64xf32>
    %cst_61 = arith.constant 1.000000e+00 : f32
    %136 = vector.broadcast %cst_61 : f32 to vector<128x64xf32>
    %137 = arith.addf %136, %135 : vector<128x64xf32>
    %138 = arith.mulf %127, %137 : vector<128x64xf32>
    %139 = arith.truncf %138 : vector<128x64xf32> to vector<128x64xbf16>
    %c0_62 = arith.constant 0 : index
    %c0_63 = arith.constant 0 : index
    %c0_64 = arith.constant 0 : index
    %140 = vector.load %arg13[%c0_62, %c0_63, %c0_64] : memref<2x64x32xbf16, #tpu.memory_space<vmem>>, vector<1x64x32xbf16>
    %141 = vector.shape_cast %140 : vector<1x64x32xbf16> to vector<64x32xbf16>
    %cst_65 = arith.constant dense<0.000000e+00> : vector<128x32xf32>
    %142 = tpu.matmul %139, %141, %cst_65 {dimension_numbers = #tpu.dot_dimension_numbers<[1], [0], [0], [1], [0, 0, 1, 1], [], []>} : vector<128x64xbf16>, vector<64x32xbf16>, vector<128x32xf32> -> vector<128x32xf32>
    %c0_66 = arith.constant 0 : index
    %c0_67 = arith.constant 0 : index
    %c0_68 = arith.constant 0 : index
    %143 = vector.load %arg14[%c0_66, %c0_67, %c0_68] : memref<2x1x32xf32, #tpu.memory_space<vmem>>, vector<1x1x32xf32>
    %144 = vector.shape_cast %143 : vector<1x1x32xf32> to vector<1x32xf32>
    %145 = vector.broadcast %144 : vector<1x32xf32> to vector<128x32xf32>
    %146 = arith.addf %142, %145 : vector<128x32xf32>
    %147 = arith.addf %146, %117 : vector<128x32xf32>
    %c0_69 = arith.constant 0 : index
    %c0_70 = arith.constant 0 : index
    %c0_71 = arith.constant 0 : index
    %148 = vector.load %arg15[%c0_69, %c0_70, %c0_71] : memref<2x1x32xf32, #tpu.memory_space<vmem>>, vector<1x1x32xf32>
    %149 = vector.shape_cast %148 : vector<1x1x32xf32> to vector<1x32xf32>
    %c0_72 = arith.constant 0 : index
    %c0_73 = arith.constant 0 : index
    %c0_74 = arith.constant 0 : index
    %150 = vector.load %arg16[%c0_72, %c0_73, %c0_74] : memref<2x1x32xf32, #tpu.memory_space<vmem>>, vector<1x1x32xf32>
    %151 = vector.shape_cast %150 : vector<1x1x32xf32> to vector<1x32xf32>
    %cst_75 = arith.constant dense<0.000000e+00> : vector<128xf32>
    %152 = vector.multi_reduction <add>, %147, %cst_75 [1] : vector<128x32xf32> to vector<128xf32>
    %153 = vector.shape_cast %152 : vector<128xf32> to vector<128x1xf32>
    %cst_76 = arith.constant 3.200000e+01 : f32
    %154 = vector.broadcast %cst_76 : f32 to vector<128x1xf32>
    %155 = arith.divf %153, %154 : vector<128x1xf32>
    %156 = vector.broadcast %155 : vector<128x1xf32> to vector<128x32xf32>
    %157 = arith.subf %147, %156 : vector<128x32xf32>
    %158 = arith.mulf %157, %157 : vector<128x32xf32>
    %cst_77 = arith.constant dense<0.000000e+00> : vector<128xf32>
    %159 = vector.multi_reduction <add>, %158, %cst_77 [1] : vector<128x32xf32> to vector<128xf32>
    %160 = vector.shape_cast %159 : vector<128xf32> to vector<128x1xf32>
    %cst_78 = arith.constant 3.200000e+01 : f32
    %161 = vector.broadcast %cst_78 : f32 to vector<128x1xf32>
    %162 = arith.divf %160, %161 : vector<128x1xf32>
    %163 = vector.broadcast %155 : vector<128x1xf32> to vector<128x32xf32>
    %164 = arith.subf %147, %163 : vector<128x32xf32>
    %cst_79 = arith.constant 9.99999996E-13 : f32
    %165 = vector.broadcast %cst_79 : f32 to vector<128x1xf32>
    %166 = arith.addf %162, %165 : vector<128x1xf32>
    %167 = math.rsqrt %166 : vector<128x1xf32>
    %168 = vector.broadcast %167 : vector<128x1xf32> to vector<128x32xf32>
    %169 = arith.mulf %164, %168 : vector<128x32xf32>
    %170 = vector.broadcast %149 : vector<1x32xf32> to vector<128x32xf32>
    %171 = arith.mulf %169, %170 : vector<128x32xf32>
    %172 = vector.broadcast %151 : vector<1x32xf32> to vector<128x32xf32>
    %173 = arith.addf %171, %172 : vector<128x32xf32>
    %174 = arith.truncf %173 : vector<128x32xf32> to vector<128x32xbf16>
    %c1 = arith.constant 1 : index
    %c0_80 = arith.constant 0 : index
    %c0_81 = arith.constant 0 : index
    %175 = vector.load %arg5[%c1, %c0_80, %c0_81] : memref<2x32x96xbf16, #tpu.memory_space<vmem>>, vector<1x32x96xbf16>
    %176 = vector.shape_cast %175 : vector<1x32x96xbf16> to vector<32x96xbf16>
    %cst_82 = arith.constant dense<0.000000e+00> : vector<128x96xf32>
    %177 = tpu.matmul %174, %176, %cst_82 {dimension_numbers = #tpu.dot_dimension_numbers<[1], [0], [0], [1], [0, 0, 1, 1], [], []>} : vector<128x32xbf16>, vector<32x96xbf16>, vector<128x96xf32> -> vector<128x96xf32>
    %c1_83 = arith.constant 1 : index
    %c0_84 = arith.constant 0 : index
    %c0_85 = arith.constant 0 : index
    %178 = vector.load %arg6[%c1_83, %c0_84, %c0_85] : memref<2x1x96xf32, #tpu.memory_space<vmem>>, vector<1x1x96xf32>
    %179 = vector.shape_cast %178 : vector<1x1x96xf32> to vector<1x96xf32>
    %180 = vector.broadcast %179 : vector<1x96xf32> to vector<128x96xf32>
    %181 = arith.addf %177, %180 : vector<128x96xf32>
    %182 = arith.truncf %181 : vector<128x96xf32> to vector<128x96xbf16>
    %183 = vector.extract_strided_slice %182 {offsets = [0, 0], sizes = [128, 8], strides = [1, 1]} : vector<128x96xbf16> to vector<128x8xbf16>
    %184 = vector.extract_strided_slice %182 {offsets = [0, 32], sizes = [128, 8], strides = [1, 1]} : vector<128x96xbf16> to vector<128x8xbf16>
    %cst_86 = arith.constant dense<0.000000e+00> : vector<128x128xf32>
    %185 = tpu.matmul %183, %184, %cst_86 {dimension_numbers = #tpu.dot_dimension_numbers<[1], [1], [0], [0], [0, 0, 1, 0], [], []>} : vector<128x8xbf16>, vector<128x8xbf16>, vector<128x128xf32> -> vector<128x128xf32>
    %186 = vector.extract_strided_slice %182 {offsets = [0, 8], sizes = [128, 8], strides = [1, 1]} : vector<128x96xbf16> to vector<128x8xbf16>
    %187 = vector.extract_strided_slice %182 {offsets = [0, 40], sizes = [128, 8], strides = [1, 1]} : vector<128x96xbf16> to vector<128x8xbf16>
    %cst_87 = arith.constant dense<0.000000e+00> : vector<128x128xf32>
    %188 = tpu.matmul %186, %187, %cst_87 {dimension_numbers = #tpu.dot_dimension_numbers<[1], [1], [0], [0], [0, 0, 1, 0], [], []>} : vector<128x8xbf16>, vector<128x8xbf16>, vector<128x128xf32> -> vector<128x128xf32>
    %189 = vector.extract_strided_slice %182 {offsets = [0, 16], sizes = [128, 8], strides = [1, 1]} : vector<128x96xbf16> to vector<128x8xbf16>
    %190 = vector.extract_strided_slice %182 {offsets = [0, 48], sizes = [128, 8], strides = [1, 1]} : vector<128x96xbf16> to vector<128x8xbf16>
    %cst_88 = arith.constant dense<0.000000e+00> : vector<128x128xf32>
    %191 = tpu.matmul %189, %190, %cst_88 {dimension_numbers = #tpu.dot_dimension_numbers<[1], [1], [0], [0], [0, 0, 1, 0], [], []>} : vector<128x8xbf16>, vector<128x8xbf16>, vector<128x128xf32> -> vector<128x128xf32>
    %192 = vector.extract_strided_slice %182 {offsets = [0, 24], sizes = [128, 8], strides = [1, 1]} : vector<128x96xbf16> to vector<128x8xbf16>
    %193 = vector.extract_strided_slice %182 {offsets = [0, 56], sizes = [128, 8], strides = [1, 1]} : vector<128x96xbf16> to vector<128x8xbf16>
    %cst_89 = arith.constant dense<0.000000e+00> : vector<128x128xf32>
    %194 = tpu.matmul %192, %193, %cst_89 {dimension_numbers = #tpu.dot_dimension_numbers<[1], [1], [0], [0], [0, 0, 1, 0], [], []>} : vector<128x8xbf16>, vector<128x8xbf16>, vector<128x128xf32> -> vector<128x128xf32>
    %195 = tpu.concatenate %185, %188, %191, %194 in 0 : vector<128x128xf32>, vector<128x128xf32>, vector<128x128xf32>, vector<128x128xf32> -> vector<512x128xf32>
    %cst_90 = arith.constant 0.353553385 : f32
    %196 = vector.broadcast %cst_90 : f32 to vector<512x128xf32>
    %197 = arith.mulf %195, %196 : vector<512x128xf32>
    %198 = arith.addf %197, %8 : vector<512x128xf32>
    %cst_91 = arith.constant dense<0xFF800000> : vector<512xf32>
    %199 = vector.multi_reduction <maximumf>, %198, %cst_91 [1] : vector<512x128xf32> to vector<512xf32>
    %200 = vector.shape_cast %199 : vector<512xf32> to vector<512x1xf32>
    %201 = vector.broadcast %200 : vector<512x1xf32> to vector<512x128xf32>
    %202 = arith.subf %198, %201 : vector<512x128xf32>
    %203 = math.exp %202 : vector<512x128xf32>
    %cst_92 = arith.constant dense<0.000000e+00> : vector<512xf32>
    %204 = vector.multi_reduction <add>, %203, %cst_92 [1] : vector<512x128xf32> to vector<512xf32>
    %205 = vector.shape_cast %204 : vector<512xf32> to vector<512x1xf32>
    %206 = tpu.reciprocal %205 {approx = true} : vector<512x1xf32> -> vector<512x1xf32>
    %207 = vector.broadcast %206 : vector<512x1xf32> to vector<512x128xf32>
    %208 = arith.mulf %203, %207 : vector<512x128xf32>
    %209 = arith.truncf %208 : vector<512x128xf32> to vector<512x128xbf16>
    %210 = vector.extract_strided_slice %209 {offsets = [0, 0], sizes = [128, 128], strides = [1, 1]} : vector<512x128xbf16> to vector<128x128xbf16>
    %211 = vector.extract_strided_slice %182 {offsets = [0, 64], sizes = [128, 8], strides = [1, 1]} : vector<128x96xbf16> to vector<128x8xbf16>
    %cst_93 = arith.constant dense<0.000000e+00> : vector<128x8xf32>
    %212 = tpu.matmul %210, %211, %cst_93 {dimension_numbers = #tpu.dot_dimension_numbers<[1], [0], [0], [1], [0, 0, 1, 1], [], []>} : vector<128x128xbf16>, vector<128x8xbf16>, vector<128x8xf32> -> vector<128x8xf32>
    %213 = vector.extract_strided_slice %209 {offsets = [128, 0], sizes = [128, 128], strides = [1, 1]} : vector<512x128xbf16> to vector<128x128xbf16>
    %214 = vector.extract_strided_slice %182 {offsets = [0, 72], sizes = [128, 8], strides = [1, 1]} : vector<128x96xbf16> to vector<128x8xbf16>
    %cst_94 = arith.constant dense<0.000000e+00> : vector<128x8xf32>
    %215 = tpu.matmul %213, %214, %cst_94 {dimension_numbers = #tpu.dot_dimension_numbers<[1], [0], [0], [1], [0, 0, 1, 1], [], []>} : vector<128x128xbf16>, vector<128x8xbf16>, vector<128x8xf32> -> vector<128x8xf32>
    %216 = vector.extract_strided_slice %209 {offsets = [256, 0], sizes = [128, 128], strides = [1, 1]} : vector<512x128xbf16> to vector<128x128xbf16>
    %217 = vector.extract_strided_slice %182 {offsets = [0, 80], sizes = [128, 8], strides = [1, 1]} : vector<128x96xbf16> to vector<128x8xbf16>
    %cst_95 = arith.constant dense<0.000000e+00> : vector<128x8xf32>
    %218 = tpu.matmul %216, %217, %cst_95 {dimension_numbers = #tpu.dot_dimension_numbers<[1], [0], [0], [1], [0, 0, 1, 1], [], []>} : vector<128x128xbf16>, vector<128x8xbf16>, vector<128x8xf32> -> vector<128x8xf32>
    %219 = vector.extract_strided_slice %209 {offsets = [384, 0], sizes = [128, 128], strides = [1, 1]} : vector<512x128xbf16> to vector<128x128xbf16>
    %220 = vector.extract_strided_slice %182 {offsets = [0, 88], sizes = [128, 8], strides = [1, 1]} : vector<128x96xbf16> to vector<128x8xbf16>
    %cst_96 = arith.constant dense<0.000000e+00> : vector<128x8xf32>
    %221 = tpu.matmul %219, %220, %cst_96 {dimension_numbers = #tpu.dot_dimension_numbers<[1], [0], [0], [1], [0, 0, 1, 1], [], []>} : vector<128x128xbf16>, vector<128x8xbf16>, vector<128x8xf32> -> vector<128x8xf32>
    %222 = tpu.concatenate %212, %215, %218, %221 in 1 : vector<128x8xf32>, vector<128x8xf32>, vector<128x8xf32>, vector<128x8xf32> -> vector<128x32xf32>
    %223 = arith.truncf %222 : vector<128x32xf32> to vector<128x32xbf16>
    %c1_97 = arith.constant 1 : index
    %c0_98 = arith.constant 0 : index
    %c0_99 = arith.constant 0 : index
    %224 = vector.load %arg7[%c1_97, %c0_98, %c0_99] : memref<2x32x32xbf16, #tpu.memory_space<vmem>>, vector<1x32x32xbf16>
    %225 = vector.shape_cast %224 : vector<1x32x32xbf16> to vector<32x32xbf16>
    %cst_100 = arith.constant dense<0.000000e+00> : vector<128x32xf32>
    %226 = tpu.matmul %223, %225, %cst_100 {dimension_numbers = #tpu.dot_dimension_numbers<[1], [0], [0], [1], [0, 0, 1, 1], [], []>} : vector<128x32xbf16>, vector<32x32xbf16>, vector<128x32xf32> -> vector<128x32xf32>
    %c1_101 = arith.constant 1 : index
    %c0_102 = arith.constant 0 : index
    %c0_103 = arith.constant 0 : index
    %227 = vector.load %arg8[%c1_101, %c0_102, %c0_103] : memref<2x1x32xf32, #tpu.memory_space<vmem>>, vector<1x1x32xf32>
    %228 = vector.shape_cast %227 : vector<1x1x32xf32> to vector<1x32xf32>
    %229 = vector.broadcast %228 : vector<1x32xf32> to vector<128x32xf32>
    %230 = arith.addf %226, %229 : vector<128x32xf32>
    %231 = arith.addf %230, %173 : vector<128x32xf32>
    %c1_104 = arith.constant 1 : index
    %c0_105 = arith.constant 0 : index
    %c0_106 = arith.constant 0 : index
    %232 = vector.load %arg9[%c1_104, %c0_105, %c0_106] : memref<2x1x32xf32, #tpu.memory_space<vmem>>, vector<1x1x32xf32>
    %233 = vector.shape_cast %232 : vector<1x1x32xf32> to vector<1x32xf32>
    %c1_107 = arith.constant 1 : index
    %c0_108 = arith.constant 0 : index
    %c0_109 = arith.constant 0 : index
    %234 = vector.load %arg10[%c1_107, %c0_108, %c0_109] : memref<2x1x32xf32, #tpu.memory_space<vmem>>, vector<1x1x32xf32>
    %235 = vector.shape_cast %234 : vector<1x1x32xf32> to vector<1x32xf32>
    %cst_110 = arith.constant dense<0.000000e+00> : vector<128xf32>
    %236 = vector.multi_reduction <add>, %231, %cst_110 [1] : vector<128x32xf32> to vector<128xf32>
    %237 = vector.shape_cast %236 : vector<128xf32> to vector<128x1xf32>
    %cst_111 = arith.constant 3.200000e+01 : f32
    %238 = vector.broadcast %cst_111 : f32 to vector<128x1xf32>
    %239 = arith.divf %237, %238 : vector<128x1xf32>
    %240 = vector.broadcast %239 : vector<128x1xf32> to vector<128x32xf32>
    %241 = arith.subf %231, %240 : vector<128x32xf32>
    %242 = arith.mulf %241, %241 : vector<128x32xf32>
    %cst_112 = arith.constant dense<0.000000e+00> : vector<128xf32>
    %243 = vector.multi_reduction <add>, %242, %cst_112 [1] : vector<128x32xf32> to vector<128xf32>
    %244 = vector.shape_cast %243 : vector<128xf32> to vector<128x1xf32>
    %cst_113 = arith.constant 3.200000e+01 : f32
    %245 = vector.broadcast %cst_113 : f32 to vector<128x1xf32>
    %246 = arith.divf %244, %245 : vector<128x1xf32>
    %247 = vector.broadcast %239 : vector<128x1xf32> to vector<128x32xf32>
    %248 = arith.subf %231, %247 : vector<128x32xf32>
    %cst_114 = arith.constant 9.99999996E-13 : f32
    %249 = vector.broadcast %cst_114 : f32 to vector<128x1xf32>
    %250 = arith.addf %246, %249 : vector<128x1xf32>
    %251 = math.rsqrt %250 : vector<128x1xf32>
    %252 = vector.broadcast %251 : vector<128x1xf32> to vector<128x32xf32>
    %253 = arith.mulf %248, %252 : vector<128x32xf32>
    %254 = vector.broadcast %233 : vector<1x32xf32> to vector<128x32xf32>
    %255 = arith.mulf %253, %254 : vector<128x32xf32>
    %256 = vector.broadcast %235 : vector<1x32xf32> to vector<128x32xf32>
    %257 = arith.addf %255, %256 : vector<128x32xf32>
    %258 = arith.truncf %257 : vector<128x32xf32> to vector<128x32xbf16>
    %c1_115 = arith.constant 1 : index
    %c0_116 = arith.constant 0 : index
    %c0_117 = arith.constant 0 : index
    %259 = vector.load %arg11[%c1_115, %c0_116, %c0_117] : memref<2x32x64xbf16, #tpu.memory_space<vmem>>, vector<1x32x64xbf16>
    %260 = vector.shape_cast %259 : vector<1x32x64xbf16> to vector<32x64xbf16>
    %cst_118 = arith.constant dense<0.000000e+00> : vector<128x64xf32>
    %261 = tpu.matmul %258, %260, %cst_118 {dimension_numbers = #tpu.dot_dimension_numbers<[1], [0], [0], [1], [0, 0, 1, 1], [], []>} : vector<128x32xbf16>, vector<32x64xbf16>, vector<128x64xf32> -> vector<128x64xf32>
    %c1_119 = arith.constant 1 : index
    %c0_120 = arith.constant 0 : index
    %c0_121 = arith.constant 0 : index
    %262 = vector.load %arg12[%c1_119, %c0_120, %c0_121] : memref<2x1x64xf32, #tpu.memory_space<vmem>>, vector<1x1x64xf32>
    %263 = vector.shape_cast %262 : vector<1x1x64xf32> to vector<1x64xf32>
    %264 = vector.broadcast %263 : vector<1x64xf32> to vector<128x64xf32>
    %265 = arith.addf %261, %264 : vector<128x64xf32>
    %cst_122 = arith.constant 5.000000e-01 : f32
    %266 = vector.broadcast %cst_122 : f32 to vector<128x64xf32>
    %267 = arith.mulf %266, %265 : vector<128x64xf32>
    %cst_123 = arith.constant 4.471500e-02 : f32
    %268 = vector.broadcast %cst_123 : f32 to vector<128x64xf32>
    %269 = arith.mulf %268, %265 : vector<128x64xf32>
    %270 = arith.mulf %269, %265 : vector<128x64xf32>
    %271 = arith.mulf %270, %265 : vector<128x64xf32>
    %272 = arith.addf %265, %271 : vector<128x64xf32>
    %cst_124 = arith.constant 0.797884583 : f32
    %273 = vector.broadcast %cst_124 : f32 to vector<128x64xf32>
    %274 = arith.mulf %273, %272 : vector<128x64xf32>
    %275 = math.tanh %274 : vector<128x64xf32>
    %cst_125 = arith.constant 1.000000e+00 : f32
    %276 = vector.broadcast %cst_125 : f32 to vector<128x64xf32>
    %277 = arith.addf %276, %275 : vector<128x64xf32>
    %278 = arith.mulf %267, %277 : vector<128x64xf32>
    %279 = arith.truncf %278 : vector<128x64xf32> to vector<128x64xbf16>
    %c1_126 = arith.constant 1 : index
    %c0_127 = arith.constant 0 : index
    %c0_128 = arith.constant 0 : index
    %280 = vector.load %arg13[%c1_126, %c0_127, %c0_128] : memref<2x64x32xbf16, #tpu.memory_space<vmem>>, vector<1x64x32xbf16>
    %281 = vector.shape_cast %280 : vector<1x64x32xbf16> to vector<64x32xbf16>
    %cst_129 = arith.constant dense<0.000000e+00> : vector<128x32xf32>
    %282 = tpu.matmul %279, %281, %cst_129 {dimension_numbers = #tpu.dot_dimension_numbers<[1], [0], [0], [1], [0, 0, 1, 1], [], []>} : vector<128x64xbf16>, vector<64x32xbf16>, vector<128x32xf32> -> vector<128x32xf32>
    %c1_130 = arith.constant 1 : index
    %c0_131 = arith.constant 0 : index
    %c0_132 = arith.constant 0 : index
    %283 = vector.load %arg14[%c1_130, %c0_131, %c0_132] : memref<2x1x32xf32, #tpu.memory_space<vmem>>, vector<1x1x32xf32>
    %284 = vector.shape_cast %283 : vector<1x1x32xf32> to vector<1x32xf32>
    %285 = vector.broadcast %284 : vector<1x32xf32> to vector<128x32xf32>
    %286 = arith.addf %282, %285 : vector<128x32xf32>
    %287 = arith.addf %286, %257 : vector<128x32xf32>
    %c1_133 = arith.constant 1 : index
    %c0_134 = arith.constant 0 : index
    %c0_135 = arith.constant 0 : index
    %288 = vector.load %arg15[%c1_133, %c0_134, %c0_135] : memref<2x1x32xf32, #tpu.memory_space<vmem>>, vector<1x1x32xf32>
    %289 = vector.shape_cast %288 : vector<1x1x32xf32> to vector<1x32xf32>
    %c1_136 = arith.constant 1 : index
    %c0_137 = arith.constant 0 : index
    %c0_138 = arith.constant 0 : index
    %290 = vector.load %arg16[%c1_136, %c0_137, %c0_138] : memref<2x1x32xf32, #tpu.memory_space<vmem>>, vector<1x1x32xf32>
    %291 = vector.shape_cast %290 : vector<1x1x32xf32> to vector<1x32xf32>
    %cst_139 = arith.constant dense<0.000000e+00> : vector<128xf32>
    %292 = vector.multi_reduction <add>, %287, %cst_139 [1] : vector<128x32xf32> to vector<128xf32>
    %293 = vector.shape_cast %292 : vector<128xf32> to vector<128x1xf32>
    %cst_140 = arith.constant 3.200000e+01 : f32
    %294 = vector.broadcast %cst_140 : f32 to vector<128x1xf32>
    %295 = arith.divf %293, %294 : vector<128x1xf32>
    %296 = vector.broadcast %295 : vector<128x1xf32> to vector<128x32xf32>
    %297 = arith.subf %287, %296 : vector<128x32xf32>
    %298 = arith.mulf %297, %297 : vector<128x32xf32>
    %cst_141 = arith.constant dense<0.000000e+00> : vector<128xf32>
    %299 = vector.multi_reduction <add>, %298, %cst_141 [1] : vector<128x32xf32> to vector<128xf32>
    %300 = vector.shape_cast %299 : vector<128xf32> to vector<128x1xf32>
    %cst_142 = arith.constant 3.200000e+01 : f32
    %301 = vector.broadcast %cst_142 : f32 to vector<128x1xf32>
    %302 = arith.divf %300, %301 : vector<128x1xf32>
    %303 = vector.broadcast %295 : vector<128x1xf32> to vector<128x32xf32>
    %304 = arith.subf %287, %303 : vector<128x32xf32>
    %cst_143 = arith.constant 9.99999996E-13 : f32
    %305 = vector.broadcast %cst_143 : f32 to vector<128x1xf32>
    %306 = arith.addf %302, %305 : vector<128x1xf32>
    %307 = math.rsqrt %306 : vector<128x1xf32>
    %308 = vector.broadcast %307 : vector<128x1xf32> to vector<128x32xf32>
    %309 = arith.mulf %304, %308 : vector<128x32xf32>
    %310 = vector.broadcast %289 : vector<1x32xf32> to vector<128x32xf32>
    %311 = arith.mulf %309, %310 : vector<128x32xf32>
    %312 = vector.broadcast %291 : vector<1x32xf32> to vector<128x32xf32>
    %313 = arith.addf %311, %312 : vector<128x32xf32>
    %314 = arith.truncf %313 : vector<128x32xf32> to vector<128x32xbf16>
    %c0_144 = arith.constant 0 : index
    %c0_145 = arith.constant 0 : index
    %315 = vector.load %arg17[%c0_144, %c0_145] : memref<32x32xbf16, #tpu.memory_space<vmem>>, vector<32x32xbf16>
    %cst_146 = arith.constant dense<0.000000e+00> : vector<128x32xf32>
    %316 = tpu.matmul %314, %315, %cst_146 {dimension_numbers = #tpu.dot_dimension_numbers<[1], [0], [0], [1], [0, 0, 1, 1], [], []>} : vector<128x32xbf16>, vector<32x32xbf16>, vector<128x32xf32> -> vector<128x32xf32>
    %c0_147 = arith.constant 0 : index
    %c0_148 = arith.constant 0 : index
    %317 = vector.load %arg18[%c0_147, %c0_148] : memref<1x32xf32, #tpu.memory_space<vmem>>, vector<1x32xf32>
    %318 = vector.broadcast %317 : vector<1x32xf32> to vector<128x32xf32>
    %319 = arith.addf %316, %318 : vector<128x32xf32>
    %320 = math.tanh %319 : vector<128x32xf32>
    %321 = arith.truncf %320 : vector<128x32xf32> to vector<128x32xbf16>
    %c0_149 = arith.constant 0 : index
    %c0_150 = arith.constant 0 : index
    %322 = vector.load %arg19[%c0_149, %c0_150] : memref<32x64xbf16, #tpu.memory_space<vmem>>, vector<32x64xbf16>
    %cst_151 = arith.constant dense<0.000000e+00> : vector<128x64xf32>
    %323 = tpu.matmul %321, %322, %cst_151 {dimension_numbers = #tpu.dot_dimension_numbers<[1], [0], [0], [1], [0, 0, 1, 1], [], []>} : vector<128x32xbf16>, vector<32x64xbf16>, vector<128x64xf32> -> vector<128x64xf32>
    %c0_152 = arith.constant 0 : index
    %c0_153 = arith.constant 0 : index
    %324 = vector.load %arg20[%c0_152, %c0_153] : memref<1x64xf32, #tpu.memory_space<vmem>>, vector<1x64xf32>
    %325 = vector.broadcast %324 : vector<1x64xf32> to vector<128x64xf32>
    %326 = arith.addf %323, %325 : vector<128x64xf32>
    %327 = tpu.concatenate %313, %320, %326 in 1 : vector<128x32xf32>, vector<128x32xf32>, vector<128x64xf32> -> vector<128x128xf32>
    %c0_154 = arith.constant 0 : index
    %c0_155 = arith.constant 0 : index
    %328 = vector.load %arg21[%c0_154, %c0_155] : memref<128x128xf32, #tpu.memory_space<vmem>>, vector<128x128xf32>
    tpu.vector_store %arg21[%c0_154, %c0_155], %327 {strides = array<i32>} : memref<128x128xf32, #tpu.memory_space<vmem>>, vector<128x128xf32>,
    return
  }
}

</mosaic_0001>

<llo_original>
// kernel: fused_forward.1
$region0: #{fused_forward.1}
  #allocation0 [shape = 'u32[]', space=smem, size = 0x4, offset = 0x4, fixed_abs, tag = 'smem constant byte address 0x4 - core index']
  #allocation1 [shape = 'u32[144,128]{1,0:T(1,128)}', space=vmem, size = 0x12000, scoped, tag = 'internal scratch']
  %s0 = inlined_call_operand.vmem [shape: f32[128,32], index: 0, kind: input, shape index: {}]
  %s1 = inlined_call_operand.vmem [shape: s32[128,1], index: 1, kind: input, shape index: {}]
  %s2 = inlined_call_operand.vmem [shape: s32[1,128], index: 2, kind: input, shape index: {}]
  %s3 = inlined_call_operand.vmem [shape: f32[1,32], index: 3, kind: input, shape index: {}]
  %s4 = inlined_call_operand.vmem [shape: f32[1,32], index: 4, kind: input, shape index: {}]
  %s5 = inlined_call_operand.vmem [shape: bf16[2,32,96], index: 5, kind: input, shape index: {}]
  %s6 = inlined_call_operand.vmem [shape: f32[2,1,96], index: 6, kind: input, shape index: {}]
  %s7 = inlined_call_operand.vmem [shape: bf16[2,32,32], index: 7, kind: input, shape index: {}]
  %s8 = inlined_call_operand.vmem [shape: f32[2,1,32], index: 8, kind: input, shape index: {}]
  %s9 = inlined_call_operand.vmem [shape: f32[2,1,32], index: 9, kind: input, shape index: {}]
  %s10 = inlined_call_operand.vmem [shape: f32[2,1,32], index: 10, kind: input, shape index: {}]
  %s11 = inlined_call_operand.vmem [shape: bf16[2,32,64], index: 11, kind: input, shape index: {}]
  %s12 = inlined_call_operand.vmem [shape: f32[2,1,64], index: 12, kind: input, shape index: {}]
  %s13 = inlined_call_operand.vmem [shape: bf16[2,64,32], index: 13, kind: input, shape index: {}]
  %s14 = inlined_call_operand.vmem [shape: f32[2,1,32], index: 14, kind: input, shape index: {}]
  %s15 = inlined_call_operand.vmem [shape: f32[2,1,32], index: 15, kind: input, shape index: {}]
  %s16 = inlined_call_operand.vmem [shape: f32[2,1,32], index: 16, kind: input, shape index: {}]
  %s17 = inlined_call_operand.vmem [shape: bf16[32,32], index: 17, kind: input, shape index: {}]
  %s18 = inlined_call_operand.vmem [shape: f32[1,32], index: 18, kind: input, shape index: {}]
  %s19 = inlined_call_operand.vmem [shape: bf16[32,64], index: 19, kind: input, shape index: {}]
  %s20 = inlined_call_operand.vmem [shape: f32[1,64], index: 20, kind: input, shape index: {}]
  %s21 = inlined_call_operand.vmem [shape: f32[128,128], index: 21, kind: output, shape index: {}]
  %s22 = sld [smem:[#allocation0]]
  $region94: #{fused_forward.1} parent=0
    _
  %s24 = ssub.s32 1, %s22
  %s25 = scalar_select 0, %s24, %s22
  // Predicated region
  $region2: #{fused_forward.1} parent=0 // pred_check
    _
  $region3: #{fused_forward.1} parent=0 // pred_check_branch
    %27 = sbr.rel (0) target = $region5
  $region4: #{fused_forward.1} parent=0 // pred_region
    _
  $region5: #{fused_forward.1} parent=0 // pred_fallthru
    _
  // Predicated region
  $region6: #{fused_forward.1} parent=0 // pred_check
    _
  $region7: #{fused_forward.1} parent=0 // pred_check_branch
    %29 = sbr.rel (0) target = $region9
  $region8: #{fused_forward.1} parent=0 // pred_region
    _
  $region9: #{fused_forward.1} parent=0 // pred_fallthru
    _
  // Predicated region
  $region10: #{fused_forward.1} parent=0 // pred_check
    _
  $region11: #{fused_forward.1} parent=0 // pred_check_branch
    %31 = sbr.rel (0) target = $region13
  $region12: #{fused_forward.1} parent=0 // pred_region
    _
  $region13: #{fused_forward.1} parent=0 // pred_fallthru
    _
  // Predicated region
  $region14: #{fused_forward.1} parent=0 // pred_check
    _
  $region15: #{fused_forward.1} parent=0 // pred_check_branch
    %33 = sbr.rel (0) target = $region17
  $region16: #{fused_forward.1} parent=0 // pred_region
    _
  $region17: #{fused_forward.1} parent=0 // pred_fallthru
    _
  // Predicated region
  $region18: #{fused_forward.1} parent=0 // pred_check
    _
  $region19: #{fused_forward.1} parent=0 // pred_check_branch
    %35 = sbr.rel (0) target = $region21
  $region20: #{fused_forward.1} parent=0 // pred_region
    _
  $region21: #{fused_forward.1} parent=0 // pred_fallthru
    _
  // Predicated region
  $region22: #{fused_forward.1} parent=0 // pred_check
    _
  $region23: #{fused_forward.1} parent=0 // pred_check_branch
    %37 = sbr.rel (0) target = $region25
  $region24: #{fused_forward.1} parent=0 // pred_region
    _
  $region25: #{fused_forward.1} parent=0 // pred_fallthru
    _
  // Predicated region
  $region26: #{fused_forward.1} parent=0 // pred_check
    _
  $region27: #{fused_forward.1} parent=0 // pred_check_branch
    %39 = sbr.rel (0) target = $region29
  $region28: #{fused_forward.1} parent=0 // pred_region
    _
  $region29: #{fused_forward.1} parent=0 // pred_fallthru
    _
  // Predicated region
  $region30: #{fused_forward.1} parent=0 // pred_check
    _
  $region31: #{fused_forward.1} parent=0 // pred_check_branch
    %41 = sbr.rel (0) target = $region33
  $region32: #{fused_forward.1} parent=0 // pred_region
    _
  $region33: #{fused_forward.1} parent=0 // pred_fallthru
    _
  // Predicated region
  $region34: #{fused_forward.1} parent=0 // pred_check
    _
  $region35: #{fused_forward.1} parent=0 // pred_check_branch
    %43 = sbr.rel (0) target = $region37
  $region36: #{fused_forward.1} parent=0 // pred_region
    _
  $region37: #{fused_forward.1} parent=0 // pred_fallthru
    _
  // Predicated region
  $region38: #{fused_forward.1} parent=0 // pred_check
    _
  $region39: #{fused_forward.1} parent=0 // pred_check_branch
    %45 = sbr.rel (0) target = $region41
  $region40: #{fused_forward.1} parent=0 // pred_region
    _
  $region41: #{fused_forward.1} parent=0 // pred_fallthru
    _
  // Predicated region
  $region42: #{fused_forward.1} parent=0 // pred_check
    _
  $region43: #{fused_forward.1} parent=0 // pred_check_branch
    %47 = sbr.rel (0) target = $region45
  $region44: #{fused_forward.1} parent=0 // pred_region
    _
  $region45: #{fused_forward.1} parent=0 // pred_fallthru
    _
  // Predicated region
  $region46: #{fused_forward.1} parent=0 // pred_check
    _
  $region47: #{fused_forward.1} parent=0 // pred_check_branch
    %49 = sbr.rel (0) target = $region49
  $region48: #{fused_forward.1} parent=0 // pred_region
    _
  $region49: #{fused_forward.1} parent=0 // pred_fallthru
    _
  // Predicated region
  $region50: #{fused_forward.1} parent=0 // pred_check
    _
  $region51: #{fused_forward.1} parent=0 // pred_check_branch
    %51 = sbr.rel (0) target = $region53
  $region52: #{fused_forward.1} parent=0 // pred_region
    _
  $region53: #{fused_forward.1} parent=0 // pred_fallthru
    _
  // Predicated region
  $region54: #{fused_forward.1} parent=0 // pred_check
    _
  $region55: #{fused_forward.1} parent=0 // pred_check_branch
    %53 = sbr.rel (0) target = $region57
  $region56: #{fused_forward.1} parent=0 // pred_region
    _
  $region57: #{fused_forward.1} parent=0 // pred_fallthru
    _
  // Predicated region
  $region58: #{fused_forward.1} parent=0 // pred_check
    _
  $region59: #{fused_forward.1} parent=0 // pred_check_branch
    %55 = sbr.rel (0) target = $region61
  $region60: #{fused_forward.1} parent=0 // pred_region
    _
  $region61: #{fused_forward.1} parent=0 // pred_fallthru
    _
  // Predicated region
  $region62: #{fused_forward.1} parent=0 // pred_check
    _
  $region63: #{fused_forward.1} parent=0 // pred_check_branch
    %57 = sbr.rel (0) target = $region65
  $region64: #{fused_forward.1} parent=0 // pred_region
    _
  $region65: #{fused_forward.1} parent=0 // pred_fallthru
    _
  // Predicated region
  $region66: #{fused_forward.1} parent=0 // pred_check
    _
  $region67: #{fused_forward.1} parent=0 // pred_check_branch
    %59 = sbr.rel (0) target = $region69
  $region68: #{fused_forward.1} parent=0 // pred_region
    _
  $region69: #{fused_forward.1} parent=0 // pred_fallthru
    _
  // Predicated region
  $region70: #{fused_forward.1} parent=0 // pred_check
    _
  $region71: #{fused_forward.1} parent=0 // pred_check_branch
    %61 = sbr.rel (0) target = $region73
  $region72: #{fused_forward.1} parent=0 // pred_region
    _
  $region73: #{fused_forward.1} parent=0 // pred_fallthru
    _
  // Predicated region
  $region74: #{fused_forward.1} parent=0 // pred_check
    _
  $region75: #{fused_forward.1} parent=0 // pred_check_branch
    %63 = sbr.rel (0) target = $region77
  $region76: #{fused_forward.1} parent=0 // pred_region
    _
  $region77: #{fused_forward.1} parent=0 // pred_fallthru
    _
  // Predicated region
  $region78: #{fused_forward.1} parent=0 // pred_check
    _
  $region79: #{fused_forward.1} parent=0 // pred_check_branch
    %65 = sbr.rel (0) target = $region81
  $region80: #{fused_forward.1} parent=0 // pred_region
    _
  $region81: #{fused_forward.1} parent=0 // pred_fallthru
    _
  // Predicated region
  $region82: #{fused_forward.1} parent=0 // pred_check
    _
  $region83: #{fused_forward.1} parent=0 // pred_check_branch
    %67 = sbr.rel (0) target = $region85
  $region84: #{fused_forward.1} parent=0 // pred_region
    _
  $region85: #{fused_forward.1} parent=0 // pred_fallthru
    _
  %v69 = vld [vmem:[%s1] sm:$0xff]
  %v70 = vld [vmem:[%s1 + $0x8] sm:$0xff]
  %v71 = vld [vmem:[%s1 + $0x10] sm:$0xff]
  %v72 = vld [vmem:[%s1 + $0x18] sm:$0xff]
  %v73 = vld [vmem:[%s1 + $0x20] sm:$0xff]
  %v74 = vld [vmem:[%s1 + $0x28] sm:$0xff]
  %v75 = vld [vmem:[%s1 + $0x30] sm:$0xff]
  %v76 = vld [vmem:[%s1 + $0x38] sm:$0xff]
  %v77 = vld [vmem:[%s1 + $0x40] sm:$0xff]
  %v78 = vld [vmem:[%s1 + $0x48] sm:$0xff]
  %v79 = vld [vmem:[%s1 + $0x50] sm:$0xff]
  %v80 = vld [vmem:[%s1 + $0x58] sm:$0xff]
  %v81 = vld [vmem:[%s1 + $0x60] sm:$0xff]
  %v82 = vld [vmem:[%s1 + $0x68] sm:$0xff]
  %v83 = vld [vmem:[%s1 + $0x70] sm:$0xff]
  %v84 = vld [vmem:[%s1 + $0x78] sm:$0xff]
  %v85 = vld [vmem:[%s2] sm:$0x1]
  %86 = vset.pattern.permute.xlu0 0
  %87 = vperm.xlu0 %86, %v69
  %v88 = vpop.permute.xlu0 %87
  %89 = vset.pattern.permute.xlu0 0
  %90 = vperm.xlu0 %89, %v70
  %v91 = vpop.permute.xlu0 %90
  %92 = vset.pattern.permute.xlu0 0
  %93 = vperm.xlu0 %92, %v71
  %v94 = vpop.permute.xlu0 %93
  %95 = vset.pattern.permute.xlu0 0
  %96 = vperm.xlu0 %95, %v72
  %v97 = vpop.permute.xlu0 %96
  %98 = vset.pattern.permute.xlu0 0
  %99 = vperm.xlu0 %98, %v73
  %v100 = vpop.permute.xlu0 %99
  %101 = vset.pattern.permute.xlu0 0
  %102 = vperm.xlu0 %101, %v74
  %v103 = vpop.permute.xlu0 %102
  %104 = vset.pattern.permute.xlu0 0
  %105 = vperm.xlu0 %104, %v75
  %v106 = vpop.permute.xlu0 %105
  %107 = vset.pattern.permute.xlu0 0
  %108 = vperm.xlu0 %107, %v76
  %v109 = vpop.permute.xlu0 %108
  %110 = vset.pattern.permute.xlu0 0
  %111 = vperm.xlu0 %110, %v77
  %v112 = vpop.permute.xlu0 %111
  %113 = vset.pattern.permute.xlu0 0
  %114 = vperm.xlu0 %113, %v78
  %v115 = vpop.permute.xlu0 %114
  %116 = vset.pattern.permute.xlu0 0
  %117 = vperm.xlu0 %116, %v79
  %v118 = vpop.permute.xlu0 %117
  %119 = vset.pattern.permute.xlu0 0
  %120 = vperm.xlu0 %119, %v80
  %v121 = vpop.permute.xlu0 %120
  %122 = vset.pattern.permute.xlu0 0
  %123 = vperm.xlu0 %122, %v81
  %v124 = vpop.permute.xlu0 %123
  %125 = vset.pattern.permute.xlu0 0
  %126 = vperm.xlu0 %125, %v82
  %v127 = vpop.permute.xlu0 %126
  %128 = vset.pattern.permute.xlu0 0
  %129 = vperm.xlu0 %128, %v83
  %v130 = vpop.permute.xlu0 %129
  %131 = vset.pattern.permute.xlu0 0
  %132 = vperm.xlu0 %131, %v84
  %v133 = vpop.permute.xlu0 %132
  %v134 = vlaneseq
  %v135 = vshrl.u32 %v134, 7
  %v136 = vsub.s32 0, %v135
  %v137 = vrot.slane %v85, %v136
  %vm138 = vcmp.eq.s32.totalorder %v88, %v137
  %vm139 = vcmp.eq.s32.totalorder %v91, %v137
  %vm140 = vcmp.eq.s32.totalorder %v94, %v137
  %vm141 = vcmp.eq.s32.totalorder %v97, %v137
  %vm142 = vcmp.eq.s32.totalorder %v100, %v137
  %vm143 = vcmp.eq.s32.totalorder %v103, %v137
  %vm144 = vcmp.eq.s32.totalorder %v106, %v137
  %vm145 = vcmp.eq.s32.totalorder %v109, %v137
  %vm146 = vcmp.eq.s32.totalorder %v112, %v137
  %vm147 = vcmp.eq.s32.totalorder %v115, %v137
  %vm148 = vcmp.eq.s32.totalorder %v118, %v137
  %vm149 = vcmp.eq.s32.totalorder %v121, %v137
  %vm150 = vcmp.eq.s32.totalorder %v124, %v137
  %vm151 = vcmp.eq.s32.totalorder %v127, %v137
  %vm152 = vcmp.eq.s32.totalorder %v130, %v137
  %vm153 = vcmp.eq.s32.totalorder %v133, %v137
  %v154 = vsel %vm138, 0.0, -1e+09
  %v155 = vsel %vm139, 0.0, -1e+09
  %v156 = vsel %vm140, 0.0, -1e+09
  %v157 = vsel %vm141, 0.0, -1e+09
  %v158 = vsel %vm142, 0.0, -1e+09
  %v159 = vsel %vm143, 0.0, -1e+09
  %v160 = vsel %vm144, 0.0, -1e+09
  %v161 = vsel %vm145, 0.0, -1e+09
  %v162 = vsel %vm146, 0.0, -1e+09
  %v163 = vsel %vm147, 0.0, -1e+09
  %v164 = vsel %vm148, 0.0, -1e+09
  %v165 = vsel %vm149, 0.0, -1e+09
  %v166 = vsel %vm150, 0.0, -1e+09
  %v167 = vsel %vm151, 0.0, -1e+09
  %v168 = vsel %vm152, 0.0, -1e+09
  %v169 = vsel %vm153, 0.0, -1e+09
  %v170 = vld [vmem:[%s0] sm:$0xff]
  %v171 = vld [vmem:[%s0 + $0x8] sm:$0xff]
  %v172 = vld [vmem:[%s0 + $0x10] sm:$0xff]
  %v173 = vld [vmem:[%s0 + $0x18] sm:$0xff]
  %v174 = vld [vmem:[%s0 + $0x20] sm:$0xff]
  %v175 = vld [vmem:[%s0 + $0x28] sm:$0xff]
  %v176 = vld [vmem:[%s0 + $0x30] sm:$0xff]
  %v177 = vld [vmem:[%s0 + $0x38] sm:$0xff]
  %v178 = vld [vmem:[%s0 + $0x40] sm:$0xff]
  %v179 = vld [vmem:[%s0 + $0x48] sm:$0xff]
  %v180 = vld [vmem:[%s0 + $0x50] sm:$0xff]
  %v181 = vld [vmem:[%s0 + $0x58] sm:$0xff]
  %v182 = vld [vmem:[%s0 + $0x60] sm:$0xff]
  %v183 = vld [vmem:[%s0 + $0x68] sm:$0xff]
  %v184 = vld [vmem:[%s0 + $0x70] sm:$0xff]
  %v185 = vld [vmem:[%s0 + $0x78] sm:$0xff]
  %v186 = vld [vmem:[%s3] sm:$0x1]
  %v187 = vld [vmem:[%s4] sm:$0x1]
  %vm188 = vcmask 261120
  %v189 = vsel %vm188, %v170, 0.0
  %190 = vadd.xlane.f32.xlu0 %v189
  %v191 = vpop.xlane.xlu0 %190
  %v192 = vsel %vm188, %v171, 0.0
  %193 = vadd.xlane.f32.xlu0 %v192
  %v194 = vpop.xlane.xlu0 %193
  %v195 = vsel %vm188, %v172, 0.0
  %196 = vadd.xlane.f32.xlu0 %v195
  %v197 = vpop.xlane.xlu0 %196
  %v198 = vsel %vm188, %v173, 0.0
  %199 = vadd.xlane.f32.xlu0 %v198
  %v200 = vpop.xlane.xlu0 %199
  %v201 = vsel %vm188, %v174, 0.0
  %202 = vadd.xlane.f32.xlu0 %v201
  %v203 = vpop.xlane.xlu0 %202
  %v204 = vsel %vm188, %v175, 0.0
  %205 = vadd.xlane.f32.xlu0 %v204
  %v206 = vpop.xlane.xlu0 %205
  %v207 = vsel %vm188, %v176, 0.0
  %208 = vadd.xlane.f32.xlu0 %v207
  %v209 = vpop.xlane.xlu0 %208
  %v210 = vsel %vm188, %v177, 0.0
  %211 = vadd.xlane.f32.xlu0 %v210
  %v212 = vpop.xlane.xlu0 %211
  %v213 = vsel %vm188, %v178, 0.0
  %214 = vadd.xlane.f32.xlu0 %v213
  %v215 = vpop.xlane.xlu0 %214
  %v216 = vsel %vm188, %v179, 0.0
  %217 = vadd.xlane.f32.xlu0 %v216
  %v218 = vpop.xlane.xlu0 %217
  %v219 = vsel %vm188, %v180, 0.0
  %220 = vadd.xlane.f32.xlu0 %v219
  %v221 = vpop.xlane.xlu0 %220
  %v222 = vsel %vm188, %v181, 0.0
  %223 = vadd.xlane.f32.xlu0 %v222
  %v224 = vpop.xlane.xlu0 %223
  %v225 = vsel %vm188, %v182, 0.0
  %226 = vadd.xlane.f32.xlu0 %v225
  %v227 = vpop.xlane.xlu0 %226
  %v228 = vsel %vm188, %v183, 0.0
  %229 = vadd.xlane.f32.xlu0 %v228
  %v230 = vpop.xlane.xlu0 %229
  %v231 = vsel %vm188, %v184, 0.0
  %232 = vadd.xlane.f32.xlu0 %v231
  %v233 = vpop.xlane.xlu0 %232
  %v234 = vsel %vm188, %v185, 0.0
  %235 = vadd.xlane.f32.xlu0 %v234
  %v236 = vpop.xlane.xlu0 %235
  %v237 = vrcp.pop 32.0
  %v238 = vmul.f32 %v191, %v237
  %v239 = vmul.f32 %v194, %v237
  %v240 = vmul.f32 %v197, %v237
  %v241 = vmul.f32 %v200, %v237
  %v242 = vmul.f32 %v203, %v237
  %v243 = vmul.f32 %v206, %v237
  %v244 = vmul.f32 %v209, %v237
  %v245 = vmul.f32 %v212, %v237
  %v246 = vmul.f32 %v215, %v237
  %v247 = vmul.f32 %v218, %v237
  %v248 = vmul.f32 %v221, %v237
  %v249 = vmul.f32 %v224, %v237
  %v250 = vmul.f32 %v227, %v237
  %v251 = vmul.f32 %v230, %v237
  %v252 = vmul.f32 %v233, %v237
  %v253 = vmul.f32 %v236, %v237
  %v254 = vsub.f32 %v170, %v238
  %v255 = vsub.f32 %v171, %v239
  %v256 = vsub.f32 %v172, %v240
  %v257 = vsub.f32 %v173, %v241
  %v258 = vsub.f32 %v174, %v242
  %v259 = vsub.f32 %v175, %v243
  %v260 = vsub.f32 %v176, %v244
  %v261 = vsub.f32 %v177, %v245
  %v262 = vsub.f32 %v178, %v246
  %v263 = vsub.f32 %v179, %v247
  %v264 = vsub.f32 %v180, %v248
  %v265 = vsub.f32 %v181, %v249
  %v266 = vsub.f32 %v182, %v250
  %v267 = vsub.f32 %v183, %v251
  %v268 = vsub.f32 %v184, %v252
  %v269 = vsub.f32 %v185, %v253
  %v270 = vmul.f32 %v254, %v254
  %v271 = vmul.f32 %v255, %v255
  %v272 = vmul.f32 %v256, %v256
  %v273 = vmul.f32 %v257, %v257
  %v274 = vmul.f32 %v258, %v258
  %v275 = vmul.f32 %v259, %v259
  %v276 = vmul.f32 %v260, %v260
  %v277 = vmul.f32 %v261, %v261
  %v278 = vmul.f32 %v262, %v262
  %v279 = vmul.f32 %v263, %v263
  %v280 = vmul.f32 %v264, %v264
  %v281 = vmul.f32 %v265, %v265
  %v282 = vmul.f32 %v266, %v266
  %v283 = vmul.f32 %v267, %v267
  %v284 = vmul.f32 %v268, %v268
  %v285 = vmul.f32 %v269, %v269
  %v286 = vsel %vm188, %v270, 0.0
  %287 = vadd.xlane.f32.xlu0 %v286
  %v288 = vpop.xlane.xlu0 %287
  %v289 = vsel %vm188, %v271, 0.0
  %290 = vadd.xlane.f32.xlu0 %v289
  %v291 = vpop.xlane.xlu0 %290
  %v292 = vsel %vm188, %v272, 0.0
  %293 = vadd.xlane.f32.xlu0 %v292
  %v294 = vpop.xlane.xlu0 %293
  %v295 = vsel %vm188, %v273, 0.0
  %296 = vadd.xlane.f32.xlu0 %v295
  %v297 = vpop.xlane.xlu0 %296
  %v298 = vsel %vm188, %v274, 0.0
  %299 = vadd.xlane.f32.xlu0 %v298
  %v300 = vpop.xlane.xlu0 %299
  %v301 = vsel %vm188, %v275, 0.0
  %302 = vadd.xlane.f32.xlu0 %v301
  %v303 = vpop.xlane.xlu0 %302
  %v304 = vsel %vm188, %v276, 0.0
  %305 = vadd.xlane.f32.xlu0 %v304
  %v306 = vpop.xlane.xlu0 %305
  %v307 = vsel %vm188, %v277, 0.0
  %308 = vadd.xlane.f32.xlu0 %v307
  %v309 = vpop.xlane.xlu0 %308
  %v310 = vsel %vm188, %v278, 0.0
  %311 = vadd.xlane.f32.xlu0 %v310
  %v312 = vpop.xlane.xlu0 %311
  %v313 = vsel %vm188, %v279, 0.0
  %314 = vadd.xlane.f32.xlu0 %v313
  %v315 = vpop.xlane.xlu0 %314
  %v316 = vsel %vm188, %v280, 0.0
  %317 = vadd.xlane.f32.xlu0 %v316
  %v318 = vpop.xlane.xlu0 %317
  %v319 = vsel %vm188, %v281, 0.0
  %320 = vadd.xlane.f32.xlu0 %v319
  %v321 = vpop.xlane.xlu0 %320
  %v322 = vsel %vm188, %v282, 0.0
  %323 = vadd.xlane.f32.xlu0 %v322
  %v324 = vpop.xlane.xlu0 %323
  %v325 = vsel %vm188, %v283, 0.0
  %326 = vadd.xlane.f32.xlu0 %v325
  %v327 = vpop.xlane.xlu0 %326
  %v328 = vsel %vm188, %v284, 0.0
  %329 = vadd.xlane.f32.xlu0 %v328
  %v330 = vpop.xlane.xlu0 %329
  %v331 = vsel %vm188, %v285, 0.0
  %332 = vadd.xlane.f32.xlu0 %v331
  %v333 = vpop.xlane.xlu0 %332
  %v334 = vmul.f32 %v288, %v237
  %v335 = vmul.f32 %v291, %v237
  %v336 = vmul.f32 %v294, %v237
  %v337 = vmul.f32 %v297, %v237
  %v338 = vmul.f32 %v300, %v237
  %v339 = vmul.f32 %v303, %v237
  %v340 = vmul.f32 %v306, %v237
  %v341 = vmul.f32 %v309, %v237
  %v342 = vmul.f32 %v312, %v237
  %v343 = vmul.f32 %v315, %v237
  %v344 = vmul.f32 %v318, %v237
  %v345 = vmul.f32 %v321, %v237
  %v346 = vmul.f32 %v324, %v237
  %v347 = vmul.f32 %v327, %v237
  %v348 = vmul.f32 %v330, %v237
  %v349 = vmul.f32 %v333, %v237
  %v350 = vadd.f32 %v334, 1e-12
  %v351 = vadd.f32 %v335, 1e-12
  %v352 = vadd.f32 %v336, 1e-12
  %v353 = vadd.f32 %v337, 1e-12
  %v354 = vadd.f32 %v338, 1e-12
  %v355 = vadd.f32 %v339, 1e-12
  %v356 = vadd.f32 %v340, 1e-12
  %v357 = vadd.f32 %v341, 1e-12
  %v358 = vadd.f32 %v342, 1e-12
  %v359 = vadd.f32 %v343, 1e-12
  %v360 = vadd.f32 %v344, 1e-12
  %v361 = vadd.f32 %v345, 1e-12
  %v362 = vadd.f32 %v346, 1e-12
  %v363 = vadd.f32 %v347, 1e-12
  %v364 = vadd.f32 %v348, 1e-12
  %v365 = vadd.f32 %v349, 1e-12
  %v366 = vrsqrt.pop %v350
  %v367 = vrsqrt.pop %v351
  %v368 = vrsqrt.pop %v352
  %v369 = vrsqrt.pop %v353
  %v370 = vrsqrt.pop %v354
  %v371 = vrsqrt.pop %v355
  %v372 = vrsqrt.pop %v356
  %v373 = vrsqrt.pop %v357
  %v374 = vrsqrt.pop %v358
  %v375 = vrsqrt.pop %v359
  %v376 = vrsqrt.pop %v360
  %v377 = vrsqrt.pop %v361
  %v378 = vrsqrt.pop %v362
  %v379 = vrsqrt.pop %v363
  %v380 = vrsqrt.pop %v364
  %v381 = vrsqrt.pop %v365
  %v382 = vmul.f32 %v254, %v366
  %v383 = vmul.f32 %v255, %v367
  %v384 = vmul.f32 %v256, %v368
  %v385 = vmul.f32 %v257, %v369
  %v386 = vmul.f32 %v258, %v370
  %v387 = vmul.f32 %v259, %v371
  %v388 = vmul.f32 %v260, %v372
  %v389 = vmul.f32 %v261, %v373
  %v390 = vmul.f32 %v262, %v374
  %v391 = vmul.f32 %v263, %v375
  %v392 = vmul.f32 %v264, %v376
  %v393 = vmul.f32 %v265, %v377
  %v394 = vmul.f32 %v266, %v378
  %v395 = vmul.f32 %v267, %v379
  %v396 = vmul.f32 %v268, %v380
  %v397 = vmul.f32 %v269, %v381
  %v399 = vlaneseq
  %v400 = vshrl.u32 %v399, 7
  %v401 = vsub.s32 0, %v400
  %v402 = vrot.slane %v186, %v401
  %v404 = vmul.f32 %v382, %v402
  %v405 = vmul.f32 %v383, %v402
  %v406 = vmul.f32 %v384, %v402
  %v407 = vmul.f32 %v385, %v402
  %v408 = vmul.f32 %v386, %v402
  %v409 = vmul.f32 %v387, %v402
  %v410 = vmul.f32 %v388, %v402
  %v411 = vmul.f32 %v389, %v402
  %v412 = vmul.f32 %v390, %v402
  %v413 = vmul.f32 %v391, %v402
  %v414 = vmul.f32 %v392, %v402
  %v415 = vmul.f32 %v393, %v402
  %v416 = vmul.f32 %v394, %v402
  %v417 = vmul.f32 %v395, %v402
  %v418 = vmul.f32 %v396, %v402
  %v419 = vmul.f32 %v397, %v402
  %v421 = vlaneseq
  %v422 = vshrl.u32 %v421, 7
  %v423 = vsub.s32 0, %v422
  %v424 = vrot.slane %v187, %v423
  %v426 = vadd.f32 %v404, %v424
  %v427 = vadd.f32 %v405, %v424
  %v428 = vadd.f32 %v406, %v424
  %v429 = vadd.f32 %v407, %v424
  %v430 = vadd.f32 %v408, %v424
  %v431 = vadd.f32 %v409, %v424
  %v432 = vadd.f32 %v410, %v424
  %v433 = vadd.f32 %v411, %v424
  %v434 = vadd.f32 %v412, %v424
  %v435 = vadd.f32 %v413, %v424
  %v436 = vadd.f32 %v414, %v424
  %v437 = vadd.f32 %v415, %v424
  %v438 = vadd.f32 %v416, %v424
  %v439 = vadd.f32 %v417, %v424
  %v440 = vadd.f32 %v418, %v424
  %v441 = vadd.f32 %v419, %v424
  %v442 = vpack.c.bf16 %v427, %v426
  %v443 = vpack.c.bf16 %v429, %v428
  %v444 = vpack.c.bf16 %v431, %v430
  %v445 = vpack.c.bf16 %v433, %v432
  %v446 = vpack.c.bf16 %v435, %v434
  %v447 = vpack.c.bf16 %v437, %v436
  %v448 = vpack.c.bf16 %v439, %v438
  %v449 = vpack.c.bf16 %v441, %v440
  %v450 = vld [vmem:[%s5] sm:$0xf]
  %v451 = vld [vmem:[%s5 + $0x4] sm:$0xf]
  %v452 = vld [vmem:[%s5 + $0x8] sm:$0xf]
  %v453 = vld [vmem:[%s5 + $0xc] sm:$0xf]
  %v454 = vld [vmem:[%s6] sm:$0x1]
  %v456 = vlaneseq
  %v457 = vshrl.u32 %v456, 7
  %v458 = vsub.s32 0, %v457
  %v459 = vrot.slane %v454, %v458
  %v465 = vunpack.c.l.b16 %v450
  %v466 = vunpack.c.l.b16 %v451
  %v467 = vunpack.c.l.b16 %v452
  %v468 = vunpack.c.l.b16 %v453
  %v469 = vpack.c.b16 %v466, %v465
  %v470 = vpack.c.b16 %v468, %v467
  %v474 = vsel %vm188, %v442, 0
  %v477 = vsel %vm188, %v443, 0
  %v480 = vsel %vm188, %v444, 0
  %v483 = vsel %vm188, %v445, 0
  %v486 = vsel %vm188, %v446, 0
  %v489 = vsel %vm188, %v447, 0
  %v492 = vsel %vm188, %v448, 0
  %v495 = vsel %vm188, %v449, 0
  %497 = vmatprep.subr.bf16.mxu0 0
  %498 = vmatpush1.bf16.msra.mxu0 %v469
  %499 = vmatprep.subr.bf16.mxu0 0
  %500 = vmatpush1.bf16.msra.mxu0 %v470
  %501 = vmatprep.subr.bf16.mxu0 0
  %502 = vmatpush1.bf16.msra.mxu0 0
  %503 = vmatprep.subr.bf16.mxu0 0
  %504 = vmatpush1.bf16.msra.mxu0 0
  %505 = vmatprep.subr.bf16.mxu0 0
  %506 = vmatpush1.bf16.msra.mxu0 0
  %507 = vmatprep.subr.bf16.mxu0 0
  %508 = vmatpush1.bf16.msra.mxu0 0
  %509 = vmatprep.subr.bf16.mxu0 0
  %510 = vmatpush1.bf16.msra.mxu0 0
  %511 = vmatprep.subr.bf16.mxu0 0
  %512 = vmatpush1.bf16.msra.mxu0 0
  %513 = vmatprep.subr.bf16.mxu0 0
  %514 = vmatpush1.bf16.msra.mxu0 0
  %515 = vmatprep.subr.bf16.mxu0 0
  %516 = vmatpush1.bf16.msra.mxu0 0
  %517 = vmatprep.subr.bf16.mxu0 0
  %518 = vmatpush1.bf16.msra.mxu0 0
  %519 = vmatprep.subr.bf16.mxu0 0
  %520 = vmatpush1.bf16.msra.mxu0 0
  %521 = vmatprep.subr.bf16.mxu0 0
  %522 = vmatpush1.bf16.msra.mxu0 0
  %523 = vmatprep.subr.bf16.mxu0 0
  %524 = vmatpush1.bf16.msra.mxu0 0
  %525 = vmatprep.subr.bf16.mxu0 0
  %526 = vmatpush1.bf16.msra.mxu0 0
  %527 = vmatprep.subr.bf16.mxu0 0
  %528 = vmatpush1.bf16.msra.mxu0 0
  %529 = vmatprep.mubr.bf16.mxu0 0
  %530 = vmatmul.mubr.bf16.gmra.mrb[0].mxu0 %v474
  %v531 = vpop.f32.mrb[0].mxu0
  %v532 = vadd.f32 %v459, %v531
  %v533 = vpop.f32.mrb[0].mxu0
  %v534 = vpop.f32.mrb[0].mxu0
  %v535 = vadd.f32 %v459, %v534
  %v536 = vpop.f32.mrb[0].mxu0
  %537 = vmatprep.mubr.bf16.mxu0 0
  %538 = vmatmul.mubr.bf16.gmra.mrb[0].mxu0 %v477
  %v539 = vpop.f32.mrb[0].mxu0
  %v540 = vadd.f32 %v459, %v539
  %v541 = vpop.f32.mrb[0].mxu0
  %v542 = vpop.f32.mrb[0].mxu0
  %v543 = vadd.f32 %v459, %v542
  %v544 = vpop.f32.mrb[0].mxu0
  %545 = vmatprep.mubr.bf16.mxu0 0
  %546 = vmatmul.mubr.bf16.gmra.mrb[0].mxu0 %v480
  %v547 = vpop.f32.mrb[0].mxu0
  %v548 = vadd.f32 %v459, %v547
  %v549 = vpop.f32.mrb[0].mxu0
  %v550 = vpop.f32.mrb[0].mxu0
  %v551 = vadd.f32 %v459, %v550
  %v552 = vpop.f32.mrb[0].mxu0
  %553 = vmatprep.mubr.bf16.mxu0 0
  %554 = vmatmul.mubr.bf16.gmra.mrb[0].mxu0 %v483
  %v555 = vpop.f32.mrb[0].mxu0
  %v556 = vadd.f32 %v459, %v555
  %v557 = vpop.f32.mrb[0].mxu0
  %v558 = vpop.f32.mrb[0].mxu0
  %v559 = vadd.f32 %v459, %v558
  %v560 = vpop.f32.mrb[0].mxu0
  %561 = vmatprep.mubr.bf16.mxu0 0
  %562 = vmatmul.mubr.bf16.gmra.mrb[0].mxu0 %v486
  %v563 = vpop.f32.mrb[0].mxu0
  %v564 = vadd.f32 %v459, %v563
  %v565 = vpop.f32.mrb[0].mxu0
  %v566 = vpop.f32.mrb[0].mxu0
  %v567 = vadd.f32 %v459, %v566
  %v568 = vpop.f32.mrb[0].mxu0
  %569 = vmatprep.mubr.bf16.mxu0 0
  %570 = vmatmul.mubr.bf16.gmra.mrb[0].mxu0 %v489
  %v571 = vpop.f32.mrb[0].mxu0
  %v572 = vadd.f32 %v459, %v571
  %v573 = vpop.f32.mrb[0].mxu0
  %v574 = vpop.f32.mrb[0].mxu0
  %v575 = vadd.f32 %v459, %v574
  %v576 = vpop.f32.mrb[0].mxu0
  %577 = vmatprep.mubr.bf16.mxu0 0
  %578 = vmatmul.mubr.bf16.gmra.mrb[0].mxu0 %v492
  %v579 = vpop.f32.mrb[0].mxu0
  %v580 = vadd.f32 %v459, %v579
  %v581 = vpop.f32.mrb[0].mxu0
  %v582 = vpop.f32.mrb[0].mxu0
  %v583 = vadd.f32 %v459, %v582
  %v584 = vpop.f32.mrb[0].mxu0
  %585 = vmatprep.mubr.bf16.mxu0 0
  %586 = vmatmul.mubr.bf16.gmra.mrb[0].mxu0 %v495
  %v587 = vpop.f32.mrb[0].mxu0
  %v588 = vadd.f32 %v459, %v587
  %v589 = vpop.f32.mrb[0].mxu0
  %v590 = vpop.f32.mrb[0].mxu0
  %v591 = vadd.f32 %v459, %v590
  %v592 = vpop.f32.mrb[0].mxu0
  %593 = vdwg.mxu0
  %v594 = vpack.c.bf16 %v535, %v532
  %v595 = vpack.c.bf16 %v543, %v540
  %v596 = vpack.c.bf16 %v551, %v548
  %v597 = vpack.c.bf16 %v559, %v556
  %v598 = vpack.c.bf16 %v567, %v564
  %v599 = vpack.c.bf16 %v575, %v572
  %v600 = vpack.c.bf16 %v583, %v580
  %v601 = vpack.c.bf16 %v591, %v588
  %610 = vrot.lane.b32.xlu0 %v594, 96
  %v611 = vpop.permute.xlu0 %610
  %612 = vrot.lane.b32.xlu0 %v595, 96
  %v613 = vpop.permute.xlu0 %612
  %614 = vrot.lane.b32.xlu0 %v596, 96
  %v615 = vpop.permute.xlu0 %614
  %616 = vrot.lane.b32.xlu0 %v597, 96
  %v617 = vpop.permute.xlu0 %616
  %618 = vrot.lane.b32.xlu0 %v598, 96
  %v619 = vpop.permute.xlu0 %618
  %620 = vrot.lane.b32.xlu0 %v599, 96
  %v621 = vpop.permute.xlu0 %620
  %622 = vrot.lane.b32.xlu0 %v600, 96
  %v623 = vpop.permute.xlu0 %622
  %624 = vrot.lane.b32.xlu0 %v601, 96
  %v625 = vpop.permute.xlu0 %624
  %vm626 = vcmask 64512
  %v628 = vsel %vm626, %v594, 0
  %v631 = vsel %vm626, %v595, 0
  %v634 = vsel %vm626, %v596, 0
  %v637 = vsel %vm626, %v597, 0
  %v640 = vsel %vm626, %v598, 0
  %v643 = vsel %vm626, %v599, 0
  %v646 = vsel %vm626, %v600, 0
  %v649 = vsel %vm626, %v601, 0
  %v652 = vsel %vm626, %v611, 0
  %v655 = vsel %vm626, %v613, 0
  %v658 = vsel %vm626, %v615, 0
  %v661 = vsel %vm626, %v617, 0
  %v664 = vsel %vm626, %v619, 0
  %v667 = vsel %vm626, %v621, 0
  %v670 = vsel %vm626, %v623, 0
  %v673 = vsel %vm626, %v625, 0
  %675 = vmatprep.subr.bf16.mxu0 0
  %676 = vmatpush1.bf16.xpose.msra.mxu0 %v652
  %677 = vmatprep.subr.bf16.mxu0 0
  %678 = vmatpush1.bf16.xpose.msra.mxu0 %v655
  %679 = vmatprep.subr.bf16.mxu0 0
  %680 = vmatpush1.bf16.xpose.msra.mxu0 %v658
  %681 = vmatprep.subr.bf16.mxu0 0
  %682 = vmatpush1.bf16.xpose.msra.mxu0 %v661
  %683 = vmatprep.subr.bf16.mxu0 0
  %684 = vmatpush1.bf16.xpose.msra.mxu0 %v664
  %685 = vmatprep.subr.bf16.mxu0 0
  %686 = vmatpush1.bf16.xpose.msra.mxu0 %v667
  %687 = vmatprep.subr.bf16.mxu0 0
  %688 = vmatpush1.bf16.xpose.msra.mxu0 %v670
  %689 = vmatprep.subr.bf16.mxu0 0
  %690 = vmatpush1.bf16.xpose.msra.mxu0 %v673
  %691 = vmatprep.subr.bf16.mxu0 0
  %692 = vmatpush1.bf16.xpose.msra.mxu0 0
  %693 = vmatprep.subr.bf16.mxu0 0
  %694 = vmatpush1.bf16.xpose.msra.mxu0 0
  %695 = vmatprep.subr.bf16.mxu0 0
  %696 = vmatpush1.bf16.xpose.msra.mxu0 0
  %697 = vmatprep.subr.bf16.mxu0 0
  %698 = vmatpush1.bf16.xpose.msra.mxu0 0
  %699 = vmatprep.subr.bf16.mxu0 0
  %700 = vmatpush1.bf16.xpose.msra.mxu0 0
  %701 = vmatprep.subr.bf16.mxu0 0
  %702 = vmatpush1.bf16.xpose.msra.mxu0 0
  %703 = vmatprep.subr.bf16.mxu0 0
  %704 = vmatpush1.bf16.xpose.msra.mxu0 0
  %705 = vmatprep.subr.bf16.mxu0 0
  %706 = vmatpush1.bf16.xpose.msra.mxu0 0
  %707 = vmatprep.mubr.bf16.mxu0 0
  %708 = vmatmul.mubr.bf16.gmra.mrb[0].mxu0 %v628
  %v709 = vpop.f32.mrb[0].mxu0
  %v710 = vadd.f32 0.0, %v709
  %v711 = vpop.f32.mrb[0].mxu0
  %v712 = vpop.f32.mrb[0].mxu0
  %v713 = vadd.f32 0.0, %v712
  %v714 = vpop.f32.mrb[0].mxu0
  %715 = vmatprep.mubr.bf16.mxu0 0
  %716 = vmatmul.mubr.bf16.gmra.mrb[0].mxu0 %v631
  %v717 = vpop.f32.mrb[0].mxu0
  %v718 = vadd.f32 0.0, %v717
  %v719 = vpop.f32.mrb[0].mxu0
  %v720 = vpop.f32.mrb[0].mxu0
  %v721 = vadd.f32 0.0, %v720
  %v722 = vpop.f32.mrb[0].mxu0
  %723 = vmatprep.mubr.bf16.mxu0 0
  %724 = vmatmul.mubr.bf16.gmra.mrb[0].mxu0 %v634
  %v725 = vpop.f32.mrb[0].mxu0
  %v726 = vadd.f32 0.0, %v725
  %v727 = vpop.f32.mrb[0].mxu0
  %v728 = vpop.f32.mrb[0].mxu0
  %v729 = vadd.f32 0.0, %v728
  %v730 = vpop.f32.mrb[0].mxu0
  %731 = vmatprep.mubr.bf16.mxu0 0
  %732 = vmatmul.mubr.bf16.gmra.mrb[0].mxu0 %v637
  %v733 = vpop.f32.mrb[0].mxu0
  %v734 = vadd.f32 0.0, %v733
  %v735 = vpop.f32.mrb[0].mxu0
  %v736 = vpop.f32.mrb[0].mxu0
  %v737 = vadd.f32 0.0, %v736
  %v738 = vpop.f32.mrb[0].mxu0
  %739 = vmatprep.mubr.bf16.mxu0 0
  %740 = vmatmul.mubr.bf16.gmra.mrb[0].mxu0 %v640
  %v741 = vpop.f32.mrb[0].mxu0
  %v742 = vadd.f32 0.0, %v741
  %v743 = vpop.f32.mrb[0].mxu0
  %v744 = vpop.f32.mrb[0].mxu0
  %v745 = vadd.f32 0.0, %v744
  %v746 = vpop.f32.mrb[0].mxu0
  %747 = vmatprep.mubr.bf16.mxu0 0
  %748 = vmatmul.mubr.bf16.gmra.mrb[0].mxu0 %v643
  %v749 = vpop.f32.mrb[0].mxu0
  %v750 = vadd.f32 0.0, %v749
  %v751 = vpop.f32.mrb[0].mxu0
  %v752 = vpop.f32.mrb[0].mxu0
  %v753 = vadd.f32 0.0, %v752
  %v754 = vpop.f32.mrb[0].mxu0
  %755 = vmatprep.mubr.bf16.mxu0 0
  %756 = vmatmul.mubr.bf16.gmra.mrb[0].mxu0 %v646
  %v757 = vpop.f32.mrb[0].mxu0
  %v758 = vadd.f32 0.0, %v757
  %v759 = vpop.f32.mrb[0].mxu0
  %v760 = vpop.f32.mrb[0].mxu0
  %v761 = vadd.f32 0.0, %v760
  %v762 = vpop.f32.mrb[0].mxu0
  %763 = vmatprep.mubr.bf16.mxu0 0
  %764 = vmatmul.mubr.bf16.gmra.mrb[0].mxu0 %v649
  %v765 = vpop.f32.mrb[0].mxu0
  %v766 = vadd.f32 0.0, %v765
  %v767 = vpop.f32.mrb[0].mxu0
  %v768 = vpop.f32.mrb[0].mxu0
  %v769 = vadd.f32 0.0, %v768
  %v770 = vpop.f32.mrb[0].mxu0
  %771 = vdwg.mxu0
  %772 = vrot.lane.b32.xlu0 %v594, 120
  %v773 = vpop.permute.xlu0 %772
  %774 = vrot.lane.b32.xlu0 %v595, 120
  %v775 = vpop.permute.xlu0 %774
  %776 = vrot.lane.b32.xlu0 %v596, 120
  %v777 = vpop.permute.xlu0 %776
  %778 = vrot.lane.b32.xlu0 %v597, 120
  %v779 = vpop.permute.xlu0 %778
  %780 = vrot.lane.b32.xlu0 %v598, 120
  %v781 = vpop.permute.xlu0 %780
  %782 = vrot.lane.b32.xlu0 %v599, 120
  %v783 = vpop.permute.xlu0 %782
  %784 = vrot.lane.b32.xlu0 %v600, 120
  %v785 = vpop.permute.xlu0 %784
  %786 = vrot.lane.b32.xlu0 %v601, 120
  %v787 = vpop.permute.xlu0 %786
  %788 = vrot.lane.b32.xlu0 %v594, 88
  %v789 = vpop.permute.xlu0 %788
  %790 = vrot.lane.b32.xlu0 %v595, 88
  %v791 = vpop.permute.xlu0 %790
  %792 = vrot.lane.b32.xlu0 %v596, 88
  %v793 = vpop.permute.xlu0 %792
  %794 = vrot.lane.b32.xlu0 %v597, 88
  %v795 = vpop.permute.xlu0 %794
  %796 = vrot.lane.b32.xlu0 %v598, 88
  %v797 = vpop.permute.xlu0 %796
  %798 = vrot.lane.b32.xlu0 %v599, 88
  %v799 = vpop.permute.xlu0 %798
  %800 = vrot.lane.b32.xlu0 %v600, 88
  %v801 = vpop.permute.xlu0 %800
  %802 = vrot.lane.b32.xlu0 %v601, 88
  %v803 = vpop.permute.xlu0 %802
  %v805 = vsel %vm626, %v773, 0
  %v808 = vsel %vm626, %v775, 0
  %v811 = vsel %vm626, %v777, 0
  %v814 = vsel %vm626, %v779, 0
  %v817 = vsel %vm626, %v781, 0
  %v820 = vsel %vm626, %v783, 0
  %v823 = vsel %vm626, %v785, 0
  %v826 = vsel %vm626, %v787, 0
  %v829 = vsel %vm626, %v789, 0
  %v832 = vsel %vm626, %v791, 0
  %v835 = vsel %vm626, %v793, 0
  %v838 = vsel %vm626, %v795, 0
  %v841 = vsel %vm626, %v797, 0
  %v844 = vsel %vm626, %v799, 0
  %v847 = vsel %vm626, %v801, 0
  %v850 = vsel %vm626, %v803, 0
  %852 = vmatprep.subr.bf16.mxu0 0
  %853 = vmatpush1.bf16.xpose.msra.mxu0 %v829
  %854 = vmatprep.subr.bf16.mxu0 0
  %855 = vmatpush1.bf16.xpose.msra.mxu0 %v832
  %856 = vmatprep.subr.bf16.mxu0 0
  %857 = vmatpush1.bf16.xpose.msra.mxu0 %v835
  %858 = vmatprep.subr.bf16.mxu0 0
  %859 = vmatpush1.bf16.xpose.msra.mxu0 %v838
  %860 = vmatprep.subr.bf16.mxu0 0
  %861 = vmatpush1.bf16.xpose.msra.mxu0 %v841
  %862 = vmatprep.subr.bf16.mxu0 0
  %863 = vmatpush1.bf16.xpose.msra.mxu0 %v844
  %864 = vmatprep.subr.bf16.mxu0 0
  %865 = vmatpush1.bf16.xpose.msra.mxu0 %v847
  %866 = vmatprep.subr.bf16.mxu0 0
  %867 = vmatpush1.bf16.xpose.msra.mxu0 %v850
  %868 = vmatprep.subr.bf16.mxu0 0
  %869 = vmatpush1.bf16.xpose.msra.mxu0 0
  %870 = vmatprep.subr.bf16.mxu0 0
  %871 = vmatpush1.bf16.xpose.msra.mxu0 0
  %872 = vmatprep.subr.bf16.mxu0 0
  %873 = vmatpush1.bf16.xpose.msra.mxu0 0
  %874 = vmatprep.subr.bf16.mxu0 0
  %875 = vmatpush1.bf16.xpose.msra.mxu0 0
  %876 = vmatprep.subr.bf16.mxu0 0
  %877 = vmatpush1.bf16.xpose.msra.mxu0 0
  %878 = vmatprep.subr.bf16.mxu0 0
  %879 = vmatpush1.bf16.xpose.msra.mxu0 0
  %880 = vmatprep.subr.bf16.mxu0 0
  %881 = vmatpush1.bf16.xpose.msra.mxu0 0
  %882 = vmatprep.subr.bf16.mxu0 0
  %883 = vmatpush1.bf16.xpose.msra.mxu0 0
  %884 = vmatprep.mubr.bf16.mxu0 0
  %885 = vmatmul.mubr.bf16.gmra.mrb[0].mxu0 %v805
  %v886 = vpop.f32.mrb[0].mxu0
  %v887 = vadd.f32 0.0, %v886
  %v888 = vpop.f32.mrb[0].mxu0
  %v889 = vpop.f32.mrb[0].mxu0
  %v890 = vadd.f32 0.0, %v889
  %v891 = vpop.f32.mrb[0].mxu0
  %892 = vmatprep.mubr.bf16.mxu0 0
  %893 = vmatmul.mubr.bf16.gmra.mrb[0].mxu0 %v808
  %v894 = vpop.f32.mrb[0].mxu0
  %v895 = vadd.f32 0.0, %v894
  %v896 = vpop.f32.mrb[0].mxu0
  %v897 = vpop.f32.mrb[0].mxu0
  %v898 = vadd.f32 0.0, %v897
  %v899 = vpop.f32.mrb[0].mxu0
  %900 = vmatprep.mubr.bf16.mxu0 0
  %901 = vmatmul.mubr.bf16.gmra.mrb[0].mxu0 %v811
  %v902 = vpop.f32.mrb[0].mxu0
  %v903 = vadd.f32 0.0, %v902
  %v904 = vpop.f32.mrb[0].mxu0
  %v905 = vpop.f32.mrb[0].mxu0
  %v906 = vadd.f32 0.0, %v905
  %v907 = vpop.f32.mrb[0].mxu0
  %908 = vmatprep.mubr.bf16.mxu0 0
  %909 = vmatmul.mubr.bf16.gmra.mrb[0].mxu0 %v814
  %v910 = vpop.f32.mrb[0].mxu0
  %v911 = vadd.f32 0.0, %v910
  %v912 = vpop.f32.mrb[0].mxu0
  %v913 = vpop.f32.mrb[0].mxu0
  %v914 = vadd.f32 0.0, %v913
  %v915 = vpop.f32.mrb[0].mxu0
  %916 = vmatprep.mubr.bf16.mxu0 0
  %917 = vmatmul.mubr.bf16.gmra.mrb[0].mxu0 %v817
  %v918 = vpop.f32.mrb[0].mxu0
  %v919 = vadd.f32 0.0, %v918
  %v920 = vpop.f32.mrb[0].mxu0
  %v921 = vpop.f32.mrb[0].mxu0
  %v922 = vadd.f32 0.0, %v921
  %v923 = vpop.f32.mrb[0].mxu0
  %924 = vmatprep.mubr.bf16.mxu0 0
  %925 = vmatmul.mubr.bf16.gmra.mrb[0].mxu0 %v820
  %v926 = vpop.f32.mrb[0].mxu0
  %v927 = vadd.f32 0.0, %v926
  %v928 = vpop.f32.mrb[0].mxu0
  %v929 = vpop.f32.mrb[0].mxu0
  %v930 = vadd.f32 0.0, %v929
  %v931 = vpop.f32.mrb[0].mxu0
  %932 = vmatprep.mubr.bf16.mxu0 0
  %933 = vmatmul.mubr.bf16.gmra.mrb[0].mxu0 %v823
  %v934 = vpop.f32.mrb[0].mxu0
  %v935 = vadd.f32 0.0, %v934
  %v936 = vpop.f32.mrb[0].mxu0
  %v937 = vpop.f32.mrb[0].mxu0
  %v938 = vadd.f32 0.0, %v937
  %v939 = vpop.f32.mrb[0].mxu0
  %940 = vmatprep.mubr.bf16.mxu0 0
  %941 = vmatmul.mubr.bf16.gmra.mrb[0].mxu0 %v826
  %v942 = vpop.f32.mrb[0].mxu0
  %v943 = vadd.f32 0.0, %v942
  %v944 = vpop.f32.mrb[0].mxu0
  %v945 = vpop.f32.mrb[0].mxu0
  %v946 = vadd.f32 0.0, %v945
  %v947 = vpop.f32.mrb[0].mxu0
  %948 = vdwg.mxu0
  %949 = vrot.lane.b32.xlu0 %v594, 112
  %v950 = vpop.permute.xlu0 %949
  %951 = vrot.lane.b32.xlu0 %v595, 112
  %v952 = vpop.permute.xlu0 %951
  %953 = vrot.lane.b32.xlu0 %v596, 112
  %v954 = vpop.permute.xlu0 %953
  %955 = vrot.lane.b32.xlu0 %v597, 112
  %v956 = vpop.permute.xlu0 %955
  %957 = vrot.lane.b32.xlu0 %v598, 112
  %v958 = vpop.permute.xlu0 %957
  %959 = vrot.lane.b32.xlu0 %v599, 112
  %v960 = vpop.permute.xlu0 %959
  %961 = vrot.lane.b32.xlu0 %v600, 112
  %v962 = vpop.permute.xlu0 %961
  %963 = vrot.lane.b32.xlu0 %v601, 112
  %v964 = vpop.permute.xlu0 %963
  %965 = vrot.lane.b32.xlu0 %v594, 80
  %v966 = vpop.permute.xlu0 %965
  %967 = vrot.lane.b32.xlu0 %v595, 80
  %v968 = vpop.permute.xlu0 %967
  %969 = vrot.lane.b32.xlu0 %v596, 80
  %v970 = vpop.permute.xlu0 %969
  %971 = vrot.lane.b32.xlu0 %v597, 80
  %v972 = vpop.permute.xlu0 %971
  %973 = vrot.lane.b32.xlu0 %v598, 80
  %v974 = vpop.permute.xlu0 %973
  %975 = vrot.lane.b32.xlu0 %v599, 80
  %v976 = vpop.permute.xlu0 %975
  %977 = vrot.lane.b32.xlu0 %v600, 80
  %v978 = vpop.permute.xlu0 %977
  %979 = vrot.lane.b32.xlu0 %v601, 80
  %v980 = vpop.permute.xlu0 %979
  %v982 = vsel %vm626, %v950, 0
  %v985 = vsel %vm626, %v952, 0
  %v988 = vsel %vm626, %v954, 0
  %v991 = vsel %vm626, %v956, 0
  %v994 = vsel %vm626, %v958, 0
  %v997 = vsel %vm626, %v960, 0
  %v1000 = vsel %vm626, %v962, 0
  %v1003 = vsel %vm626, %v964, 0
  %v1006 = vsel %vm626, %v966, 0
  %v1009 = vsel %vm626, %v968, 0
  %v1012 = vsel %vm626, %v970, 0
  %v1015 = vsel %vm626, %v972, 0
  %v1018 = vsel %vm626, %v974, 0
  %v1021 = vsel %vm626, %v976, 0
  %v1024 = vsel %vm626, %v978, 0
  %v1027 = vsel %vm626, %v980, 0
  %1029 = vmatprep.subr.bf16.mxu0 0
  %1030 = vmatpush1.bf16.xpose.msra.mxu0 %v1006
  %1031 = vmatprep.subr.bf16.mxu0 0
  %1032 = vmatpush1.bf16.xpose.msra.mxu0 %v1009
  %1033 = vmatprep.subr.bf16.mxu0 0
  %1034 = vmatpush1.bf16.xpose.msra.mxu0 %v1012
  %1035 = vmatprep.subr.bf16.mxu0 0
  %1036 = vmatpush1.bf16.xpose.msra.mxu0 %v1015
  %1037 = vmatprep.subr.bf16.mxu0 0
  %1038 = vmatpush1.bf16.xpose.msra.mxu0 %v1018
  %1039 = vmatprep.subr.bf16.mxu0 0
  %1040 = vmatpush1.bf16.xpose.msra.mxu0 %v1021
  %1041 = vmatprep.subr.bf16.mxu0 0
  %1042 = vmatpush1.bf16.xpose.msra.mxu0 %v1024
  %1043 = vmatprep.subr.bf16.mxu0 0
  %1044 = vmatpush1.bf16.xpose.msra.mxu0 %v1027
  %1045 = vmatprep.subr.bf16.mxu0 0
  %1046 = vmatpush1.bf16.xpose.msra.mxu0 0
  %1047 = vmatprep.subr.bf16.mxu0 0
  %1048 = vmatpush1.bf16.xpose.msra.mxu0 0
  %1049 = vmatprep.subr.bf16.mxu0 0
  %1050 = vmatpush1.bf16.xpose.msra.mxu0 0
  %1051 = vmatprep.subr.bf16.mxu0 0
  %1052 = vmatpush1.bf16.xpose.msra.mxu0 0
  %1053 = vmatprep.subr.bf16.mxu0 0
  %1054 = vmatpush1.bf16.xpose.msra.mxu0 0
  %1055 = vmatprep.subr.bf16.mxu0 0
  %1056 = vmatpush1.bf16.xpose.msra.mxu0 0
  %1057 = vmatprep.subr.bf16.mxu0 0
  %1058 = vmatpush1.bf16.xpose.msra.mxu0 0
  %1059 = vmatprep.subr.bf16.mxu0 0
  %1060 = vmatpush1.bf16.xpose.msra.mxu0 0
  %1061 = vmatprep.mubr.bf16.mxu0 0
  %1062 = vmatmul.mubr.bf16.gmra.mrb[0].mxu0 %v982
  %v1063 = vpop.f32.mrb[0].mxu0
  %v1064 = vadd.f32 0.0, %v1063
  %v1065 = vpop.f32.mrb[0].mxu0
  %v1066 = vpop.f32.mrb[0].mxu0
  %v1067 = vadd.f32 0.0, %v1066
  %v1068 = vpop.f32.mrb[0].mxu0
  %1069 = vmatprep.mubr.bf16.mxu0 0
  %1070 = vmatmul.mubr.bf16.gmra.mrb[0].mxu0 %v985
  %v1071 = vpop.f32.mrb[0].mxu0
  %v1072 = vadd.f32 0.0, %v1071
  %v1073 = vpop.f32.mrb[0].mxu0
  %v1074 = vpop.f32.mrb[0].mxu0
  %v1075 = vadd.f32 0.0, %v1074
  %v1076 = vpop.f32.mrb[0].mxu0
  %1077 = vmatprep.mubr.bf16.mxu0 0
  %1078 = vmatmul.mubr.bf16.gmra.mrb[0].mxu0 %v988
  %v1079 = vpop.f32.mrb[0].mxu0
  %v1080 = vadd.f32 0.0, %v1079
  %v1081 = vpop.f32.mrb[0].mxu0
  %v1082 = vpop.f32.mrb[0].mxu0
  %v1083 = vadd.f32 0.0, %v1082
  %v1084 = vpop.f32.mrb[0].mxu0
  %1085 = vmatprep.mubr.bf16.mxu0 0
  %1086 = vmatmul.mubr.bf16.gmra.mrb[0].mxu0 %v991
  %v1087 = vpop.f32.mrb[0].mxu0
  %v1088 = vadd.f32 0.0, %v1087
  %v1089 = vpop.f32.mrb[0].mxu0
  %v1090 = vpop.f32.mrb[0].mxu0
  %v1091 = vadd.f32 0.0, %v1090
  %v1092 = vpop.f32.mrb[0].mxu0
  %1093 = vmatprep.mubr.bf16.mxu0 0
  %1094 = vmatmul.mubr.bf16.gmra.mrb[0].mxu0 %v994
  %v1095 = vpop.f32.mrb[0].mxu0
  %v1096 = vadd.f32 0.0, %v1095
  %v1097 = vpop.f32.mrb[0].mxu0
  %v1098 = vpop.f32.mrb[0].mxu0
  %v1099 = vadd.f32 0.0, %v1098
  %v1100 = vpop.f32.mrb[0].mxu0
  %1101 = vmatprep.mubr.bf16.mxu0 0
  %1102 = vmatmul.mubr.bf16.gmra.mrb[0].mxu0 %v997
  %v1103 = vpop.f32.mrb[0].mxu0
  %v1104 = vadd.f32 0.0, %v1103
  %v1105 = vpop.f32.mrb[0].mxu0
  %v1106 = vpop.f32.mrb[0].mxu0
  %v1107 = vadd.f32 0.0, %v1106
  %v1108 = vpop.f32.mrb[0].mxu0
  %1109 = vmatprep.mubr.bf16.mxu0 0
  %1110 = vmatmul.mubr.bf16.gmra.mrb[0].mxu0 %v1000
  %v1111 = vpop.f32.mrb[0].mxu0
  %v1112 = vadd.f32 0.0, %v1111
  %v1113 = vpop.f32.mrb[0].mxu0
  %v1114 = vpop.f32.mrb[0].mxu0
  %v1115 = vadd.f32 0.0, %v1114
  %v1116 = vpop.f32.mrb[0].mxu0
  %1117 = vmatprep.mubr.bf16.mxu0 0
  %1118 = vmatmul.mubr.bf16.gmra.mrb[0].mxu0 %v1003
  %v1119 = vpop.f32.mrb[0].mxu0
  %v1120 = vadd.f32 0.0, %v1119
  %v1121 = vpop.f32.mrb[0].mxu0
  %v1122 = vpop.f32.mrb[0].mxu0
  %v1123 = vadd.f32 0.0, %v1122
  %v1124 = vpop.f32.mrb[0].mxu0
  %1125 = vdwg.mxu0
  %1126 = vrot.lane.b32.xlu0 %v594, 104
  %v1127 = vpop.permute.xlu0 %1126
  %1128 = vrot.lane.b32.xlu0 %v595, 104
  %v1129 = vpop.permute.xlu0 %1128
  %1130 = vrot.lane.b32.xlu0 %v596, 104
  %v1131 = vpop.permute.xlu0 %1130
  %1132 = vrot.lane.b32.xlu0 %v597, 104
  %v1133 = vpop.permute.xlu0 %1132
  %1134 = vrot.lane.b32.xlu0 %v598, 104
  %v1135 = vpop.permute.xlu0 %1134
  %1136 = vrot.lane.b32.xlu0 %v599, 104
  %v1137 = vpop.permute.xlu0 %1136
  %1138 = vrot.lane.b32.xlu0 %v600, 104
  %v1139 = vpop.permute.xlu0 %1138
  %1140 = vrot.lane.b32.xlu0 %v601, 104
  %v1141 = vpop.permute.xlu0 %1140
  %1142 = vrot.lane.b32.xlu0 %v594, 72
  %v1143 = vpop.permute.xlu0 %1142
  %1144 = vrot.lane.b32.xlu0 %v595, 72
  %v1145 = vpop.permute.xlu0 %1144
  %1146 = vrot.lane.b32.xlu0 %v596, 72
  %v1147 = vpop.permute.xlu0 %1146
  %1148 = vrot.lane.b32.xlu0 %v597, 72
  %v1149 = vpop.permute.xlu0 %1148
  %1150 = vrot.lane.b32.xlu0 %v598, 72
  %v1151 = vpop.permute.xlu0 %1150
  %1152 = vrot.lane.b32.xlu0 %v599, 72
  %v1153 = vpop.permute.xlu0 %1152
  %1154 = vrot.lane.b32.xlu0 %v600, 72
  %v1155 = vpop.permute.xlu0 %1154
  %1156 = vrot.lane.b32.xlu0 %v601, 72
  %v1157 = vpop.permute.xlu0 %1156
  %v1159 = vsel %vm626, %v1127, 0
  %v1162 = vsel %vm626, %v1129, 0
  %v1165 = vsel %vm626, %v1131, 0
  %v1168 = vsel %vm626, %v1133, 0
  %v1171 = vsel %vm626, %v1135, 0
  %v1174 = vsel %vm626, %v1137, 0
  %v1177 = vsel %vm626, %v1139, 0
  %v1180 = vsel %vm626, %v1141, 0
  %v1183 = vsel %vm626, %v1143, 0
  %v1186 = vsel %vm626, %v1145, 0
  %v1189 = vsel %vm626, %v1147, 0
  %v1192 = vsel %vm626, %v1149, 0
  %v1195 = vsel %vm626, %v1151, 0
  %v1198 = vsel %vm626, %v1153, 0
  %v1201 = vsel %vm626, %v1155, 0
  %v1204 = vsel %vm626, %v1157, 0
  %1206 = vmatprep.subr.bf16.mxu0 0
  %1207 = vmatpush1.bf16.xpose.msra.mxu0 %v1183
  %1208 = vmatprep.subr.bf16.mxu0 0
  %1209 = vmatpush1.bf16.xpose.msra.mxu0 %v1186
  %1210 = vmatprep.subr.bf16.mxu0 0
  %1211 = vmatpush1.bf16.xpose.msra.mxu0 %v1189
  %1212 = vmatprep.subr.bf16.mxu0 0
  %1213 = vmatpush1.bf16.xpose.msra.mxu0 %v1192
  %1214 = vmatprep.subr.bf16.mxu0 0
  %1215 = vmatpush1.bf16.xpose.msra.mxu0 %v1195
  %1216 = vmatprep.subr.bf16.mxu0 0
  %1217 = vmatpush1.bf16.xpose.msra.mxu0 %v1198
  %1218 = vmatprep.subr.bf16.mxu0 0
  %1219 = vmatpush1.bf16.xpose.msra.mxu0 %v1201
  %1220 = vmatprep.subr.bf16.mxu0 0
  %1221 = vmatpush1.bf16.xpose.msra.mxu0 %v1204
  %1222 = vmatprep.subr.bf16.mxu0 0
  %1223 = vmatpush1.bf16.xpose.msra.mxu0 0
  %1224 = vmatprep.subr.bf16.mxu0 0
  %1225 = vmatpush1.bf16.xpose.msra.mxu0 0
  %1226 = vmatprep.subr.bf16.mxu0 0
  %1227 = vmatpush1.bf16.xpose.msra.mxu0 0
  %1228 = vmatprep.subr.bf16.mxu0 0
  %1229 = vmatpush1.bf16.xpose.msra.mxu0 0
  %1230 = vmatprep.subr.bf16.mxu0 0
  %1231 = vmatpush1.bf16.xpose.msra.mxu0 0
  %1232 = vmatprep.subr.bf16.mxu0 0
  %1233 = vmatpush1.bf16.xpose.msra.mxu0 0
  %1234 = vmatprep.subr.bf16.mxu0 0
  %1235 = vmatpush1.bf16.xpose.msra.mxu0 0
  %1236 = vmatprep.subr.bf16.mxu0 0
  %1237 = vmatpush1.bf16.xpose.msra.mxu0 0
  %1238 = vmatprep.mubr.bf16.mxu0 0
  %1239 = vmatmul.mubr.bf16.gmra.mrb[0].mxu0 %v1159
  %v1240 = vpop.f32.mrb[0].mxu0
  %v1241 = vadd.f32 0.0, %v1240
  %v1242 = vpop.f32.mrb[0].mxu0
  %v1243 = vpop.f32.mrb[0].mxu0
  %v1244 = vadd.f32 0.0, %v1243
  %v1245 = vpop.f32.mrb[0].mxu0
  %1246 = vmatprep.mubr.bf16.mxu0 0
  %1247 = vmatmul.mubr.bf16.gmra.mrb[0].mxu0 %v1162
  %v1248 = vpop.f32.mrb[0].mxu0
  %v1249 = vadd.f32 0.0, %v1248
  %v1250 = vpop.f32.mrb[0].mxu0
  %v1251 = vpop.f32.mrb[0].mxu0
  %v1252 = vadd.f32 0.0, %v1251
  %v1253 = vpop.f32.mrb[0].mxu0
  %1254 = vmatprep.mubr.bf16.mxu0 0
  %1255 = vmatmul.mubr.bf16.gmra.mrb[0].mxu0 %v1165
  %v1256 = vpop.f32.mrb[0].mxu0
  %v1257 = vadd.f32 0.0, %v1256
  %v1258 = vpop.f32.mrb[0].mxu0
  %v1259 = vpop.f32.mrb[0].mxu0
  %v1260 = vadd.f32 0.0, %v1259
  %v1261 = vpop.f32.mrb[0].mxu0
  %1262 = vmatprep.mubr.bf16.mxu0 0
  %1263 = vmatmul.mubr.bf16.gmra.mrb[0].mxu0 %v1168
  %v1264 = vpop.f32.mrb[0].mxu0
  %v1265 = vadd.f32 0.0, %v1264
  %v1266 = vpop.f32.mrb[0].mxu0
  %v1267 = vpop.f32.mrb[0].mxu0
  %v1268 = vadd.f32 0.0, %v1267
  %v1269 = vpop.f32.mrb[0].mxu0
  %1270 = vmatprep.mubr.bf16.mxu0 0
  %1271 = vmatmul.mubr.bf16.gmra.mrb[0].mxu0 %v1171
  %v1272 = vpop.f32.mrb[0].mxu0
  %v1273 = vadd.f32 0.0, %v1272
  %v1274 = vpop.f32.mrb[0].mxu0
  %v1275 = vpop.f32.mrb[0].mxu0
  %v1276 = vadd.f32 0.0, %v1275
  %v1277 = vpop.f32.mrb[0].mxu0
  %1278 = vmatprep.mubr.bf16.mxu0 0
  %1279 = vmatmul.mubr.bf16.gmra.mrb[0].mxu0 %v1174
  %v1280 = vpop.f32.mrb[0].mxu0
  %v1281 = vadd.f32 0.0, %v1280
  %v1282 = vpop.f32.mrb[0].mxu0
  %v1283 = vpop.f32.mrb[0].mxu0
  %v1284 = vadd.f32 0.0, %v1283
  %v1285 = vpop.f32.mrb[0].mxu0
  %1286 = vmatprep.mubr.bf16.mxu0 0
  %1287 = vmatmul.mubr.bf16.gmra.mrb[0].mxu0 %v1177
  %v1288 = vpop.f32.mrb[0].mxu0
  %v1289 = vadd.f32 0.0, %v1288
  %v1290 = vpop.f32.mrb[0].mxu0
  %v1291 = vpop.f32.mrb[0].mxu0
  %v1292 = vadd.f32 0.0, %v1291
  %v1293 = vpop.f32.mrb[0].mxu0
  %1294 = vmatprep.mubr.bf16.mxu0 0
  %1295 = vmatmul.mubr.bf16.gmra.mrb[0].mxu0 %v1180
  %v1296 = vpop.f32.mrb[0].mxu0
  %v1297 = vadd.f32 0.0, %v1296
  %v1298 = vpop.f32.mrb[0].mxu0
  %v1299 = vpop.f32.mrb[0].mxu0
  %v1300 = vadd.f32 0.0, %v1299
  %v1301 = vpop.f32.mrb[0].mxu0
  %1302 = vdwg.mxu0
  %v1303 = vmul.f32 %v710, 0.35355338
  %v1304 = vmul.f32 %v713, 0.35355338
  %v1305 = vmul.f32 %v718, 0.35355338
  %v1306 = vmul.f32 %v721, 0.35355338
  %v1307 = vmul.f32 %v726, 0.35355338
  %v1308 = vmul.f32 %v729, 0.35355338
  %v1309 = vmul.f32 %v734, 0.35355338
  %v1310 = vmul.f32 %v737, 0.35355338
  %v1311 = vmul.f32 %v742, 0.35355338
  %v1312 = vmul.f32 %v745, 0.35355338
  %v1313 = vmul.f32 %v750, 0.35355338
  %v1314 = vmul.f32 %v753, 0.35355338
  %v1315 = vmul.f32 %v758, 0.35355338
  %v1316 = vmul.f32 %v761, 0.35355338
  %v1317 = vmul.f32 %v766, 0.35355338
  %v1318 = vmul.f32 %v769, 0.35355338
  %v1319 = vmul.f32 %v887, 0.35355338
  %v1320 = vmul.f32 %v890, 0.35355338
  %v1321 = vmul.f32 %v895, 0.35355338
  %v1322 = vmul.f32 %v898, 0.35355338
  %v1323 = vmul.f32 %v903, 0.35355338
  %v1324 = vmul.f32 %v906, 0.35355338
  %v1325 = vmul.f32 %v911, 0.35355338
  %v1326 = vmul.f32 %v914, 0.35355338
  %v1327 = vmul.f32 %v919, 0.35355338
  %v1328 = vmul.f32 %v922, 0.35355338
  %v1329 = vmul.f32 %v927, 0.35355338
  %v1330 = vmul.f32 %v930, 0.35355338
  %v1331 = vmul.f32 %v935, 0.35355338
  %v1332 = vmul.f32 %v938, 0.35355338
  %v1333 = vmul.f32 %v943, 0.35355338
  %v1334 = vmul.f32 %v946, 0.35355338
  %v1335 = vmul.f32 %v1064, 0.35355338
  %v1336 = vmul.f32 %v1067, 0.35355338
  %v1337 = vmul.f32 %v1072, 0.35355338
  %v1338 = vmul.f32 %v1075, 0.35355338
  %v1339 = vmul.f32 %v1080, 0.35355338
  %v1340 = vmul.f32 %v1083, 0.35355338
  %v1341 = vmul.f32 %v1088, 0.35355338
  %v1342 = vmul.f32 %v1091, 0.35355338
  %v1343 = vmul.f32 %v1096, 0.35355338
  %v1344 = vmul.f32 %v1099, 0.35355338
  %v1345 = vmul.f32 %v1104, 0.35355338
  %v1346 = vmul.f32 %v1107, 0.35355338
  %v1347 = vmul.f32 %v1112, 0.35355338
  %v1348 = vmul.f32 %v1115, 0.35355338
  %v1349 = vmul.f32 %v1120, 0.35355338
  %v1350 = vmul.f32 %v1123, 0.35355338
  %v1351 = vmul.f32 %v1241, 0.35355338
  %v1352 = vmul.f32 %v1244, 0.35355338
  %v1353 = vmul.f32 %v1249, 0.35355338
  %v1354 = vmul.f32 %v1252, 0.35355338
  %v1355 = vmul.f32 %v1257, 0.35355338
  %v1356 = vmul.f32 %v1260, 0.35355338
  %v1357 = vmul.f32 %v1265, 0.35355338
  %v1358 = vmul.f32 %v1268, 0.35355338
  %v1359 = vmul.f32 %v1273, 0.35355338
  %v1360 = vmul.f32 %v1276, 0.35355338
  %v1361 = vmul.f32 %v1281, 0.35355338
  %v1362 = vmul.f32 %v1284, 0.35355338
  %v1363 = vmul.f32 %v1289, 0.35355338
  %v1364 = vmul.f32 %v1292, 0.35355338
  %v1365 = vmul.f32 %v1297, 0.35355338
  %v1366 = vmul.f32 %v1300, 0.35355338
  %v1367 = vadd.f32 %v1303, %v154
  %v1368 = vadd.f32 %v1304, %v155
  %v1369 = vadd.f32 %v1305, %v156
  %v1370 = vadd.f32 %v1306, %v157
  %v1371 = vadd.f32 %v1307, %v158
  %v1372 = vadd.f32 %v1308, %v159
  %v1373 = vadd.f32 %v1309, %v160
  %v1374 = vadd.f32 %v1310, %v161
  %v1375 = vadd.f32 %v1311, %v162
  %v1376 = vadd.f32 %v1312, %v163
  %v1377 = vadd.f32 %v1313, %v164
  %v1378 = vadd.f32 %v1314, %v165
  %v1379 = vadd.f32 %v1315, %v166
  %v1380 = vadd.f32 %v1316, %v167
  %v1381 = vadd.f32 %v1317, %v168
  %v1382 = vadd.f32 %v1318, %v169
  %v1383 = vadd.f32 %v1319, %v154
  %v1384 = vadd.f32 %v1320, %v155
  %v1385 = vadd.f32 %v1321, %v156
  %v1386 = vadd.f32 %v1322, %v157
  %v1387 = vadd.f32 %v1323, %v158
  %v1388 = vadd.f32 %v1324, %v159
  %v1389 = vadd.f32 %v1325, %v160
  %v1390 = vadd.f32 %v1326, %v161
  %v1391 = vadd.f32 %v1327, %v162
  %v1392 = vadd.f32 %v1328, %v163
  %v1393 = vadd.f32 %v1329, %v164
  %v1394 = vadd.f32 %v1330, %v165
  %v1395 = vadd.f32 %v1331, %v166
  %v1396 = vadd.f32 %v1332, %v167
  %v1397 = vadd.f32 %v1333, %v168
  %v1398 = vadd.f32 %v1334, %v169
  %v1399 = vadd.f32 %v1335, %v154
  %v1400 = vadd.f32 %v1336, %v155
  %v1401 = vadd.f32 %v1337, %v156
  %v1402 = vadd.f32 %v1338, %v157
  %v1403 = vadd.f32 %v1339, %v158
  %v1404 = vadd.f32 %v1340, %v159
  %v1405 = vadd.f32 %v1341, %v160
  %v1406 = vadd.f32 %v1342, %v161
  %v1407 = vadd.f32 %v1343, %v162
  %v1408 = vadd.f32 %v1344, %v163
  %v1409 = vadd.f32 %v1345, %v164
  %v1410 = vadd.f32 %v1346, %v165
  %v1411 = vadd.f32 %v1347, %v166
  %v1412 = vadd.f32 %v1348, %v167
  %v1413 = vadd.f32 %v1349, %v168
  %v1414 = vadd.f32 %v1350, %v169
  %v1415 = vadd.f32 %v1351, %v154
  %v1416 = vadd.f32 %v1352, %v155
  %v1417 = vadd.f32 %v1353, %v156
  %v1418 = vadd.f32 %v1354, %v157
  %v1419 = vadd.f32 %v1355, %v158
  %v1420 = vadd.f32 %v1356, %v159
  %v1421 = vadd.f32 %v1357, %v160
  %v1422 = vadd.f32 %v1358, %v161
  %v1423 = vadd.f32 %v1359, %v162
  %v1424 = vadd.f32 %v1360, %v163
  %v1425 = vadd.f32 %v1361, %v164
  %v1426 = vadd.f32 %v1362, %v165
  %v1427 = vadd.f32 %v1363, %v166
  %v1428 = vadd.f32 %v1364, %v167
  %v1429 = vadd.f32 %v1365, %v168
  %v1430 = vadd.f32 %v1366, %v169
  %1431 = vmax.xlane.f32.xlu0 %v1367
  %v1432 = vpop.xlane.xlu0 %1431
  %1433 = vmax.xlane.f32.xlu0 %v1368
  %v1434 = vpop.xlane.xlu0 %1433
  %1435 = vmax.xlane.f32.xlu0 %v1369
  %v1436 = vpop.xlane.xlu0 %1435
  %1437 = vmax.xlane.f32.xlu0 %v1370
  %v1438 = vpop.xlane.xlu0 %1437
  %1439 = vmax.xlane.f32.xlu0 %v1371
  %v1440 = vpop.xlane.xlu0 %1439
  %1441 = vmax.xlane.f32.xlu0 %v1372
  %v1442 = vpop.xlane.xlu0 %1441
  %1443 = vmax.xlane.f32.xlu0 %v1373
  %v1444 = vpop.xlane.xlu0 %1443
  %1445 = vmax.xlane.f32.xlu0 %v1374
  %v1446 = vpop.xlane.xlu0 %1445
  %1447 = vmax.xlane.f32.xlu0 %v1375
  %v1448 = vpop.xlane.xlu0 %1447
  %1449 = vmax.xlane.f32.xlu0 %v1376
  %v1450 = vpop.xlane.xlu0 %1449
  %1451 = vmax.xlane.f32.xlu0 %v1377
  %v1452 = vpop.xlane.xlu0 %1451
  %1453 = vmax.xlane.f32.xlu0 %v1378
  %v1454 = vpop.xlane.xlu0 %1453
  %1455 = vmax.xlane.f32.xlu0 %v1379
  %v1456 = vpop.xlane.xlu0 %1455
  %1457 = vmax.xlane.f32.xlu0 %v1380
  %v1458 = vpop.xlane.xlu0 %1457
  %1459 = vmax.xlane.f32.xlu0 %v1381
  %v1460 = vpop.xlane.xlu0 %1459
  %1461 = vmax.xlane.f32.xlu0 %v1382
  %v1462 = vpop.xlane.xlu0 %1461
  %1463 = vmax.xlane.f32.xlu0 %v1383
  %v1464 = vpop.xlane.xlu0 %1463
  %1465 = vmax.xlane.f32.xlu0 %v1384
  %v1466 = vpop.xlane.xlu0 %1465
  %1467 = vmax.xlane.f32.xlu0 %v1385
  %v1468 = vpop.xlane.xlu0 %1467
  %1469 = vmax.xlane.f32.xlu0 %v1386
  %v1470 = vpop.xlane.xlu0 %1469
  %1471 = vmax.xlane.f32.xlu0 %v1387
  %v1472 = vpop.xlane.xlu0 %1471
  %1473 = vmax.xlane.f32.xlu0 %v1388
  %v1474 = vpop.xlane.xlu0 %1473
  %1475 = vmax.xlane.f32.xlu0 %v1389
  %v1476 = vpop.xlane.xlu0 %1475
  %1477 = vmax.xlane.f32.xlu0 %v1390
  %v1478 = vpop.xlane.xlu0 %1477
  %1479 = vmax.xlane.f32.xlu0 %v1391
  %v1480 = vpop.xlane.xlu0 %1479
  %1481 = vmax.xlane.f32.xlu0 %v1392
  %v1482 = vpop.xlane.xlu0 %1481
  %1483 = vmax.xlane.f32.xlu0 %v1393
  %v1484 = vpop.xlane.xlu0 %1483
  %1485 = vmax.xlane.f32.xlu0 %v1394
  %v1486 = vpop.xlane.xlu0 %1485
  %1487 = vmax.xlane.f32.xlu0 %v1395
  %v1488 = vpop.xlane.xlu0 %1487
  %1489 = vmax.xlane.f32.xlu0 %v1396
  %v1490 = vpop.xlane.xlu0 %1489
  %1491 = vmax.xlane.f32.xlu0 %v1397
  %v1492 = vpop.xlane.xlu0 %1491
  %1493 = vmax.xlane.f32.xlu0 %v1398
  %v1494 = vpop.xlane.xlu0 %1493
  %1495 = vmax.xlane.f32.xlu0 %v1399
  %v1496 = vpop.xlane.xlu0 %1495
  %1497 = vmax.xlane.f32.xlu0 %v1400
  %v1498 = vpop.xlane.xlu0 %1497
  %1499 = vmax.xlane.f32.xlu0 %v1401
  %v1500 = vpop.xlane.xlu0 %1499
  %1501 = vmax.xlane.f32.xlu0 %v1402
  %v1502 = vpop.xlane.xlu0 %1501
  %1503 = vmax.xlane.f32.xlu0 %v1403
  %v1504 = vpop.xlane.xlu0 %1503
  %1505 = vmax.xlane.f32.xlu0 %v1404
  %v1506 = vpop.xlane.xlu0 %1505
  %1507 = vmax.xlane.f32.xlu0 %v1405
  %v1508 = vpop.xlane.xlu0 %1507
  %1509 = vmax.xlane.f32.xlu0 %v1406
  %v1510 = vpop.xlane.xlu0 %1509
  %1511 = vmax.xlane.f32.xlu0 %v1407
  %v1512 = vpop.xlane.xlu0 %1511
  %1513 = vmax.xlane.f32.xlu0 %v1408
  %v1514 = vpop.xlane.xlu0 %1513
  %1515 = vmax.xlane.f32.xlu0 %v1409
  %v1516 = vpop.xlane.xlu0 %1515
  %1517 = vmax.xlane.f32.xlu0 %v1410
  %v1518 = vpop.xlane.xlu0 %1517
  %1519 = vmax.xlane.f32.xlu0 %v1411
  %v1520 = vpop.xlane.xlu0 %1519
  %1521 = vmax.xlane.f32.xlu0 %v1412
  %v1522 = vpop.xlane.xlu0 %1521
  %1523 = vmax.xlane.f32.xlu0 %v1413
  %v1524 = vpop.xlane.xlu0 %1523
  %1525 = vmax.xlane.f32.xlu0 %v1414
  %v1526 = vpop.xlane.xlu0 %1525
  %1527 = vmax.xlane.f32.xlu0 %v1415
  %v1528 = vpop.xlane.xlu0 %1527
  %1529 = vmax.xlane.f32.xlu0 %v1416
  %v1530 = vpop.xlane.xlu0 %1529
  %1531 = vmax.xlane.f32.xlu0 %v1417
  %v1532 = vpop.xlane.xlu0 %1531
  %1533 = vmax.xlane.f32.xlu0 %v1418
  %v1534 = vpop.xlane.xlu0 %1533
  %1535 = vmax.xlane.f32.xlu0 %v1419
  %v1536 = vpop.xlane.xlu0 %1535
  %1537 = vmax.xlane.f32.xlu0 %v1420
  %v1538 = vpop.xlane.xlu0 %1537
  %1539 = vmax.xlane.f32.xlu0 %v1421
  %v1540 = vpop.xlane.xlu0 %1539
  %1541 = vmax.xlane.f32.xlu0 %v1422
  %v1542 = vpop.xlane.xlu0 %1541
  %1543 = vmax.xlane.f32.xlu0 %v1423
  %v1544 = vpop.xlane.xlu0 %1543
  %1545 = vmax.xlane.f32.xlu0 %v1424
  %v1546 = vpop.xlane.xlu0 %1545
  %1547 = vmax.xlane.f32.xlu0 %v1425
  %v1548 = vpop.xlane.xlu0 %1547
  %1549 = vmax.xlane.f32.xlu0 %v1426
  %v1550 = vpop.xlane.xlu0 %1549
  %1551 = vmax.xlane.f32.xlu0 %v1427
  %v1552 = vpop.xlane.xlu0 %1551
  %1553 = vmax.xlane.f32.xlu0 %v1428
  %v1554 = vpop.xlane.xlu0 %1553
  %1555 = vmax.xlane.f32.xlu0 %v1429
  %v1556 = vpop.xlane.xlu0 %1555
  %1557 = vmax.xlane.f32.xlu0 %v1430
  %v1558 = vpop.xlane.xlu0 %1557
  %v1559 = vsub.f32 %v1367, %v1432
  %v1560 = vsub.f32 %v1368, %v1434
  %v1561 = vsub.f32 %v1369, %v1436
  %v1562 = vsub.f32 %v1370, %v1438
  %v1563 = vsub.f32 %v1371, %v1440
  %v1564 = vsub.f32 %v1372, %v1442
  %v1565 = vsub.f32 %v1373, %v1444
  %v1566 = vsub.f32 %v1374, %v1446
  %v1567 = vsub.f32 %v1375, %v1448
  %v1568 = vsub.f32 %v1376, %v1450
  %v1569 = vsub.f32 %v1377, %v1452
  %v1570 = vsub.f32 %v1378, %v1454
  %v1571 = vsub.f32 %v1379, %v1456
  %v1572 = vsub.f32 %v1380, %v1458
  %v1573 = vsub.f32 %v1381, %v1460
  %v1574 = vsub.f32 %v1382, %v1462
  %v1575 = vsub.f32 %v1383, %v1464
  %v1576 = vsub.f32 %v1384, %v1466
  %v1577 = vsub.f32 %v1385, %v1468
  %v1578 = vsub.f32 %v1386, %v1470
  %v1579 = vsub.f32 %v1387, %v1472
  %v1580 = vsub.f32 %v1388, %v1474
  %v1581 = vsub.f32 %v1389, %v1476
  %v1582 = vsub.f32 %v1390, %v1478
  %v1583 = vsub.f32 %v1391, %v1480
  %v1584 = vsub.f32 %v1392, %v1482
  %v1585 = vsub.f32 %v1393, %v1484
  %v1586 = vsub.f32 %v1394, %v1486
  %v1587 = vsub.f32 %v1395, %v1488
  %v1588 = vsub.f32 %v1396, %v1490
  %v1589 = vsub.f32 %v1397, %v1492
  %v1590 = vsub.f32 %v1398, %v1494
  %v1591 = vsub.f32 %v1399, %v1496
  %v1592 = vsub.f32 %v1400, %v1498
  %v1593 = vsub.f32 %v1401, %v1500
  %v1594 = vsub.f32 %v1402, %v1502
  %v1595 = vsub.f32 %v1403, %v1504
  %v1596 = vsub.f32 %v1404, %v1506
  %v1597 = vsub.f32 %v1405, %v1508
  %v1598 = vsub.f32 %v1406, %v1510
  %v1599 = vsub.f32 %v1407, %v1512
  %v1600 = vsub.f32 %v1408, %v1514
  %v1601 = vsub.f32 %v1409, %v1516
  %v1602 = vsub.f32 %v1410, %v1518
  %v1603 = vsub.f32 %v1411, %v1520
  %v1604 = vsub.f32 %v1412, %v1522
  %v1605 = vsub.f32 %v1413, %v1524
  %v1606 = vsub.f32 %v1414, %v1526
  %v1607 = vsub.f32 %v1415, %v1528
  %v1608 = vsub.f32 %v1416, %v1530
  %v1609 = vsub.f32 %v1417, %v1532
  %v1610 = vsub.f32 %v1418, %v1534
  %v1611 = vsub.f32 %v1419, %v1536
  %v1612 = vsub.f32 %v1420, %v1538
  %v1613 = vsub.f32 %v1421, %v1540
  %v1614 = vsub.f32 %v1422, %v1542
  %v1615 = vsub.f32 %v1423, %v1544
  %v1616 = vsub.f32 %v1424, %v1546
  %v1617 = vsub.f32 %v1425, %v1548
  %v1618 = vsub.f32 %v1426, %v1550
  %v1619 = vsub.f32 %v1427, %v1552
  %v1620 = vsub.f32 %v1428, %v1554
  %v1621 = vsub.f32 %v1429, %v1556
  %v1622 = vsub.f32 %v1430, %v1558
  %v1623 = vmul.f32 %v1559, 1.442695
  %v1624 = vpow.pop %v1623
  %v1625 = vmul.f32 %v1560, 1.442695
  %v1626 = vpow.pop %v1625
  %v1627 = vmul.f32 %v1561, 1.442695
  %v1628 = vpow.pop %v1627
  %v1629 = vmul.f32 %v1562, 1.442695
  %v1630 = vpow.pop %v1629
  %v1631 = vmul.f32 %v1563, 1.442695
  %v1632 = vpow.pop %v1631
  %v1633 = vmul.f32 %v1564, 1.442695
  %v1634 = vpow.pop %v1633
  %v1635 = vmul.f32 %v1565, 1.442695
  %v1636 = vpow.pop %v1635
  %v1637 = vmul.f32 %v1566, 1.442695
  %v1638 = vpow.pop %v1637
  %v1639 = vmul.f32 %v1567, 1.442695
  %v1640 = vpow.pop %v1639
  %v1641 = vmul.f32 %v1568, 1.442695
  %v1642 = vpow.pop %v1641
  %v1643 = vmul.f32 %v1569, 1.442695
  %v1644 = vpow.pop %v1643
  %v1645 = vmul.f32 %v1570, 1.442695
  %v1646 = vpow.pop %v1645
  %v1647 = vmul.f32 %v1571, 1.442695
  %v1648 = vpow.pop %v1647
  %v1649 = vmul.f32 %v1572, 1.442695
  %v1650 = vpow.pop %v1649
  %v1651 = vmul.f32 %v1573, 1.442695
  %v1652 = vpow.pop %v1651
  %v1653 = vmul.f32 %v1574, 1.442695
  %v1654 = vpow.pop %v1653
  %v1655 = vmul.f32 %v1575, 1.442695
  %v1656 = vpow.pop %v1655
  %v1657 = vmul.f32 %v1576, 1.442695
  %v1658 = vpow.pop %v1657
  %v1659 = vmul.f32 %v1577, 1.442695
  %v1660 = vpow.pop %v1659
  %v1661 = vmul.f32 %v1578, 1.442695
  %v1662 = vpow.pop %v1661
  %v1663 = vmul.f32 %v1579, 1.442695
  %v1664 = vpow.pop %v1663
  %v1665 = vmul.f32 %v1580, 1.442695
  %v1666 = vpow.pop %v1665
  %v1667 = vmul.f32 %v1581, 1.442695
  %v1668 = vpow.pop %v1667
  %v1669 = vmul.f32 %v1582, 1.442695
  %v1670 = vpow.pop %v1669
  %v1671 = vmul.f32 %v1583, 1.442695
  %v1672 = vpow.pop %v1671
  %v1673 = vmul.f32 %v1584, 1.442695
  %v1674 = vpow.pop %v1673
  %v1675 = vmul.f32 %v1585, 1.442695
  %v1676 = vpow.pop %v1675
  %v1677 = vmul.f32 %v1586, 1.442695
  %v1678 = vpow.pop %v1677
  %v1679 = vmul.f32 %v1587, 1.442695
  %v1680 = vpow.pop %v1679
  %v1681 = vmul.f32 %v1588, 1.442695
  %v1682 = vpow.pop %v1681
  %v1683 = vmul.f32 %v1589, 1.442695
  %v1684 = vpow.pop %v1683
  %v1685 = vmul.f32 %v1590, 1.442695
  %v1686 = vpow.pop %v1685
  %v1687 = vmul.f32 %v1591, 1.442695
  %v1688 = vpow.pop %v1687
  %v1689 = vmul.f32 %v1592, 1.442695
  %v1690 = vpow.pop %v1689
  %v1691 = vmul.f32 %v1593, 1.442695
  %v1692 = vpow.pop %v1691
  %v1693 = vmul.f32 %v1594, 1.442695
  %v1694 = vpow.pop %v1693
  %v1695 = vmul.f32 %v1595, 1.442695
  %v1696 = vpow.pop %v1695
  %v1697 = vmul.f32 %v1596, 1.442695
  %v1698 = vpow.pop %v1697
  %v1699 = vmul.f32 %v1597, 1.442695
  %v1700 = vpow.pop %v1699
  %v1701 = vmul.f32 %v1598, 1.442695
  %v1702 = vpow.pop %v1701
  %v1703 = vmul.f32 %v1599, 1.442695
  %v1704 = vpow.pop %v1703
  %v1705 = vmul.f32 %v1600, 1.442695
  %v1706 = vpow.pop %v1705
  %v1707 = vmul.f32 %v1601, 1.442695
  %v1708 = vpow.pop %v1707
  %v1709 = vmul.f32 %v1602, 1.442695
  %v1710 = vpow.pop %v1709
  %v1711 = vmul.f32 %v1603, 1.442695
  %v1712 = vpow.pop %v1711
  %v1713 = vmul.f32 %v1604, 1.442695
  %v1714 = vpow.pop %v1713
  %v1715 = vmul.f32 %v1605, 1.442695
  %v1716 = vpow.pop %v1715
  %v1717 = vmul.f32 %v1606, 1.442695
  %v1718 = vpow.pop %v1717
  %v1719 = vmul.f32 %v1607, 1.442695
  %v1720 = vpow.pop %v1719
  %v1721 = vmul.f32 %v1608, 1.442695
  %v1722 = vpow.pop %v1721
  %v1723 = vmul.f32 %v1609, 1.442695
  %v1724 = vpow.pop %v1723
  %v1725 = vmul.f32 %v1610, 1.442695
  %v1726 = vpow.pop %v1725
  %v1727 = vmul.f32 %v1611, 1.442695
  %v1728 = vpow.pop %v1727
  %v1729 = vmul.f32 %v1612, 1.442695
  %v1730 = vpow.pop %v1729
  %v1731 = vmul.f32 %v1613, 1.442695
  %v1732 = vpow.pop %v1731
  %v1733 = vmul.f32 %v1614, 1.442695
  %v1734 = vpow.pop %v1733
  %v1735 = vmul.f32 %v1615, 1.442695
  %v1736 = vpow.pop %v1735
  %v1737 = vmul.f32 %v1616, 1.442695
  %v1738 = vpow.pop %v1737
  %v1739 = vmul.f32 %v1617, 1.442695
  %v1740 = vpow.pop %v1739
  %v1741 = vmul.f32 %v1618, 1.442695
  %v1742 = vpow.pop %v1741
  %v1743 = vmul.f32 %v1619, 1.442695
  %v1744 = vpow.pop %v1743
  %v1745 = vmul.f32 %v1620, 1.442695
  %v1746 = vpow.pop %v1745
  %v1747 = vmul.f32 %v1621, 1.442695
  %v1748 = vpow.pop %v1747
  %v1749 = vmul.f32 %v1622, 1.442695
  %v1750 = vpow.pop %v1749
  %1751 = vadd.xlane.f32.xlu0 %v1624
  %v1752 = vpop.xlane.xlu0 %1751
  %1753 = vadd.xlane.f32.xlu0 %v1626
  %v1754 = vpop.xlane.xlu0 %1753
  %1755 = vadd.xlane.f32.xlu0 %v1628
  %v1756 = vpop.xlane.xlu0 %1755
  %1757 = vadd.xlane.f32.xlu0 %v1630
  %v1758 = vpop.xlane.xlu0 %1757
  %1759 = vadd.xlane.f32.xlu0 %v1632
  %v1760 = vpop.xlane.xlu0 %1759
  %1761 = vadd.xlane.f32.xlu0 %v1634
  %v1762 = vpop.xlane.xlu0 %1761
  %1763 = vadd.xlane.f32.xlu0 %v1636
  %v1764 = vpop.xlane.xlu0 %1763
  %1765 = vadd.xlane.f32.xlu0 %v1638
  %v1766 = vpop.xlane.xlu0 %1765
  %1767 = vadd.xlane.f32.xlu0 %v1640
  %v1768 = vpop.xlane.xlu0 %1767
  %1769 = vadd.xlane.f32.xlu0 %v1642
  %v1770 = vpop.xlane.xlu0 %1769
  %1771 = vadd.xlane.f32.xlu0 %v1644
  %v1772 = vpop.xlane.xlu0 %1771
  %1773 = vadd.xlane.f32.xlu0 %v1646
  %v1774 = vpop.xlane.xlu0 %1773
  %1775 = vadd.xlane.f32.xlu0 %v1648
  %v1776 = vpop.xlane.xlu0 %1775
  %1777 = vadd.xlane.f32.xlu0 %v1650
  %v1778 = vpop.xlane.xlu0 %1777
  %1779 = vadd.xlane.f32.xlu0 %v1652
  %v1780 = vpop.xlane.xlu0 %1779
  %1781 = vadd.xlane.f32.xlu0 %v1654
  %v1782 = vpop.xlane.xlu0 %1781
  %1783 = vadd.xlane.f32.xlu0 %v1656
  %v1784 = vpop.xlane.xlu0 %1783
  %1785 = vadd.xlane.f32.xlu0 %v1658
  %v1786 = vpop.xlane.xlu0 %1785
  %1787 = vadd.xlane.f32.xlu0 %v1660
  %v1788 = vpop.xlane.xlu0 %1787
  %1789 = vadd.xlane.f32.xlu0 %v1662
  %v1790 = vpop.xlane.xlu0 %1789
  %1791 = vadd.xlane.f32.xlu0 %v1664
  %v1792 = vpop.xlane.xlu0 %1791
  %1793 = vadd.xlane.f32.xlu0 %v1666
  %v1794 = vpop.xlane.xlu0 %1793
  %1795 = vadd.xlane.f32.xlu0 %v1668
  %v1796 = vpop.xlane.xlu0 %1795
  %1797 = vadd.xlane.f32.xlu0 %v1670
  %v1798 = vpop.xlane.xlu0 %1797
  %1799 = vadd.xlane.f32.xlu0 %v1672
  %v1800 = vpop.xlane.xlu0 %1799
  %1801 = vadd.xlane.f32.xlu0 %v1674
  %v1802 = vpop.xlane.xlu0 %1801
  %1803 = vadd.xlane.f32.xlu0 %v1676
  %v1804 = vpop.xlane.xlu0 %1803
  %1805 = vadd.xlane.f32.xlu0 %v1678
  %v1806 = vpop.xlane.xlu0 %1805
  %1807 = vadd.xlane.f32.xlu0 %v1680
  %v1808 = vpop.xlane.xlu0 %1807
  %1809 = vadd.xlane.f32.xlu0 %v1682
  %v1810 = vpop.xlane.xlu0 %1809
  %1811 = vadd.xlane.f32.xlu0 %v1684
  %v1812 = vpop.xlane.xlu0 %1811
  %1813 = vadd.xlane.f32.xlu0 %v1686
  %v1814 = vpop.xlane.xlu0 %1813
  %1815 = vadd.xlane.f32.xlu0 %v1688
  %v1816 = vpop.xlane.xlu0 %1815
  %1817 = vadd.xlane.f32.xlu0 %v1690
  %v1818 = vpop.xlane.xlu0 %1817
  %1819 = vadd.xlane.f32.xlu0 %v1692
  %v1820 = vpop.xlane.xlu0 %1819
  %1821 = vadd.xlane.f32.xlu0 %v1694
  %v1822 = vpop.xlane.xlu0 %1821
  %1823 = vadd.xlane.f32.xlu0 %v1696
  %v1824 = vpop.xlane.xlu0 %1823
  %1825 = vadd.xlane.f32.xlu0 %v1698
  %v1826 = vpop.xlane.xlu0 %1825
  %1827 = vadd.xlane.f32.xlu0 %v1700
  %v1828 = vpop.xlane.xlu0 %1827
  %1829 = vadd.xlane.f32.xlu0 %v1702
  %v1830 = vpop.xlane.xlu0 %1829
  %1831 = vadd.xlane.f32.xlu0 %v1704
  %v1832 = vpop.xlane.xlu0 %1831
  %1833 = vadd.xlane.f32.xlu0 %v1706
  %v1834 = vpop.xlane.xlu0 %1833
  %1835 = vadd.xlane.f32.xlu0 %v1708
  %v1836 = vpop.xlane.xlu0 %1835
  %1837 = vadd.xlane.f32.xlu0 %v1710
  %v1838 = vpop.xlane.xlu0 %1837
  %1839 = vadd.xlane.f32.xlu0 %v1712
  %v1840 = vpop.xlane.xlu0 %1839
  %1841 = vadd.xlane.f32.xlu0 %v1714
  %v1842 = vpop.xlane.xlu0 %1841
  %1843 = vadd.xlane.f32.xlu0 %v1716
  %v1844 = vpop.xlane.xlu0 %1843
  %1845 = vadd.xlane.f32.xlu0 %v1718
  %v1846 = vpop.xlane.xlu0 %1845
  %1847 = vadd.xlane.f32.xlu0 %v1720
  %v1848 = vpop.xlane.xlu0 %1847
  %1849 = vadd.xlane.f32.xlu0 %v1722
  %v1850 = vpop.xlane.xlu0 %1849
  %1851 = vadd.xlane.f32.xlu0 %v1724
  %v1852 = vpop.xlane.xlu0 %1851
  %1853 = vadd.xlane.f32.xlu0 %v1726
  %v1854 = vpop.xlane.xlu0 %1853
  %1855 = vadd.xlane.f32.xlu0 %v1728
  %v1856 = vpop.xlane.xlu0 %1855
  %1857 = vadd.xlane.f32.xlu0 %v1730
  %v1858 = vpop.xlane.xlu0 %1857
  %1859 = vadd.xlane.f32.xlu0 %v1732
  %v1860 = vpop.xlane.xlu0 %1859
  %1861 = vadd.xlane.f32.xlu0 %v1734
  %v1862 = vpop.xlane.xlu0 %1861
  %1863 = vadd.xlane.f32.xlu0 %v1736
  %v1864 = vpop.xlane.xlu0 %1863
  %1865 = vadd.xlane.f32.xlu0 %v1738
  %v1866 = vpop.xlane.xlu0 %1865
  %1867 = vadd.xlane.f32.xlu0 %v1740
  %v1868 = vpop.xlane.xlu0 %1867
  %1869 = vadd.xlane.f32.xlu0 %v1742
  %v1870 = vpop.xlane.xlu0 %1869
  %1871 = vadd.xlane.f32.xlu0 %v1744
  %v1872 = vpop.xlane.xlu0 %1871
  %1873 = vadd.xlane.f32.xlu0 %v1746
  %v1874 = vpop.xlane.xlu0 %1873
  %1875 = vadd.xlane.f32.xlu0 %v1748
  %v1876 = vpop.xlane.xlu0 %1875
  %1877 = vadd.xlane.f32.xlu0 %v1750
  %v1878 = vpop.xlane.xlu0 %1877
  %v1879 = vrcp.pop %v1752
  %v1880 = vrcp.pop %v1754
  %v1881 = vrcp.pop %v1756
  %v1882 = vrcp.pop %v1758
  %v1883 = vrcp.pop %v1760
  %v1884 = vrcp.pop %v1762
  %v1885 = vrcp.pop %v1764
  %v1886 = vrcp.pop %v1766
  %v1887 = vrcp.pop %v1768
  %v1888 = vrcp.pop %v1770
  %v1889 = vrcp.pop %v1772
  %v1890 = vrcp.pop %v1774
  %v1891 = vrcp.pop %v1776
  %v1892 = vrcp.pop %v1778
  %v1893 = vrcp.pop %v1780
  %v1894 = vrcp.pop %v1782
  %v1895 = vrcp.pop %v1784
  %v1896 = vrcp.pop %v1786
  %v1897 = vrcp.pop %v1788
  %v1898 = vrcp.pop %v1790
  %v1899 = vrcp.pop %v1792
  %v1900 = vrcp.pop %v1794
  %v1901 = vrcp.pop %v1796
  %v1902 = vrcp.pop %v1798
  %v1903 = vrcp.pop %v1800
  %v1904 = vrcp.pop %v1802
  %v1905 = vrcp.pop %v1804
  %v1906 = vrcp.pop %v1806
  %v1907 = vrcp.pop %v1808
  %v1908 = vrcp.pop %v1810
  %v1909 = vrcp.pop %v1812
  %v1910 = vrcp.pop %v1814
  %v1911 = vrcp.pop %v1816
  %v1912 = vrcp.pop %v1818
  %v1913 = vrcp.pop %v1820
  %v1914 = vrcp.pop %v1822
  %v1915 = vrcp.pop %v1824
  %v1916 = vrcp.pop %v1826
  %v1917 = vrcp.pop %v1828
  %v1918 = vrcp.pop %v1830
  %v1919 = vrcp.pop %v1832
  %v1920 = vrcp.pop %v1834
  %v1921 = vrcp.pop %v1836
  %v1922 = vrcp.pop %v1838
  %v1923 = vrcp.pop %v1840
  %v1924 = vrcp.pop %v1842
  %v1925 = vrcp.pop %v1844
  %v1926 = vrcp.pop %v1846
  %v1927 = vrcp.pop %v1848
  %v1928 = vrcp.pop %v1850
  %v1929 = vrcp.pop %v1852
  %v1930 = vrcp.pop %v1854
  %v1931 = vrcp.pop %v1856
  %v1932 = vrcp.pop %v1858
  %v1933 = vrcp.pop %v1860
  %v1934 = vrcp.pop %v1862
  %v1935 = vrcp.pop %v1864
  %v1936 = vrcp.pop %v1866
  %v1937 = vrcp.pop %v1868
  %v1938 = vrcp.pop %v1870
  %v1939 = vrcp.pop %v1872
  %v1940 = vrcp.pop %v1874
  %v1941 = vrcp.pop %v1876
  %v1942 = vrcp.pop %v1878
  %v1943 = vmul.f32 %v1624, %v1879
  %v1944 = vmul.f32 %v1626, %v1880
  %v1945 = vmul.f32 %v1628, %v1881
  %v1946 = vmul.f32 %v1630, %v1882
  %v1947 = vmul.f32 %v1632, %v1883
  %v1948 = vmul.f32 %v1634, %v1884
  %v1949 = vmul.f32 %v1636, %v1885
  %v1950 = vmul.f32 %v1638, %v1886
  %v1951 = vmul.f32 %v1640, %v1887
  %v1952 = vmul.f32 %v1642, %v1888
  %v1953 = vmul.f32 %v1644, %v1889
  %v1954 = vmul.f32 %v1646, %v1890
  %v1955 = vmul.f32 %v1648, %v1891
  %v1956 = vmul.f32 %v1650, %v1892
  %v1957 = vmul.f32 %v1652, %v1893
  %v1958 = vmul.f32 %v1654, %v1894
  %v1959 = vmul.f32 %v1656, %v1895
  %v1960 = vmul.f32 %v1658, %v1896
  %v1961 = vmul.f32 %v1660, %v1897
  %v1962 = vmul.f32 %v1662, %v1898
  %v1963 = vmul.f32 %v1664, %v1899
  %v1964 = vmul.f32 %v1666, %v1900
  %v1965 = vmul.f32 %v1668, %v1901
  %v1966 = vmul.f32 %v1670, %v1902
  %v1967 = vmul.f32 %v1672, %v1903
  %v1968 = vmul.f32 %v1674, %v1904
  %v1969 = vmul.f32 %v1676, %v1905
  %v1970 = vmul.f32 %v1678, %v1906
  %v1971 = vmul.f32 %v1680, %v1907
  %v1972 = vmul.f32 %v1682, %v1908
  %v1973 = vmul.f32 %v1684, %v1909
  %v1974 = vmul.f32 %v1686, %v1910
  %v1975 = vmul.f32 %v1688, %v1911
  %v1976 = vmul.f32 %v1690, %v1912
  %v1977 = vmul.f32 %v1692, %v1913
  %v1978 = vmul.f32 %v1694, %v1914
  %v1979 = vmul.f32 %v1696, %v1915
  %v1980 = vmul.f32 %v1698, %v1916
  %v1981 = vmul.f32 %v1700, %v1917
  %v1982 = vmul.f32 %v1702, %v1918
  %v1983 = vmul.f32 %v1704, %v1919
  %v1984 = vmul.f32 %v1706, %v1920
  %v1985 = vmul.f32 %v1708, %v1921
  %v1986 = vmul.f32 %v1710, %v1922
  %v1987 = vmul.f32 %v1712, %v1923
  %v1988 = vmul.f32 %v1714, %v1924
  %v1989 = vmul.f32 %v1716, %v1925
  %v1990 = vmul.f32 %v1718, %v1926
  %v1991 = vmul.f32 %v1720, %v1927
  %v1992 = vmul.f32 %v1722, %v1928
  %v1993 = vmul.f32 %v1724, %v1929
  %v1994 = vmul.f32 %v1726, %v1930
  %v1995 = vmul.f32 %v1728, %v1931
  %v1996 = vmul.f32 %v1730, %v1932
  %v1997 = vmul.f32 %v1732, %v1933
  %v1998 = vmul.f32 %v1734, %v1934
  %v1999 = vmul.f32 %v1736, %v1935
  %v2000 = vmul.f32 %v1738, %v1936
  %v2001 = vmul.f32 %v1740, %v1937
  %v2002 = vmul.f32 %v1742, %v1938
  %v2003 = vmul.f32 %v1744, %v1939
  %v2004 = vmul.f32 %v1746, %v1940
  %v2005 = vmul.f32 %v1748, %v1941
  %v2006 = vmul.f32 %v1750, %v1942
  %v2007 = vpack.c.bf16 %v1944, %v1943
  %v2008 = vpack.c.bf16 %v1946, %v1945
  %v2009 = vpack.c.bf16 %v1948, %v1947
  %v2010 = vpack.c.bf16 %v1950, %v1949
  %v2011 = vpack.c.bf16 %v1952, %v1951
  %v2012 = vpack.c.bf16 %v1954, %v1953
  %v2013 = vpack.c.bf16 %v1956, %v1955
  %v2014 = vpack.c.bf16 %v1958, %v1957
  %v2015 = vpack.c.bf16 %v1960, %v1959
  %v2016 = vpack.c.bf16 %v1962, %v1961
  %v2017 = vpack.c.bf16 %v1964, %v1963
  %v2018 = vpack.c.bf16 %v1966, %v1965
  %v2019 = vpack.c.bf16 %v1968, %v1967
  %v2020 = vpack.c.bf16 %v1970, %v1969
  %v2021 = vpack.c.bf16 %v1972, %v1971
  %v2022 = vpack.c.bf16 %v1974, %v1973
  %v2023 = vpack.c.bf16 %v1976, %v1975
  %v2024 = vpack.c.bf16 %v1978, %v1977
  %v2025 = vpack.c.bf16 %v1980, %v1979
  %v2026 = vpack.c.bf16 %v1982, %v1981
  %v2027 = vpack.c.bf16 %v1984, %v1983
  %v2028 = vpack.c.bf16 %v1986, %v1985
  %v2029 = vpack.c.bf16 %v1988, %v1987
  %v2030 = vpack.c.bf16 %v1990, %v1989
  %v2031 = vpack.c.bf16 %v1992, %v1991
  %v2032 = vpack.c.bf16 %v1994, %v1993
  %v2033 = vpack.c.bf16 %v1996, %v1995
  %v2034 = vpack.c.bf16 %v1998, %v1997
  %v2035 = vpack.c.bf16 %v2000, %v1999
  %v2036 = vpack.c.bf16 %v2002, %v2001
  %v2037 = vpack.c.bf16 %v2004, %v2003
  %v2038 = vpack.c.bf16 %v2006, %v2005
  %2039 = vrot.lane.b32.xlu0 %v594, 64
  %v2040 = vpop.permute.xlu0 %2039
  %2041 = vrot.lane.b32.xlu0 %v595, 64
  %v2042 = vpop.permute.xlu0 %2041
  %2043 = vrot.lane.b32.xlu0 %v596, 64
  %v2044 = vpop.permute.xlu0 %2043
  %2045 = vrot.lane.b32.xlu0 %v597, 64
  %v2046 = vpop.permute.xlu0 %2045
  %2047 = vrot.lane.b32.xlu0 %v598, 64
  %v2048 = vpop.permute.xlu0 %2047
  %2049 = vrot.lane.b32.xlu0 %v599, 64
  %v2050 = vpop.permute.xlu0 %2049
  %2051 = vrot.lane.b32.xlu0 %v600, 64
  %v2052 = vpop.permute.xlu0 %2051
  %2053 = vrot.lane.b32.xlu0 %v601, 64
  %v2054 = vpop.permute.xlu0 %2053
  %2063 = vmatprep.subr.bf16.mxu0 0
  %2064 = vmatpush1.bf16.msra.mxu0 %v2040
  %2065 = vmatprep.subr.bf16.mxu0 0
  %2066 = vmatpush1.bf16.msra.mxu0 %v2042
  %2067 = vmatprep.subr.bf16.mxu0 0
  %2068 = vmatpush1.bf16.msra.mxu0 %v2044
  %2069 = vmatprep.subr.bf16.mxu0 0
  %2070 = vmatpush1.bf16.msra.mxu0 %v2046
  %2071 = vmatprep.subr.bf16.mxu0 0
  %2072 = vmatpush1.bf16.msra.mxu0 %v2048
  %2073 = vmatprep.subr.bf16.mxu0 0
  %2074 = vmatpush1.bf16.msra.mxu0 %v2050
  %2075 = vmatprep.subr.bf16.mxu0 0
  %2076 = vmatpush1.bf16.msra.mxu0 %v2052
  %2077 = vmatprep.subr.bf16.mxu0 0
  %2078 = vmatpush1.bf16.msra.mxu0 %v2054
  %2079 = vmatprep.subr.bf16.mxu0 0
  %2080 = vmatpush1.bf16.msra.mxu0 0
  %2081 = vmatprep.subr.bf16.mxu0 0
  %2082 = vmatpush1.bf16.msra.mxu0 0
  %2083 = vmatprep.subr.bf16.mxu0 0
  %2084 = vmatpush1.bf16.msra.mxu0 0
  %2085 = vmatprep.subr.bf16.mxu0 0
  %2086 = vmatpush1.bf16.msra.mxu0 0
  %2087 = vmatprep.subr.bf16.mxu0 0
  %2088 = vmatpush1.bf16.msra.mxu0 0
  %2089 = vmatprep.subr.bf16.mxu0 0
  %2090 = vmatpush1.bf16.msra.mxu0 0
  %2091 = vmatprep.subr.bf16.mxu0 0
  %2092 = vmatpush1.bf16.msra.mxu0 0
  %2093 = vmatprep.subr.bf16.mxu0 0
  %2094 = vmatpush1.bf16.msra.mxu0 0
  %2095 = vmatprep.mubr.bf16.mxu0 0
  %2096 = vmatmul.mubr.bf16.gmra.mrb[0].mxu0 %v2007
  %v2097 = vpop.f32.mrb[0].mxu0
  %v2098 = vadd.f32 0.0, %v2097
  %v2099 = vpop.f32.mrb[0].mxu0
  %v2100 = vpop.f32.mrb[0].mxu0
  %v2101 = vadd.f32 0.0, %v2100
  %v2102 = vpop.f32.mrb[0].mxu0
  %2103 = vmatprep.mubr.bf16.mxu0 0
  %2104 = vmatmul.mubr.bf16.gmra.mrb[0].mxu0 %v2008
  %v2105 = vpop.f32.mrb[0].mxu0
  %v2106 = vadd.f32 0.0, %v2105
  %v2107 = vpop.f32.mrb[0].mxu0
  %v2108 = vpop.f32.mrb[0].mxu0
  %v2109 = vadd.f32 0.0, %v2108
  %v2110 = vpop.f32.mrb[0].mxu0
  %2111 = vmatprep.mubr.bf16.mxu0 0
  %2112 = vmatmul.mubr.bf16.gmra.mrb[0].mxu0 %v2009
  %v2113 = vpop.f32.mrb[0].mxu0
  %v2114 = vadd.f32 0.0, %v2113
  %v2115 = vpop.f32.mrb[0].mxu0
  %v2116 = vpop.f32.mrb[0].mxu0
  %v2117 = vadd.f32 0.0, %v2116
  %v2118 = vpop.f32.mrb[0].mxu0
  %2119 = vmatprep.mubr.bf16.mxu0 0
  %2120 = vmatmul.mubr.bf16.gmra.mrb[0].mxu0 %v2010
  %v2121 = vpop.f32.mrb[0].mxu0
  %v2122 = vadd.f32 0.0, %v2121
  %v2123 = vpop.f32.mrb[0].mxu0
  %v2124 = vpop.f32.mrb[0].mxu0
  %v2125 = vadd.f32 0.0, %v2124
  %v2126 = vpop.f32.mrb[0].mxu0
  %2127 = vmatprep.mubr.bf16.mxu0 0
  %2128 = vmatmul.mubr.bf16.gmra.mrb[0].mxu0 %v2011
  %v2129 = vpop.f32.mrb[0].mxu0
  %v2130 = vadd.f32 0.0, %v2129
  %v2131 = vpop.f32.mrb[0].mxu0
  %v2132 = vpop.f32.mrb[0].mxu0
  %v2133 = vadd.f32 0.0, %v2132
  %v2134 = vpop.f32.mrb[0].mxu0
  %2135 = vmatprep.mubr.bf16.mxu0 0
  %2136 = vmatmul.mubr.bf16.gmra.mrb[0].mxu0 %v2012
  %v2137 = vpop.f32.mrb[0].mxu0
  %v2138 = vadd.f32 0.0, %v2137
  %v2139 = vpop.f32.mrb[0].mxu0
  %v2140 = vpop.f32.mrb[0].mxu0
  %v2141 = vadd.f32 0.0, %v2140
  %v2142 = vpop.f32.mrb[0].mxu0
  %2143 = vmatprep.mubr.bf16.mxu0 0
  %2144 = vmatmul.mubr.bf16.gmra.mrb[0].mxu0 %v2013
  %v2145 = vpop.f32.mrb[0].mxu0
  %v2146 = vadd.f32 0.0, %v2145
  %v2147 = vpop.f32.mrb[0].mxu0
  %v2148 = vpop.f32.mrb[0].mxu0
  %v2149 = vadd.f32 0.0, %v2148
  %v2150 = vpop.f32.mrb[0].mxu0
  %2151 = vmatprep.mubr.bf16.mxu0 0
  %2152 = vmatmul.mubr.bf16.gmra.mrb[0].mxu0 %v2014
  %v2153 = vpop.f32.mrb[0].mxu0
  %v2154 = vadd.f32 0.0, %v2153
  %v2155 = vpop.f32.mrb[0].mxu0
  %v2156 = vpop.f32.mrb[0].mxu0
  %v2157 = vadd.f32 0.0, %v2156
  %v2158 = vpop.f32.mrb[0].mxu0
  %2159 = vdwg.mxu0
  %2160 = vrot.lane.b32.xlu0 %v594, 56
  %v2161 = vpop.permute.xlu0 %2160
  %2162 = vrot.lane.b32.xlu0 %v595, 56
  %v2163 = vpop.permute.xlu0 %2162
  %2164 = vrot.lane.b32.xlu0 %v596, 56
  %v2165 = vpop.permute.xlu0 %2164
  %2166 = vrot.lane.b32.xlu0 %v597, 56
  %v2167 = vpop.permute.xlu0 %2166
  %2168 = vrot.lane.b32.xlu0 %v598, 56
  %v2169 = vpop.permute.xlu0 %2168
  %2170 = vrot.lane.b32.xlu0 %v599, 56
  %v2171 = vpop.permute.xlu0 %2170
  %2172 = vrot.lane.b32.xlu0 %v600, 56
  %v2173 = vpop.permute.xlu0 %2172
  %2174 = vrot.lane.b32.xlu0 %v601, 56
  %v2175 = vpop.permute.xlu0 %2174
  %2184 = vmatprep.subr.bf16.mxu0 0
  %2185 = vmatpush1.bf16.msra.mxu0 %v2161
  %2186 = vmatprep.subr.bf16.mxu0 0
  %2187 = vmatpush1.bf16.msra.mxu0 %v2163
  %2188 = vmatprep.subr.bf16.mxu0 0
  %2189 = vmatpush1.bf16.msra.mxu0 %v2165
  %2190 = vmatprep.subr.bf16.mxu0 0
  %2191 = vmatpush1.bf16.msra.mxu0 %v2167
  %2192 = vmatprep.subr.bf16.mxu0 0
  %2193 = vmatpush1.bf16.msra.mxu0 %v2169
  %2194 = vmatprep.subr.bf16.mxu0 0
  %2195 = vmatpush1.bf16.msra.mxu0 %v2171
  %2196 = vmatprep.subr.bf16.mxu0 0
  %2197 = vmatpush1.bf16.msra.mxu0 %v2173
  %2198 = vmatprep.subr.bf16.mxu0 0
  %2199 = vmatpush1.bf16.msra.mxu0 %v2175
  %2200 = vmatprep.subr.bf16.mxu0 0
  %2201 = vmatpush1.bf16.msra.mxu0 0
  %2202 = vmatprep.subr.bf16.mxu0 0
  %2203 = vmatpush1.bf16.msra.mxu0 0
  %2204 = vmatprep.subr.bf16.mxu0 0
  %2205 = vmatpush1.bf16.msra.mxu0 0
  %2206 = vmatprep.subr.bf16.mxu0 0
  %2207 = vmatpush1.bf16.msra.mxu0 0
  %2208 = vmatprep.subr.bf16.mxu0 0
  %2209 = vmatpush1.bf16.msra.mxu0 0
  %2210 = vmatprep.subr.bf16.mxu0 0
  %2211 = vmatpush1.bf16.msra.mxu0 0
  %2212 = vmatprep.subr.bf16.mxu0 0
  %2213 = vmatpush1.bf16.msra.mxu0 0
  %2214 = vmatprep.subr.bf16.mxu0 0
  %2215 = vmatpush1.bf16.msra.mxu0 0
  %2216 = vmatprep.mubr.bf16.mxu0 0
  %2217 = vmatmul.mubr.bf16.gmra.mrb[0].mxu0 %v2015
  %v2218 = vpop.f32.mrb[0].mxu0
  %v2219 = vadd.f32 0.0, %v2218
  %v2220 = vpop.f32.mrb[0].mxu0
  %v2221 = vpop.f32.mrb[0].mxu0
  %v2222 = vadd.f32 0.0, %v2221
  %v2223 = vpop.f32.mrb[0].mxu0
  %2224 = vmatprep.mubr.bf16.mxu0 0
  %2225 = vmatmul.mubr.bf16.gmra.mrb[0].mxu0 %v2016
  %v2226 = vpop.f32.mrb[0].mxu0
  %v2227 = vadd.f32 0.0, %v2226
  %v2228 = vpop.f32.mrb[0].mxu0
  %v2229 = vpop.f32.mrb[0].mxu0
  %v2230 = vadd.f32 0.0, %v2229
  %v2231 = vpop.f32.mrb[0].mxu0
  %2232 = vmatprep.mubr.bf16.mxu0 0
  %2233 = vmatmul.mubr.bf16.gmra.mrb[0].mxu0 %v2017
  %v2234 = vpop.f32.mrb[0].mxu0
  %v2235 = vadd.f32 0.0, %v2234
  %v2236 = vpop.f32.mrb[0].mxu0
  %v2237 = vpop.f32.mrb[0].mxu0
  %v2238 = vadd.f32 0.0, %v2237
  %v2239 = vpop.f32.mrb[0].mxu0
  %2240 = vmatprep.mubr.bf16.mxu0 0
  %2241 = vmatmul.mubr.bf16.gmra.mrb[0].mxu0 %v2018
  %v2242 = vpop.f32.mrb[0].mxu0
  %v2243 = vadd.f32 0.0, %v2242
  %v2244 = vpop.f32.mrb[0].mxu0
  %v2245 = vpop.f32.mrb[0].mxu0
  %v2246 = vadd.f32 0.0, %v2245
  %v2247 = vpop.f32.mrb[0].mxu0
  %2248 = vmatprep.mubr.bf16.mxu0 0
  %2249 = vmatmul.mubr.bf16.gmra.mrb[0].mxu0 %v2019
  %v2250 = vpop.f32.mrb[0].mxu0
  %v2251 = vadd.f32 0.0, %v2250
  %v2252 = vpop.f32.mrb[0].mxu0
  %v2253 = vpop.f32.mrb[0].mxu0
  %v2254 = vadd.f32 0.0, %v2253
  %v2255 = vpop.f32.mrb[0].mxu0
  %2256 = vmatprep.mubr.bf16.mxu0 0
  %2257 = vmatmul.mubr.bf16.gmra.mrb[0].mxu0 %v2020
  %v2258 = vpop.f32.mrb[0].mxu0
  %v2259 = vadd.f32 0.0, %v2258
  %v2260 = vpop.f32.mrb[0].mxu0
  %v2261 = vpop.f32.mrb[0].mxu0
  %v2262 = vadd.f32 0.0, %v2261
  %v2263 = vpop.f32.mrb[0].mxu0
  %2264 = vmatprep.mubr.bf16.mxu0 0
  %2265 = vmatmul.mubr.bf16.gmra.mrb[0].mxu0 %v2021
  %v2266 = vpop.f32.mrb[0].mxu0
  %v2267 = vadd.f32 0.0, %v2266
  %v2268 = vpop.f32.mrb[0].mxu0
  %v2269 = vpop.f32.mrb[0].mxu0
  %v2270 = vadd.f32 0.0, %v2269
  %v2271 = vpop.f32.mrb[0].mxu0
  %2272 = vmatprep.mubr.bf16.mxu0 0
  %2273 = vmatmul.mubr.bf16.gmra.mrb[0].mxu0 %v2022
  %v2274 = vpop.f32.mrb[0].mxu0
  %v2275 = vadd.f32 0.0, %v2274
  %v2276 = vpop.f32.mrb[0].mxu0
  %v2277 = vpop.f32.mrb[0].mxu0
  %v2278 = vadd.f32 0.0, %v2277
  %v2279 = vpop.f32.mrb[0].mxu0
  %2280 = vdwg.mxu0
  %2281 = vrot.lane.b32.xlu0 %v594, 48
  %v2282 = vpop.permute.xlu0 %2281
  %2283 = vrot.lane.b32.xlu0 %v595, 48
  %v2284 = vpop.permute.xlu0 %2283
  %2285 = vrot.lane.b32.xlu0 %v596, 48
  %v2286 = vpop.permute.xlu0 %2285
  %2287 = vrot.lane.b32.xlu0 %v597, 48
  %v2288 = vpop.permute.xlu0 %2287
  %2289 = vrot.lane.b32.xlu0 %v598, 48
  %v2290 = vpop.permute.xlu0 %2289
  %2291 = vrot.lane.b32.xlu0 %v599, 48
  %v2292 = vpop.permute.xlu0 %2291
  %2293 = vrot.lane.b32.xlu0 %v600, 48
  %v2294 = vpop.permute.xlu0 %2293
  %2295 = vrot.lane.b32.xlu0 %v601, 48
  %v2296 = vpop.permute.xlu0 %2295
  %2305 = vmatprep.subr.bf16.mxu0 0
  %2306 = vmatpush1.bf16.msra.mxu0 %v2282
  %2307 = vmatprep.subr.bf16.mxu0 0
  %2308 = vmatpush1.bf16.msra.mxu0 %v2284
  %2309 = vmatprep.subr.bf16.mxu0 0
  %2310 = vmatpush1.bf16.msra.mxu0 %v2286
  %2311 = vmatprep.subr.bf16.mxu0 0
  %2312 = vmatpush1.bf16.msra.mxu0 %v2288
  %2313 = vmatprep.subr.bf16.mxu0 0
  %2314 = vmatpush1.bf16.msra.mxu0 %v2290
  %2315 = vmatprep.subr.bf16.mxu0 0
  %2316 = vmatpush1.bf16.msra.mxu0 %v2292
  %2317 = vmatprep.subr.bf16.mxu0 0
  %2318 = vmatpush1.bf16.msra.mxu0 %v2294
  %2319 = vmatprep.subr.bf16.mxu0 0
  %2320 = vmatpush1.bf16.msra.mxu0 %v2296
  %2321 = vmatprep.subr.bf16.mxu0 0
  %2322 = vmatpush1.bf16.msra.mxu0 0
  %2323 = vmatprep.subr.bf16.mxu0 0
  %2324 = vmatpush1.bf16.msra.mxu0 0
  %2325 = vmatprep.subr.bf16.mxu0 0
  %2326 = vmatpush1.bf16.msra.mxu0 0
  %2327 = vmatprep.subr.bf16.mxu0 0
  %2328 = vmatpush1.bf16.msra.mxu0 0
  %2329 = vmatprep.subr.bf16.mxu0 0
  %2330 = vmatpush1.bf16.msra.mxu0 0
  %2331 = vmatprep.subr.bf16.mxu0 0
  %2332 = vmatpush1.bf16.msra.mxu0 0
  %2333 = vmatprep.subr.bf16.mxu0 0
  %2334 = vmatpush1.bf16.msra.mxu0 0
  %2335 = vmatprep.subr.bf16.mxu0 0
  %2336 = vmatpush1.bf16.msra.mxu0 0
  %2337 = vmatprep.mubr.bf16.mxu0 0
  %2338 = vmatmul.mubr.bf16.gmra.mrb[0].mxu0 %v2023
  %v2339 = vpop.f32.mrb[0].mxu0
  %v2340 = vadd.f32 0.0, %v2339
  %v2341 = vpop.f32.mrb[0].mxu0
  %v2342 = vpop.f32.mrb[0].mxu0
  %v2343 = vadd.f32 0.0, %v2342
  %v2344 = vpop.f32.mrb[0].mxu0
  %2345 = vmatprep.mubr.bf16.mxu0 0
  %2346 = vmatmul.mubr.bf16.gmra.mrb[0].mxu0 %v2024
  %v2347 = vpop.f32.mrb[0].mxu0
  %v2348 = vadd.f32 0.0, %v2347
  %v2349 = vpop.f32.mrb[0].mxu0
  %v2350 = vpop.f32.mrb[0].mxu0
  %v2351 = vadd.f32 0.0, %v2350
  %v2352 = vpop.f32.mrb[0].mxu0
  %2353 = vmatprep.mubr.bf16.mxu0 0
  %2354 = vmatmul.mubr.bf16.gmra.mrb[0].mxu0 %v2025
  %v2355 = vpop.f32.mrb[0].mxu0
  %v2356 = vadd.f32 0.0, %v2355
  %v2357 = vpop.f32.mrb[0].mxu0
  %v2358 = vpop.f32.mrb[0].mxu0
  %v2359 = vadd.f32 0.0, %v2358
  %v2360 = vpop.f32.mrb[0].mxu0
  %2361 = vmatprep.mubr.bf16.mxu0 0
  %2362 = vmatmul.mubr.bf16.gmra.mrb[0].mxu0 %v2026
  %v2363 = vpop.f32.mrb[0].mxu0
  %v2364 = vadd.f32 0.0, %v2363
  %v2365 = vpop.f32.mrb[0].mxu0
  %v2366 = vpop.f32.mrb[0].mxu0
  %v2367 = vadd.f32 0.0, %v2366
  %v2368 = vpop.f32.mrb[0].mxu0
  %2369 = vmatprep.mubr.bf16.mxu0 0
  %2370 = vmatmul.mubr.bf16.gmra.mrb[0].mxu0 %v2027
  %v2371 = vpop.f32.mrb[0].mxu0
  %v2372 = vadd.f32 0.0, %v2371
  %v2373 = vpop.f32.mrb[0].mxu0
  %v2374 = vpop.f32.mrb[0].mxu0
  %v2375 = vadd.f32 0.0, %v2374
  %v2376 = vpop.f32.mrb[0].mxu0
  %2377 = vmatprep.mubr.bf16.mxu0 0
  %2378 = vmatmul.mubr.bf16.gmra.mrb[0].mxu0 %v2028
  %v2379 = vpop.f32.mrb[0].mxu0
  %v2380 = vadd.f32 0.0, %v2379
  %v2381 = vpop.f32.mrb[0].mxu0
  %v2382 = vpop.f32.mrb[0].mxu0
  %v2383 = vadd.f32 0.0, %v2382
  %v2384 = vpop.f32.mrb[0].mxu0
  %2385 = vmatprep.mubr.bf16.mxu0 0
  %2386 = vmatmul.mubr.bf16.gmra.mrb[0].mxu0 %v2029
  %v2387 = vpop.f32.mrb[0].mxu0
  %v2388 = vadd.f32 0.0, %v2387
  %v2389 = vpop.f32.mrb[0].mxu0
  %v2390 = vpop.f32.mrb[0].mxu0
  %v2391 = vadd.f32 0.0, %v2390
  %v2392 = vpop.f32.mrb[0].mxu0
  %2393 = vmatprep.mubr.bf16.mxu0 0
  %2394 = vmatmul.mubr.bf16.gmra.mrb[0].mxu0 %v2030
  %v2395 = vpop.f32.mrb[0].mxu0
  %v2396 = vadd.f32 0.0, %v2395
  %v2397 = vpop.f32.mrb[0].mxu0
  %v2398 = vpop.f32.mrb[0].mxu0
  %v2399 = vadd.f32 0.0, %v2398
  %v2400 = vpop.f32.mrb[0].mxu0
  %2401 = vdwg.mxu0
  %2402 = vrot.lane.b32.xlu0 %v594, 40
  %v2403 = vpop.permute.xlu0 %2402
  %2404 = vrot.lane.b32.xlu0 %v595, 40
  %v2405 = vpop.permute.xlu0 %2404
  %2406 = vrot.lane.b32.xlu0 %v596, 40
  %v2407 = vpop.permute.xlu0 %2406
  %2408 = vrot.lane.b32.xlu0 %v597, 40
  %v2409 = vpop.permute.xlu0 %2408
  %2410 = vrot.lane.b32.xlu0 %v598, 40
  %v2411 = vpop.permute.xlu0 %2410
  %2412 = vrot.lane.b32.xlu0 %v599, 40
  %v2413 = vpop.permute.xlu0 %2412
  %2414 = vrot.lane.b32.xlu0 %v600, 40
  %v2415 = vpop.permute.xlu0 %2414
  %2416 = vrot.lane.b32.xlu0 %v601, 40
  %v2417 = vpop.permute.xlu0 %2416
  %2426 = vmatprep.subr.bf16.mxu0 0
  %2427 = vmatpush1.bf16.msra.mxu0 %v2403
  %2428 = vmatprep.subr.bf16.mxu0 0
  %2429 = vmatpush1.bf16.msra.mxu0 %v2405
  %2430 = vmatprep.subr.bf16.mxu0 0
  %2431 = vmatpush1.bf16.msra.mxu0 %v2407
  %2432 = vmatprep.subr.bf16.mxu0 0
  %2433 = vmatpush1.bf16.msra.mxu0 %v2409
  %2434 = vmatprep.subr.bf16.mxu0 0
  %2435 = vmatpush1.bf16.msra.mxu0 %v2411
  %2436 = vmatprep.subr.bf16.mxu0 0
  %2437 = vmatpush1.bf16.msra.mxu0 %v2413
  %2438 = vmatprep.subr.bf16.mxu0 0
  %2439 = vmatpush1.bf16.msra.mxu0 %v2415
  %2440 = vmatprep.subr.bf16.mxu0 0
  %2441 = vmatpush1.bf16.msra.mxu0 %v2417
  %2442 = vmatprep.subr.bf16.mxu0 0
  %2443 = vmatpush1.bf16.msra.mxu0 0
  %2444 = vmatprep.subr.bf16.mxu0 0
  %2445 = vmatpush1.bf16.msra.mxu0 0
  %2446 = vmatprep.subr.bf16.mxu0 0
  %2447 = vmatpush1.bf16.msra.mxu0 0
  %2448 = vmatprep.subr.bf16.mxu0 0
  %2449 = vmatpush1.bf16.msra.mxu0 0
  %2450 = vmatprep.subr.bf16.mxu0 0
  %2451 = vmatpush1.bf16.msra.mxu0 0
  %2452 = vmatprep.subr.bf16.mxu0 0
  %2453 = vmatpush1.bf16.msra.mxu0 0
  %2454 = vmatprep.subr.bf16.mxu0 0
  %2455 = vmatpush1.bf16.msra.mxu0 0
  %2456 = vmatprep.subr.bf16.mxu0 0
  %2457 = vmatpush1.bf16.msra.mxu0 0
  %2458 = vmatprep.mubr.bf16.mxu0 0
  %2459 = vmatmul.mubr.bf16.gmra.mrb[0].mxu0 %v2031
  %v2460 = vpop.f32.mrb[0].mxu0
  %v2461 = vadd.f32 0.0, %v2460
  %v2462 = vpop.f32.mrb[0].mxu0
  %v2463 = vpop.f32.mrb[0].mxu0
  %v2464 = vadd.f32 0.0, %v2463
  %v2465 = vpop.f32.mrb[0].mxu0
  %2466 = vmatprep.mubr.bf16.mxu0 0
  %2467 = vmatmul.mubr.bf16.gmra.mrb[0].mxu0 %v2032
  %v2468 = vpop.f32.mrb[0].mxu0
  %v2469 = vadd.f32 0.0, %v2468
  %v2470 = vpop.f32.mrb[0].mxu0
  %v2471 = vpop.f32.mrb[0].mxu0
  %v2472 = vadd.f32 0.0, %v2471
  %v2473 = vpop.f32.mrb[0].mxu0
  %2474 = vmatprep.mubr.bf16.mxu0 0
  %2475 = vmatmul.mubr.bf16.gmra.mrb[0].mxu0 %v2033
  %v2476 = vpop.f32.mrb[0].mxu0
  %v2477 = vadd.f32 0.0, %v2476
  %v2478 = vpop.f32.mrb[0].mxu0
  %v2479 = vpop.f32.mrb[0].mxu0
  %v2480 = vadd.f32 0.0, %v2479
  %v2481 = vpop.f32.mrb[0].mxu0
  %2482 = vmatprep.mubr.bf16.mxu0 0
  %2483 = vmatmul.mubr.bf16.gmra.mrb[0].mxu0 %v2034
  %v2484 = vpop.f32.mrb[0].mxu0
  %v2485 = vadd.f32 0.0, %v2484
  %v2486 = vpop.f32.mrb[0].mxu0
  %v2487 = vpop.f32.mrb[0].mxu0
  %v2488 = vadd.f32 0.0, %v2487
  %v2489 = vpop.f32.mrb[0].mxu0
  %2490 = vmatprep.mubr.bf16.mxu0 0
  %2491 = vmatmul.mubr.bf16.gmra.mrb[0].mxu0 %v2035
  %v2492 = vpop.f32.mrb[0].mxu0
  %v2493 = vadd.f32 0.0, %v2492
  %v2494 = vpop.f32.mrb[0].mxu0
  %v2495 = vpop.f32.mrb[0].mxu0
  %v2496 = vadd.f32 0.0, %v2495
  %v2497 = vpop.f32.mrb[0].mxu0
  %2498 = vmatprep.mubr.bf16.mxu0 0
  %2499 = vmatmul.mubr.bf16.gmra.mrb[0].mxu0 %v2036
  %v2500 = vpop.f32.mrb[0].mxu0
  %v2501 = vadd.f32 0.0, %v2500
  %v2502 = vpop.f32.mrb[0].mxu0
  %v2503 = vpop.f32.mrb[0].mxu0
  %v2504 = vadd.f32 0.0, %v2503
  %v2505 = vpop.f32.mrb[0].mxu0
  %2506 = vmatprep.mubr.bf16.mxu0 0
  %2507 = vmatmul.mubr.bf16.gmra.mrb[0].mxu0 %v2037
  %v2508 = vpop.f32.mrb[0].mxu0
  %v2509 = vadd.f32 0.0, %v2508
  %v2510 = vpop.f32.mrb[0].mxu0
  %v2511 = vpop.f32.mrb[0].mxu0
  %v2512 = vadd.f32 0.0, %v2511
  %v2513 = vpop.f32.mrb[0].mxu0
  %2514 = vmatprep.mubr.bf16.mxu0 0
  %2515 = vmatmul.mubr.bf16.gmra.mrb[0].mxu0 %v2038
  %v2516 = vpop.f32.mrb[0].mxu0
  %v2517 = vadd.f32 0.0, %v2516
  %v2518 = vpop.f32.mrb[0].mxu0
  %v2519 = vpop.f32.mrb[0].mxu0
  %v2520 = vadd.f32 0.0, %v2519
  %v2521 = vpop.f32.mrb[0].mxu0
  %2522 = vdwg.mxu0
  %2539 = vrot.lane.b32.xlu0 %v2219, 8
  %v2540 = vpop.permute.xlu0 %2539
  %2541 = vrot.lane.b32.xlu0 %v2222, 8
  %v2542 = vpop.permute.xlu0 %2541
  %2543 = vrot.lane.b32.xlu0 %v2227, 8
  %v2544 = vpop.permute.xlu0 %2543
  %2545 = vrot.lane.b32.xlu0 %v2230, 8
  %v2546 = vpop.permute.xlu0 %2545
  %2547 = vrot.lane.b32.xlu0 %v2235, 8
  %v2548 = vpop.permute.xlu0 %2547
  %2549 = vrot.lane.b32.xlu0 %v2238, 8
  %v2550 = vpop.permute.xlu0 %2549
  %2551 = vrot.lane.b32.xlu0 %v2243, 8
  %v2552 = vpop.permute.xlu0 %2551
  %2553 = vrot.lane.b32.xlu0 %v2246, 8
  %v2554 = vpop.permute.xlu0 %2553
  %2555 = vrot.lane.b32.xlu0 %v2251, 8
  %v2556 = vpop.permute.xlu0 %2555
  %2557 = vrot.lane.b32.xlu0 %v2254, 8
  %v2558 = vpop.permute.xlu0 %2557
  %2559 = vrot.lane.b32.xlu0 %v2259, 8
  %v2560 = vpop.permute.xlu0 %2559
  %2561 = vrot.lane.b32.xlu0 %v2262, 8
  %v2562 = vpop.permute.xlu0 %2561
  %2563 = vrot.lane.b32.xlu0 %v2267, 8
  %v2564 = vpop.permute.xlu0 %2563
  %2565 = vrot.lane.b32.xlu0 %v2270, 8
  %v2566 = vpop.permute.xlu0 %2565
  %2567 = vrot.lane.b32.xlu0 %v2275, 8
  %v2568 = vpop.permute.xlu0 %2567
  %2569 = vrot.lane.b32.xlu0 %v2278, 8
  %v2570 = vpop.permute.xlu0 %2569
  %2603 = vrot.lane.b32.xlu0 %v2340, 16
  %v2604 = vpop.permute.xlu0 %2603
  %2605 = vrot.lane.b32.xlu0 %v2343, 16
  %v2606 = vpop.permute.xlu0 %2605
  %2607 = vrot.lane.b32.xlu0 %v2348, 16
  %v2608 = vpop.permute.xlu0 %2607
  %2609 = vrot.lane.b32.xlu0 %v2351, 16
  %v2610 = vpop.permute.xlu0 %2609
  %2611 = vrot.lane.b32.xlu0 %v2356, 16
  %v2612 = vpop.permute.xlu0 %2611
  %2613 = vrot.lane.b32.xlu0 %v2359, 16
  %v2614 = vpop.permute.xlu0 %2613
  %2615 = vrot.lane.b32.xlu0 %v2364, 16
  %v2616 = vpop.permute.xlu0 %2615
  %2617 = vrot.lane.b32.xlu0 %v2367, 16
  %v2618 = vpop.permute.xlu0 %2617
  %2619 = vrot.lane.b32.xlu0 %v2372, 16
  %v2620 = vpop.permute.xlu0 %2619
  %2621 = vrot.lane.b32.xlu0 %v2375, 16
  %v2622 = vpop.permute.xlu0 %2621
  %2623 = vrot.lane.b32.xlu0 %v2380, 16
  %v2624 = vpop.permute.xlu0 %2623
  %2625 = vrot.lane.b32.xlu0 %v2383, 16
  %v2626 = vpop.permute.xlu0 %2625
  %2627 = vrot.lane.b32.xlu0 %v2388, 16
  %v2628 = vpop.permute.xlu0 %2627
  %2629 = vrot.lane.b32.xlu0 %v2391, 16
  %v2630 = vpop.permute.xlu0 %2629
  %2631 = vrot.lane.b32.xlu0 %v2396, 16
  %v2632 = vpop.permute.xlu0 %2631
  %2633 = vrot.lane.b32.xlu0 %v2399, 16
  %v2634 = vpop.permute.xlu0 %2633
  %2667 = vrot.lane.b32.xlu0 %v2461, 24
  %v2668 = vpop.permute.xlu0 %2667
  %2669 = vrot.lane.b32.xlu0 %v2464, 24
  %v2670 = vpop.permute.xlu0 %2669
  %2671 = vrot.lane.b32.xlu0 %v2469, 24
  %v2672 = vpop.permute.xlu0 %2671
  %2673 = vrot.lane.b32.xlu0 %v2472, 24
  %v2674 = vpop.permute.xlu0 %2673
  %2675 = vrot.lane.b32.xlu0 %v2477, 24
  %v2676 = vpop.permute.xlu0 %2675
  %2677 = vrot.lane.b32.xlu0 %v2480, 24
  %v2678 = vpop.permute.xlu0 %2677
  %2679 = vrot.lane.b32.xlu0 %v2485, 24
  %v2680 = vpop.permute.xlu0 %2679
  %2681 = vrot.lane.b32.xlu0 %v2488, 24
  %v2682 = vpop.permute.xlu0 %2681
  %2683 = vrot.lane.b32.xlu0 %v2493, 24
  %v2684 = vpop.permute.xlu0 %2683
  %2685 = vrot.lane.b32.xlu0 %v2496, 24
  %v2686 = vpop.permute.xlu0 %2685
  %2687 = vrot.lane.b32.xlu0 %v2501, 24
  %v2688 = vpop.permute.xlu0 %2687
  %2689 = vrot.lane.b32.xlu0 %v2504, 24
  %v2690 = vpop.permute.xlu0 %2689
  %2691 = vrot.lane.b32.xlu0 %v2509, 24
  %v2692 = vpop.permute.xlu0 %2691
  %2693 = vrot.lane.b32.xlu0 %v2512, 24
  %v2694 = vpop.permute.xlu0 %2693
  %2695 = vrot.lane.b32.xlu0 %v2517, 24
  %v2696 = vpop.permute.xlu0 %2695
  %2697 = vrot.lane.b32.xlu0 %v2520, 24
  %v2698 = vpop.permute.xlu0 %2697
  %v2715 = vsel %vm626, %v2098, %v2540
  %v2716 = vsel %vm626, %v2101, %v2542
  %v2717 = vsel %vm626, %v2106, %v2544
  %v2718 = vsel %vm626, %v2109, %v2546
  %v2719 = vsel %vm626, %v2114, %v2548
  %v2720 = vsel %vm626, %v2117, %v2550
  %v2721 = vsel %vm626, %v2122, %v2552
  %v2722 = vsel %vm626, %v2125, %v2554
  %v2723 = vsel %vm626, %v2130, %v2556
  %v2724 = vsel %vm626, %v2133, %v2558
  %v2725 = vsel %vm626, %v2138, %v2560
  %v2726 = vsel %vm626, %v2141, %v2562
  %v2727 = vsel %vm626, %v2146, %v2564
  %v2728 = vsel %vm626, %v2149, %v2566
  %v2729 = vsel %vm626, %v2154, %v2568
  %v2730 = vsel %vm626, %v2157, %v2570
  %vm2731 = vcmask 130048
  %v2732 = vsel %vm2731, %v2715, %v2604
  %v2733 = vsel %vm2731, %v2716, %v2606
  %v2734 = vsel %vm2731, %v2717, %v2608
  %v2735 = vsel %vm2731, %v2718, %v2610
  %v2736 = vsel %vm2731, %v2719, %v2612
  %v2737 = vsel %vm2731, %v2720, %v2614
  %v2738 = vsel %vm2731, %v2721, %v2616
  %v2739 = vsel %vm2731, %v2722, %v2618
  %v2740 = vsel %vm2731, %v2723, %v2620
  %v2741 = vsel %vm2731, %v2724, %v2622
  %v2742 = vsel %vm2731, %v2725, %v2624
  %v2743 = vsel %vm2731, %v2726, %v2626
  %v2744 = vsel %vm2731, %v2727, %v2628
  %v2745 = vsel %vm2731, %v2728, %v2630
  %v2746 = vsel %vm2731, %v2729, %v2632
  %v2747 = vsel %vm2731, %v2730, %v2634
  %vm2748 = vcmask 195584
  %v2749 = vsel %vm2748, %v2732, %v2668
  %v2750 = vsel %vm2748, %v2733, %v2670
  %v2751 = vsel %vm2748, %v2734, %v2672
  %v2752 = vsel %vm2748, %v2735, %v2674
  %v2753 = vsel %vm2748, %v2736, %v2676
  %v2754 = vsel %vm2748, %v2737, %v2678
  %v2755 = vsel %vm2748, %v2738, %v2680
  %v2756 = vsel %vm2748, %v2739, %v2682
  %v2757 = vsel %vm2748, %v2740, %v2684
  %v2758 = vsel %vm2748, %v2741, %v2686
  %v2759 = vsel %vm2748, %v2742, %v2688
  %v2760 = vsel %vm2748, %v2743, %v2690
  %v2761 = vsel %vm2748, %v2744, %v2692
  %v2762 = vsel %vm2748, %v2745, %v2694
  %v2763 = vsel %vm2748, %v2746, %v2696
  %v2764 = vsel %vm2748, %v2747, %v2698
  %v2765 = vpack.c.bf16 %v2750, %v2749
  %v2766 = vpack.c.bf16 %v2752, %v2751
  %v2767 = vpack.c.bf16 %v2754, %v2753
  %v2768 = vpack.c.bf16 %v2756, %v2755
  %v2769 = vpack.c.bf16 %v2758, %v2757
  %v2770 = vpack.c.bf16 %v2760, %v2759
  %v2771 = vpack.c.bf16 %v2762, %v2761
  %v2772 = vpack.c.bf16 %v2764, %v2763
  %v2773 = vld [vmem:[%s7] sm:$0xf]
  %v2774 = vld [vmem:[%s7 + $0x4] sm:$0xf]
  %v2775 = vld [vmem:[%s7 + $0x8] sm:$0xf]
  %v2776 = vld [vmem:[%s7 + $0xc] sm:$0xf]
  %v2777 = vld [vmem:[%s8] sm:$0x1]
  %v2779 = vlaneseq
  %v2780 = vshrl.u32 %v2779, 7
  %v2781 = vsub.s32 0, %v2780
  %v2782 = vrot.slane %v2777, %v2781
  %v2788 = vunpack.c.l.b16 %v2773
  %v2789 = vunpack.c.l.b16 %v2774
  %v2790 = vunpack.c.l.b16 %v2775
  %v2791 = vunpack.c.l.b16 %v2776
  %v2792 = vpack.c.b16 %v2789, %v2788
  %v2793 = vpack.c.b16 %v2791, %v2790
  %v2797 = vsel %vm188, %v2765, 0
  %v2800 = vsel %vm188, %v2766, 0
  %v2803 = vsel %vm188, %v2767, 0
  %v2806 = vsel %vm188, %v2768, 0
  %v2809 = vsel %vm188, %v2769, 0
  %v2812 = vsel %vm188, %v2770, 0
  %v2815 = vsel %vm188, %v2771, 0
  %v2818 = vsel %vm188, %v2772, 0
  %2820 = vmatprep.subr.bf16.mxu0 0
  %2821 = vmatpush1.bf16.msra.mxu0 %v2792
  %2822 = vmatprep.subr.bf16.mxu0 0
  %2823 = vmatpush1.bf16.msra.mxu0 %v2793
  %2824 = vmatprep.subr.bf16.mxu0 0
  %2825 = vmatpush1.bf16.msra.mxu0 0
  %2826 = vmatprep.subr.bf16.mxu0 0
  %2827 = vmatpush1.bf16.msra.mxu0 0
  %2828 = vmatprep.subr.bf16.mxu0 0
  %2829 = vmatpush1.bf16.msra.mxu0 0
  %2830 = vmatprep.subr.bf16.mxu0 0
  %2831 = vmatpush1.bf16.msra.mxu0 0
  %2832 = vmatprep.subr.bf16.mxu0 0
  %2833 = vmatpush1.bf16.msra.mxu0 0
  %2834 = vmatprep.subr.bf16.mxu0 0
  %2835 = vmatpush1.bf16.msra.mxu0 0
  %2836 = vmatprep.subr.bf16.mxu0 0
  %2837 = vmatpush1.bf16.msra.mxu0 0
  %2838 = vmatprep.subr.bf16.mxu0 0
  %2839 = vmatpush1.bf16.msra.mxu0 0
  %2840 = vmatprep.subr.bf16.mxu0 0
  %2841 = vmatpush1.bf16.msra.mxu0 0
  %2842 = vmatprep.subr.bf16.mxu0 0
  %2843 = vmatpush1.bf16.msra.mxu0 0
  %2844 = vmatprep.subr.bf16.mxu0 0
  %2845 = vmatpush1.bf16.msra.mxu0 0
  %2846 = vmatprep.subr.bf16.mxu0 0
  %2847 = vmatpush1.bf16.msra.mxu0 0
  %2848 = vmatprep.subr.bf16.mxu0 0
  %2849 = vmatpush1.bf16.msra.mxu0 0
  %2850 = vmatprep.subr.bf16.mxu0 0
  %2851 = vmatpush1.bf16.msra.mxu0 0
  %2852 = vmatprep.mubr.bf16.mxu0 0
  %2853 = vmatmul.mubr.bf16.gmra.mrb[0].mxu0 %v2797
  %v2854 = vpop.f32.mrb[0].mxu0
  %v2855 = vadd.f32 %v2782, %v2854
  %v2856 = vpop.f32.mrb[0].mxu0
  %v2857 = vpop.f32.mrb[0].mxu0
  %v2858 = vadd.f32 %v2782, %v2857
  %v2859 = vpop.f32.mrb[0].mxu0
  %2860 = vmatprep.mubr.bf16.mxu0 0
  %2861 = vmatmul.mubr.bf16.gmra.mrb[0].mxu0 %v2800
  %v2862 = vpop.f32.mrb[0].mxu0
  %v2863 = vadd.f32 %v2782, %v2862
  %v2864 = vpop.f32.mrb[0].mxu0
  %v2865 = vpop.f32.mrb[0].mxu0
  %v2866 = vadd.f32 %v2782, %v2865
  %v2867 = vpop.f32.mrb[0].mxu0
  %2868 = vmatprep.mubr.bf16.mxu0 0
  %2869 = vmatmul.mubr.bf16.gmra.mrb[0].mxu0 %v2803
  %v2870 = vpop.f32.mrb[0].mxu0
  %v2871 = vadd.f32 %v2782, %v2870
  %v2872 = vpop.f32.mrb[0].mxu0
  %v2873 = vpop.f32.mrb[0].mxu0
  %v2874 = vadd.f32 %v2782, %v2873
  %v2875 = vpop.f32.mrb[0].mxu0
  %2876 = vmatprep.mubr.bf16.mxu0 0
  %2877 = vmatmul.mubr.bf16.gmra.mrb[0].mxu0 %v2806
  %v2878 = vpop.f32.mrb[0].mxu0
  %v2879 = vadd.f32 %v2782, %v2878
  %v2880 = vpop.f32.mrb[0].mxu0
  %v2881 = vpop.f32.mrb[0].mxu0
  %v2882 = vadd.f32 %v2782, %v2881
  %v2883 = vpop.f32.mrb[0].mxu0
  %2884 = vmatprep.mubr.bf16.mxu0 0
  %2885 = vmatmul.mubr.bf16.gmra.mrb[0].mxu0 %v2809
  %v2886 = vpop.f32.mrb[0].mxu0
  %v2887 = vadd.f32 %v2782, %v2886
  %v2888 = vpop.f32.mrb[0].mxu0
  %v2889 = vpop.f32.mrb[0].mxu0
  %v2890 = vadd.f32 %v2782, %v2889
  %v2891 = vpop.f32.mrb[0].mxu0
  %2892 = vmatprep.mubr.bf16.mxu0 0
  %2893 = vmatmul.mubr.bf16.gmra.mrb[0].mxu0 %v2812
  %v2894 = vpop.f32.mrb[0].mxu0
  %v2895 = vadd.f32 %v2782, %v2894
  %v2896 = vpop.f32.mrb[0].mxu0
  %v2897 = vpop.f32.mrb[0].mxu0
  %v2898 = vadd.f32 %v2782, %v2897
  %v2899 = vpop.f32.mrb[0].mxu0
  %2900 = vmatprep.mubr.bf16.mxu0 0
  %2901 = vmatmul.mubr.bf16.gmra.mrb[0].mxu0 %v2815
  %v2902 = vpop.f32.mrb[0].mxu0
  %v2903 = vadd.f32 %v2782, %v2902
  %v2904 = vpop.f32.mrb[0].mxu0
  %v2905 = vpop.f32.mrb[0].mxu0
  %v2906 = vadd.f32 %v2782, %v2905
  %v2907 = vpop.f32.mrb[0].mxu0
  %2908 = vmatprep.mubr.bf16.mxu0 0
  %2909 = vmatmul.mubr.bf16.gmra.mrb[0].mxu0 %v2818
  %v2910 = vpop.f32.mrb[0].mxu0
  %v2911 = vadd.f32 %v2782, %v2910
  %v2912 = vpop.f32.mrb[0].mxu0
  %v2913 = vpop.f32.mrb[0].mxu0
  %v2914 = vadd.f32 %v2782, %v2913
  %v2915 = vpop.f32.mrb[0].mxu0
  %2916 = vdwg.mxu0
  %v2917 = vadd.f32 %v2855, %v426
  %v2918 = vadd.f32 %v2858, %v427
  %v2919 = vadd.f32 %v2863, %v428
  %v2920 = vadd.f32 %v2866, %v429
  %v2921 = vadd.f32 %v2871, %v430
  %v2922 = vadd.f32 %v2874, %v431
  %v2923 = vadd.f32 %v2879, %v432
  %v2924 = vadd.f32 %v2882, %v433
  %v2925 = vadd.f32 %v2887, %v434
  %v2926 = vadd.f32 %v2890, %v435
  %v2927 = vadd.f32 %v2895, %v436
  %v2928 = vadd.f32 %v2898, %v437
  %v2929 = vadd.f32 %v2903, %v438
  %v2930 = vadd.f32 %v2906, %v439
  %v2931 = vadd.f32 %v2911, %v440
  %v2932 = vadd.f32 %v2914, %v441
  %v2933 = vld [vmem:[%s9] sm:$0x1]
  %v2934 = vld [vmem:[%s10] sm:$0x1]
  %v2935 = vsel %vm188, %v2917, 0.0
  %2936 = vadd.xlane.f32.xlu0 %v2935
  %v2937 = vpop.xlane.xlu0 %2936
  %v2938 = vsel %vm188, %v2918, 0.0
  %2939 = vadd.xlane.f32.xlu0 %v2938
  %v2940 = vpop.xlane.xlu0 %2939
  %v2941 = vsel %vm188, %v2919, 0.0
  %2942 = vadd.xlane.f32.xlu0 %v2941
  %v2943 = vpop.xlane.xlu0 %2942
  %v2944 = vsel %vm188, %v2920, 0.0
  %2945 = vadd.xlane.f32.xlu0 %v2944
  %v2946 = vpop.xlane.xlu0 %2945
  %v2947 = vsel %vm188, %v2921, 0.0
  %2948 = vadd.xlane.f32.xlu0 %v2947
  %v2949 = vpop.xlane.xlu0 %2948
  %v2950 = vsel %vm188, %v2922, 0.0
  %2951 = vadd.xlane.f32.xlu0 %v2950
  %v2952 = vpop.xlane.xlu0 %2951
  %v2953 = vsel %vm188, %v2923, 0.0
  %2954 = vadd.xlane.f32.xlu0 %v2953
  %v2955 = vpop.xlane.xlu0 %2954
  %v2956 = vsel %vm188, %v2924, 0.0
  %2957 = vadd.xlane.f32.xlu0 %v2956
  %v2958 = vpop.xlane.xlu0 %2957
  %v2959 = vsel %vm188, %v2925, 0.0
  %2960 = vadd.xlane.f32.xlu0 %v2959
  %v2961 = vpop.xlane.xlu0 %2960
  %v2962 = vsel %vm188, %v2926, 0.0
  %2963 = vadd.xlane.f32.xlu0 %v2962
  %v2964 = vpop.xlane.xlu0 %2963
  %v2965 = vsel %vm188, %v2927, 0.0
  %2966 = vadd.xlane.f32.xlu0 %v2965
  %v2967 = vpop.xlane.xlu0 %2966
  %v2968 = vsel %vm188, %v2928, 0.0
  %2969 = vadd.xlane.f32.xlu0 %v2968
  %v2970 = vpop.xlane.xlu0 %2969
  %v2971 = vsel %vm188, %v2929, 0.0
  %2972 = vadd.xlane.f32.xlu0 %v2971
  %v2973 = vpop.xlane.xlu0 %2972
  %v2974 = vsel %vm188, %v2930, 0.0
  %2975 = vadd.xlane.f32.xlu0 %v2974
  %v2976 = vpop.xlane.xlu0 %2975
  %v2977 = vsel %vm188, %v2931, 0.0
  %2978 = vadd.xlane.f32.xlu0 %v2977
  %v2979 = vpop.xlane.xlu0 %2978
  %v2980 = vsel %vm188, %v2932, 0.0
  %2981 = vadd.xlane.f32.xlu0 %v2980
  %v2982 = vpop.xlane.xlu0 %2981
  %v2983 = vmul.f32 %v2937, %v237
  %v2984 = vmul.f32 %v2940, %v237
  %v2985 = vmul.f32 %v2943, %v237
  %v2986 = vmul.f32 %v2946, %v237
  %v2987 = vmul.f32 %v2949, %v237
  %v2988 = vmul.f32 %v2952, %v237
  %v2989 = vmul.f32 %v2955, %v237
  %v2990 = vmul.f32 %v2958, %v237
  %v2991 = vmul.f32 %v2961, %v237
  %v2992 = vmul.f32 %v2964, %v237
  %v2993 = vmul.f32 %v2967, %v237
  %v2994 = vmul.f32 %v2970, %v237
  %v2995 = vmul.f32 %v2973, %v237
  %v2996 = vmul.f32 %v2976, %v237
  %v2997 = vmul.f32 %v2979, %v237
  %v2998 = vmul.f32 %v2982, %v237
  %v2999 = vsub.f32 %v2917, %v2983
  %v3000 = vsub.f32 %v2918, %v2984
  %v3001 = vsub.f32 %v2919, %v2985
  %v3002 = vsub.f32 %v2920, %v2986
  %v3003 = vsub.f32 %v2921, %v2987
  %v3004 = vsub.f32 %v2922, %v2988
  %v3005 = vsub.f32 %v2923, %v2989
  %v3006 = vsub.f32 %v2924, %v2990
  %v3007 = vsub.f32 %v2925, %v2991
  %v3008 = vsub.f32 %v2926, %v2992
  %v3009 = vsub.f32 %v2927, %v2993
  %v3010 = vsub.f32 %v2928, %v2994
  %v3011 = vsub.f32 %v2929, %v2995
  %v3012 = vsub.f32 %v2930, %v2996
  %v3013 = vsub.f32 %v2931, %v2997
  %v3014 = vsub.f32 %v2932, %v2998
  %v3015 = vmul.f32 %v2999, %v2999
  %v3016 = vmul.f32 %v3000, %v3000
  %v3017 = vmul.f32 %v3001, %v3001
  %v3018 = vmul.f32 %v3002, %v3002
  %v3019 = vmul.f32 %v3003, %v3003
  %v3020 = vmul.f32 %v3004, %v3004
  %v3021 = vmul.f32 %v3005, %v3005
  %v3022 = vmul.f32 %v3006, %v3006
  %v3023 = vmul.f32 %v3007, %v3007
  %v3024 = vmul.f32 %v3008, %v3008
  %v3025 = vmul.f32 %v3009, %v3009
  %v3026 = vmul.f32 %v3010, %v3010
  %v3027 = vmul.f32 %v3011, %v3011
  %v3028 = vmul.f32 %v3012, %v3012
  %v3029 = vmul.f32 %v3013, %v3013
  %v3030 = vmul.f32 %v3014, %v3014
  %v3031 = vsel %vm188, %v3015, 0.0
  %3032 = vadd.xlane.f32.xlu0 %v3031
  %v3033 = vpop.xlane.xlu0 %3032
  %v3034 = vsel %vm188, %v3016, 0.0
  %3035 = vadd.xlane.f32.xlu0 %v3034
  %v3036 = vpop.xlane.xlu0 %3035
  %v3037 = vsel %vm188, %v3017, 0.0
  %3038 = vadd.xlane.f32.xlu0 %v3037
  %v3039 = vpop.xlane.xlu0 %3038
  %v3040 = vsel %vm188, %v3018, 0.0
  %3041 = vadd.xlane.f32.xlu0 %v3040
  %v3042 = vpop.xlane.xlu0 %3041
  %v3043 = vsel %vm188, %v3019, 0.0
  %3044 = vadd.xlane.f32.xlu0 %v3043
  %v3045 = vpop.xlane.xlu0 %3044
  %v3046 = vsel %vm188, %v3020, 0.0
  %3047 = vadd.xlane.f32.xlu0 %v3046
  %v3048 = vpop.xlane.xlu0 %3047
  %v3049 = vsel %vm188, %v3021, 0.0
  %3050 = vadd.xlane.f32.xlu0 %v3049
  %v3051 = vpop.xlane.xlu0 %3050
  %v3052 = vsel %vm188, %v3022, 0.0
  %3053 = vadd.xlane.f32.xlu0 %v3052
  %v3054 = vpop.xlane.xlu0 %3053
  %v3055 = vsel %vm188, %v3023, 0.0
  %3056 = vadd.xlane.f32.xlu0 %v3055
  %v3057 = vpop.xlane.xlu0 %3056
  %v3058 = vsel %vm188, %v3024, 0.0
  %3059 = vadd.xlane.f32.xlu0 %v3058
  %v3060 = vpop.xlane.xlu0 %3059
  %v3061 = vsel %vm188, %v3025, 0.0
  %3062 = vadd.xlane.f32.xlu0 %v3061
  %v3063 = vpop.xlane.xlu0 %3062
  %v3064 = vsel %vm188, %v3026, 0.0
  %3065 = vadd.xlane.f32.xlu0 %v3064
  %v3066 = vpop.xlane.xlu0 %3065
  %v3067 = vsel %vm188, %v3027, 0.0
  %3068 = vadd.xlane.f32.xlu0 %v3067
  %v3069 = vpop.xlane.xlu0 %3068
  %v3070 = vsel %vm188, %v3028, 0.0
  %3071 = vadd.xlane.f32.xlu0 %v3070
  %v3072 = vpop.xlane.xlu0 %3071
  %v3073 = vsel %vm188, %v3029, 0.0
  %3074 = vadd.xlane.f32.xlu0 %v3073
  %v3075 = vpop.xlane.xlu0 %3074
  %v3076 = vsel %vm188, %v3030, 0.0
  %3077 = vadd.xlane.f32.xlu0 %v3076
  %v3078 = vpop.xlane.xlu0 %3077
  %v3079 = vmul.f32 %v3033, %v237
  %v3080 = vmul.f32 %v3036, %v237
  %v3081 = vmul.f32 %v3039, %v237
  %v3082 = vmul.f32 %v3042, %v237
  %v3083 = vmul.f32 %v3045, %v237
  %v3084 = vmul.f32 %v3048, %v237
  %v3085 = vmul.f32 %v3051, %v237
  %v3086 = vmul.f32 %v3054, %v237
  %v3087 = vmul.f32 %v3057, %v237
  %v3088 = vmul.f32 %v3060, %v237
  %v3089 = vmul.f32 %v3063, %v237
  %v3090 = vmul.f32 %v3066, %v237
  %v3091 = vmul.f32 %v3069, %v237
  %v3092 = vmul.f32 %v3072, %v237
  %v3093 = vmul.f32 %v3075, %v237
  %v3094 = vmul.f32 %v3078, %v237
  %v3095 = vadd.f32 %v3079, 1e-12
  %v3096 = vadd.f32 %v3080, 1e-12
  %v3097 = vadd.f32 %v3081, 1e-12
  %v3098 = vadd.f32 %v3082, 1e-12
  %v3099 = vadd.f32 %v3083, 1e-12
  %v3100 = vadd.f32 %v3084, 1e-12
  %v3101 = vadd.f32 %v3085, 1e-12
  %v3102 = vadd.f32 %v3086, 1e-12
  %v3103 = vadd.f32 %v3087, 1e-12
  %v3104 = vadd.f32 %v3088, 1e-12
  %v3105 = vadd.f32 %v3089, 1e-12
  %v3106 = vadd.f32 %v3090, 1e-12
  %v3107 = vadd.f32 %v3091, 1e-12
  %v3108 = vadd.f32 %v3092, 1e-12
  %v3109 = vadd.f32 %v3093, 1e-12
  %v3110 = vadd.f32 %v3094, 1e-12
  %v3111 = vrsqrt.pop %v3095
  %v3112 = vrsqrt.pop %v3096
  %v3113 = vrsqrt.pop %v3097
  %v3114 = vrsqrt.pop %v3098
  %v3115 = vrsqrt.pop %v3099
  %v3116 = vrsqrt.pop %v3100
  %v3117 = vrsqrt.pop %v3101
  %v3118 = vrsqrt.pop %v3102
  %v3119 = vrsqrt.pop %v3103
  %v3120 = vrsqrt.pop %v3104
  %v3121 = vrsqrt.pop %v3105
  %v3122 = vrsqrt.pop %v3106
  %v3123 = vrsqrt.pop %v3107
  %v3124 = vrsqrt.pop %v3108
  %v3125 = vrsqrt.pop %v3109
  %v3126 = vrsqrt.pop %v3110
  %v3127 = vmul.f32 %v2999, %v3111
  %v3128 = vmul.f32 %v3000, %v3112
  %v3129 = vmul.f32 %v3001, %v3113
  %v3130 = vmul.f32 %v3002, %v3114
  %v3131 = vmul.f32 %v3003, %v3115
  %v3132 = vmul.f32 %v3004, %v3116
  %v3133 = vmul.f32 %v3005, %v3117
  %v3134 = vmul.f32 %v3006, %v3118
  %v3135 = vmul.f32 %v3007, %v3119
  %v3136 = vmul.f32 %v3008, %v3120
  %v3137 = vmul.f32 %v3009, %v3121
  %v3138 = vmul.f32 %v3010, %v3122
  %v3139 = vmul.f32 %v3011, %v3123
  %v3140 = vmul.f32 %v3012, %v3124
  %v3141 = vmul.f32 %v3013, %v3125
  %v3142 = vmul.f32 %v3014, %v3126
  %v3144 = vlaneseq
  %v3145 = vshrl.u32 %v3144, 7
  %v3146 = vsub.s32 0, %v3145
  %v3147 = vrot.slane %v2933, %v3146
  %v3149 = vmul.f32 %v3127, %v3147
  %v3150 = vmul.f32 %v3128, %v3147
  %v3151 = vmul.f32 %v3129, %v3147
  %v3152 = vmul.f32 %v3130, %v3147
  %v3153 = vmul.f32 %v3131, %v3147
  %v3154 = vmul.f32 %v3132, %v3147
  %v3155 = vmul.f32 %v3133, %v3147
  %v3156 = vmul.f32 %v3134, %v3147
  %v3157 = vmul.f32 %v3135, %v3147
  %v3158 = vmul.f32 %v3136, %v3147
  %v3159 = vmul.f32 %v3137, %v3147
  %v3160 = vmul.f32 %v3138, %v3147
  %v3161 = vmul.f32 %v3139, %v3147
  %v3162 = vmul.f32 %v3140, %v3147
  %v3163 = vmul.f32 %v3141, %v3147
  %v3164 = vmul.f32 %v3142, %v3147
  %v3166 = vlaneseq
  %v3167 = vshrl.u32 %v3166, 7
  %v3168 = vsub.s32 0, %v3167
  %v3169 = vrot.slane %v2934, %v3168
  %v3171 = vadd.f32 %v3149, %v3169
  %v3172 = vadd.f32 %v3150, %v3169
  %v3173 = vadd.f32 %v3151, %v3169
  %v3174 = vadd.f32 %v3152, %v3169
  %v3175 = vadd.f32 %v3153, %v3169
  %v3176 = vadd.f32 %v3154, %v3169
  %v3177 = vadd.f32 %v3155, %v3169
  %v3178 = vadd.f32 %v3156, %v3169
  %v3179 = vadd.f32 %v3157, %v3169
  %v3180 = vadd.f32 %v3158, %v3169
  %v3181 = vadd.f32 %v3159, %v3169
  %v3182 = vadd.f32 %v3160, %v3169
  %v3183 = vadd.f32 %v3161, %v3169
  %v3184 = vadd.f32 %v3162, %v3169
  %v3185 = vadd.f32 %v3163, %v3169
  %v3186 = vadd.f32 %v3164, %v3169
  %v3187 = vpack.c.bf16 %v3172, %v3171
  %v3188 = vpack.c.bf16 %v3174, %v3173
  %v3189 = vpack.c.bf16 %v3176, %v3175
  %v3190 = vpack.c.bf16 %v3178, %v3177
  %v3191 = vpack.c.bf16 %v3180, %v3179
  %v3192 = vpack.c.bf16 %v3182, %v3181
  %v3193 = vpack.c.bf16 %v3184, %v3183
  %v3194 = vpack.c.bf16 %v3186, %v3185
  %v3195 = vld [vmem:[%s11] sm:$0xf]
  %v3196 = vld [vmem:[%s11 + $0x4] sm:$0xf]
  %v3197 = vld [vmem:[%s11 + $0x8] sm:$0xf]
  %v3198 = vld [vmem:[%s11 + $0xc] sm:$0xf]
  %v3199 = vld [vmem:[%s12] sm:$0x1]
  %v3201 = vlaneseq
  %v3202 = vshrl.u32 %v3201, 7
  %v3203 = vsub.s32 0, %v3202
  %v3204 = vrot.slane %v3199, %v3203
  %v3210 = vunpack.c.l.b16 %v3195
  %v3211 = vunpack.c.l.b16 %v3196
  %v3212 = vunpack.c.l.b16 %v3197
  %v3213 = vunpack.c.l.b16 %v3198
  %v3214 = vpack.c.b16 %v3211, %v3210
  %v3215 = vpack.c.b16 %v3213, %v3212
  %v3219 = vsel %vm188, %v3187, 0
  %v3222 = vsel %vm188, %v3188, 0
  %v3225 = vsel %vm188, %v3189, 0
  %v3228 = vsel %vm188, %v3190, 0
  %v3231 = vsel %vm188, %v3191, 0
  %v3234 = vsel %vm188, %v3192, 0
  %v3237 = vsel %vm188, %v3193, 0
  %v3240 = vsel %vm188, %v3194, 0
  %3242 = vmatprep.subr.bf16.mxu0 0
  %3243 = vmatpush1.bf16.msra.mxu0 %v3214
  %3244 = vmatprep.subr.bf16.mxu0 0
  %3245 = vmatpush1.bf16.msra.mxu0 %v3215
  %3246 = vmatprep.subr.bf16.mxu0 0
  %3247 = vmatpush1.bf16.msra.mxu0 0
  %3248 = vmatprep.subr.bf16.mxu0 0
  %3249 = vmatpush1.bf16.msra.mxu0 0
  %3250 = vmatprep.subr.bf16.mxu0 0
  %3251 = vmatpush1.bf16.msra.mxu0 0
  %3252 = vmatprep.subr.bf16.mxu0 0
  %3253 = vmatpush1.bf16.msra.mxu0 0
  %3254 = vmatprep.subr.bf16.mxu0 0
  %3255 = vmatpush1.bf16.msra.mxu0 0
  %3256 = vmatprep.subr.bf16.mxu0 0
  %3257 = vmatpush1.bf16.msra.mxu0 0
  %3258 = vmatprep.subr.bf16.mxu0 0
  %3259 = vmatpush1.bf16.msra.mxu0 0
  %3260 = vmatprep.subr.bf16.mxu0 0
  %3261 = vmatpush1.bf16.msra.mxu0 0
  %3262 = vmatprep.subr.bf16.mxu0 0
  %3263 = vmatpush1.bf16.msra.mxu0 0
  %3264 = vmatprep.subr.bf16.mxu0 0
  %3265 = vmatpush1.bf16.msra.mxu0 0
  %3266 = vmatprep.subr.bf16.mxu0 0
  %3267 = vmatpush1.bf16.msra.mxu0 0
  %3268 = vmatprep.subr.bf16.mxu0 0
  %3269 = vmatpush1.bf16.msra.mxu0 0
  %3270 = vmatprep.subr.bf16.mxu0 0
  %3271 = vmatpush1.bf16.msra.mxu0 0
  %3272 = vmatprep.subr.bf16.mxu0 0
  %3273 = vmatpush1.bf16.msra.mxu0 0
  %3274 = vmatprep.mubr.bf16.mxu0 0
  %3275 = vmatmul.mubr.bf16.gmra.mrb[0].mxu0 %v3219
  %v3276 = vpop.f32.mrb[0].mxu0
  %v3277 = vadd.f32 %v3204, %v3276
  %v3278 = vpop.f32.mrb[0].mxu0
  %v3279 = vpop.f32.mrb[0].mxu0
  %v3280 = vadd.f32 %v3204, %v3279
  %v3281 = vpop.f32.mrb[0].mxu0
  %3282 = vmatprep.mubr.bf16.mxu0 0
  %3283 = vmatmul.mubr.bf16.gmra.mrb[0].mxu0 %v3222
  %v3284 = vpop.f32.mrb[0].mxu0
  %v3285 = vadd.f32 %v3204, %v3284
  %v3286 = vpop.f32.mrb[0].mxu0
  %v3287 = vpop.f32.mrb[0].mxu0
  %v3288 = vadd.f32 %v3204, %v3287
  %v3289 = vpop.f32.mrb[0].mxu0
  %3290 = vmatprep.mubr.bf16.mxu0 0
  %3291 = vmatmul.mubr.bf16.gmra.mrb[0].mxu0 %v3225
  %v3292 = vpop.f32.mrb[0].mxu0
  %v3293 = vadd.f32 %v3204, %v3292
  %v3294 = vpop.f32.mrb[0].mxu0
  %v3295 = vpop.f32.mrb[0].mxu0
  %v3296 = vadd.f32 %v3204, %v3295
  %v3297 = vpop.f32.mrb[0].mxu0
  %3298 = vmatprep.mubr.bf16.mxu0 0
  %3299 = vmatmul.mubr.bf16.gmra.mrb[0].mxu0 %v3228
  %v3300 = vpop.f32.mrb[0].mxu0
  %v3301 = vadd.f32 %v3204, %v3300
  %v3302 = vpop.f32.mrb[0].mxu0
  %v3303 = vpop.f32.mrb[0].mxu0
  %v3304 = vadd.f32 %v3204, %v3303
  %v3305 = vpop.f32.mrb[0].mxu0
  %3306 = vmatprep.mubr.bf16.mxu0 0
  %3307 = vmatmul.mubr.bf16.gmra.mrb[0].mxu0 %v3231
  %v3308 = vpop.f32.mrb[0].mxu0
  %v3309 = vadd.f32 %v3204, %v3308
  %v3310 = vpop.f32.mrb[0].mxu0
  %v3311 = vpop.f32.mrb[0].mxu0
  %v3312 = vadd.f32 %v3204, %v3311
  %v3313 = vpop.f32.mrb[0].mxu0
  %3314 = vmatprep.mubr.bf16.mxu0 0
  %3315 = vmatmul.mubr.bf16.gmra.mrb[0].mxu0 %v3234
  %v3316 = vpop.f32.mrb[0].mxu0
  %v3317 = vadd.f32 %v3204, %v3316
  %v3318 = vpop.f32.mrb[0].mxu0
  %v3319 = vpop.f32.mrb[0].mxu0
  %v3320 = vadd.f32 %v3204, %v3319
  %v3321 = vpop.f32.mrb[0].mxu0
  %3322 = vmatprep.mubr.bf16.mxu0 0
  %3323 = vmatmul.mubr.bf16.gmra.mrb[0].mxu0 %v3237
  %v3324 = vpop.f32.mrb[0].mxu0
  %v3325 = vadd.f32 %v3204, %v3324
  %v3326 = vpop.f32.mrb[0].mxu0
  %v3327 = vpop.f32.mrb[0].mxu0
  %v3328 = vadd.f32 %v3204, %v3327
  %v3329 = vpop.f32.mrb[0].mxu0
  %3330 = vmatprep.mubr.bf16.mxu0 0
  %3331 = vmatmul.mubr.bf16.gmra.mrb[0].mxu0 %v3240
  %v3332 = vpop.f32.mrb[0].mxu0
  %v3333 = vadd.f32 %v3204, %v3332
  %v3334 = vpop.f32.mrb[0].mxu0
  %v3335 = vpop.f32.mrb[0].mxu0
  %v3336 = vadd.f32 %v3204, %v3335
  %v3337 = vpop.f32.mrb[0].mxu0
  %3338 = vdwg.mxu0
  %v3339 = vmul.f32 %v3277, 0.5
  %v3340 = vmul.f32 %v3280, 0.5
  %v3341 = vmul.f32 %v3285, 0.5
  %v3342 = vmul.f32 %v3288, 0.5
  %v3343 = vmul.f32 %v3293, 0.5
  %v3344 = vmul.f32 %v3296, 0.5
  %v3345 = vmul.f32 %v3301, 0.5
  %v3346 = vmul.f32 %v3304, 0.5
  %v3347 = vmul.f32 %v3309, 0.5
  %v3348 = vmul.f32 %v3312, 0.5
  %v3349 = vmul.f32 %v3317, 0.5
  %v3350 = vmul.f32 %v3320, 0.5
  %v3351 = vmul.f32 %v3325, 0.5
  %v3352 = vmul.f32 %v3328, 0.5
  %v3353 = vmul.f32 %v3333, 0.5
  %v3354 = vmul.f32 %v3336, 0.5
  %v3355 = vmul.f32 %v3277, 0.044715
  %v3356 = vmul.f32 %v3280, 0.044715
  %v3357 = vmul.f32 %v3285, 0.044715
  %v3358 = vmul.f32 %v3288, 0.044715
  %v3359 = vmul.f32 %v3293, 0.044715
  %v3360 = vmul.f32 %v3296, 0.044715
  %v3361 = vmul.f32 %v3301, 0.044715
  %v3362 = vmul.f32 %v3304, 0.044715
  %v3363 = vmul.f32 %v3309, 0.044715
  %v3364 = vmul.f32 %v3312, 0.044715
  %v3365 = vmul.f32 %v3317, 0.044715
  %v3366 = vmul.f32 %v3320, 0.044715
  %v3367 = vmul.f32 %v3325, 0.044715
  %v3368 = vmul.f32 %v3328, 0.044715
  %v3369 = vmul.f32 %v3333, 0.044715
  %v3370 = vmul.f32 %v3336, 0.044715
  %v3371 = vmul.f32 %v3355, %v3277
  %v3372 = vmul.f32 %v3356, %v3280
  %v3373 = vmul.f32 %v3357, %v3285
  %v3374 = vmul.f32 %v3358, %v3288
  %v3375 = vmul.f32 %v3359, %v3293
  %v3376 = vmul.f32 %v3360, %v3296
  %v3377 = vmul.f32 %v3361, %v3301
  %v3378 = vmul.f32 %v3362, %v3304
  %v3379 = vmul.f32 %v3363, %v3309
  %v3380 = vmul.f32 %v3364, %v3312
  %v3381 = vmul.f32 %v3365, %v3317
  %v3382 = vmul.f32 %v3366, %v3320
  %v3383 = vmul.f32 %v3367, %v3325
  %v3384 = vmul.f32 %v3368, %v3328
  %v3385 = vmul.f32 %v3369, %v3333
  %v3386 = vmul.f32 %v3370, %v3336
  %v3387 = vmul.f32 %v3371, %v3277
  %v3388 = vmul.f32 %v3372, %v3280
  %v3389 = vmul.f32 %v3373, %v3285
  %v3390 = vmul.f32 %v3374, %v3288
  %v3391 = vmul.f32 %v3375, %v3293
  %v3392 = vmul.f32 %v3376, %v3296
  %v3393 = vmul.f32 %v3377, %v3301
  %v3394 = vmul.f32 %v3378, %v3304
  %v3395 = vmul.f32 %v3379, %v3309
  %v3396 = vmul.f32 %v3380, %v3312
  %v3397 = vmul.f32 %v3381, %v3317
  %v3398 = vmul.f32 %v3382, %v3320
  %v3399 = vmul.f32 %v3383, %v3325
  %v3400 = vmul.f32 %v3384, %v3328
  %v3401 = vmul.f32 %v3385, %v3333
  %v3402 = vmul.f32 %v3386, %v3336
  %v3403 = vadd.f32 %v3277, %v3387
  %v3404 = vadd.f32 %v3280, %v3388
  %v3405 = vadd.f32 %v3285, %v3389
  %v3406 = vadd.f32 %v3288, %v3390
  %v3407 = vadd.f32 %v3293, %v3391
  %v3408 = vadd.f32 %v3296, %v3392
  %v3409 = vadd.f32 %v3301, %v3393
  %v3410 = vadd.f32 %v3304, %v3394
  %v3411 = vadd.f32 %v3309, %v3395
  %v3412 = vadd.f32 %v3312, %v3396
  %v3413 = vadd.f32 %v3317, %v3397
  %v3414 = vadd.f32 %v3320, %v3398
  %v3415 = vadd.f32 %v3325, %v3399
  %v3416 = vadd.f32 %v3328, %v3400
  %v3417 = vadd.f32 %v3333, %v3401
  %v3418 = vadd.f32 %v3336, %v3402
  %v3419 = vmul.f32 %v3403, 0.7978846
  %v3420 = vmul.f32 %v3404, 0.7978846
  %v3421 = vmul.f32 %v3405, 0.7978846
  %v3422 = vmul.f32 %v3406, 0.7978846
  %v3423 = vmul.f32 %v3407, 0.7978846
  %v3424 = vmul.f32 %v3408, 0.7978846
  %v3425 = vmul.f32 %v3409, 0.7978846
  %v3426 = vmul.f32 %v3410, 0.7978846
  %v3427 = vmul.f32 %v3411, 0.7978846
  %v3428 = vmul.f32 %v3412, 0.7978846
  %v3429 = vmul.f32 %v3413, 0.7978846
  %v3430 = vmul.f32 %v3414, 0.7978846
  %v3431 = vmul.f32 %v3415, 0.7978846
  %v3432 = vmul.f32 %v3416, 0.7978846
  %v3433 = vmul.f32 %v3417, 0.7978846
  %v3434 = vmul.f32 %v3418, 0.7978846
  %v3435 = vtanh.pop %v3419
  %v3436 = vtanh.pop %v3420
  %v3437 = vtanh.pop %v3421
  %v3438 = vtanh.pop %v3422
  %v3439 = vtanh.pop %v3423
  %v3440 = vtanh.pop %v3424
  %v3441 = vtanh.pop %v3425
  %v3442 = vtanh.pop %v3426
  %v3443 = vtanh.pop %v3427
  %v3444 = vtanh.pop %v3428
  %v3445 = vtanh.pop %v3429
  %v3446 = vtanh.pop %v3430
  %v3447 = vtanh.pop %v3431
  %v3448 = vtanh.pop %v3432
  %v3449 = vtanh.pop %v3433
  %v3450 = vtanh.pop %v3434
  %v3451 = vadd.f32 %v3435, 1.0
  %v3452 = vadd.f32 %v3436, 1.0
  %v3453 = vadd.f32 %v3437, 1.0
  %v3454 = vadd.f32 %v3438, 1.0
  %v3455 = vadd.f32 %v3439, 1.0
  %v3456 = vadd.f32 %v3440, 1.0
  %v3457 = vadd.f32 %v3441, 1.0
  %v3458 = vadd.f32 %v3442, 1.0
  %v3459 = vadd.f32 %v3443, 1.0
  %v3460 = vadd.f32 %v3444, 1.0
  %v3461 = vadd.f32 %v3445, 1.0
  %v3462 = vadd.f32 %v3446, 1.0
  %v3463 = vadd.f32 %v3447, 1.0
  %v3464 = vadd.f32 %v3448, 1.0
  %v3465 = vadd.f32 %v3449, 1.0
  %v3466 = vadd.f32 %v3450, 1.0
  %v3467 = vmul.f32 %v3339, %v3451
  %v3468 = vmul.f32 %v3340, %v3452
  %v3469 = vmul.f32 %v3341, %v3453
  %v3470 = vmul.f32 %v3342, %v3454
  %v3471 = vmul.f32 %v3343, %v3455
  %v3472 = vmul.f32 %v3344, %v3456
  %v3473 = vmul.f32 %v3345, %v3457
  %v3474 = vmul.f32 %v3346, %v3458
  %v3475 = vmul.f32 %v3347, %v3459
  %v3476 = vmul.f32 %v3348, %v3460
  %v3477 = vmul.f32 %v3349, %v3461
  %v3478 = vmul.f32 %v3350, %v3462
  %v3479 = vmul.f32 %v3351, %v3463
  %v3480 = vmul.f32 %v3352, %v3464
  %v3481 = vmul.f32 %v3353, %v3465
  %v3482 = vmul.f32 %v3354, %v3466
  %v3483 = vpack.c.bf16 %v3468, %v3467
  %v3484 = vpack.c.bf16 %v3470, %v3469
  %v3485 = vpack.c.bf16 %v3472, %v3471
  %v3486 = vpack.c.bf16 %v3474, %v3473
  %v3487 = vpack.c.bf16 %v3476, %v3475
  %v3488 = vpack.c.bf16 %v3478, %v3477
  %v3489 = vpack.c.bf16 %v3480, %v3479
  %v3490 = vpack.c.bf16 %v3482, %v3481
  %v3491 = vld [vmem:[%s13] sm:$0xf]
  %v3492 = vld [vmem:[%s13 + $0x4] sm:$0xf]
  %v3493 = vld [vmem:[%s13 + $0x8] sm:$0xf]
  %v3494 = vld [vmem:[%s13 + $0xc] sm:$0xf]
  %v3495 = vld [vmem:[%s13 + $0x10] sm:$0xf]
  %v3496 = vld [vmem:[%s13 + $0x14] sm:$0xf]
  %v3497 = vld [vmem:[%s13 + $0x18] sm:$0xf]
  %v3498 = vld [vmem:[%s13 + $0x1c] sm:$0xf]
  %v3499 = vld [vmem:[%s14] sm:$0x1]
  %v3501 = vlaneseq
  %v3502 = vshrl.u32 %v3501, 7
  %v3503 = vsub.s32 0, %v3502
  %v3504 = vrot.slane %v3499, %v3503
  %v3514 = vunpack.c.l.b16 %v3491
  %v3515 = vunpack.c.l.b16 %v3492
  %v3516 = vunpack.c.l.b16 %v3493
  %v3517 = vunpack.c.l.b16 %v3494
  %v3518 = vunpack.c.l.b16 %v3495
  %v3519 = vunpack.c.l.b16 %v3496
  %v3520 = vunpack.c.l.b16 %v3497
  %v3521 = vunpack.c.l.b16 %v3498
  %v3522 = vpack.c.b16 %v3515, %v3514
  %v3523 = vpack.c.b16 %v3517, %v3516
  %v3524 = vpack.c.b16 %v3519, %v3518
  %v3525 = vpack.c.b16 %v3521, %v3520
  %vm3530 = vcmask 523264
  %v3532 = vsel %vm3530, %v3483, 0
  %v3535 = vsel %vm3530, %v3484, 0
  %v3538 = vsel %vm3530, %v3485, 0
  %v3541 = vsel %vm3530, %v3486, 0
  %v3544 = vsel %vm3530, %v3487, 0
  %v3547 = vsel %vm3530, %v3488, 0
  %v3550 = vsel %vm3530, %v3489, 0
  %v3553 = vsel %vm3530, %v3490, 0
  %3555 = vmatprep.subr.bf16.mxu0 0
  %3556 = vmatpush1.bf16.msra.mxu0 %v3522
  %3557 = vmatprep.subr.bf16.mxu0 0
  %3558 = vmatpush1.bf16.msra.mxu0 %v3523
  %3559 = vmatprep.subr.bf16.mxu0 0
  %3560 = vmatpush1.bf16.msra.mxu0 %v3524
  %3561 = vmatprep.subr.bf16.mxu0 0
  %3562 = vmatpush1.bf16.msra.mxu0 %v3525
  %3563 = vmatprep.subr.bf16.mxu0 0
  %3564 = vmatpush1.bf16.msra.mxu0 0
  %3565 = vmatprep.subr.bf16.mxu0 0
  %3566 = vmatpush1.bf16.msra.mxu0 0
  %3567 = vmatprep.subr.bf16.mxu0 0
  %3568 = vmatpush1.bf16.msra.mxu0 0
  %3569 = vmatprep.subr.bf16.mxu0 0
  %3570 = vmatpush1.bf16.msra.mxu0 0
  %3571 = vmatprep.subr.bf16.mxu0 0
  %3572 = vmatpush1.bf16.msra.mxu0 0
  %3573 = vmatprep.subr.bf16.mxu0 0
  %3574 = vmatpush1.bf16.msra.mxu0 0
  %3575 = vmatprep.subr.bf16.mxu0 0
  %3576 = vmatpush1.bf16.msra.mxu0 0
  %3577 = vmatprep.subr.bf16.mxu0 0
  %3578 = vmatpush1.bf16.msra.mxu0 0
  %3579 = vmatprep.subr.bf16.mxu0 0
  %3580 = vmatpush1.bf16.msra.mxu0 0
  %3581 = vmatprep.subr.bf16.mxu0 0
  %3582 = vmatpush1.bf16.msra.mxu0 0
  %3583 = vmatprep.subr.bf16.mxu0 0
  %3584 = vmatpush1.bf16.msra.mxu0 0
  %3585 = vmatprep.subr.bf16.mxu0 0
  %3586 = vmatpush1.bf16.msra.mxu0 0
  %3587 = vmatprep.mubr.bf16.mxu0 0
  %3588 = vmatmul.mubr.bf16.gmra.mrb[0].mxu0 %v3532
  %v3589 = vpop.f32.mrb[0].mxu0
  %v3590 = vadd.f32 %v3504, %v3589
  %v3591 = vpop.f32.mrb[0].mxu0
  %v3592 = vpop.f32.mrb[0].mxu0
  %v3593 = vadd.f32 %v3504, %v3592
  %v3594 = vpop.f32.mrb[0].mxu0
  %3595 = vmatprep.mubr.bf16.mxu0 0
  %3596 = vmatmul.mubr.bf16.gmra.mrb[0].mxu0 %v3535
  %v3597 = vpop.f32.mrb[0].mxu0
  %v3598 = vadd.f32 %v3504, %v3597
  %v3599 = vpop.f32.mrb[0].mxu0
  %v3600 = vpop.f32.mrb[0].mxu0
  %v3601 = vadd.f32 %v3504, %v3600
  %v3602 = vpop.f32.mrb[0].mxu0
  %3603 = vmatprep.mubr.bf16.mxu0 0
  %3604 = vmatmul.mubr.bf16.gmra.mrb[0].mxu0 %v3538
  %v3605 = vpop.f32.mrb[0].mxu0
  %v3606 = vadd.f32 %v3504, %v3605
  %v3607 = vpop.f32.mrb[0].mxu0
  %v3608 = vpop.f32.mrb[0].mxu0
  %v3609 = vadd.f32 %v3504, %v3608
  %v3610 = vpop.f32.mrb[0].mxu0
  %3611 = vmatprep.mubr.bf16.mxu0 0
  %3612 = vmatmul.mubr.bf16.gmra.mrb[0].mxu0 %v3541
  %v3613 = vpop.f32.mrb[0].mxu0
  %v3614 = vadd.f32 %v3504, %v3613
  %v3615 = vpop.f32.mrb[0].mxu0
  %v3616 = vpop.f32.mrb[0].mxu0
  %v3617 = vadd.f32 %v3504, %v3616
  %v3618 = vpop.f32.mrb[0].mxu0
  %3619 = vmatprep.mubr.bf16.mxu0 0
  %3620 = vmatmul.mubr.bf16.gmra.mrb[0].mxu0 %v3544
  %v3621 = vpop.f32.mrb[0].mxu0
  %v3622 = vadd.f32 %v3504, %v3621
  %v3623 = vpop.f32.mrb[0].mxu0
  %v3624 = vpop.f32.mrb[0].mxu0
  %v3625 = vadd.f32 %v3504, %v3624
  %v3626 = vpop.f32.mrb[0].mxu0
  %3627 = vmatprep.mubr.bf16.mxu0 0
  %3628 = vmatmul.mubr.bf16.gmra.mrb[0].mxu0 %v3547
  %v3629 = vpop.f32.mrb[0].mxu0
  %v3630 = vadd.f32 %v3504, %v3629
  %v3631 = vpop.f32.mrb[0].mxu0
  %v3632 = vpop.f32.mrb[0].mxu0
  %v3633 = vadd.f32 %v3504, %v3632
  %v3634 = vpop.f32.mrb[0].mxu0
  %3635 = vmatprep.mubr.bf16.mxu0 0
  %3636 = vmatmul.mubr.bf16.gmra.mrb[0].mxu0 %v3550
  %v3637 = vpop.f32.mrb[0].mxu0
  %v3638 = vadd.f32 %v3504, %v3637
  %v3639 = vpop.f32.mrb[0].mxu0
  %v3640 = vpop.f32.mrb[0].mxu0
  %v3641 = vadd.f32 %v3504, %v3640
  %v3642 = vpop.f32.mrb[0].mxu0
  %3643 = vmatprep.mubr.bf16.mxu0 0
  %3644 = vmatmul.mubr.bf16.gmra.mrb[0].mxu0 %v3553
  %v3645 = vpop.f32.mrb[0].mxu0
  %v3646 = vadd.f32 %v3504, %v3645
  %v3647 = vpop.f32.mrb[0].mxu0
  %v3648 = vpop.f32.mrb[0].mxu0
  %v3649 = vadd.f32 %v3504, %v3648
  %v3650 = vpop.f32.mrb[0].mxu0
  %3651 = vdwg.mxu0
  %v3652 = vadd.f32 %v3590, %v3171
  %v3653 = vadd.f32 %v3593, %v3172
  %v3654 = vadd.f32 %v3598, %v3173
  %v3655 = vadd.f32 %v3601, %v3174
  %v3656 = vadd.f32 %v3606, %v3175
  %v3657 = vadd.f32 %v3609, %v3176
  %v3658 = vadd.f32 %v3614, %v3177
  %v3659 = vadd.f32 %v3617, %v3178
  %v3660 = vadd.f32 %v3622, %v3179
  %v3661 = vadd.f32 %v3625, %v3180
  %v3662 = vadd.f32 %v3630, %v3181
  %v3663 = vadd.f32 %v3633, %v3182
  %v3664 = vadd.f32 %v3638, %v3183
  %v3665 = vadd.f32 %v3641, %v3184
  %v3666 = vadd.f32 %v3646, %v3185
  %v3667 = vadd.f32 %v3649, %v3186
  %v3668 = vld [vmem:[%s15] sm:$0x1]
  %v3669 = vld [vmem:[%s16] sm:$0x1]
  %v3670 = vsel %vm188, %v3652, 0.0
  %3671 = vadd.xlane.f32.xlu0 %v3670
  %v3672 = vpop.xlane.xlu0 %3671
  %v3673 = vsel %vm188, %v3653, 0.0
  %3674 = vadd.xlane.f32.xlu0 %v3673
  %v3675 = vpop.xlane.xlu0 %3674
  %v3676 = vsel %vm188, %v3654, 0.0
  %3677 = vadd.xlane.f32.xlu0 %v3676
  %v3678 = vpop.xlane.xlu0 %3677
  %v3679 = vsel %vm188, %v3655, 0.0
  %3680 = vadd.xlane.f32.xlu0 %v3679
  %v3681 = vpop.xlane.xlu0 %3680
  %v3682 = vsel %vm188, %v3656, 0.0
  %3683 = vadd.xlane.f32.xlu0 %v3682
  %v3684 = vpop.xlane.xlu0 %3683
  %v3685 = vsel %vm188, %v3657, 0.0
  %3686 = vadd.xlane.f32.xlu0 %v3685
  %v3687 = vpop.xlane.xlu0 %3686
  %v3688 = vsel %vm188, %v3658, 0.0
  %3689 = vadd.xlane.f32.xlu0 %v3688
  %v3690 = vpop.xlane.xlu0 %3689
  %v3691 = vsel %vm188, %v3659, 0.0
  %3692 = vadd.xlane.f32.xlu0 %v3691
  %v3693 = vpop.xlane.xlu0 %3692
  %v3694 = vsel %vm188, %v3660, 0.0
  %3695 = vadd.xlane.f32.xlu0 %v3694
  %v3696 = vpop.xlane.xlu0 %3695
  %v3697 = vsel %vm188, %v3661, 0.0
  %3698 = vadd.xlane.f32.xlu0 %v3697
  %v3699 = vpop.xlane.xlu0 %3698
  %v3700 = vsel %vm188, %v3662, 0.0
  %3701 = vadd.xlane.f32.xlu0 %v3700
  %v3702 = vpop.xlane.xlu0 %3701
  %v3703 = vsel %vm188, %v3663, 0.0
  %3704 = vadd.xlane.f32.xlu0 %v3703
  %v3705 = vpop.xlane.xlu0 %3704
  %v3706 = vsel %vm188, %v3664, 0.0
  %3707 = vadd.xlane.f32.xlu0 %v3706
  %v3708 = vpop.xlane.xlu0 %3707
  %v3709 = vsel %vm188, %v3665, 0.0
  %3710 = vadd.xlane.f32.xlu0 %v3709
  %v3711 = vpop.xlane.xlu0 %3710
  %v3712 = vsel %vm188, %v3666, 0.0
  %3713 = vadd.xlane.f32.xlu0 %v3712
  %v3714 = vpop.xlane.xlu0 %3713
  %v3715 = vsel %vm188, %v3667, 0.0
  %3716 = vadd.xlane.f32.xlu0 %v3715
  %v3717 = vpop.xlane.xlu0 %3716
  %v3718 = vmul.f32 %v3672, %v237
  %v3719 = vmul.f32 %v3675, %v237
  %v3720 = vmul.f32 %v3678, %v237
  %v3721 = vmul.f32 %v3681, %v237
  %v3722 = vmul.f32 %v3684, %v237
  %v3723 = vmul.f32 %v3687, %v237
  %v3724 = vmul.f32 %v3690, %v237
  %v3725 = vmul.f32 %v3693, %v237
  %v3726 = vmul.f32 %v3696, %v237
  %v3727 = vmul.f32 %v3699, %v237
  %v3728 = vmul.f32 %v3702, %v237
  %v3729 = vmul.f32 %v3705, %v237
  %v3730 = vmul.f32 %v3708, %v237
  %v3731 = vmul.f32 %v3711, %v237
  %v3732 = vmul.f32 %v3714, %v237
  %v3733 = vmul.f32 %v3717, %v237
  %v3734 = vsub.f32 %v3652, %v3718
  %v3735 = vsub.f32 %v3653, %v3719
  %v3736 = vsub.f32 %v3654, %v3720
  %v3737 = vsub.f32 %v3655, %v3721
  %v3738 = vsub.f32 %v3656, %v3722
  %v3739 = vsub.f32 %v3657, %v3723
  %v3740 = vsub.f32 %v3658, %v3724
  %v3741 = vsub.f32 %v3659, %v3725
  %v3742 = vsub.f32 %v3660, %v3726
  %v3743 = vsub.f32 %v3661, %v3727
  %v3744 = vsub.f32 %v3662, %v3728
  %v3745 = vsub.f32 %v3663, %v3729
  %v3746 = vsub.f32 %v3664, %v3730
  %v3747 = vsub.f32 %v3665, %v3731
  %v3748 = vsub.f32 %v3666, %v3732
  %v3749 = vsub.f32 %v3667, %v3733
  %v3750 = vmul.f32 %v3734, %v3734
  %v3751 = vmul.f32 %v3735, %v3735
  %v3752 = vmul.f32 %v3736, %v3736
  %v3753 = vmul.f32 %v3737, %v3737
  %v3754 = vmul.f32 %v3738, %v3738
  %v3755 = vmul.f32 %v3739, %v3739
  %v3756 = vmul.f32 %v3740, %v3740
  %v3757 = vmul.f32 %v3741, %v3741
  %v3758 = vmul.f32 %v3742, %v3742
  %v3759 = vmul.f32 %v3743, %v3743
  %v3760 = vmul.f32 %v3744, %v3744
  %v3761 = vmul.f32 %v3745, %v3745
  %v3762 = vmul.f32 %v3746, %v3746
  %v3763 = vmul.f32 %v3747, %v3747
  %v3764 = vmul.f32 %v3748, %v3748
  %v3765 = vmul.f32 %v3749, %v3749
  %v3766 = vsel %vm188, %v3750, 0.0
  %3767 = vadd.xlane.f32.xlu0 %v3766
  %v3768 = vpop.xlane.xlu0 %3767
  %v3769 = vsel %vm188, %v3751, 0.0
  %3770 = vadd.xlane.f32.xlu0 %v3769
  %v3771 = vpop.xlane.xlu0 %3770
  %v3772 = vsel %vm188, %v3752, 0.0
  %3773 = vadd.xlane.f32.xlu0 %v3772
  %v3774 = vpop.xlane.xlu0 %3773
  %v3775 = vsel %vm188, %v3753, 0.0
  %3776 = vadd.xlane.f32.xlu0 %v3775
  %v3777 = vpop.xlane.xlu0 %3776
  %v3778 = vsel %vm188, %v3754, 0.0
  %3779 = vadd.xlane.f32.xlu0 %v3778
  %v3780 = vpop.xlane.xlu0 %3779
  %v3781 = vsel %vm188, %v3755, 0.0
  %3782 = vadd.xlane.f32.xlu0 %v3781
  %v3783 = vpop.xlane.xlu0 %3782
  %v3784 = vsel %vm188, %v3756, 0.0
  %3785 = vadd.xlane.f32.xlu0 %v3784
  %v3786 = vpop.xlane.xlu0 %3785
  %v3787 = vsel %vm188, %v3757, 0.0
  %3788 = vadd.xlane.f32.xlu0 %v3787
  %v3789 = vpop.xlane.xlu0 %3788
  %v3790 = vsel %vm188, %v3758, 0.0
  %3791 = vadd.xlane.f32.xlu0 %v3790
  %v3792 = vpop.xlane.xlu0 %3791
  %v3793 = vsel %vm188, %v3759, 0.0
  %3794 = vadd.xlane.f32.xlu0 %v3793
  %v3795 = vpop.xlane.xlu0 %3794
  %v3796 = vsel %vm188, %v3760, 0.0
  %3797 = vadd.xlane.f32.xlu0 %v3796
  %v3798 = vpop.xlane.xlu0 %3797
  %v3799 = vsel %vm188, %v3761, 0.0
  %3800 = vadd.xlane.f32.xlu0 %v3799
  %v3801 = vpop.xlane.xlu0 %3800
  %v3802 = vsel %vm188, %v3762, 0.0
  %3803 = vadd.xlane.f32.xlu0 %v3802
  %v3804 = vpop.xlane.xlu0 %3803
  %v3805 = vsel %vm188, %v3763, 0.0
  %3806 = vadd.xlane.f32.xlu0 %v3805
  %v3807 = vpop.xlane.xlu0 %3806
  %v3808 = vsel %vm188, %v3764, 0.0
  %3809 = vadd.xlane.f32.xlu0 %v3808
  %v3810 = vpop.xlane.xlu0 %3809
  %v3811 = vsel %vm188, %v3765, 0.0
  %3812 = vadd.xlane.f32.xlu0 %v3811
  %v3813 = vpop.xlane.xlu0 %3812
  %v3814 = vmul.f32 %v3768, %v237
  %v3815 = vmul.f32 %v3771, %v237
  %v3816 = vmul.f32 %v3774, %v237
  %v3817 = vmul.f32 %v3777, %v237
  %v3818 = vmul.f32 %v3780, %v237
  %v3819 = vmul.f32 %v3783, %v237
  %v3820 = vmul.f32 %v3786, %v237
  %v3821 = vmul.f32 %v3789, %v237
  %v3822 = vmul.f32 %v3792, %v237
  %v3823 = vmul.f32 %v3795, %v237
  %v3824 = vmul.f32 %v3798, %v237
  %v3825 = vmul.f32 %v3801, %v237
  %v3826 = vmul.f32 %v3804, %v237
  %v3827 = vmul.f32 %v3807, %v237
  %v3828 = vmul.f32 %v3810, %v237
  %v3829 = vmul.f32 %v3813, %v237
  %v3830 = vadd.f32 %v3814, 1e-12
  %v3831 = vadd.f32 %v3815, 1e-12
  %v3832 = vadd.f32 %v3816, 1e-12
  %v3833 = vadd.f32 %v3817, 1e-12
  %v3834 = vadd.f32 %v3818, 1e-12
  %v3835 = vadd.f32 %v3819, 1e-12
  %v3836 = vadd.f32 %v3820, 1e-12
  %v3837 = vadd.f32 %v3821, 1e-12
  %v3838 = vadd.f32 %v3822, 1e-12
  %v3839 = vadd.f32 %v3823, 1e-12
  %v3840 = vadd.f32 %v3824, 1e-12
  %v3841 = vadd.f32 %v3825, 1e-12
  %v3842 = vadd.f32 %v3826, 1e-12
  %v3843 = vadd.f32 %v3827, 1e-12
  %v3844 = vadd.f32 %v3828, 1e-12
  %v3845 = vadd.f32 %v3829, 1e-12
  %v3846 = vrsqrt.pop %v3830
  %v3847 = vrsqrt.pop %v3831
  %v3848 = vrsqrt.pop %v3832
  %v3849 = vrsqrt.pop %v3833
  %v3850 = vrsqrt.pop %v3834
  %v3851 = vrsqrt.pop %v3835
  %v3852 = vrsqrt.pop %v3836
  %v3853 = vrsqrt.pop %v3837
  %v3854 = vrsqrt.pop %v3838
  %v3855 = vrsqrt.pop %v3839
  %v3856 = vrsqrt.pop %v3840
  %v3857 = vrsqrt.pop %v3841
  %v3858 = vrsqrt.pop %v3842
  %v3859 = vrsqrt.pop %v3843
  %v3860 = vrsqrt.pop %v3844
  %v3861 = vrsqrt.pop %v3845
  %v3862 = vmul.f32 %v3734, %v3846
  %v3863 = vmul.f32 %v3735, %v3847
  %v3864 = vmul.f32 %v3736, %v3848
  %v3865 = vmul.f32 %v3737, %v3849
  %v3866 = vmul.f32 %v3738, %v3850
  %v3867 = vmul.f32 %v3739, %v3851
  %v3868 = vmul.f32 %v3740, %v3852
  %v3869 = vmul.f32 %v3741, %v3853
  %v3870 = vmul.f32 %v3742, %v3854
  %v3871 = vmul.f32 %v3743, %v3855
  %v3872 = vmul.f32 %v3744, %v3856
  %v3873 = vmul.f32 %v3745, %v3857
  %v3874 = vmul.f32 %v3746, %v3858
  %v3875 = vmul.f32 %v3747, %v3859
  %v3876 = vmul.f32 %v3748, %v3860
  %v3877 = vmul.f32 %v3749, %v3861
  %v3879 = vlaneseq
  %v3880 = vshrl.u32 %v3879, 7
  %v3881 = vsub.s32 0, %v3880
  %v3882 = vrot.slane %v3668, %v3881
  %v3884 = vmul.f32 %v3862, %v3882
  %v3885 = vmul.f32 %v3863, %v3882
  %v3886 = vmul.f32 %v3864, %v3882
  %v3887 = vmul.f32 %v3865, %v3882
  %v3888 = vmul.f32 %v3866, %v3882
  %v3889 = vmul.f32 %v3867, %v3882
  %v3890 = vmul.f32 %v3868, %v3882
  %v3891 = vmul.f32 %v3869, %v3882
  %v3892 = vmul.f32 %v3870, %v3882
  %v3893 = vmul.f32 %v3871, %v3882
  %v3894 = vmul.f32 %v3872, %v3882
  %v3895 = vmul.f32 %v3873, %v3882
  %v3896 = vmul.f32 %v3874, %v3882
  %v3897 = vmul.f32 %v3875, %v3882
  %v3898 = vmul.f32 %v3876, %v3882
  %v3899 = vmul.f32 %v3877, %v3882
  %v3901 = vlaneseq
  %v3902 = vshrl.u32 %v3901, 7
  %v3903 = vsub.s32 0, %v3902
  %v3904 = vrot.slane %v3669, %v3903
  %v3906 = vadd.f32 %v3884, %v3904
  %v3907 = vadd.f32 %v3885, %v3904
  %v3908 = vadd.f32 %v3886, %v3904
  %v3909 = vadd.f32 %v3887, %v3904
  %v3910 = vadd.f32 %v3888, %v3904
  %v3911 = vadd.f32 %v3889, %v3904
  %v3912 = vadd.f32 %v3890, %v3904
  %v3913 = vadd.f32 %v3891, %v3904
  %v3914 = vadd.f32 %v3892, %v3904
  %v3915 = vadd.f32 %v3893, %v3904
  %v3916 = vadd.f32 %v3894, %v3904
  %v3917 = vadd.f32 %v3895, %v3904
  %v3918 = vadd.f32 %v3896, %v3904
  %v3919 = vadd.f32 %v3897, %v3904
  %v3920 = vadd.f32 %v3898, %v3904
  %v3921 = vadd.f32 %v3899, %v3904
  %v3922 = vpack.c.bf16 %v3907, %v3906
  %v3923 = vpack.c.bf16 %v3909, %v3908
  %v3924 = vpack.c.bf16 %v3911, %v3910
  %v3925 = vpack.c.bf16 %v3913, %v3912
  %v3926 = vpack.c.bf16 %v3915, %v3914
  %v3927 = vpack.c.bf16 %v3917, %v3916
  %v3928 = vpack.c.bf16 %v3919, %v3918
  %v3929 = vpack.c.bf16 %v3921, %v3920
  %s3930 = scalar_lea.vmem %s5, 16
  %v3931 = vld [vmem:[%s3930] sm:$0xf]
  %v3932 = vld [vmem:[%s3930 + $0x4] sm:$0xf]
  %v3933 = vld [vmem:[%s3930 + $0x8] sm:$0xf]
  %v3934 = vld [vmem:[%s3930 + $0xc] sm:$0xf]
  %s3935 = scalar_lea.vmem %s6, 1
  %v3936 = vld [vmem:[%s3935] sm:$0x1]
  %v3938 = vlaneseq
  %v3939 = vshrl.u32 %v3938, 7
  %v3940 = vsub.s32 0, %v3939
  %v3941 = vrot.slane %v3936, %v3940
  %v3947 = vunpack.c.l.b16 %v3931
  %v3948 = vunpack.c.l.b16 %v3932
  %v3949 = vunpack.c.l.b16 %v3933
  %v3950 = vunpack.c.l.b16 %v3934
  %v3951 = vpack.c.b16 %v3948, %v3947
  %v3952 = vpack.c.b16 %v3950, %v3949
  %v3956 = vsel %vm188, %v3922, 0
  %v3959 = vsel %vm188, %v3923, 0
  %v3962 = vsel %vm188, %v3924, 0
  %v3965 = vsel %vm188, %v3925, 0
  %v3968 = vsel %vm188, %v3926, 0
  %v3971 = vsel %vm188, %v3927, 0
  %v3974 = vsel %vm188, %v3928, 0
  %v3977 = vsel %vm188, %v3929, 0
  %3979 = vmatprep.subr.bf16.mxu0 0
  %3980 = vmatpush1.bf16.msra.mxu0 %v3951
  %3981 = vmatprep.subr.bf16.mxu0 0
  %3982 = vmatpush1.bf16.msra.mxu0 %v3952
  %3983 = vmatprep.subr.bf16.mxu0 0
  %3984 = vmatpush1.bf16.msra.mxu0 0
  %3985 = vmatprep.subr.bf16.mxu0 0
  %3986 = vmatpush1.bf16.msra.mxu0 0
  %3987 = vmatprep.subr.bf16.mxu0 0
  %3988 = vmatpush1.bf16.msra.mxu0 0
  %3989 = vmatprep.subr.bf16.mxu0 0
  %3990 = vmatpush1.bf16.msra.mxu0 0
  %3991 = vmatprep.subr.bf16.mxu0 0
  %3992 = vmatpush1.bf16.msra.mxu0 0
  %3993 = vmatprep.subr.bf16.mxu0 0
  %3994 = vmatpush1.bf16.msra.mxu0 0
  %3995 = vmatprep.subr.bf16.mxu0 0
  %3996 = vmatpush1.bf16.msra.mxu0 0
  %3997 = vmatprep.subr.bf16.mxu0 0
  %3998 = vmatpush1.bf16.msra.mxu0 0
  %3999 = vmatprep.subr.bf16.mxu0 0
  %4000 = vmatpush1.bf16.msra.mxu0 0
  %4001 = vmatprep.subr.bf16.mxu0 0
  %4002 = vmatpush1.bf16.msra.mxu0 0
  %4003 = vmatprep.subr.bf16.mxu0 0
  %4004 = vmatpush1.bf16.msra.mxu0 0
  %4005 = vmatprep.subr.bf16.mxu0 0
  %4006 = vmatpush1.bf16.msra.mxu0 0
  %4007 = vmatprep.subr.bf16.mxu0 0
  %4008 = vmatpush1.bf16.msra.mxu0 0
  %4009 = vmatprep.subr.bf16.mxu0 0
  %4010 = vmatpush1.bf16.msra.mxu0 0
  %4011 = vmatprep.mubr.bf16.mxu0 0
  %4012 = vmatmul.mubr.bf16.gmra.mrb[0].mxu0 %v3956
  %v4013 = vpop.f32.mrb[0].mxu0
  %v4014 = vadd.f32 %v3941, %v4013
  %v4015 = vpop.f32.mrb[0].mxu0
  %v4016 = vpop.f32.mrb[0].mxu0
  %v4017 = vadd.f32 %v3941, %v4016
  %v4018 = vpop.f32.mrb[0].mxu0
  %4019 = vmatprep.mubr.bf16.mxu0 0
  %4020 = vmatmul.mubr.bf16.gmra.mrb[0].mxu0 %v3959
  %v4021 = vpop.f32.mrb[0].mxu0
  %v4022 = vadd.f32 %v3941, %v4021
  %v4023 = vpop.f32.mrb[0].mxu0
  %v4024 = vpop.f32.mrb[0].mxu0
  %v4025 = vadd.f32 %v3941, %v4024
  %v4026 = vpop.f32.mrb[0].mxu0
  %4027 = vmatprep.mubr.bf16.mxu0 0
  %4028 = vmatmul.mubr.bf16.gmra.mrb[0].mxu0 %v3962
  %v4029 = vpop.f32.mrb[0].mxu0
  %v4030 = vadd.f32 %v3941, %v4029
  %v4031 = vpop.f32.mrb[0].mxu0
  %v4032 = vpop.f32.mrb[0].mxu0
  %v4033 = vadd.f32 %v3941, %v4032
  %v4034 = vpop.f32.mrb[0].mxu0
  %4035 = vmatprep.mubr.bf16.mxu0 0
  %4036 = vmatmul.mubr.bf16.gmra.mrb[0].mxu0 %v3965
  %v4037 = vpop.f32.mrb[0].mxu0
  %v4038 = vadd.f32 %v3941, %v4037
  %v4039 = vpop.f32.mrb[0].mxu0
  %v4040 = vpop.f32.mrb[0].mxu0
  %v4041 = vadd.f32 %v3941, %v4040
  %v4042 = vpop.f32.mrb[0].mxu0
  %4043 = vmatprep.mubr.bf16.mxu0 0
  %4044 = vmatmul.mubr.bf16.gmra.mrb[0].mxu0 %v3968
  %v4045 = vpop.f32.mrb[0].mxu0
  %v4046 = vadd.f32 %v3941, %v4045
  %v4047 = vpop.f32.mrb[0].mxu0
  %v4048 = vpop.f32.mrb[0].mxu0
  %v4049 = vadd.f32 %v3941, %v4048
  %v4050 = vpop.f32.mrb[0].mxu0
  %4051 = vmatprep.mubr.bf16.mxu0 0
  %4052 = vmatmul.mubr.bf16.gmra.mrb[0].mxu0 %v3971
  %v4053 = vpop.f32.mrb[0].mxu0
  %v4054 = vadd.f32 %v3941, %v4053
  %v4055 = vpop.f32.mrb[0].mxu0
  %v4056 = vpop.f32.mrb[0].mxu0
  %v4057 = vadd.f32 %v3941, %v4056
  %v4058 = vpop.f32.mrb[0].mxu0
  %4059 = vmatprep.mubr.bf16.mxu0 0
  %4060 = vmatmul.mubr.bf16.gmra.mrb[0].mxu0 %v3974
  %v4061 = vpop.f32.mrb[0].mxu0
  %v4062 = vadd.f32 %v3941, %v4061
  %v4063 = vpop.f32.mrb[0].mxu0
  %v4064 = vpop.f32.mrb[0].mxu0
  %v4065 = vadd.f32 %v3941, %v4064
  %v4066 = vpop.f32.mrb[0].mxu0
  %4067 = vmatprep.mubr.bf16.mxu0 0
  %4068 = vmatmul.mubr.bf16.gmra.mrb[0].mxu0 %v3977
  %v4069 = vpop.f32.mrb[0].mxu0
  %v4070 = vadd.f32 %v3941, %v4069
  %v4071 = vpop.f32.mrb[0].mxu0
  %v4072 = vpop.f32.mrb[0].mxu0
  %v4073 = vadd.f32 %v3941, %v4072
  %v4074 = vpop.f32.mrb[0].mxu0
  %4075 = vdwg.mxu0
  %v4076 = vpack.c.bf16 %v4017, %v4014
  %v4077 = vpack.c.bf16 %v4025, %v4022
  %v4078 = vpack.c.bf16 %v4033, %v4030
  %v4079 = vpack.c.bf16 %v4041, %v4038
  %v4080 = vpack.c.bf16 %v4049, %v4046
  %v4081 = vpack.c.bf16 %v4057, %v4054
  %v4082 = vpack.c.bf16 %v4065, %v4062
  %v4083 = vpack.c.bf16 %v4073, %v4070
  %4092 = vrot.lane.b32.xlu0 %v4076, 96
  %v4093 = vpop.permute.xlu0 %4092
  %4094 = vrot.lane.b32.xlu0 %v4077, 96
  %v4095 = vpop.permute.xlu0 %4094
  %4096 = vrot.lane.b32.xlu0 %v4078, 96
  %v4097 = vpop.permute.xlu0 %4096
  %4098 = vrot.lane.b32.xlu0 %v4079, 96
  %v4099 = vpop.permute.xlu0 %4098
  %4100 = vrot.lane.b32.xlu0 %v4080, 96
  %v4101 = vpop.permute.xlu0 %4100
  %4102 = vrot.lane.b32.xlu0 %v4081, 96
  %v4103 = vpop.permute.xlu0 %4102
  %4104 = vrot.lane.b32.xlu0 %v4082, 96
  %v4105 = vpop.permute.xlu0 %4104
  %4106 = vrot.lane.b32.xlu0 %v4083, 96
  %v4107 = vpop.permute.xlu0 %4106
  %v4109 = vsel %vm626, %v4076, 0
  %v4112 = vsel %vm626, %v4077, 0
  %v4115 = vsel %vm626, %v4078, 0
  %v4118 = vsel %vm626, %v4079, 0
  %v4121 = vsel %vm626, %v4080, 0
  %v4124 = vsel %vm626, %v4081, 0
  %v4127 = vsel %vm626, %v4082, 0
  %v4130 = vsel %vm626, %v4083, 0
  %v4133 = vsel %vm626, %v4093, 0
  %v4136 = vsel %vm626, %v4095, 0
  %v4139 = vsel %vm626, %v4097, 0
  %v4142 = vsel %vm626, %v4099, 0
  %v4145 = vsel %vm626, %v4101, 0
  %v4148 = vsel %vm626, %v4103, 0
  %v4151 = vsel %vm626, %v4105, 0
  %v4154 = vsel %vm626, %v4107, 0
  %4156 = vmatprep.subr.bf16.mxu0 0
  %4157 = vmatpush1.bf16.xpose.msra.mxu0 %v4133
  %4158 = vmatprep.subr.bf16.mxu0 0
  %4159 = vmatpush1.bf16.xpose.msra.mxu0 %v4136
  %4160 = vmatprep.subr.bf16.mxu0 0
  %4161 = vmatpush1.bf16.xpose.msra.mxu0 %v4139
  %4162 = vmatprep.subr.bf16.mxu0 0
  %4163 = vmatpush1.bf16.xpose.msra.mxu0 %v4142
  %4164 = vmatprep.subr.bf16.mxu0 0
  %4165 = vmatpush1.bf16.xpose.msra.mxu0 %v4145
  %4166 = vmatprep.subr.bf16.mxu0 0
  %4167 = vmatpush1.bf16.xpose.msra.mxu0 %v4148
  %4168 = vmatprep.subr.bf16.mxu0 0
  %4169 = vmatpush1.bf16.xpose.msra.mxu0 %v4151
  %4170 = vmatprep.subr.bf16.mxu0 0
  %4171 = vmatpush1.bf16.xpose.msra.mxu0 %v4154
  %4172 = vmatprep.subr.bf16.mxu0 0
  %4173 = vmatpush1.bf16.xpose.msra.mxu0 0
  %4174 = vmatprep.subr.bf16.mxu0 0
  %4175 = vmatpush1.bf16.xpose.msra.mxu0 0
  %4176 = vmatprep.subr.bf16.mxu0 0
  %4177 = vmatpush1.bf16.xpose.msra.mxu0 0
  %4178 = vmatprep.subr.bf16.mxu0 0
  %4179 = vmatpush1.bf16.xpose.msra.mxu0 0
  %4180 = vmatprep.subr.bf16.mxu0 0
  %4181 = vmatpush1.bf16.xpose.msra.mxu0 0
  %4182 = vmatprep.subr.bf16.mxu0 0
  %4183 = vmatpush1.bf16.xpose.msra.mxu0 0
  %4184 = vmatprep.subr.bf16.mxu0 0
  %4185 = vmatpush1.bf16.xpose.msra.mxu0 0
  %4186 = vmatprep.subr.bf16.mxu0 0
  %4187 = vmatpush1.bf16.xpose.msra.mxu0 0
  %4188 = vmatprep.mubr.bf16.mxu0 0
  %4189 = vmatmul.mubr.bf16.gmra.mrb[0].mxu0 %v4109
  %v4190 = vpop.f32.mrb[0].mxu0
  %v4191 = vadd.f32 0.0, %v4190
  %v4192 = vpop.f32.mrb[0].mxu0
  %v4193 = vpop.f32.mrb[0].mxu0
  %v4194 = vadd.f32 0.0, %v4193
  %v4195 = vpop.f32.mrb[0].mxu0
  %4196 = vmatprep.mubr.bf16.mxu0 0
  %4197 = vmatmul.mubr.bf16.gmra.mrb[0].mxu0 %v4112
  %v4198 = vpop.f32.mrb[0].mxu0
  %v4199 = vadd.f32 0.0, %v4198
  %v4200 = vpop.f32.mrb[0].mxu0
  %v4201 = vpop.f32.mrb[0].mxu0
  %v4202 = vadd.f32 0.0, %v4201
  %v4203 = vpop.f32.mrb[0].mxu0
  %4204 = vmatprep.mubr.bf16.mxu0 0
  %4205 = vmatmul.mubr.bf16.gmra.mrb[0].mxu0 %v4115
  %v4206 = vpop.f32.mrb[0].mxu0
  %v4207 = vadd.f32 0.0, %v4206
  %v4208 = vpop.f32.mrb[0].mxu0
  %v4209 = vpop.f32.mrb[0].mxu0
  %v4210 = vadd.f32 0.0, %v4209
  %v4211 = vpop.f32.mrb[0].mxu0
  %4212 = vmatprep.mubr.bf16.mxu0 0
  %4213 = vmatmul.mubr.bf16.gmra.mrb[0].mxu0 %v4118
  %v4214 = vpop.f32.mrb[0].mxu0
  %v4215 = vadd.f32 0.0, %v4214
  %v4216 = vpop.f32.mrb[0].mxu0
  %v4217 = vpop.f32.mrb[0].mxu0
  %v4218 = vadd.f32 0.0, %v4217
  %v4219 = vpop.f32.mrb[0].mxu0
  %4220 = vmatprep.mubr.bf16.mxu0 0
  %4221 = vmatmul.mubr.bf16.gmra.mrb[0].mxu0 %v4121
  %v4222 = vpop.f32.mrb[0].mxu0
  %v4223 = vadd.f32 0.0, %v4222
  %v4224 = vpop.f32.mrb[0].mxu0
  %v4225 = vpop.f32.mrb[0].mxu0
  %v4226 = vadd.f32 0.0, %v4225
  %v4227 = vpop.f32.mrb[0].mxu0
  %4228 = vmatprep.mubr.bf16.mxu0 0
  %4229 = vmatmul.mubr.bf16.gmra.mrb[0].mxu0 %v4124
  %v4230 = vpop.f32.mrb[0].mxu0
  %v4231 = vadd.f32 0.0, %v4230
  %v4232 = vpop.f32.mrb[0].mxu0
  %v4233 = vpop.f32.mrb[0].mxu0
  %v4234 = vadd.f32 0.0, %v4233
  %v4235 = vpop.f32.mrb[0].mxu0
  %4236 = vmatprep.mubr.bf16.mxu0 0
  %4237 = vmatmul.mubr.bf16.gmra.mrb[0].mxu0 %v4127
  %v4238 = vpop.f32.mrb[0].mxu0
  %v4239 = vadd.f32 0.0, %v4238
  %v4240 = vpop.f32.mrb[0].mxu0
  %v4241 = vpop.f32.mrb[0].mxu0
  %v4242 = vadd.f32 0.0, %v4241
  %v4243 = vpop.f32.mrb[0].mxu0
  %4244 = vmatprep.mubr.bf16.mxu0 0
  %4245 = vmatmul.mubr.bf16.gmra.mrb[0].mxu0 %v4130
  %v4246 = vpop.f32.mrb[0].mxu0
  %v4247 = vadd.f32 0.0, %v4246
  %v4248 = vpop.f32.mrb[0].mxu0
  %v4249 = vpop.f32.mrb[0].mxu0
  %v4250 = vadd.f32 0.0, %v4249
  %v4251 = vpop.f32.mrb[0].mxu0
  %4252 = vdwg.mxu0
  %4253 = vrot.lane.b32.xlu0 %v4076, 120
  %v4254 = vpop.permute.xlu0 %4253
  %4255 = vrot.lane.b32.xlu0 %v4077, 120
  %v4256 = vpop.permute.xlu0 %4255
  %4257 = vrot.lane.b32.xlu0 %v4078, 120
  %v4258 = vpop.permute.xlu0 %4257
  %4259 = vrot.lane.b32.xlu0 %v4079, 120
  %v4260 = vpop.permute.xlu0 %4259
  %4261 = vrot.lane.b32.xlu0 %v4080, 120
  %v4262 = vpop.permute.xlu0 %4261
  %4263 = vrot.lane.b32.xlu0 %v4081, 120
  %v4264 = vpop.permute.xlu0 %4263
  %4265 = vrot.lane.b32.xlu0 %v4082, 120
  %v4266 = vpop.permute.xlu0 %4265
  %4267 = vrot.lane.b32.xlu0 %v4083, 120
  %v4268 = vpop.permute.xlu0 %4267
  %4269 = vrot.lane.b32.xlu0 %v4076, 88
  %v4270 = vpop.permute.xlu0 %4269
  %4271 = vrot.lane.b32.xlu0 %v4077, 88
  %v4272 = vpop.permute.xlu0 %4271
  %4273 = vrot.lane.b32.xlu0 %v4078, 88
  %v4274 = vpop.permute.xlu0 %4273
  %4275 = vrot.lane.b32.xlu0 %v4079, 88
  %v4276 = vpop.permute.xlu0 %4275
  %4277 = vrot.lane.b32.xlu0 %v4080, 88
  %v4278 = vpop.permute.xlu0 %4277
  %4279 = vrot.lane.b32.xlu0 %v4081, 88
  %v4280 = vpop.permute.xlu0 %4279
  %4281 = vrot.lane.b32.xlu0 %v4082, 88
  %v4282 = vpop.permute.xlu0 %4281
  %4283 = vrot.lane.b32.xlu0 %v4083, 88
  %v4284 = vpop.permute.xlu0 %4283
  %v4286 = vsel %vm626, %v4254, 0
  %v4289 = vsel %vm626, %v4256, 0
  %v4292 = vsel %vm626, %v4258, 0
  %v4295 = vsel %vm626, %v4260, 0
  %v4298 = vsel %vm626, %v4262, 0
  %v4301 = vsel %vm626, %v4264, 0
  %v4304 = vsel %vm626, %v4266, 0
  %v4307 = vsel %vm626, %v4268, 0
  %v4310 = vsel %vm626, %v4270, 0
  %v4313 = vsel %vm626, %v4272, 0
  %v4316 = vsel %vm626, %v4274, 0
  %v4319 = vsel %vm626, %v4276, 0
  %v4322 = vsel %vm626, %v4278, 0
  %v4325 = vsel %vm626, %v4280, 0
  %v4328 = vsel %vm626, %v4282, 0
  %v4331 = vsel %vm626, %v4284, 0
  %4333 = vmatprep.subr.bf16.mxu0 0
  %4334 = vmatpush1.bf16.xpose.msra.mxu0 %v4310
  %4335 = vmatprep.subr.bf16.mxu0 0
  %4336 = vmatpush1.bf16.xpose.msra.mxu0 %v4313
  %4337 = vmatprep.subr.bf16.mxu0 0
  %4338 = vmatpush1.bf16.xpose.msra.mxu0 %v4316
  %4339 = vmatprep.subr.bf16.mxu0 0
  %4340 = vmatpush1.bf16.xpose.msra.mxu0 %v4319
  %4341 = vmatprep.subr.bf16.mxu0 0
  %4342 = vmatpush1.bf16.xpose.msra.mxu0 %v4322
  %4343 = vmatprep.subr.bf16.mxu0 0
  %4344 = vmatpush1.bf16.xpose.msra.mxu0 %v4325
  %4345 = vmatprep.subr.bf16.mxu0 0
  %4346 = vmatpush1.bf16.xpose.msra.mxu0 %v4328
  %4347 = vmatprep.subr.bf16.mxu0 0
  %4348 = vmatpush1.bf16.xpose.msra.mxu0 %v4331
  %4349 = vmatprep.subr.bf16.mxu0 0
  %4350 = vmatpush1.bf16.xpose.msra.mxu0 0
  %4351 = vmatprep.subr.bf16.mxu0 0
  %4352 = vmatpush1.bf16.xpose.msra.mxu0 0
  %4353 = vmatprep.subr.bf16.mxu0 0
  %4354 = vmatpush1.bf16.xpose.msra.mxu0 0
  %4355 = vmatprep.subr.bf16.mxu0 0
  %4356 = vmatpush1.bf16.xpose.msra.mxu0 0
  %4357 = vmatprep.subr.bf16.mxu0 0
  %4358 = vmatpush1.bf16.xpose.msra.mxu0 0
  %4359 = vmatprep.subr.bf16.mxu0 0
  %4360 = vmatpush1.bf16.xpose.msra.mxu0 0
  %4361 = vmatprep.subr.bf16.mxu0 0
  %4362 = vmatpush1.bf16.xpose.msra.mxu0 0
  %4363 = vmatprep.subr.bf16.mxu0 0
  %4364 = vmatpush1.bf16.xpose.msra.mxu0 0
  %4365 = vmatprep.mubr.bf16.mxu0 0
  %4366 = vmatmul.mubr.bf16.gmra.mrb[0].mxu0 %v4286
  %v4367 = vpop.f32.mrb[0].mxu0
  %v4368 = vadd.f32 0.0, %v4367
  %v4369 = vpop.f32.mrb[0].mxu0
  %v4370 = vpop.f32.mrb[0].mxu0
  %v4371 = vadd.f32 0.0, %v4370
  %v4372 = vpop.f32.mrb[0].mxu0
  %4373 = vmatprep.mubr.bf16.mxu0 0
  %4374 = vmatmul.mubr.bf16.gmra.mrb[0].mxu0 %v4289
  %v4375 = vpop.f32.mrb[0].mxu0
  %v4376 = vadd.f32 0.0, %v4375
  %v4377 = vpop.f32.mrb[0].mxu0
  %v4378 = vpop.f32.mrb[0].mxu0
  %v4379 = vadd.f32 0.0, %v4378
  %v4380 = vpop.f32.mrb[0].mxu0
  %4381 = vmatprep.mubr.bf16.mxu0 0
  %4382 = vmatmul.mubr.bf16.gmra.mrb[0].mxu0 %v4292
  %v4383 = vpop.f32.mrb[0].mxu0
  %v4384 = vadd.f32 0.0, %v4383
  %v4385 = vpop.f32.mrb[0].mxu0
  %v4386 = vpop.f32.mrb[0].mxu0
  %v4387 = vadd.f32 0.0, %v4386
  %v4388 = vpop.f32.mrb[0].mxu0
  %4389 = vmatprep.mubr.bf16.mxu0 0
  %4390 = vmatmul.mubr.bf16.gmra.mrb[0].mxu0 %v4295
  %v4391 = vpop.f32.mrb[0].mxu0
  %v4392 = vadd.f32 0.0, %v4391
  %v4393 = vpop.f32.mrb[0].mxu0
  %v4394 = vpop.f32.mrb[0].mxu0
  %v4395 = vadd.f32 0.0, %v4394
  %v4396 = vpop.f32.mrb[0].mxu0
  %4397 = vmatprep.mubr.bf16.mxu0 0
  %4398 = vmatmul.mubr.bf16.gmra.mrb[0].mxu0 %v4298
  %v4399 = vpop.f32.mrb[0].mxu0
  %v4400 = vadd.f32 0.0, %v4399
  %v4401 = vpop.f32.mrb[0].mxu0
  %v4402 = vpop.f32.mrb[0].mxu0
  %v4403 = vadd.f32 0.0, %v4402
  %v4404 = vpop.f32.mrb[0].mxu0
  %4405 = vmatprep.mubr.bf16.mxu0 0
  %4406 = vmatmul.mubr.bf16.gmra.mrb[0].mxu0 %v4301
  %v4407 = vpop.f32.mrb[0].mxu0
  %v4408 = vadd.f32 0.0, %v4407
  %v4409 = vpop.f32.mrb[0].mxu0
  %v4410 = vpop.f32.mrb[0].mxu0
  %v4411 = vadd.f32 0.0, %v4410
  %v4412 = vpop.f32.mrb[0].mxu0
  %4413 = vmatprep.mubr.bf16.mxu0 0
  %4414 = vmatmul.mubr.bf16.gmra.mrb[0].mxu0 %v4304
  %v4415 = vpop.f32.mrb[0].mxu0
  %v4416 = vadd.f32 0.0, %v4415
  %v4417 = vpop.f32.mrb[0].mxu0
  %v4418 = vpop.f32.mrb[0].mxu0
  %v4419 = vadd.f32 0.0, %v4418
  %v4420 = vpop.f32.mrb[0].mxu0
  %4421 = vmatprep.mubr.bf16.mxu0 0
  %4422 = vmatmul.mubr.bf16.gmra.mrb[0].mxu0 %v4307
  %v4423 = vpop.f32.mrb[0].mxu0
  %v4424 = vadd.f32 0.0, %v4423
  %v4425 = vpop.f32.mrb[0].mxu0
  %v4426 = vpop.f32.mrb[0].mxu0
  %v4427 = vadd.f32 0.0, %v4426
  %v4428 = vpop.f32.mrb[0].mxu0
  %4429 = vdwg.mxu0
  %4430 = vrot.lane.b32.xlu0 %v4076, 112
  %v4431 = vpop.permute.xlu0 %4430
  %4432 = vrot.lane.b32.xlu0 %v4077, 112
  %v4433 = vpop.permute.xlu0 %4432
  %4434 = vrot.lane.b32.xlu0 %v4078, 112
  %v4435 = vpop.permute.xlu0 %4434
  %4436 = vrot.lane.b32.xlu0 %v4079, 112
  %v4437 = vpop.permute.xlu0 %4436
  %4438 = vrot.lane.b32.xlu0 %v4080, 112
  %v4439 = vpop.permute.xlu0 %4438
  %4440 = vrot.lane.b32.xlu0 %v4081, 112
  %v4441 = vpop.permute.xlu0 %4440
  %4442 = vrot.lane.b32.xlu0 %v4082, 112
  %v4443 = vpop.permute.xlu0 %4442
  %4444 = vrot.lane.b32.xlu0 %v4083, 112
  %v4445 = vpop.permute.xlu0 %4444
  %4446 = vrot.lane.b32.xlu0 %v4076, 80
  %v4447 = vpop.permute.xlu0 %4446
  %4448 = vrot.lane.b32.xlu0 %v4077, 80
  %v4449 = vpop.permute.xlu0 %4448
  %4450 = vrot.lane.b32.xlu0 %v4078, 80
  %v4451 = vpop.permute.xlu0 %4450
  %4452 = vrot.lane.b32.xlu0 %v4079, 80
  %v4453 = vpop.permute.xlu0 %4452
  %4454 = vrot.lane.b32.xlu0 %v4080, 80
  %v4455 = vpop.permute.xlu0 %4454
  %4456 = vrot.lane.b32.xlu0 %v4081, 80
  %v4457 = vpop.permute.xlu0 %4456
  %4458 = vrot.lane.b32.xlu0 %v4082, 80
  %v4459 = vpop.permute.xlu0 %4458
  %4460 = vrot.lane.b32.xlu0 %v4083, 80
  %v4461 = vpop.permute.xlu0 %4460
  %v4463 = vsel %vm626, %v4431, 0
  %v4466 = vsel %vm626, %v4433, 0
  %v4469 = vsel %vm626, %v4435, 0
  %v4472 = vsel %vm626, %v4437, 0
  %v4475 = vsel %vm626, %v4439, 0
  %v4478 = vsel %vm626, %v4441, 0
  %v4481 = vsel %vm626, %v4443, 0
  %v4484 = vsel %vm626, %v4445, 0
  %v4487 = vsel %vm626, %v4447, 0
  %v4490 = vsel %vm626, %v4449, 0
  %v4493 = vsel %vm626, %v4451, 0
  %v4496 = vsel %vm626, %v4453, 0
  %v4499 = vsel %vm626, %v4455, 0
  %v4502 = vsel %vm626, %v4457, 0
  %v4505 = vsel %vm626, %v4459, 0
  %v4508 = vsel %vm626, %v4461, 0
  %4510 = vmatprep.subr.bf16.mxu0 0
  %4511 = vmatpush1.bf16.xpose.msra.mxu0 %v4487
  %4512 = vmatprep.subr.bf16.mxu0 0
  %4513 = vmatpush1.bf16.xpose.msra.mxu0 %v4490
  %4514 = vmatprep.subr.bf16.mxu0 0
  %4515 = vmatpush1.bf16.xpose.msra.mxu0 %v4493
  %4516 = vmatprep.subr.bf16.mxu0 0
  %4517 = vmatpush1.bf16.xpose.msra.mxu0 %v4496
  %4518 = vmatprep.subr.bf16.mxu0 0
  %4519 = vmatpush1.bf16.xpose.msra.mxu0 %v4499
  %4520 = vmatprep.subr.bf16.mxu0 0
  %4521 = vmatpush1.bf16.xpose.msra.mxu0 %v4502
  %4522 = vmatprep.subr.bf16.mxu0 0
  %4523 = vmatpush1.bf16.xpose.msra.mxu0 %v4505
  %4524 = vmatprep.subr.bf16.mxu0 0
  %4525 = vmatpush1.bf16.xpose.msra.mxu0 %v4508
  %4526 = vmatprep.subr.bf16.mxu0 0
  %4527 = vmatpush1.bf16.xpose.msra.mxu0 0
  %4528 = vmatprep.subr.bf16.mxu0 0
  %4529 = vmatpush1.bf16.xpose.msra.mxu0 0
  %4530 = vmatprep.subr.bf16.mxu0 0
  %4531 = vmatpush1.bf16.xpose.msra.mxu0 0
  %4532 = vmatprep.subr.bf16.mxu0 0
  %4533 = vmatpush1.bf16.xpose.msra.mxu0 0
  %4534 = vmatprep.subr.bf16.mxu0 0
  %4535 = vmatpush1.bf16.xpose.msra.mxu0 0
  %4536 = vmatprep.subr.bf16.mxu0 0
  %4537 = vmatpush1.bf16.xpose.msra.mxu0 0
  %4538 = vmatprep.subr.bf16.mxu0 0
  %4539 = vmatpush1.bf16.xpose.msra.mxu0 0
  %4540 = vmatprep.subr.bf16.mxu0 0
  %4541 = vmatpush1.bf16.xpose.msra.mxu0 0
  %4542 = vmatprep.mubr.bf16.mxu0 0
  %4543 = vmatmul.mubr.bf16.gmra.mrb[0].mxu0 %v4463
  %v4544 = vpop.f32.mrb[0].mxu0
  %v4545 = vadd.f32 0.0, %v4544
  %v4546 = vpop.f32.mrb[0].mxu0
  %v4547 = vpop.f32.mrb[0].mxu0
  %v4548 = vadd.f32 0.0, %v4547
  %v4549 = vpop.f32.mrb[0].mxu0
  %4550 = vmatprep.mubr.bf16.mxu0 0
  %4551 = vmatmul.mubr.bf16.gmra.mrb[0].mxu0 %v4466
  %v4552 = vpop.f32.mrb[0].mxu0
  %v4553 = vadd.f32 0.0, %v4552
  %v4554 = vpop.f32.mrb[0].mxu0
  %v4555 = vpop.f32.mrb[0].mxu0
  %v4556 = vadd.f32 0.0, %v4555
  %v4557 = vpop.f32.mrb[0].mxu0
  %4558 = vmatprep.mubr.bf16.mxu0 0
  %4559 = vmatmul.mubr.bf16.gmra.mrb[0].mxu0 %v4469
  %v4560 = vpop.f32.mrb[0].mxu0
  %v4561 = vadd.f32 0.0, %v4560
  %v4562 = vpop.f32.mrb[0].mxu0
  %v4563 = vpop.f32.mrb[0].mxu0
  %v4564 = vadd.f32 0.0, %v4563
  %v4565 = vpop.f32.mrb[0].mxu0
  %4566 = vmatprep.mubr.bf16.mxu0 0
  %4567 = vmatmul.mubr.bf16.gmra.mrb[0].mxu0 %v4472
  %v4568 = vpop.f32.mrb[0].mxu0
  %v4569 = vadd.f32 0.0, %v4568
  %v4570 = vpop.f32.mrb[0].mxu0
  %v4571 = vpop.f32.mrb[0].mxu0
  %v4572 = vadd.f32 0.0, %v4571
  %v4573 = vpop.f32.mrb[0].mxu0
  %4574 = vmatprep.mubr.bf16.mxu0 0
  %4575 = vmatmul.mubr.bf16.gmra.mrb[0].mxu0 %v4475
  %v4576 = vpop.f32.mrb[0].mxu0
  %v4577 = vadd.f32 0.0, %v4576
  %v4578 = vpop.f32.mrb[0].mxu0
  %v4579 = vpop.f32.mrb[0].mxu0
  %v4580 = vadd.f32 0.0, %v4579
  %v4581 = vpop.f32.mrb[0].mxu0
  %4582 = vmatprep.mubr.bf16.mxu0 0
  %4583 = vmatmul.mubr.bf16.gmra.mrb[0].mxu0 %v4478
  %v4584 = vpop.f32.mrb[0].mxu0
  %v4585 = vadd.f32 0.0, %v4584
  %v4586 = vpop.f32.mrb[0].mxu0
  %v4587 = vpop.f32.mrb[0].mxu0
  %v4588 = vadd.f32 0.0, %v4587
  %v4589 = vpop.f32.mrb[0].mxu0
  %4590 = vmatprep.mubr.bf16.mxu0 0
  %4591 = vmatmul.mubr.bf16.gmra.mrb[0].mxu0 %v4481
  %v4592 = vpop.f32.mrb[0].mxu0
  %v4593 = vadd.f32 0.0, %v4592
  %v4594 = vpop.f32.mrb[0].mxu0
  %v4595 = vpop.f32.mrb[0].mxu0
  %v4596 = vadd.f32 0.0, %v4595
  %v4597 = vpop.f32.mrb[0].mxu0
  %4598 = vmatprep.mubr.bf16.mxu0 0
  %4599 = vmatmul.mubr.bf16.gmra.mrb[0].mxu0 %v4484
  %v4600 = vpop.f32.mrb[0].mxu0
  %v4601 = vadd.f32 0.0, %v4600
  %v4602 = vpop.f32.mrb[0].mxu0
  %v4603 = vpop.f32.mrb[0].mxu0
  %v4604 = vadd.f32 0.0, %v4603
  %v4605 = vpop.f32.mrb[0].mxu0
  %4606 = vdwg.mxu0
  %4607 = vrot.lane.b32.xlu0 %v4076, 104
  %v4608 = vpop.permute.xlu0 %4607
  %4609 = vrot.lane.b32.xlu0 %v4077, 104
  %v4610 = vpop.permute.xlu0 %4609
  %4611 = vrot.lane.b32.xlu0 %v4078, 104
  %v4612 = vpop.permute.xlu0 %4611
  %4613 = vrot.lane.b32.xlu0 %v4079, 104
  %v4614 = vpop.permute.xlu0 %4613
  %4615 = vrot.lane.b32.xlu0 %v4080, 104
  %v4616 = vpop.permute.xlu0 %4615
  %4617 = vrot.lane.b32.xlu0 %v4081, 104
  %v4618 = vpop.permute.xlu0 %4617
  %4619 = vrot.lane.b32.xlu0 %v4082, 104
  %v4620 = vpop.permute.xlu0 %4619
  %4621 = vrot.lane.b32.xlu0 %v4083, 104
  %v4622 = vpop.permute.xlu0 %4621
  %4623 = vrot.lane.b32.xlu0 %v4076, 72
  %v4624 = vpop.permute.xlu0 %4623
  %4625 = vrot.lane.b32.xlu0 %v4077, 72
  %v4626 = vpop.permute.xlu0 %4625
  %4627 = vrot.lane.b32.xlu0 %v4078, 72
  %v4628 = vpop.permute.xlu0 %4627
  %4629 = vrot.lane.b32.xlu0 %v4079, 72
  %v4630 = vpop.permute.xlu0 %4629
  %4631 = vrot.lane.b32.xlu0 %v4080, 72
  %v4632 = vpop.permute.xlu0 %4631
  %4633 = vrot.lane.b32.xlu0 %v4081, 72
  %v4634 = vpop.permute.xlu0 %4633
  %4635 = vrot.lane.b32.xlu0 %v4082, 72
  %v4636 = vpop.permute.xlu0 %4635
  %4637 = vrot.lane.b32.xlu0 %v4083, 72
  %v4638 = vpop.permute.xlu0 %4637
  %v4640 = vsel %vm626, %v4608, 0
  %v4643 = vsel %vm626, %v4610, 0
  %v4646 = vsel %vm626, %v4612, 0
  %v4649 = vsel %vm626, %v4614, 0
  %v4652 = vsel %vm626, %v4616, 0
  %v4655 = vsel %vm626, %v4618, 0
  %v4658 = vsel %vm626, %v4620, 0
  %v4661 = vsel %vm626, %v4622, 0
  %v4664 = vsel %vm626, %v4624, 0
  %v4667 = vsel %vm626, %v4626, 0
  %v4670 = vsel %vm626, %v4628, 0
  %v4673 = vsel %vm626, %v4630, 0
  %v4676 = vsel %vm626, %v4632, 0
  %v4679 = vsel %vm626, %v4634, 0
  %v4682 = vsel %vm626, %v4636, 0
  %v4685 = vsel %vm626, %v4638, 0
  %4687 = vmatprep.subr.bf16.mxu0 0
  %4688 = vmatpush1.bf16.xpose.msra.mxu0 %v4664
  %4689 = vmatprep.subr.bf16.mxu0 0
  %4690 = vmatpush1.bf16.xpose.msra.mxu0 %v4667
  %4691 = vmatprep.subr.bf16.mxu0 0
  %4692 = vmatpush1.bf16.xpose.msra.mxu0 %v4670
  %4693 = vmatprep.subr.bf16.mxu0 0
  %4694 = vmatpush1.bf16.xpose.msra.mxu0 %v4673
  %4695 = vmatprep.subr.bf16.mxu0 0
  %4696 = vmatpush1.bf16.xpose.msra.mxu0 %v4676
  %4697 = vmatprep.subr.bf16.mxu0 0
  %4698 = vmatpush1.bf16.xpose.msra.mxu0 %v4679
  %4699 = vmatprep.subr.bf16.mxu0 0
  %4700 = vmatpush1.bf16.xpose.msra.mxu0 %v4682
  %4701 = vmatprep.subr.bf16.mxu0 0
  %4702 = vmatpush1.bf16.xpose.msra.mxu0 %v4685
  %4703 = vmatprep.subr.bf16.mxu0 0
  %4704 = vmatpush1.bf16.xpose.msra.mxu0 0
  %4705 = vmatprep.subr.bf16.mxu0 0
  %4706 = vmatpush1.bf16.xpose.msra.mxu0 0
  %4707 = vmatprep.subr.bf16.mxu0 0
  %4708 = vmatpush1.bf16.xpose.msra.mxu0 0
  %4709 = vmatprep.subr.bf16.mxu0 0
  %4710 = vmatpush1.bf16.xpose.msra.mxu0 0
  %4711 = vmatprep.subr.bf16.mxu0 0
  %4712 = vmatpush1.bf16.xpose.msra.mxu0 0
  %4713 = vmatprep.subr.bf16.mxu0 0
  %4714 = vmatpush1.bf16.xpose.msra.mxu0 0
  %4715 = vmatprep.subr.bf16.mxu0 0
  %4716 = vmatpush1.bf16.xpose.msra.mxu0 0
  %4717 = vmatprep.subr.bf16.mxu0 0
  %4718 = vmatpush1.bf16.xpose.msra.mxu0 0
  %4719 = vmatprep.mubr.bf16.mxu0 0
  %4720 = vmatmul.mubr.bf16.gmra.mrb[0].mxu0 %v4640
  %v4721 = vpop.f32.mrb[0].mxu0
  %v4722 = vadd.f32 0.0, %v4721
  %v4723 = vpop.f32.mrb[0].mxu0
  %v4724 = vpop.f32.mrb[0].mxu0
  %v4725 = vadd.f32 0.0, %v4724
  %v4726 = vpop.f32.mrb[0].mxu0
  %4727 = vmatprep.mubr.bf16.mxu0 0
  %4728 = vmatmul.mubr.bf16.gmra.mrb[0].mxu0 %v4643
  %v4729 = vpop.f32.mrb[0].mxu0
  %v4730 = vadd.f32 0.0, %v4729
  %v4731 = vpop.f32.mrb[0].mxu0
  %v4732 = vpop.f32.mrb[0].mxu0
  %v4733 = vadd.f32 0.0, %v4732
  %v4734 = vpop.f32.mrb[0].mxu0
  %4735 = vmatprep.mubr.bf16.mxu0 0
  %4736 = vmatmul.mubr.bf16.gmra.mrb[0].mxu0 %v4646
  %v4737 = vpop.f32.mrb[0].mxu0
  %v4738 = vadd.f32 0.0, %v4737
  %v4739 = vpop.f32.mrb[0].mxu0
  %v4740 = vpop.f32.mrb[0].mxu0
  %v4741 = vadd.f32 0.0, %v4740
  %v4742 = vpop.f32.mrb[0].mxu0
  %4743 = vmatprep.mubr.bf16.mxu0 0
  %4744 = vmatmul.mubr.bf16.gmra.mrb[0].mxu0 %v4649
  %v4745 = vpop.f32.mrb[0].mxu0
  %v4746 = vadd.f32 0.0, %v4745
  %v4747 = vpop.f32.mrb[0].mxu0
  %v4748 = vpop.f32.mrb[0].mxu0
  %v4749 = vadd.f32 0.0, %v4748
  %v4750 = vpop.f32.mrb[0].mxu0
  %4751 = vmatprep.mubr.bf16.mxu0 0
  %4752 = vmatmul.mubr.bf16.gmra.mrb[0].mxu0 %v4652
  %v4753 = vpop.f32.mrb[0].mxu0
  %v4754 = vadd.f32 0.0, %v4753
  %v4755 = vpop.f32.mrb[0].mxu0
  %v4756 = vpop.f32.mrb[0].mxu0
  %v4757 = vadd.f32 0.0, %v4756
  %v4758 = vpop.f32.mrb[0].mxu0
  %4759 = vmatprep.mubr.bf16.mxu0 0
  %4760 = vmatmul.mubr.bf16.gmra.mrb[0].mxu0 %v4655
  %v4761 = vpop.f32.mrb[0].mxu0
  %v4762 = vadd.f32 0.0, %v4761
  %v4763 = vpop.f32.mrb[0].mxu0
  %v4764 = vpop.f32.mrb[0].mxu0
  %v4765 = vadd.f32 0.0, %v4764
  %v4766 = vpop.f32.mrb[0].mxu0
  %4767 = vmatprep.mubr.bf16.mxu0 0
  %4768 = vmatmul.mubr.bf16.gmra.mrb[0].mxu0 %v4658
  %v4769 = vpop.f32.mrb[0].mxu0
  %v4770 = vadd.f32 0.0, %v4769
  %v4771 = vpop.f32.mrb[0].mxu0
  %v4772 = vpop.f32.mrb[0].mxu0
  %v4773 = vadd.f32 0.0, %v4772
  %v4774 = vpop.f32.mrb[0].mxu0
  %4775 = vmatprep.mubr.bf16.mxu0 0
  %4776 = vmatmul.mubr.bf16.gmra.mrb[0].mxu0 %v4661
  %v4777 = vpop.f32.mrb[0].mxu0
  %v4778 = vadd.f32 0.0, %v4777
  %v4779 = vpop.f32.mrb[0].mxu0
  %v4780 = vpop.f32.mrb[0].mxu0
  %v4781 = vadd.f32 0.0, %v4780
  %v4782 = vpop.f32.mrb[0].mxu0
  %4783 = vdwg.mxu0
  %v4784 = vmul.f32 %v4191, 0.35355338
  %v4785 = vmul.f32 %v4194, 0.35355338
  %v4786 = vmul.f32 %v4199, 0.35355338
  %v4787 = vmul.f32 %v4202, 0.35355338
  %v4788 = vmul.f32 %v4207, 0.35355338
  %v4789 = vmul.f32 %v4210, 0.35355338
  %v4790 = vmul.f32 %v4215, 0.35355338
  %v4791 = vmul.f32 %v4218, 0.35355338
  %v4792 = vmul.f32 %v4223, 0.35355338
  %v4793 = vmul.f32 %v4226, 0.35355338
  %v4794 = vmul.f32 %v4231, 0.35355338
  %v4795 = vmul.f32 %v4234, 0.35355338
  %v4796 = vmul.f32 %v4239, 0.35355338
  %v4797 = vmul.f32 %v4242, 0.35355338
  %v4798 = vmul.f32 %v4247, 0.35355338
  %v4799 = vmul.f32 %v4250, 0.35355338
  %v4800 = vmul.f32 %v4368, 0.35355338
  %v4801 = vmul.f32 %v4371, 0.35355338
  %v4802 = vmul.f32 %v4376, 0.35355338
  %v4803 = vmul.f32 %v4379, 0.35355338
  %v4804 = vmul.f32 %v4384, 0.35355338
  %v4805 = vmul.f32 %v4387, 0.35355338
  %v4806 = vmul.f32 %v4392, 0.35355338
  %v4807 = vmul.f32 %v4395, 0.35355338
  %v4808 = vmul.f32 %v4400, 0.35355338
  %v4809 = vmul.f32 %v4403, 0.35355338
  %v4810 = vmul.f32 %v4408, 0.35355338
  %v4811 = vmul.f32 %v4411, 0.35355338
  %v4812 = vmul.f32 %v4416, 0.35355338
  %v4813 = vmul.f32 %v4419, 0.35355338
  %v4814 = vmul.f32 %v4424, 0.35355338
  %v4815 = vmul.f32 %v4427, 0.35355338
  %v4816 = vmul.f32 %v4545, 0.35355338
  %v4817 = vmul.f32 %v4548, 0.35355338
  %v4818 = vmul.f32 %v4553, 0.35355338
  %v4819 = vmul.f32 %v4556, 0.35355338
  %v4820 = vmul.f32 %v4561, 0.35355338
  %v4821 = vmul.f32 %v4564, 0.35355338
  %v4822 = vmul.f32 %v4569, 0.35355338
  %v4823 = vmul.f32 %v4572, 0.35355338
  %v4824 = vmul.f32 %v4577, 0.35355338
  %v4825 = vmul.f32 %v4580, 0.35355338
  %v4826 = vmul.f32 %v4585, 0.35355338
  %v4827 = vmul.f32 %v4588, 0.35355338
  %v4828 = vmul.f32 %v4593, 0.35355338
  %v4829 = vmul.f32 %v4596, 0.35355338
  %v4830 = vmul.f32 %v4601, 0.35355338
  %v4831 = vmul.f32 %v4604, 0.35355338
  %v4832 = vmul.f32 %v4722, 0.35355338
  %v4833 = vmul.f32 %v4725, 0.35355338
  %v4834 = vmul.f32 %v4730, 0.35355338
  %v4835 = vmul.f32 %v4733, 0.35355338
  %v4836 = vmul.f32 %v4738, 0.35355338
  %v4837 = vmul.f32 %v4741, 0.35355338
  %v4838 = vmul.f32 %v4746, 0.35355338
  %v4839 = vmul.f32 %v4749, 0.35355338
  %v4840 = vmul.f32 %v4754, 0.35355338
  %v4841 = vmul.f32 %v4757, 0.35355338
  %v4842 = vmul.f32 %v4762, 0.35355338
  %v4843 = vmul.f32 %v4765, 0.35355338
  %v4844 = vmul.f32 %v4770, 0.35355338
  %v4845 = vmul.f32 %v4773, 0.35355338
  %v4846 = vmul.f32 %v4778, 0.35355338
  %v4847 = vmul.f32 %v4781, 0.35355338
  %v4848 = vadd.f32 %v4784, %v154
  %v4849 = vadd.f32 %v4785, %v155
  %v4850 = vadd.f32 %v4786, %v156
  %v4851 = vadd.f32 %v4787, %v157
  %v4852 = vadd.f32 %v4788, %v158
  %v4853 = vadd.f32 %v4789, %v159
  %v4854 = vadd.f32 %v4790, %v160
  %v4855 = vadd.f32 %v4791, %v161
  %v4856 = vadd.f32 %v4792, %v162
  %v4857 = vadd.f32 %v4793, %v163
  %v4858 = vadd.f32 %v4794, %v164
  %v4859 = vadd.f32 %v4795, %v165
  %v4860 = vadd.f32 %v4796, %v166
  %v4861 = vadd.f32 %v4797, %v167
  %v4862 = vadd.f32 %v4798, %v168
  %v4863 = vadd.f32 %v4799, %v169
  %v4864 = vadd.f32 %v4800, %v154
  %v4865 = vadd.f32 %v4801, %v155
  %v4866 = vadd.f32 %v4802, %v156
  %v4867 = vadd.f32 %v4803, %v157
  %v4868 = vadd.f32 %v4804, %v158
  %v4869 = vadd.f32 %v4805, %v159
  %v4870 = vadd.f32 %v4806, %v160
  %v4871 = vadd.f32 %v4807, %v161
  %v4872 = vadd.f32 %v4808, %v162
  %v4873 = vadd.f32 %v4809, %v163
  %v4874 = vadd.f32 %v4810, %v164
  %v4875 = vadd.f32 %v4811, %v165
  %v4876 = vadd.f32 %v4812, %v166
  %v4877 = vadd.f32 %v4813, %v167
  %v4878 = vadd.f32 %v4814, %v168
  %v4879 = vadd.f32 %v4815, %v169
  %v4880 = vadd.f32 %v4816, %v154
  %v4881 = vadd.f32 %v4817, %v155
  %v4882 = vadd.f32 %v4818, %v156
  %v4883 = vadd.f32 %v4819, %v157
  %v4884 = vadd.f32 %v4820, %v158
  %v4885 = vadd.f32 %v4821, %v159
  %v4886 = vadd.f32 %v4822, %v160
  %v4887 = vadd.f32 %v4823, %v161
  %v4888 = vadd.f32 %v4824, %v162
  %v4889 = vadd.f32 %v4825, %v163
  %v4890 = vadd.f32 %v4826, %v164
  %v4891 = vadd.f32 %v4827, %v165
  %v4892 = vadd.f32 %v4828, %v166
  %v4893 = vadd.f32 %v4829, %v167
  %v4894 = vadd.f32 %v4830, %v168
  %v4895 = vadd.f32 %v4831, %v169
  %v4896 = vadd.f32 %v4832, %v154
  %v4897 = vadd.f32 %v4833, %v155
  %v4898 = vadd.f32 %v4834, %v156
  %v4899 = vadd.f32 %v4835, %v157
  %v4900 = vadd.f32 %v4836, %v158
  %v4901 = vadd.f32 %v4837, %v159
  %v4902 = vadd.f32 %v4838, %v160
  %v4903 = vadd.f32 %v4839, %v161
  %v4904 = vadd.f32 %v4840, %v162
  %v4905 = vadd.f32 %v4841, %v163
  %v4906 = vadd.f32 %v4842, %v164
  %v4907 = vadd.f32 %v4843, %v165
  %v4908 = vadd.f32 %v4844, %v166
  %v4909 = vadd.f32 %v4845, %v167
  %v4910 = vadd.f32 %v4846, %v168
  %v4911 = vadd.f32 %v4847, %v169
  %4912 = vmax.xlane.f32.xlu0 %v4848
  %v4913 = vpop.xlane.xlu0 %4912
  %4914 = vmax.xlane.f32.xlu0 %v4849
  %v4915 = vpop.xlane.xlu0 %4914
  %4916 = vmax.xlane.f32.xlu0 %v4850
  %v4917 = vpop.xlane.xlu0 %4916
  %4918 = vmax.xlane.f32.xlu0 %v4851
  %v4919 = vpop.xlane.xlu0 %4918
  %4920 = vmax.xlane.f32.xlu0 %v4852
  %v4921 = vpop.xlane.xlu0 %4920
  %4922 = vmax.xlane.f32.xlu0 %v4853
  %v4923 = vpop.xlane.xlu0 %4922
  %4924 = vmax.xlane.f32.xlu0 %v4854
  %v4925 = vpop.xlane.xlu0 %4924
  %4926 = vmax.xlane.f32.xlu0 %v4855
  %v4927 = vpop.xlane.xlu0 %4926
  %4928 = vmax.xlane.f32.xlu0 %v4856
  %v4929 = vpop.xlane.xlu0 %4928
  %4930 = vmax.xlane.f32.xlu0 %v4857
  %v4931 = vpop.xlane.xlu0 %4930
  %4932 = vmax.xlane.f32.xlu0 %v4858
  %v4933 = vpop.xlane.xlu0 %4932
  %4934 = vmax.xlane.f32.xlu0 %v4859
  %v4935 = vpop.xlane.xlu0 %4934
  %4936 = vmax.xlane.f32.xlu0 %v4860
  %v4937 = vpop.xlane.xlu0 %4936
  %4938 = vmax.xlane.f32.xlu0 %v4861
  %v4939 = vpop.xlane.xlu0 %4938
  %4940 = vmax.xlane.f32.xlu0 %v4862
  %v4941 = vpop.xlane.xlu0 %4940
  %4942 = vmax.xlane.f32.xlu0 %v4863
  %v4943 = vpop.xlane.xlu0 %4942
  %4944 = vmax.xlane.f32.xlu0 %v4864
  %v4945 = vpop.xlane.xlu0 %4944
  %4946 = vmax.xlane.f32.xlu0 %v4865
  %v4947 = vpop.xlane.xlu0 %4946
  %4948 = vmax.xlane.f32.xlu0 %v4866
  %v4949 = vpop.xlane.xlu0 %4948
  %4950 = vmax.xlane.f32.xlu0 %v4867
  %v4951 = vpop.xlane.xlu0 %4950
  %4952 = vmax.xlane.f32.xlu0 %v4868
  %v4953 = vpop.xlane.xlu0 %4952
  %4954 = vmax.xlane.f32.xlu0 %v4869
  %v4955 = vpop.xlane.xlu0 %4954
  %4956 = vmax.xlane.f32.xlu0 %v4870
  %v4957 = vpop.xlane.xlu0 %4956
  %4958 = vmax.xlane.f32.xlu0 %v4871
  %v4959 = vpop.xlane.xlu0 %4958
  %4960 = vmax.xlane.f32.xlu0 %v4872
  %v4961 = vpop.xlane.xlu0 %4960
  %4962 = vmax.xlane.f32.xlu0 %v4873
  %v4963 = vpop.xlane.xlu0 %4962
  %4964 = vmax.xlane.f32.xlu0 %v4874
  %v4965 = vpop.xlane.xlu0 %4964
  %4966 = vmax.xlane.f32.xlu0 %v4875
  %v4967 = vpop.xlane.xlu0 %4966
  %4968 = vmax.xlane.f32.xlu0 %v4876
  %v4969 = vpop.xlane.xlu0 %4968
  %4970 = vmax.xlane.f32.xlu0 %v4877
  %v4971 = vpop.xlane.xlu0 %4970
  %4972 = vmax.xlane.f32.xlu0 %v4878
  %v4973 = vpop.xlane.xlu0 %4972
  %4974 = vmax.xlane.f32.xlu0 %v4879
  %v4975 = vpop.xlane.xlu0 %4974
  %4976 = vmax.xlane.f32.xlu0 %v4880
  %v4977 = vpop.xlane.xlu0 %4976
  %4978 = vmax.xlane.f32.xlu0 %v4881
  %v4979 = vpop.xlane.xlu0 %4978
  %4980 = vmax.xlane.f32.xlu0 %v4882
  %v4981 = vpop.xlane.xlu0 %4980
  %4982 = vmax.xlane.f32.xlu0 %v4883
  %v4983 = vpop.xlane.xlu0 %4982
  %4984 = vmax.xlane.f32.xlu0 %v4884
  %v4985 = vpop.xlane.xlu0 %4984
  %4986 = vmax.xlane.f32.xlu0 %v4885
  %v4987 = vpop.xlane.xlu0 %4986
  %4988 = vmax.xlane.f32.xlu0 %v4886
  %v4989 = vpop.xlane.xlu0 %4988
  %4990 = vmax.xlane.f32.xlu0 %v4887
  %v4991 = vpop.xlane.xlu0 %4990
  %4992 = vmax.xlane.f32.xlu0 %v4888
  %v4993 = vpop.xlane.xlu0 %4992
  %4994 = vmax.xlane.f32.xlu0 %v4889
  %v4995 = vpop.xlane.xlu0 %4994
  %4996 = vmax.xlane.f32.xlu0 %v4890
  %v4997 = vpop.xlane.xlu0 %4996
  %4998 = vmax.xlane.f32.xlu0 %v4891
  %v4999 = vpop.xlane.xlu0 %4998
  %5000 = vmax.xlane.f32.xlu0 %v4892
  %v5001 = vpop.xlane.xlu0 %5000
  %5002 = vmax.xlane.f32.xlu0 %v4893
  %v5003 = vpop.xlane.xlu0 %5002
  %5004 = vmax.xlane.f32.xlu0 %v4894
  %v5005 = vpop.xlane.xlu0 %5004
  %5006 = vmax.xlane.f32.xlu0 %v4895
  %v5007 = vpop.xlane.xlu0 %5006
  %5008 = vmax.xlane.f32.xlu0 %v4896
  %v5009 = vpop.xlane.xlu0 %5008
  %5010 = vmax.xlane.f32.xlu0 %v4897
  %v5011 = vpop.xlane.xlu0 %5010
  %5012 = vmax.xlane.f32.xlu0 %v4898
  %v5013 = vpop.xlane.xlu0 %5012
  %5014 = vmax.xlane.f32.xlu0 %v4899
  %v5015 = vpop.xlane.xlu0 %5014
  %5016 = vmax.xlane.f32.xlu0 %v4900
  %v5017 = vpop.xlane.xlu0 %5016
  %5018 = vmax.xlane.f32.xlu0 %v4901
  %v5019 = vpop.xlane.xlu0 %5018
  %5020 = vmax.xlane.f32.xlu0 %v4902
  %v5021 = vpop.xlane.xlu0 %5020
  %5022 = vmax.xlane.f32.xlu0 %v4903
  %v5023 = vpop.xlane.xlu0 %5022
  %5024 = vmax.xlane.f32.xlu0 %v4904
  %v5025 = vpop.xlane.xlu0 %5024
  %5026 = vmax.xlane.f32.xlu0 %v4905
  %v5027 = vpop.xlane.xlu0 %5026
  %5028 = vmax.xlane.f32.xlu0 %v4906
  %v5029 = vpop.xlane.xlu0 %5028
  %5030 = vmax.xlane.f32.xlu0 %v4907
  %v5031 = vpop.xlane.xlu0 %5030
  %5032 = vmax.xlane.f32.xlu0 %v4908
  %v5033 = vpop.xlane.xlu0 %5032
  %5034 = vmax.xlane.f32.xlu0 %v4909
  %v5035 = vpop.xlane.xlu0 %5034
  %5036 = vmax.xlane.f32.xlu0 %v4910
  %v5037 = vpop.xlane.xlu0 %5036
  %5038 = vmax.xlane.f32.xlu0 %v4911
  %v5039 = vpop.xlane.xlu0 %5038
  %v5040 = vsub.f32 %v4848, %v4913
  %v5041 = vsub.f32 %v4849, %v4915
  %v5042 = vsub.f32 %v4850, %v4917
  %v5043 = vsub.f32 %v4851, %v4919
  %v5044 = vsub.f32 %v4852, %v4921
  %v5045 = vsub.f32 %v4853, %v4923
  %v5046 = vsub.f32 %v4854, %v4925
  %v5047 = vsub.f32 %v4855, %v4927
  %v5048 = vsub.f32 %v4856, %v4929
  %v5049 = vsub.f32 %v4857, %v4931
  %v5050 = vsub.f32 %v4858, %v4933
  %v5051 = vsub.f32 %v4859, %v4935
  %v5052 = vsub.f32 %v4860, %v4937
  %v5053 = vsub.f32 %v4861, %v4939
  %v5054 = vsub.f32 %v4862, %v4941
  %v5055 = vsub.f32 %v4863, %v4943
  %v5056 = vsub.f32 %v4864, %v4945
  %v5057 = vsub.f32 %v4865, %v4947
  %v5058 = vsub.f32 %v4866, %v4949
  %v5059 = vsub.f32 %v4867, %v4951
  %v5060 = vsub.f32 %v4868, %v4953
  %v5061 = vsub.f32 %v4869, %v4955
  %v5062 = vsub.f32 %v4870, %v4957
  %v5063 = vsub.f32 %v4871, %v4959
  %v5064 = vsub.f32 %v4872, %v4961
  %v5065 = vsub.f32 %v4873, %v4963
  %v5066 = vsub.f32 %v4874, %v4965
  %v5067 = vsub.f32 %v4875, %v4967
  %v5068 = vsub.f32 %v4876, %v4969
  %v5069 = vsub.f32 %v4877, %v4971
  %v5070 = vsub.f32 %v4878, %v4973
  %v5071 = vsub.f32 %v4879, %v4975
  %v5072 = vsub.f32 %v4880, %v4977
  %v5073 = vsub.f32 %v4881, %v4979
  %v5074 = vsub.f32 %v4882, %v4981
  %v5075 = vsub.f32 %v4883, %v4983
  %v5076 = vsub.f32 %v4884, %v4985
  %v5077 = vsub.f32 %v4885, %v4987
  %v5078 = vsub.f32 %v4886, %v4989
  %v5079 = vsub.f32 %v4887, %v4991
  %v5080 = vsub.f32 %v4888, %v4993
  %v5081 = vsub.f32 %v4889, %v4995
  %v5082 = vsub.f32 %v4890, %v4997
  %v5083 = vsub.f32 %v4891, %v4999
  %v5084 = vsub.f32 %v4892, %v5001
  %v5085 = vsub.f32 %v4893, %v5003
  %v5086 = vsub.f32 %v4894, %v5005
  %v5087 = vsub.f32 %v4895, %v5007
  %v5088 = vsub.f32 %v4896, %v5009
  %v5089 = vsub.f32 %v4897, %v5011
  %v5090 = vsub.f32 %v4898, %v5013
  %v5091 = vsub.f32 %v4899, %v5015
  %v5092 = vsub.f32 %v4900, %v5017
  %v5093 = vsub.f32 %v4901, %v5019
  %v5094 = vsub.f32 %v4902, %v5021
  %v5095 = vsub.f32 %v4903, %v5023
  %v5096 = vsub.f32 %v4904, %v5025
  %v5097 = vsub.f32 %v4905, %v5027
  %v5098 = vsub.f32 %v4906, %v5029
  %v5099 = vsub.f32 %v4907, %v5031
  %v5100 = vsub.f32 %v4908, %v5033
  %v5101 = vsub.f32 %v4909, %v5035
  %v5102 = vsub.f32 %v4910, %v5037
  %v5103 = vsub.f32 %v4911, %v5039
  %v5104 = vmul.f32 %v5040, 1.442695
  %v5105 = vpow.pop %v5104
  %v5106 = vmul.f32 %v5041, 1.442695
  %v5107 = vpow.pop %v5106
  %v5108 = vmul.f32 %v5042, 1.442695
  %v5109 = vpow.pop %v5108
  %v5110 = vmul.f32 %v5043, 1.442695
  %v5111 = vpow.pop %v5110
  %v5112 = vmul.f32 %v5044, 1.442695
  %v5113 = vpow.pop %v5112
  %v5114 = vmul.f32 %v5045, 1.442695
  %v5115 = vpow.pop %v5114
  %v5116 = vmul.f32 %v5046, 1.442695
  %v5117 = vpow.pop %v5116
  %v5118 = vmul.f32 %v5047, 1.442695
  %v5119 = vpow.pop %v5118
  %v5120 = vmul.f32 %v5048, 1.442695
  %v5121 = vpow.pop %v5120
  %v5122 = vmul.f32 %v5049, 1.442695
  %v5123 = vpow.pop %v5122
  %v5124 = vmul.f32 %v5050, 1.442695
  %v5125 = vpow.pop %v5124
  %v5126 = vmul.f32 %v5051, 1.442695
  %v5127 = vpow.pop %v5126
  %v5128 = vmul.f32 %v5052, 1.442695
  %v5129 = vpow.pop %v5128
  %v5130 = vmul.f32 %v5053, 1.442695
  %v5131 = vpow.pop %v5130
  %v5132 = vmul.f32 %v5054, 1.442695
  %v5133 = vpow.pop %v5132
  %v5134 = vmul.f32 %v5055, 1.442695
  %v5135 = vpow.pop %v5134
  %v5136 = vmul.f32 %v5056, 1.442695
  %v5137 = vpow.pop %v5136
  %v5138 = vmul.f32 %v5057, 1.442695
  %v5139 = vpow.pop %v5138
  %v5140 = vmul.f32 %v5058, 1.442695
  %v5141 = vpow.pop %v5140
  %v5142 = vmul.f32 %v5059, 1.442695
  %v5143 = vpow.pop %v5142
  %v5144 = vmul.f32 %v5060, 1.442695
  %v5145 = vpow.pop %v5144
  %v5146 = vmul.f32 %v5061, 1.442695
  %v5147 = vpow.pop %v5146
  %v5148 = vmul.f32 %v5062, 1.442695
  %v5149 = vpow.pop %v5148
  %v5150 = vmul.f32 %v5063, 1.442695
  %v5151 = vpow.pop %v5150
  %v5152 = vmul.f32 %v5064, 1.442695
  %v5153 = vpow.pop %v5152
  %v5154 = vmul.f32 %v5065, 1.442695
  %v5155 = vpow.pop %v5154
  %v5156 = vmul.f32 %v5066, 1.442695
  %v5157 = vpow.pop %v5156
  %v5158 = vmul.f32 %v5067, 1.442695
  %v5159 = vpow.pop %v5158
  %v5160 = vmul.f32 %v5068, 1.442695
  %v5161 = vpow.pop %v5160
  %v5162 = vmul.f32 %v5069, 1.442695
  %v5163 = vpow.pop %v5162
  %v5164 = vmul.f32 %v5070, 1.442695
  %v5165 = vpow.pop %v5164
  %v5166 = vmul.f32 %v5071, 1.442695
  %v5167 = vpow.pop %v5166
  %v5168 = vmul.f32 %v5072, 1.442695
  %v5169 = vpow.pop %v5168
  %v5170 = vmul.f32 %v5073, 1.442695
  %v5171 = vpow.pop %v5170
  %v5172 = vmul.f32 %v5074, 1.442695
  %v5173 = vpow.pop %v5172
  %v5174 = vmul.f32 %v5075, 1.442695
  %v5175 = vpow.pop %v5174
  %v5176 = vmul.f32 %v5076, 1.442695
  %v5177 = vpow.pop %v5176
  %v5178 = vmul.f32 %v5077, 1.442695
  %v5179 = vpow.pop %v5178
  %v5180 = vmul.f32 %v5078, 1.442695
  %v5181 = vpow.pop %v5180
  %v5182 = vmul.f32 %v5079, 1.442695
  %v5183 = vpow.pop %v5182
  %v5184 = vmul.f32 %v5080, 1.442695
  %v5185 = vpow.pop %v5184
  %v5186 = vmul.f32 %v5081, 1.442695
  %v5187 = vpow.pop %v5186
  %v5188 = vmul.f32 %v5082, 1.442695
  %v5189 = vpow.pop %v5188
  %v5190 = vmul.f32 %v5083, 1.442695
  %v5191 = vpow.pop %v5190
  %v5192 = vmul.f32 %v5084, 1.442695
  %v5193 = vpow.pop %v5192
  %v5194 = vmul.f32 %v5085, 1.442695
  %v5195 = vpow.pop %v5194
  %v5196 = vmul.f32 %v5086, 1.442695
  %v5197 = vpow.pop %v5196
  %v5198 = vmul.f32 %v5087, 1.442695
  %v5199 = vpow.pop %v5198
  %v5200 = vmul.f32 %v5088, 1.442695
  %v5201 = vpow.pop %v5200
  %v5202 = vmul.f32 %v5089, 1.442695
  %v5203 = vpow.pop %v5202
  %v5204 = vmul.f32 %v5090, 1.442695
  %v5205 = vpow.pop %v5204
  %v5206 = vmul.f32 %v5091, 1.442695
  %v5207 = vpow.pop %v5206
  %v5208 = vmul.f32 %v5092, 1.442695
  %v5209 = vpow.pop %v5208
  %v5210 = vmul.f32 %v5093, 1.442695
  %v5211 = vpow.pop %v5210
  %v5212 = vmul.f32 %v5094, 1.442695
  %v5213 = vpow.pop %v5212
  %v5214 = vmul.f32 %v5095, 1.442695
  %v5215 = vpow.pop %v5214
  %v5216 = vmul.f32 %v5096, 1.442695
  %v5217 = vpow.pop %v5216
  %v5218 = vmul.f32 %v5097, 1.442695
  %v5219 = vpow.pop %v5218
  %v5220 = vmul.f32 %v5098, 1.442695
  %v5221 = vpow.pop %v5220
  %v5222 = vmul.f32 %v5099, 1.442695
  %v5223 = vpow.pop %v5222
  %v5224 = vmul.f32 %v5100, 1.442695
  %v5225 = vpow.pop %v5224
  %v5226 = vmul.f32 %v5101, 1.442695
  %v5227 = vpow.pop %v5226
  %v5228 = vmul.f32 %v5102, 1.442695
  %v5229 = vpow.pop %v5228
  %v5230 = vmul.f32 %v5103, 1.442695
  %v5231 = vpow.pop %v5230
  %5232 = vadd.xlane.f32.xlu0 %v5105
  %v5233 = vpop.xlane.xlu0 %5232
  %5234 = vadd.xlane.f32.xlu0 %v5107
  %v5235 = vpop.xlane.xlu0 %5234
  %5236 = vadd.xlane.f32.xlu0 %v5109
  %v5237 = vpop.xlane.xlu0 %5236
  %5238 = vadd.xlane.f32.xlu0 %v5111
  %v5239 = vpop.xlane.xlu0 %5238
  %5240 = vadd.xlane.f32.xlu0 %v5113
  %v5241 = vpop.xlane.xlu0 %5240
  %5242 = vadd.xlane.f32.xlu0 %v5115
  %v5243 = vpop.xlane.xlu0 %5242
  %5244 = vadd.xlane.f32.xlu0 %v5117
  %v5245 = vpop.xlane.xlu0 %5244
  %5246 = vadd.xlane.f32.xlu0 %v5119
  %v5247 = vpop.xlane.xlu0 %5246
  %5248 = vadd.xlane.f32.xlu0 %v5121
  %v5249 = vpop.xlane.xlu0 %5248
  %5250 = vadd.xlane.f32.xlu0 %v5123
  %v5251 = vpop.xlane.xlu0 %5250
  %5252 = vadd.xlane.f32.xlu0 %v5125
  %v5253 = vpop.xlane.xlu0 %5252
  %5254 = vadd.xlane.f32.xlu0 %v5127
  %v5255 = vpop.xlane.xlu0 %5254
  %5256 = vadd.xlane.f32.xlu0 %v5129
  %v5257 = vpop.xlane.xlu0 %5256
  %5258 = vadd.xlane.f32.xlu0 %v5131
  %v5259 = vpop.xlane.xlu0 %5258
  %5260 = vadd.xlane.f32.xlu0 %v5133
  %v5261 = vpop.xlane.xlu0 %5260
  %5262 = vadd.xlane.f32.xlu0 %v5135
  %v5263 = vpop.xlane.xlu0 %5262
  %5264 = vadd.xlane.f32.xlu0 %v5137
  %v5265 = vpop.xlane.xlu0 %5264
  %5266 = vadd.xlane.f32.xlu0 %v5139
  %v5267 = vpop.xlane.xlu0 %5266
  %5268 = vadd.xlane.f32.xlu0 %v5141
  %v5269 = vpop.xlane.xlu0 %5268
  %5270 = vadd.xlane.f32.xlu0 %v5143
  %v5271 = vpop.xlane.xlu0 %5270
  %5272 = vadd.xlane.f32.xlu0 %v5145
  %v5273 = vpop.xlane.xlu0 %5272
  %5274 = vadd.xlane.f32.xlu0 %v5147
  %v5275 = vpop.xlane.xlu0 %5274
  %5276 = vadd.xlane.f32.xlu0 %v5149
  %v5277 = vpop.xlane.xlu0 %5276
  %5278 = vadd.xlane.f32.xlu0 %v5151
  %v5279 = vpop.xlane.xlu0 %5278
  %5280 = vadd.xlane.f32.xlu0 %v5153
  %v5281 = vpop.xlane.xlu0 %5280
  %5282 = vadd.xlane.f32.xlu0 %v5155
  %v5283 = vpop.xlane.xlu0 %5282
  %5284 = vadd.xlane.f32.xlu0 %v5157
  %v5285 = vpop.xlane.xlu0 %5284
  %5286 = vadd.xlane.f32.xlu0 %v5159
  %v5287 = vpop.xlane.xlu0 %5286
  %5288 = vadd.xlane.f32.xlu0 %v5161
  %v5289 = vpop.xlane.xlu0 %5288
  %5290 = vadd.xlane.f32.xlu0 %v5163
  %v5291 = vpop.xlane.xlu0 %5290
  %5292 = vadd.xlane.f32.xlu0 %v5165
  %v5293 = vpop.xlane.xlu0 %5292
  %5294 = vadd.xlane.f32.xlu0 %v5167
  %v5295 = vpop.xlane.xlu0 %5294
  %5296 = vadd.xlane.f32.xlu0 %v5169
  %v5297 = vpop.xlane.xlu0 %5296
  %5298 = vadd.xlane.f32.xlu0 %v5171
  %v5299 = vpop.xlane.xlu0 %5298
  %5300 = vadd.xlane.f32.xlu0 %v5173
  %v5301 = vpop.xlane.xlu0 %5300
  %5302 = vadd.xlane.f32.xlu0 %v5175
  %v5303 = vpop.xlane.xlu0 %5302
  %5304 = vadd.xlane.f32.xlu0 %v5177
  %v5305 = vpop.xlane.xlu0 %5304
  %5306 = vadd.xlane.f32.xlu0 %v5179
  %v5307 = vpop.xlane.xlu0 %5306
  %5308 = vadd.xlane.f32.xlu0 %v5181
  %v5309 = vpop.xlane.xlu0 %5308
  %5310 = vadd.xlane.f32.xlu0 %v5183
  %v5311 = vpop.xlane.xlu0 %5310
  %5312 = vadd.xlane.f32.xlu0 %v5185
  %v5313 = vpop.xlane.xlu0 %5312
  %5314 = vadd.xlane.f32.xlu0 %v5187
  %v5315 = vpop.xlane.xlu0 %5314
  %5316 = vadd.xlane.f32.xlu0 %v5189
  %v5317 = vpop.xlane.xlu0 %5316
  %5318 = vadd.xlane.f32.xlu0 %v5191
  %v5319 = vpop.xlane.xlu0 %5318
  %5320 = vadd.xlane.f32.xlu0 %v5193
  %v5321 = vpop.xlane.xlu0 %5320
  %5322 = vadd.xlane.f32.xlu0 %v5195
  %v5323 = vpop.xlane.xlu0 %5322
  %5324 = vadd.xlane.f32.xlu0 %v5197
  %v5325 = vpop.xlane.xlu0 %5324
  %5326 = vadd.xlane.f32.xlu0 %v5199
  %v5327 = vpop.xlane.xlu0 %5326
  %5328 = vadd.xlane.f32.xlu0 %v5201
  %v5329 = vpop.xlane.xlu0 %5328
  %5330 = vadd.xlane.f32.xlu0 %v5203
  %v5331 = vpop.xlane.xlu0 %5330
  %5332 = vadd.xlane.f32.xlu0 %v5205
  %v5333 = vpop.xlane.xlu0 %5332
  %5334 = vadd.xlane.f32.xlu0 %v5207
  %v5335 = vpop.xlane.xlu0 %5334
  %5336 = vadd.xlane.f32.xlu0 %v5209
  %v5337 = vpop.xlane.xlu0 %5336
  %5338 = vadd.xlane.f32.xlu0 %v5211
  %v5339 = vpop.xlane.xlu0 %5338
  %5340 = vadd.xlane.f32.xlu0 %v5213
  %v5341 = vpop.xlane.xlu0 %5340
  %5342 = vadd.xlane.f32.xlu0 %v5215
  %v5343 = vpop.xlane.xlu0 %5342
  %5344 = vadd.xlane.f32.xlu0 %v5217
  %v5345 = vpop.xlane.xlu0 %5344
  %5346 = vadd.xlane.f32.xlu0 %v5219
  %v5347 = vpop.xlane.xlu0 %5346
  %5348 = vadd.xlane.f32.xlu0 %v5221
  %v5349 = vpop.xlane.xlu0 %5348
  %5350 = vadd.xlane.f32.xlu0 %v5223
  %v5351 = vpop.xlane.xlu0 %5350
  %5352 = vadd.xlane.f32.xlu0 %v5225
  %v5353 = vpop.xlane.xlu0 %5352
  %5354 = vadd.xlane.f32.xlu0 %v5227
  %v5355 = vpop.xlane.xlu0 %5354
  %5356 = vadd.xlane.f32.xlu0 %v5229
  %v5357 = vpop.xlane.xlu0 %5356
  %5358 = vadd.xlane.f32.xlu0 %v5231
  %v5359 = vpop.xlane.xlu0 %5358
  %v5360 = vrcp.pop %v5233
  %v5361 = vrcp.pop %v5235
  %v5362 = vrcp.pop %v5237
  %v5363 = vrcp.pop %v5239
  %v5364 = vrcp.pop %v5241
  %v5365 = vrcp.pop %v5243
  %v5366 = vrcp.pop %v5245
  %v5367 = vrcp.pop %v5247
  %v5368 = vrcp.pop %v5249
  %v5369 = vrcp.pop %v5251
  %v5370 = vrcp.pop %v5253
  %v5371 = vrcp.pop %v5255
  %v5372 = vrcp.pop %v5257
  %v5373 = vrcp.pop %v5259
  %v5374 = vrcp.pop %v5261
  %v5375 = vrcp.pop %v5263
  %v5376 = vrcp.pop %v5265
  %v5377 = vrcp.pop %v5267
  %v5378 = vrcp.pop %v5269
  %v5379 = vrcp.pop %v5271
  %v5380 = vrcp.pop %v5273
  %v5381 = vrcp.pop %v5275
  %v5382 = vrcp.pop %v5277
  %v5383 = vrcp.pop %v5279
  %v5384 = vrcp.pop %v5281
  %v5385 = vrcp.pop %v5283
  %v5386 = vrcp.pop %v5285
  %v5387 = vrcp.pop %v5287
  %v5388 = vrcp.pop %v5289
  %v5389 = vrcp.pop %v5291
  %v5390 = vrcp.pop %v5293
  %v5391 = vrcp.pop %v5295
  %v5392 = vrcp.pop %v5297
  %v5393 = vrcp.pop %v5299
  %v5394 = vrcp.pop %v5301
  %v5395 = vrcp.pop %v5303
  %v5396 = vrcp.pop %v5305
  %v5397 = vrcp.pop %v5307
  %v5398 = vrcp.pop %v5309
  %v5399 = vrcp.pop %v5311
  %v5400 = vrcp.pop %v5313
  %v5401 = vrcp.pop %v5315
  %v5402 = vrcp.pop %v5317
  %v5403 = vrcp.pop %v5319
  %v5404 = vrcp.pop %v5321
  %v5405 = vrcp.pop %v5323
  %v5406 = vrcp.pop %v5325
  %v5407 = vrcp.pop %v5327
  %v5408 = vrcp.pop %v5329
  %v5409 = vrcp.pop %v5331
  %v5410 = vrcp.pop %v5333
  %v5411 = vrcp.pop %v5335
  %v5412 = vrcp.pop %v5337
  %v5413 = vrcp.pop %v5339
  %v5414 = vrcp.pop %v5341
  %v5415 = vrcp.pop %v5343
  %v5416 = vrcp.pop %v5345
  %v5417 = vrcp.pop %v5347
  %v5418 = vrcp.pop %v5349
  %v5419 = vrcp.pop %v5351
  %v5420 = vrcp.pop %v5353
  %v5421 = vrcp.pop %v5355
  %v5422 = vrcp.pop %v5357
  %v5423 = vrcp.pop %v5359
  %v5424 = vmul.f32 %v5105, %v5360
  %v5425 = vmul.f32 %v5107, %v5361
  %v5426 = vmul.f32 %v5109, %v5362
  %v5427 = vmul.f32 %v5111, %v5363
  %v5428 = vmul.f32 %v5113, %v5364
  %v5429 = vmul.f32 %v5115, %v5365
  %v5430 = vmul.f32 %v5117, %v5366
  %v5431 = vmul.f32 %v5119, %v5367
  %v5432 = vmul.f32 %v5121, %v5368
  %v5433 = vmul.f32 %v5123, %v5369
  %v5434 = vmul.f32 %v5125, %v5370
  %v5435 = vmul.f32 %v5127, %v5371
  %v5436 = vmul.f32 %v5129, %v5372
  %v5437 = vmul.f32 %v5131, %v5373
  %v5438 = vmul.f32 %v5133, %v5374
  %v5439 = vmul.f32 %v5135, %v5375
  %v5440 = vmul.f32 %v5137, %v5376
  %v5441 = vmul.f32 %v5139, %v5377
  %v5442 = vmul.f32 %v5141, %v5378
  %v5443 = vmul.f32 %v5143, %v5379
  %v5444 = vmul.f32 %v5145, %v5380
  %v5445 = vmul.f32 %v5147, %v5381
  %v5446 = vmul.f32 %v5149, %v5382
  %v5447 = vmul.f32 %v5151, %v5383
  %v5448 = vmul.f32 %v5153, %v5384
  %v5449 = vmul.f32 %v5155, %v5385
  %v5450 = vmul.f32 %v5157, %v5386
  %v5451 = vmul.f32 %v5159, %v5387
  %v5452 = vmul.f32 %v5161, %v5388
  %v5453 = vmul.f32 %v5163, %v5389
  %v5454 = vmul.f32 %v5165, %v5390
  %v5455 = vmul.f32 %v5167, %v5391
  %v5456 = vmul.f32 %v5169, %v5392
  %v5457 = vmul.f32 %v5171, %v5393
  %v5458 = vmul.f32 %v5173, %v5394
  %v5459 = vmul.f32 %v5175, %v5395
  %v5460 = vmul.f32 %v5177, %v5396
  %v5461 = vmul.f32 %v5179, %v5397
  %v5462 = vmul.f32 %v5181, %v5398
  %v5463 = vmul.f32 %v5183, %v5399
  %v5464 = vmul.f32 %v5185, %v5400
  %v5465 = vmul.f32 %v5187, %v5401
  %v5466 = vmul.f32 %v5189, %v5402
  %v5467 = vmul.f32 %v5191, %v5403
  %v5468 = vmul.f32 %v5193, %v5404
  %v5469 = vmul.f32 %v5195, %v5405
  %v5470 = vmul.f32 %v5197, %v5406
  %v5471 = vmul.f32 %v5199, %v5407
  %v5472 = vmul.f32 %v5201, %v5408
  %v5473 = vmul.f32 %v5203, %v5409
  %v5474 = vmul.f32 %v5205, %v5410
  %v5475 = vmul.f32 %v5207, %v5411
  %v5476 = vmul.f32 %v5209, %v5412
  %v5477 = vmul.f32 %v5211, %v5413
  %v5478 = vmul.f32 %v5213, %v5414
  %v5479 = vmul.f32 %v5215, %v5415
  %v5480 = vmul.f32 %v5217, %v5416
  %v5481 = vmul.f32 %v5219, %v5417
  %v5482 = vmul.f32 %v5221, %v5418
  %v5483 = vmul.f32 %v5223, %v5419
  %v5484 = vmul.f32 %v5225, %v5420
  %v5485 = vmul.f32 %v5227, %v5421
  %v5486 = vmul.f32 %v5229, %v5422
  %v5487 = vmul.f32 %v5231, %v5423
  %v5488 = vpack.c.bf16 %v5425, %v5424
  %v5489 = vpack.c.bf16 %v5427, %v5426
  %v5490 = vpack.c.bf16 %v5429, %v5428
  %v5491 = vpack.c.bf16 %v5431, %v5430
  %v5492 = vpack.c.bf16 %v5433, %v5432
  %v5493 = vpack.c.bf16 %v5435, %v5434
  %v5494 = vpack.c.bf16 %v5437, %v5436
  %v5495 = vpack.c.bf16 %v5439, %v5438
  %v5496 = vpack.c.bf16 %v5441, %v5440
  %v5497 = vpack.c.bf16 %v5443, %v5442
  %v5498 = vpack.c.bf16 %v5445, %v5444
  %v5499 = vpack.c.bf16 %v5447, %v5446
  %v5500 = vpack.c.bf16 %v5449, %v5448
  %v5501 = vpack.c.bf16 %v5451, %v5450
  %v5502 = vpack.c.bf16 %v5453, %v5452
  %v5503 = vpack.c.bf16 %v5455, %v5454
  %v5504 = vpack.c.bf16 %v5457, %v5456
  %v5505 = vpack.c.bf16 %v5459, %v5458
  %v5506 = vpack.c.bf16 %v5461, %v5460
  %v5507 = vpack.c.bf16 %v5463, %v5462
  %v5508 = vpack.c.bf16 %v5465, %v5464
  %v5509 = vpack.c.bf16 %v5467, %v5466
  %v5510 = vpack.c.bf16 %v5469, %v5468
  %v5511 = vpack.c.bf16 %v5471, %v5470
  %v5512 = vpack.c.bf16 %v5473, %v5472
  %v5513 = vpack.c.bf16 %v5475, %v5474
  %v5514 = vpack.c.bf16 %v5477, %v5476
  %v5515 = vpack.c.bf16 %v5479, %v5478
  %v5516 = vpack.c.bf16 %v5481, %v5480
  %v5517 = vpack.c.bf16 %v5483, %v5482
  %v5518 = vpack.c.bf16 %v5485, %v5484
  %v5519 = vpack.c.bf16 %v5487, %v5486
  %5520 = vrot.lane.b32.xlu0 %v4076, 64
  %v5521 = vpop.permute.xlu0 %5520
  %5522 = vrot.lane.b32.xlu0 %v4077, 64
  %v5523 = vpop.permute.xlu0 %5522
  %5524 = vrot.lane.b32.xlu0 %v4078, 64
  %v5525 = vpop.permute.xlu0 %5524
  %5526 = vrot.lane.b32.xlu0 %v4079, 64
  %v5527 = vpop.permute.xlu0 %5526
  %5528 = vrot.lane.b32.xlu0 %v4080, 64
  %v5529 = vpop.permute.xlu0 %5528
  %5530 = vrot.lane.b32.xlu0 %v4081, 64
  %v5531 = vpop.permute.xlu0 %5530
  %5532 = vrot.lane.b32.xlu0 %v4082, 64
  %v5533 = vpop.permute.xlu0 %5532
  %5534 = vrot.lane.b32.xlu0 %v4083, 64
  %v5535 = vpop.permute.xlu0 %5534
  %5544 = vmatprep.subr.bf16.mxu0 0
  %5545 = vmatpush1.bf16.msra.mxu0 %v5521
  %5546 = vmatprep.subr.bf16.mxu0 0
  %5547 = vmatpush1.bf16.msra.mxu0 %v5523
  %5548 = vmatprep.subr.bf16.mxu0 0
  %5549 = vmatpush1.bf16.msra.mxu0 %v5525
  %5550 = vmatprep.subr.bf16.mxu0 0
  %5551 = vmatpush1.bf16.msra.mxu0 %v5527
  %5552 = vmatprep.subr.bf16.mxu0 0
  %5553 = vmatpush1.bf16.msra.mxu0 %v5529
  %5554 = vmatprep.subr.bf16.mxu0 0
  %5555 = vmatpush1.bf16.msra.mxu0 %v5531
  %5556 = vmatprep.subr.bf16.mxu0 0
  %5557 = vmatpush1.bf16.msra.mxu0 %v5533
  %5558 = vmatprep.subr.bf16.mxu0 0
  %5559 = vmatpush1.bf16.msra.mxu0 %v5535
  %5560 = vmatprep.subr.bf16.mxu0 0
  %5561 = vmatpush1.bf16.msra.mxu0 0
  %5562 = vmatprep.subr.bf16.mxu0 0
  %5563 = vmatpush1.bf16.msra.mxu0 0
  %5564 = vmatprep.subr.bf16.mxu0 0
  %5565 = vmatpush1.bf16.msra.mxu0 0
  %5566 = vmatprep.subr.bf16.mxu0 0
  %5567 = vmatpush1.bf16.msra.mxu0 0
  %5568 = vmatprep.subr.bf16.mxu0 0
  %5569 = vmatpush1.bf16.msra.mxu0 0
  %5570 = vmatprep.subr.bf16.mxu0 0
  %5571 = vmatpush1.bf16.msra.mxu0 0
  %5572 = vmatprep.subr.bf16.mxu0 0
  %5573 = vmatpush1.bf16.msra.mxu0 0
  %5574 = vmatprep.subr.bf16.mxu0 0
  %5575 = vmatpush1.bf16.msra.mxu0 0
  %5576 = vmatprep.mubr.bf16.mxu0 0
  %5577 = vmatmul.mubr.bf16.gmra.mrb[0].mxu0 %v5488
  %v5578 = vpop.f32.mrb[0].mxu0
  %v5579 = vadd.f32 0.0, %v5578
  %v5580 = vpop.f32.mrb[0].mxu0
  %v5581 = vpop.f32.mrb[0].mxu0
  %v5582 = vadd.f32 0.0, %v5581
  %v5583 = vpop.f32.mrb[0].mxu0
  %5584 = vmatprep.mubr.bf16.mxu0 0
  %5585 = vmatmul.mubr.bf16.gmra.mrb[0].mxu0 %v5489
  %v5586 = vpop.f32.mrb[0].mxu0
  %v5587 = vadd.f32 0.0, %v5586
  %v5588 = vpop.f32.mrb[0].mxu0
  %v5589 = vpop.f32.mrb[0].mxu0
  %v5590 = vadd.f32 0.0, %v5589
  %v5591 = vpop.f32.mrb[0].mxu0
  %5592 = vmatprep.mubr.bf16.mxu0 0
  %5593 = vmatmul.mubr.bf16.gmra.mrb[0].mxu0 %v5490
  %v5594 = vpop.f32.mrb[0].mxu0
  %v5595 = vadd.f32 0.0, %v5594
  %v5596 = vpop.f32.mrb[0].mxu0
  %v5597 = vpop.f32.mrb[0].mxu0
  %v5598 = vadd.f32 0.0, %v5597
  %v5599 = vpop.f32.mrb[0].mxu0
  %5600 = vmatprep.mubr.bf16.mxu0 0
  %5601 = vmatmul.mubr.bf16.gmra.mrb[0].mxu0 %v5491
  %v5602 = vpop.f32.mrb[0].mxu0
  %v5603 = vadd.f32 0.0, %v5602
  %v5604 = vpop.f32.mrb[0].mxu0
  %v5605 = vpop.f32.mrb[0].mxu0
  %v5606 = vadd.f32 0.0, %v5605
  %v5607 = vpop.f32.mrb[0].mxu0
  %5608 = vmatprep.mubr.bf16.mxu0 0
  %5609 = vmatmul.mubr.bf16.gmra.mrb[0].mxu0 %v5492
  %v5610 = vpop.f32.mrb[0].mxu0
  %v5611 = vadd.f32 0.0, %v5610
  %v5612 = vpop.f32.mrb[0].mxu0
  %v5613 = vpop.f32.mrb[0].mxu0
  %v5614 = vadd.f32 0.0, %v5613
  %v5615 = vpop.f32.mrb[0].mxu0
  %5616 = vmatprep.mubr.bf16.mxu0 0
  %5617 = vmatmul.mubr.bf16.gmra.mrb[0].mxu0 %v5493
  %v5618 = vpop.f32.mrb[0].mxu0
  %v5619 = vadd.f32 0.0, %v5618
  %v5620 = vpop.f32.mrb[0].mxu0
  %v5621 = vpop.f32.mrb[0].mxu0
  %v5622 = vadd.f32 0.0, %v5621
  %v5623 = vpop.f32.mrb[0].mxu0
  %5624 = vmatprep.mubr.bf16.mxu0 0
  %5625 = vmatmul.mubr.bf16.gmra.mrb[0].mxu0 %v5494
  %v5626 = vpop.f32.mrb[0].mxu0
  %v5627 = vadd.f32 0.0, %v5626
  %v5628 = vpop.f32.mrb[0].mxu0
  %v5629 = vpop.f32.mrb[0].mxu0
  %v5630 = vadd.f32 0.0, %v5629
  %v5631 = vpop.f32.mrb[0].mxu0
  %5632 = vmatprep.mubr.bf16.mxu0 0
  %5633 = vmatmul.mubr.bf16.gmra.mrb[0].mxu0 %v5495
  %v5634 = vpop.f32.mrb[0].mxu0
  %v5635 = vadd.f32 0.0, %v5634
  %v5636 = vpop.f32.mrb[0].mxu0
  %v5637 = vpop.f32.mrb[0].mxu0
  %v5638 = vadd.f32 0.0, %v5637
  %v5639 = vpop.f32.mrb[0].mxu0
  %5640 = vdwg.mxu0
  %5641 = vrot.lane.b32.xlu0 %v4076, 56
  %v5642 = vpop.permute.xlu0 %5641
  %5643 = vrot.lane.b32.xlu0 %v4077, 56
  %v5644 = vpop.permute.xlu0 %5643
  %5645 = vrot.lane.b32.xlu0 %v4078, 56
  %v5646 = vpop.permute.xlu0 %5645
  %5647 = vrot.lane.b32.xlu0 %v4079, 56
  %v5648 = vpop.permute.xlu0 %5647
  %5649 = vrot.lane.b32.xlu0 %v4080, 56
  %v5650 = vpop.permute.xlu0 %5649
  %5651 = vrot.lane.b32.xlu0 %v4081, 56
  %v5652 = vpop.permute.xlu0 %5651
  %5653 = vrot.lane.b32.xlu0 %v4082, 56
  %v5654 = vpop.permute.xlu0 %5653
  %5655 = vrot.lane.b32.xlu0 %v4083, 56
  %v5656 = vpop.permute.xlu0 %5655
  %5665 = vmatprep.subr.bf16.mxu0 0
  %5666 = vmatpush1.bf16.msra.mxu0 %v5642
  %5667 = vmatprep.subr.bf16.mxu0 0
  %5668 = vmatpush1.bf16.msra.mxu0 %v5644
  %5669 = vmatprep.subr.bf16.mxu0 0
  %5670 = vmatpush1.bf16.msra.mxu0 %v5646
  %5671 = vmatprep.subr.bf16.mxu0 0
  %5672 = vmatpush1.bf16.msra.mxu0 %v5648
  %5673 = vmatprep.subr.bf16.mxu0 0
  %5674 = vmatpush1.bf16.msra.mxu0 %v5650
  %5675 = vmatprep.subr.bf16.mxu0 0
  %5676 = vmatpush1.bf16.msra.mxu0 %v5652
  %5677 = vmatprep.subr.bf16.mxu0 0
  %5678 = vmatpush1.bf16.msra.mxu0 %v5654
  %5679 = vmatprep.subr.bf16.mxu0 0
  %5680 = vmatpush1.bf16.msra.mxu0 %v5656
  %5681 = vmatprep.subr.bf16.mxu0 0
  %5682 = vmatpush1.bf16.msra.mxu0 0
  %5683 = vmatprep.subr.bf16.mxu0 0
  %5684 = vmatpush1.bf16.msra.mxu0 0
  %5685 = vmatprep.subr.bf16.mxu0 0
  %5686 = vmatpush1.bf16.msra.mxu0 0
  %5687 = vmatprep.subr.bf16.mxu0 0
  %5688 = vmatpush1.bf16.msra.mxu0 0
  %5689 = vmatprep.subr.bf16.mxu0 0
  %5690 = vmatpush1.bf16.msra.mxu0 0
  %5691 = vmatprep.subr.bf16.mxu0 0
  %5692 = vmatpush1.bf16.msra.mxu0 0
  %5693 = vmatprep.subr.bf16.mxu0 0
  %5694 = vmatpush1.bf16.msra.mxu0 0
  %5695 = vmatprep.subr.bf16.mxu0 0
  %5696 = vmatpush1.bf16.msra.mxu0 0
  %5697 = vmatprep.mubr.bf16.mxu0 0
  %5698 = vmatmul.mubr.bf16.gmra.mrb[0].mxu0 %v5496
  %v5699 = vpop.f32.mrb[0].mxu0
  %v5700 = vadd.f32 0.0, %v5699
  %v5701 = vpop.f32.mrb[0].mxu0
  %v5702 = vpop.f32.mrb[0].mxu0
  %v5703 = vadd.f32 0.0, %v5702
  %v5704 = vpop.f32.mrb[0].mxu0
  %5705 = vmatprep.mubr.bf16.mxu0 0
  %5706 = vmatmul.mubr.bf16.gmra.mrb[0].mxu0 %v5497
  %v5707 = vpop.f32.mrb[0].mxu0
  %v5708 = vadd.f32 0.0, %v5707
  %v5709 = vpop.f32.mrb[0].mxu0
  %v5710 = vpop.f32.mrb[0].mxu0
  %v5711 = vadd.f32 0.0, %v5710
  %v5712 = vpop.f32.mrb[0].mxu0
  %5713 = vmatprep.mubr.bf16.mxu0 0
  %5714 = vmatmul.mubr.bf16.gmra.mrb[0].mxu0 %v5498
  %v5715 = vpop.f32.mrb[0].mxu0
  %v5716 = vadd.f32 0.0, %v5715
  %v5717 = vpop.f32.mrb[0].mxu0
  %v5718 = vpop.f32.mrb[0].mxu0
  %v5719 = vadd.f32 0.0, %v5718
  %v5720 = vpop.f32.mrb[0].mxu0
  %5721 = vmatprep.mubr.bf16.mxu0 0
  %5722 = vmatmul.mubr.bf16.gmra.mrb[0].mxu0 %v5499
  %v5723 = vpop.f32.mrb[0].mxu0
  %v5724 = vadd.f32 0.0, %v5723
  %v5725 = vpop.f32.mrb[0].mxu0
  %v5726 = vpop.f32.mrb[0].mxu0
  %v5727 = vadd.f32 0.0, %v5726
  %v5728 = vpop.f32.mrb[0].mxu0
  %5729 = vmatprep.mubr.bf16.mxu0 0
  %5730 = vmatmul.mubr.bf16.gmra.mrb[0].mxu0 %v5500
  %v5731 = vpop.f32.mrb[0].mxu0
  %v5732 = vadd.f32 0.0, %v5731
  %v5733 = vpop.f32.mrb[0].mxu0
  %v5734 = vpop.f32.mrb[0].mxu0
  %v5735 = vadd.f32 0.0, %v5734
  %v5736 = vpop.f32.mrb[0].mxu0
  %5737 = vmatprep.mubr.bf16.mxu0 0
  %5738 = vmatmul.mubr.bf16.gmra.mrb[0].mxu0 %v5501
  %v5739 = vpop.f32.mrb[0].mxu0
  %v5740 = vadd.f32 0.0, %v5739
  %v5741 = vpop.f32.mrb[0].mxu0
  %v5742 = vpop.f32.mrb[0].mxu0
  %v5743 = vadd.f32 0.0, %v5742
  %v5744 = vpop.f32.mrb[0].mxu0
  %5745 = vmatprep.mubr.bf16.mxu0 0
  %5746 = vmatmul.mubr.bf16.gmra.mrb[0].mxu0 %v5502
  %v5747 = vpop.f32.mrb[0].mxu0
  %v5748 = vadd.f32 0.0, %v5747
  %v5749 = vpop.f32.mrb[0].mxu0
  %v5750 = vpop.f32.mrb[0].mxu0
  %v5751 = vadd.f32 0.0, %v5750
  %v5752 = vpop.f32.mrb[0].mxu0
  %5753 = vmatprep.mubr.bf16.mxu0 0
  %5754 = vmatmul.mubr.bf16.gmra.mrb[0].mxu0 %v5503
  %v5755 = vpop.f32.mrb[0].mxu0
  %v5756 = vadd.f32 0.0, %v5755
  %v5757 = vpop.f32.mrb[0].mxu0
  %v5758 = vpop.f32.mrb[0].mxu0
  %v5759 = vadd.f32 0.0, %v5758
  %v5760 = vpop.f32.mrb[0].mxu0
  %5761 = vdwg.mxu0
  %5762 = vrot.lane.b32.xlu0 %v4076, 48
  %v5763 = vpop.permute.xlu0 %5762
  %5764 = vrot.lane.b32.xlu0 %v4077, 48
  %v5765 = vpop.permute.xlu0 %5764
  %5766 = vrot.lane.b32.xlu0 %v4078, 48
  %v5767 = vpop.permute.xlu0 %5766
  %5768 = vrot.lane.b32.xlu0 %v4079, 48
  %v5769 = vpop.permute.xlu0 %5768
  %5770 = vrot.lane.b32.xlu0 %v4080, 48
  %v5771 = vpop.permute.xlu0 %5770
  %5772 = vrot.lane.b32.xlu0 %v4081, 48
  %v5773 = vpop.permute.xlu0 %5772
  %5774 = vrot.lane.b32.xlu0 %v4082, 48
  %v5775 = vpop.permute.xlu0 %5774
  %5776 = vrot.lane.b32.xlu0 %v4083, 48
  %v5777 = vpop.permute.xlu0 %5776
  %5786 = vmatprep.subr.bf16.mxu0 0
  %5787 = vmatpush1.bf16.msra.mxu0 %v5763
  %5788 = vmatprep.subr.bf16.mxu0 0
  %5789 = vmatpush1.bf16.msra.mxu0 %v5765
  %5790 = vmatprep.subr.bf16.mxu0 0
  %5791 = vmatpush1.bf16.msra.mxu0 %v5767
  %5792 = vmatprep.subr.bf16.mxu0 0
  %5793 = vmatpush1.bf16.msra.mxu0 %v5769
  %5794 = vmatprep.subr.bf16.mxu0 0
  %5795 = vmatpush1.bf16.msra.mxu0 %v5771
  %5796 = vmatprep.subr.bf16.mxu0 0
  %5797 = vmatpush1.bf16.msra.mxu0 %v5773
  %5798 = vmatprep.subr.bf16.mxu0 0
  %5799 = vmatpush1.bf16.msra.mxu0 %v5775
  %5800 = vmatprep.subr.bf16.mxu0 0
  %5801 = vmatpush1.bf16.msra.mxu0 %v5777
  %5802 = vmatprep.subr.bf16.mxu0 0
  %5803 = vmatpush1.bf16.msra.mxu0 0
  %5804 = vmatprep.subr.bf16.mxu0 0
  %5805 = vmatpush1.bf16.msra.mxu0 0
  %5806 = vmatprep.subr.bf16.mxu0 0
  %5807 = vmatpush1.bf16.msra.mxu0 0
  %5808 = vmatprep.subr.bf16.mxu0 0
  %5809 = vmatpush1.bf16.msra.mxu0 0
  %5810 = vmatprep.subr.bf16.mxu0 0
  %5811 = vmatpush1.bf16.msra.mxu0 0
  %5812 = vmatprep.subr.bf16.mxu0 0
  %5813 = vmatpush1.bf16.msra.mxu0 0
  %5814 = vmatprep.subr.bf16.mxu0 0
  %5815 = vmatpush1.bf16.msra.mxu0 0
  %5816 = vmatprep.subr.bf16.mxu0 0
  %5817 = vmatpush1.bf16.msra.mxu0 0
  %5818 = vmatprep.mubr.bf16.mxu0 0
  %5819 = vmatmul.mubr.bf16.gmra.mrb[0].mxu0 %v5504
  %v5820 = vpop.f32.mrb[0].mxu0
  %v5821 = vadd.f32 0.0, %v5820
  %v5822 = vpop.f32.mrb[0].mxu0
  %v5823 = vpop.f32.mrb[0].mxu0
  %v5824 = vadd.f32 0.0, %v5823
  %v5825 = vpop.f32.mrb[0].mxu0
  %5826 = vmatprep.mubr.bf16.mxu0 0
  %5827 = vmatmul.mubr.bf16.gmra.mrb[0].mxu0 %v5505
  %v5828 = vpop.f32.mrb[0].mxu0
  %v5829 = vadd.f32 0.0, %v5828
  %v5830 = vpop.f32.mrb[0].mxu0
  %v5831 = vpop.f32.mrb[0].mxu0
  %v5832 = vadd.f32 0.0, %v5831
  %v5833 = vpop.f32.mrb[0].mxu0
  %5834 = vmatprep.mubr.bf16.mxu0 0
  %5835 = vmatmul.mubr.bf16.gmra.mrb[0].mxu0 %v5506
  %v5836 = vpop.f32.mrb[0].mxu0
  %v5837 = vadd.f32 0.0, %v5836
  %v5838 = vpop.f32.mrb[0].mxu0
  %v5839 = vpop.f32.mrb[0].mxu0
  %v5840 = vadd.f32 0.0, %v5839
  %v5841 = vpop.f32.mrb[0].mxu0
  %5842 = vmatprep.mubr.bf16.mxu0 0
  %5843 = vmatmul.mubr.bf16.gmra.mrb[0].mxu0 %v5507
  %v5844 = vpop.f32.mrb[0].mxu0
  %v5845 = vadd.f32 0.0, %v5844
  %v5846 = vpop.f32.mrb[0].mxu0
  %v5847 = vpop.f32.mrb[0].mxu0
  %v5848 = vadd.f32 0.0, %v5847
  %v5849 = vpop.f32.mrb[0].mxu0
  %5850 = vmatprep.mubr.bf16.mxu0 0
  %5851 = vmatmul.mubr.bf16.gmra.mrb[0].mxu0 %v5508
  %v5852 = vpop.f32.mrb[0].mxu0
  %v5853 = vadd.f32 0.0, %v5852
  %v5854 = vpop.f32.mrb[0].mxu0
  %v5855 = vpop.f32.mrb[0].mxu0
  %v5856 = vadd.f32 0.0, %v5855
  %v5857 = vpop.f32.mrb[0].mxu0
  %5858 = vmatprep.mubr.bf16.mxu0 0
  %5859 = vmatmul.mubr.bf16.gmra.mrb[0].mxu0 %v5509
  %v5860 = vpop.f32.mrb[0].mxu0
  %v5861 = vadd.f32 0.0, %v5860
  %v5862 = vpop.f32.mrb[0].mxu0
  %v5863 = vpop.f32.mrb[0].mxu0
  %v5864 = vadd.f32 0.0, %v5863
  %v5865 = vpop.f32.mrb[0].mxu0
  %5866 = vmatprep.mubr.bf16.mxu0 0
  %5867 = vmatmul.mubr.bf16.gmra.mrb[0].mxu0 %v5510
  %v5868 = vpop.f32.mrb[0].mxu0
  %v5869 = vadd.f32 0.0, %v5868
  %v5870 = vpop.f32.mrb[0].mxu0
  %v5871 = vpop.f32.mrb[0].mxu0
  %v5872 = vadd.f32 0.0, %v5871
  %v5873 = vpop.f32.mrb[0].mxu0
  %5874 = vmatprep.mubr.bf16.mxu0 0
  %5875 = vmatmul.mubr.bf16.gmra.mrb[0].mxu0 %v5511
  %v5876 = vpop.f32.mrb[0].mxu0
  %v5877 = vadd.f32 0.0, %v5876
  %v5878 = vpop.f32.mrb[0].mxu0
  %v5879 = vpop.f32.mrb[0].mxu0
  %v5880 = vadd.f32 0.0, %v5879
  %v5881 = vpop.f32.mrb[0].mxu0
  %5882 = vdwg.mxu0
  %5883 = vrot.lane.b32.xlu0 %v4076, 40
  %v5884 = vpop.permute.xlu0 %5883
  %5885 = vrot.lane.b32.xlu0 %v4077, 40
  %v5886 = vpop.permute.xlu0 %5885
  %5887 = vrot.lane.b32.xlu0 %v4078, 40
  %v5888 = vpop.permute.xlu0 %5887
  %5889 = vrot.lane.b32.xlu0 %v4079, 40
  %v5890 = vpop.permute.xlu0 %5889
  %5891 = vrot.lane.b32.xlu0 %v4080, 40
  %v5892 = vpop.permute.xlu0 %5891
  %5893 = vrot.lane.b32.xlu0 %v4081, 40
  %v5894 = vpop.permute.xlu0 %5893
  %5895 = vrot.lane.b32.xlu0 %v4082, 40
  %v5896 = vpop.permute.xlu0 %5895
  %5897 = vrot.lane.b32.xlu0 %v4083, 40
  %v5898 = vpop.permute.xlu0 %5897
  %5907 = vmatprep.subr.bf16.mxu0 0
  %5908 = vmatpush1.bf16.msra.mxu0 %v5884
  %5909 = vmatprep.subr.bf16.mxu0 0
  %5910 = vmatpush1.bf16.msra.mxu0 %v5886
  %5911 = vmatprep.subr.bf16.mxu0 0
  %5912 = vmatpush1.bf16.msra.mxu0 %v5888
  %5913 = vmatprep.subr.bf16.mxu0 0
  %5914 = vmatpush1.bf16.msra.mxu0 %v5890
  %5915 = vmatprep.subr.bf16.mxu0 0
  %5916 = vmatpush1.bf16.msra.mxu0 %v5892
  %5917 = vmatprep.subr.bf16.mxu0 0
  %5918 = vmatpush1.bf16.msra.mxu0 %v5894
  %5919 = vmatprep.subr.bf16.mxu0 0
  %5920 = vmatpush1.bf16.msra.mxu0 %v5896
  %5921 = vmatprep.subr.bf16.mxu0 0
  %5922 = vmatpush1.bf16.msra.mxu0 %v5898
  %5923 = vmatprep.subr.bf16.mxu0 0
  %5924 = vmatpush1.bf16.msra.mxu0 0
  %5925 = vmatprep.subr.bf16.mxu0 0
  %5926 = vmatpush1.bf16.msra.mxu0 0
  %5927 = vmatprep.subr.bf16.mxu0 0
  %5928 = vmatpush1.bf16.msra.mxu0 0
  %5929 = vmatprep.subr.bf16.mxu0 0
  %5930 = vmatpush1.bf16.msra.mxu0 0
  %5931 = vmatprep.subr.bf16.mxu0 0
  %5932 = vmatpush1.bf16.msra.mxu0 0
  %5933 = vmatprep.subr.bf16.mxu0 0
  %5934 = vmatpush1.bf16.msra.mxu0 0
  %5935 = vmatprep.subr.bf16.mxu0 0
  %5936 = vmatpush1.bf16.msra.mxu0 0
  %5937 = vmatprep.subr.bf16.mxu0 0
  %5938 = vmatpush1.bf16.msra.mxu0 0
  %5939 = vmatprep.mubr.bf16.mxu0 0
  %5940 = vmatmul.mubr.bf16.gmra.mrb[0].mxu0 %v5512
  %v5941 = vpop.f32.mrb[0].mxu0
  %v5942 = vadd.f32 0.0, %v5941
  %v5943 = vpop.f32.mrb[0].mxu0
  %v5944 = vpop.f32.mrb[0].mxu0
  %v5945 = vadd.f32 0.0, %v5944
  %v5946 = vpop.f32.mrb[0].mxu0
  %5947 = vmatprep.mubr.bf16.mxu0 0
  %5948 = vmatmul.mubr.bf16.gmra.mrb[0].mxu0 %v5513
  %v5949 = vpop.f32.mrb[0].mxu0
  %v5950 = vadd.f32 0.0, %v5949
  %v5951 = vpop.f32.mrb[0].mxu0
  %v5952 = vpop.f32.mrb[0].mxu0
  %v5953 = vadd.f32 0.0, %v5952
  %v5954 = vpop.f32.mrb[0].mxu0
  %5955 = vmatprep.mubr.bf16.mxu0 0
  %5956 = vmatmul.mubr.bf16.gmra.mrb[0].mxu0 %v5514
  %v5957 = vpop.f32.mrb[0].mxu0
  %v5958 = vadd.f32 0.0, %v5957
  %v5959 = vpop.f32.mrb[0].mxu0
  %v5960 = vpop.f32.mrb[0].mxu0
  %v5961 = vadd.f32 0.0, %v5960
  %v5962 = vpop.f32.mrb[0].mxu0
  %5963 = vmatprep.mubr.bf16.mxu0 0
  %5964 = vmatmul.mubr.bf16.gmra.mrb[0].mxu0 %v5515
  %v5965 = vpop.f32.mrb[0].mxu0
  %v5966 = vadd.f32 0.0, %v5965
  %v5967 = vpop.f32.mrb[0].mxu0
  %v5968 = vpop.f32.mrb[0].mxu0
  %v5969 = vadd.f32 0.0, %v5968
  %v5970 = vpop.f32.mrb[0].mxu0
  %5971 = vmatprep.mubr.bf16.mxu0 0
  %5972 = vmatmul.mubr.bf16.gmra.mrb[0].mxu0 %v5516
  %v5973 = vpop.f32.mrb[0].mxu0
  %v5974 = vadd.f32 0.0, %v5973
  %v5975 = vpop.f32.mrb[0].mxu0
  %v5976 = vpop.f32.mrb[0].mxu0
  %v5977 = vadd.f32 0.0, %v5976
  %v5978 = vpop.f32.mrb[0].mxu0
  %5979 = vmatprep.mubr.bf16.mxu0 0
  %5980 = vmatmul.mubr.bf16.gmra.mrb[0].mxu0 %v5517
  %v5981 = vpop.f32.mrb[0].mxu0
  %v5982 = vadd.f32 0.0, %v5981
  %v5983 = vpop.f32.mrb[0].mxu0
  %v5984 = vpop.f32.mrb[0].mxu0
  %v5985 = vadd.f32 0.0, %v5984
  %v5986 = vpop.f32.mrb[0].mxu0
  %5987 = vmatprep.mubr.bf16.mxu0 0
  %5988 = vmatmul.mubr.bf16.gmra.mrb[0].mxu0 %v5518
  %v5989 = vpop.f32.mrb[0].mxu0
  %v5990 = vadd.f32 0.0, %v5989
  %v5991 = vpop.f32.mrb[0].mxu0
  %v5992 = vpop.f32.mrb[0].mxu0
  %v5993 = vadd.f32 0.0, %v5992
  %v5994 = vpop.f32.mrb[0].mxu0
  %5995 = vmatprep.mubr.bf16.mxu0 0
  %5996 = vmatmul.mubr.bf16.gmra.mrb[0].mxu0 %v5519
  %v5997 = vpop.f32.mrb[0].mxu0
  %v5998 = vadd.f32 0.0, %v5997
  %v5999 = vpop.f32.mrb[0].mxu0
  %v6000 = vpop.f32.mrb[0].mxu0
  %v6001 = vadd.f32 0.0, %v6000
  %v6002 = vpop.f32.mrb[0].mxu0
  %6003 = vdwg.mxu0
  %6020 = vrot.lane.b32.xlu0 %v5700, 8
  %v6021 = vpop.permute.xlu0 %6020
  %6022 = vrot.lane.b32.xlu0 %v5703, 8
  %v6023 = vpop.permute.xlu0 %6022
  %6024 = vrot.lane.b32.xlu0 %v5708, 8
  %v6025 = vpop.permute.xlu0 %6024
  %6026 = vrot.lane.b32.xlu0 %v5711, 8
  %v6027 = vpop.permute.xlu0 %6026
  %6028 = vrot.lane.b32.xlu0 %v5716, 8
  %v6029 = vpop.permute.xlu0 %6028
  %6030 = vrot.lane.b32.xlu0 %v5719, 8
  %v6031 = vpop.permute.xlu0 %6030
  %6032 = vrot.lane.b32.xlu0 %v5724, 8
  %v6033 = vpop.permute.xlu0 %6032
  %6034 = vrot.lane.b32.xlu0 %v5727, 8
  %v6035 = vpop.permute.xlu0 %6034
  %6036 = vrot.lane.b32.xlu0 %v5732, 8
  %v6037 = vpop.permute.xlu0 %6036
  %6038 = vrot.lane.b32.xlu0 %v5735, 8
  %v6039 = vpop.permute.xlu0 %6038
  %6040 = vrot.lane.b32.xlu0 %v5740, 8
  %v6041 = vpop.permute.xlu0 %6040
  %6042 = vrot.lane.b32.xlu0 %v5743, 8
  %v6043 = vpop.permute.xlu0 %6042
  %6044 = vrot.lane.b32.xlu0 %v5748, 8
  %v6045 = vpop.permute.xlu0 %6044
  %6046 = vrot.lane.b32.xlu0 %v5751, 8
  %v6047 = vpop.permute.xlu0 %6046
  %6048 = vrot.lane.b32.xlu0 %v5756, 8
  %v6049 = vpop.permute.xlu0 %6048
  %6050 = vrot.lane.b32.xlu0 %v5759, 8
  %v6051 = vpop.permute.xlu0 %6050
  %6084 = vrot.lane.b32.xlu0 %v5821, 16
  %v6085 = vpop.permute.xlu0 %6084
  %6086 = vrot.lane.b32.xlu0 %v5824, 16
  %v6087 = vpop.permute.xlu0 %6086
  %6088 = vrot.lane.b32.xlu0 %v5829, 16
  %v6089 = vpop.permute.xlu0 %6088
  %6090 = vrot.lane.b32.xlu0 %v5832, 16
  %v6091 = vpop.permute.xlu0 %6090
  %6092 = vrot.lane.b32.xlu0 %v5837, 16
  %v6093 = vpop.permute.xlu0 %6092
  %6094 = vrot.lane.b32.xlu0 %v5840, 16
  %v6095 = vpop.permute.xlu0 %6094
  %6096 = vrot.lane.b32.xlu0 %v5845, 16
  %v6097 = vpop.permute.xlu0 %6096
  %6098 = vrot.lane.b32.xlu0 %v5848, 16
  %v6099 = vpop.permute.xlu0 %6098
  %6100 = vrot.lane.b32.xlu0 %v5853, 16
  %v6101 = vpop.permute.xlu0 %6100
  %6102 = vrot.lane.b32.xlu0 %v5856, 16
  %v6103 = vpop.permute.xlu0 %6102
  %6104 = vrot.lane.b32.xlu0 %v5861, 16
  %v6105 = vpop.permute.xlu0 %6104
  %6106 = vrot.lane.b32.xlu0 %v5864, 16
  %v6107 = vpop.permute.xlu0 %6106
  %6108 = vrot.lane.b32.xlu0 %v5869, 16
  %v6109 = vpop.permute.xlu0 %6108
  %6110 = vrot.lane.b32.xlu0 %v5872, 16
  %v6111 = vpop.permute.xlu0 %6110
  %6112 = vrot.lane.b32.xlu0 %v5877, 16
  %v6113 = vpop.permute.xlu0 %6112
  %6114 = vrot.lane.b32.xlu0 %v5880, 16
  %v6115 = vpop.permute.xlu0 %6114
  %6148 = vrot.lane.b32.xlu0 %v5942, 24
  %v6149 = vpop.permute.xlu0 %6148
  %6150 = vrot.lane.b32.xlu0 %v5945, 24
  %v6151 = vpop.permute.xlu0 %6150
  %6152 = vrot.lane.b32.xlu0 %v5950, 24
  %v6153 = vpop.permute.xlu0 %6152
  %6154 = vrot.lane.b32.xlu0 %v5953, 24
  %v6155 = vpop.permute.xlu0 %6154
  %6156 = vrot.lane.b32.xlu0 %v5958, 24
  %v6157 = vpop.permute.xlu0 %6156
  %6158 = vrot.lane.b32.xlu0 %v5961, 24
  %v6159 = vpop.permute.xlu0 %6158
  %6160 = vrot.lane.b32.xlu0 %v5966, 24
  %v6161 = vpop.permute.xlu0 %6160
  %6162 = vrot.lane.b32.xlu0 %v5969, 24
  %v6163 = vpop.permute.xlu0 %6162
  %6164 = vrot.lane.b32.xlu0 %v5974, 24
  %v6165 = vpop.permute.xlu0 %6164
  %6166 = vrot.lane.b32.xlu0 %v5977, 24
  %v6167 = vpop.permute.xlu0 %6166
  %6168 = vrot.lane.b32.xlu0 %v5982, 24
  %v6169 = vpop.permute.xlu0 %6168
  %6170 = vrot.lane.b32.xlu0 %v5985, 24
  %v6171 = vpop.permute.xlu0 %6170
  %6172 = vrot.lane.b32.xlu0 %v5990, 24
  %v6173 = vpop.permute.xlu0 %6172
  %6174 = vrot.lane.b32.xlu0 %v5993, 24
  %v6175 = vpop.permute.xlu0 %6174
  %6176 = vrot.lane.b32.xlu0 %v5998, 24
  %v6177 = vpop.permute.xlu0 %6176
  %6178 = vrot.lane.b32.xlu0 %v6001, 24
  %v6179 = vpop.permute.xlu0 %6178
  %v6196 = vsel %vm626, %v5579, %v6021
  %v6197 = vsel %vm626, %v5582, %v6023
  %v6198 = vsel %vm626, %v5587, %v6025
  %v6199 = vsel %vm626, %v5590, %v6027
  %v6200 = vsel %vm626, %v5595, %v6029
  %v6201 = vsel %vm626, %v5598, %v6031
  %v6202 = vsel %vm626, %v5603, %v6033
  %v6203 = vsel %vm626, %v5606, %v6035
  %v6204 = vsel %vm626, %v5611, %v6037
  %v6205 = vsel %vm626, %v5614, %v6039
  %v6206 = vsel %vm626, %v5619, %v6041
  %v6207 = vsel %vm626, %v5622, %v6043
  %v6208 = vsel %vm626, %v5627, %v6045
  %v6209 = vsel %vm626, %v5630, %v6047
  %v6210 = vsel %vm626, %v5635, %v6049
  %v6211 = vsel %vm626, %v5638, %v6051
  %v6212 = vsel %vm2731, %v6196, %v6085
  %v6213 = vsel %vm2731, %v6197, %v6087
  %v6214 = vsel %vm2731, %v6198, %v6089
  %v6215 = vsel %vm2731, %v6199, %v6091
  %v6216 = vsel %vm2731, %v6200, %v6093
  %v6217 = vsel %vm2731, %v6201, %v6095
  %v6218 = vsel %vm2731, %v6202, %v6097
  %v6219 = vsel %vm2731, %v6203, %v6099
  %v6220 = vsel %vm2731, %v6204, %v6101
  %v6221 = vsel %vm2731, %v6205, %v6103
  %v6222 = vsel %vm2731, %v6206, %v6105
  %v6223 = vsel %vm2731, %v6207, %v6107
  %v6224 = vsel %vm2731, %v6208, %v6109
  %v6225 = vsel %vm2731, %v6209, %v6111
  %v6226 = vsel %vm2731, %v6210, %v6113
  %v6227 = vsel %vm2731, %v6211, %v6115
  %v6228 = vsel %vm2748, %v6212, %v6149
  %v6229 = vsel %vm2748, %v6213, %v6151
  %v6230 = vsel %vm2748, %v6214, %v6153
  %v6231 = vsel %vm2748, %v6215, %v6155
  %v6232 = vsel %vm2748, %v6216, %v6157
  %v6233 = vsel %vm2748, %v6217, %v6159
  %v6234 = vsel %vm2748, %v6218, %v6161
  %v6235 = vsel %vm2748, %v6219, %v6163
  %v6236 = vsel %vm2748, %v6220, %v6165
  %v6237 = vsel %vm2748, %v6221, %v6167
  %v6238 = vsel %vm2748, %v6222, %v6169
  %v6239 = vsel %vm2748, %v6223, %v6171
  %v6240 = vsel %vm2748, %v6224, %v6173
  %v6241 = vsel %vm2748, %v6225, %v6175
  %v6242 = vsel %vm2748, %v6226, %v6177
  %v6243 = vsel %vm2748, %v6227, %v6179
  %v6244 = vpack.c.bf16 %v6229, %v6228
  %v6245 = vpack.c.bf16 %v6231, %v6230
  %v6246 = vpack.c.bf16 %v6233, %v6232
  %v6247 = vpack.c.bf16 %v6235, %v6234
  %v6248 = vpack.c.bf16 %v6237, %v6236
  %v6249 = vpack.c.bf16 %v6239, %v6238
  %v6250 = vpack.c.bf16 %v6241, %v6240
  %v6251 = vpack.c.bf16 %v6243, %v6242
  %s6252 = scalar_lea.vmem %s7, 16
  %v6253 = vld [vmem:[%s6252] sm:$0xf]
  %v6254 = vld [vmem:[%s6252 + $0x4] sm:$0xf]
  %v6255 = vld [vmem:[%s6252 + $0x8] sm:$0xf]
  %v6256 = vld [vmem:[%s6252 + $0xc] sm:$0xf]
  %s6257 = scalar_lea.vmem %s8, 1
  %v6258 = vld [vmem:[%s6257] sm:$0x1]
  %v6260 = vlaneseq
  %v6261 = vshrl.u32 %v6260, 7
  %v6262 = vsub.s32 0, %v6261
  %v6263 = vrot.slane %v6258, %v6262
  %v6269 = vunpack.c.l.b16 %v6253
  %v6270 = vunpack.c.l.b16 %v6254
  %v6271 = vunpack.c.l.b16 %v6255
  %v6272 = vunpack.c.l.b16 %v6256
  %v6273 = vpack.c.b16 %v6270, %v6269
  %v6274 = vpack.c.b16 %v6272, %v6271
  %v6278 = vsel %vm188, %v6244, 0
  %v6281 = vsel %vm188, %v6245, 0
  %v6284 = vsel %vm188, %v6246, 0
  %v6287 = vsel %vm188, %v6247, 0
  %v6290 = vsel %vm188, %v6248, 0
  %v6293 = vsel %vm188, %v6249, 0
  %v6296 = vsel %vm188, %v6250, 0
  %v6299 = vsel %vm188, %v6251, 0
  %6301 = vmatprep.subr.bf16.mxu0 0
  %6302 = vmatpush1.bf16.msra.mxu0 %v6273
  %6303 = vmatprep.subr.bf16.mxu0 0
  %6304 = vmatpush1.bf16.msra.mxu0 %v6274
  %6305 = vmatprep.subr.bf16.mxu0 0
  %6306 = vmatpush1.bf16.msra.mxu0 0
  %6307 = vmatprep.subr.bf16.mxu0 0
  %6308 = vmatpush1.bf16.msra.mxu0 0
  %6309 = vmatprep.subr.bf16.mxu0 0
  %6310 = vmatpush1.bf16.msra.mxu0 0
  %6311 = vmatprep.subr.bf16.mxu0 0
  %6312 = vmatpush1.bf16.msra.mxu0 0
  %6313 = vmatprep.subr.bf16.mxu0 0
  %6314 = vmatpush1.bf16.msra.mxu0 0
  %6315 = vmatprep.subr.bf16.mxu0 0
  %6316 = vmatpush1.bf16.msra.mxu0 0
  %6317 = vmatprep.subr.bf16.mxu0 0
  %6318 = vmatpush1.bf16.msra.mxu0 0
  %6319 = vmatprep.subr.bf16.mxu0 0
  %6320 = vmatpush1.bf16.msra.mxu0 0
  %6321 = vmatprep.subr.bf16.mxu0 0
  %6322 = vmatpush1.bf16.msra.mxu0 0
  %6323 = vmatprep.subr.bf16.mxu0 0
  %6324 = vmatpush1.bf16.msra.mxu0 0
  %6325 = vmatprep.subr.bf16.mxu0 0
  %6326 = vmatpush1.bf16.msra.mxu0 0
  %6327 = vmatprep.subr.bf16.mxu0 0
  %6328 = vmatpush1.bf16.msra.mxu0 0
  %6329 = vmatprep.subr.bf16.mxu0 0
  %6330 = vmatpush1.bf16.msra.mxu0 0
  %6331 = vmatprep.subr.bf16.mxu0 0
  %6332 = vmatpush1.bf16.msra.mxu0 0
  %6333 = vmatprep.mubr.bf16.mxu0 0
  %6334 = vmatmul.mubr.bf16.gmra.mrb[0].mxu0 %v6278
  %v6335 = vpop.f32.mrb[0].mxu0
  %v6336 = vadd.f32 %v6263, %v6335
  %v6337 = vpop.f32.mrb[0].mxu0
  %v6338 = vpop.f32.mrb[0].mxu0
  %v6339 = vadd.f32 %v6263, %v6338
  %v6340 = vpop.f32.mrb[0].mxu0
  %6341 = vmatprep.mubr.bf16.mxu0 0
  %6342 = vmatmul.mubr.bf16.gmra.mrb[0].mxu0 %v6281
  %v6343 = vpop.f32.mrb[0].mxu0
  %v6344 = vadd.f32 %v6263, %v6343
  %v6345 = vpop.f32.mrb[0].mxu0
  %v6346 = vpop.f32.mrb[0].mxu0
  %v6347 = vadd.f32 %v6263, %v6346
  %v6348 = vpop.f32.mrb[0].mxu0
  %6349 = vmatprep.mubr.bf16.mxu0 0
  %6350 = vmatmul.mubr.bf16.gmra.mrb[0].mxu0 %v6284
  %v6351 = vpop.f32.mrb[0].mxu0
  %v6352 = vadd.f32 %v6263, %v6351
  %v6353 = vpop.f32.mrb[0].mxu0
  %v6354 = vpop.f32.mrb[0].mxu0
  %v6355 = vadd.f32 %v6263, %v6354
  %v6356 = vpop.f32.mrb[0].mxu0
  %6357 = vmatprep.mubr.bf16.mxu0 0
  %6358 = vmatmul.mubr.bf16.gmra.mrb[0].mxu0 %v6287
  %v6359 = vpop.f32.mrb[0].mxu0
  %v6360 = vadd.f32 %v6263, %v6359
  %v6361 = vpop.f32.mrb[0].mxu0
  %v6362 = vpop.f32.mrb[0].mxu0
  %v6363 = vadd.f32 %v6263, %v6362
  %v6364 = vpop.f32.mrb[0].mxu0
  %6365 = vmatprep.mubr.bf16.mxu0 0
  %6366 = vmatmul.mubr.bf16.gmra.mrb[0].mxu0 %v6290
  %v6367 = vpop.f32.mrb[0].mxu0
  %v6368 = vadd.f32 %v6263, %v6367
  %v6369 = vpop.f32.mrb[0].mxu0
  %v6370 = vpop.f32.mrb[0].mxu0
  %v6371 = vadd.f32 %v6263, %v6370
  %v6372 = vpop.f32.mrb[0].mxu0
  %6373 = vmatprep.mubr.bf16.mxu0 0
  %6374 = vmatmul.mubr.bf16.gmra.mrb[0].mxu0 %v6293
  %v6375 = vpop.f32.mrb[0].mxu0
  %v6376 = vadd.f32 %v6263, %v6375
  %v6377 = vpop.f32.mrb[0].mxu0
  %v6378 = vpop.f32.mrb[0].mxu0
  %v6379 = vadd.f32 %v6263, %v6378
  %v6380 = vpop.f32.mrb[0].mxu0
  %6381 = vmatprep.mubr.bf16.mxu0 0
  %6382 = vmatmul.mubr.bf16.gmra.mrb[0].mxu0 %v6296
  %v6383 = vpop.f32.mrb[0].mxu0
  %v6384 = vadd.f32 %v6263, %v6383
  %v6385 = vpop.f32.mrb[0].mxu0
  %v6386 = vpop.f32.mrb[0].mxu0
  %v6387 = vadd.f32 %v6263, %v6386
  %v6388 = vpop.f32.mrb[0].mxu0
  %6389 = vmatprep.mubr.bf16.mxu0 0
  %6390 = vmatmul.mubr.bf16.gmra.mrb[0].mxu0 %v6299
  %v6391 = vpop.f32.mrb[0].mxu0
  %v6392 = vadd.f32 %v6263, %v6391
  %v6393 = vpop.f32.mrb[0].mxu0
  %v6394 = vpop.f32.mrb[0].mxu0
  %v6395 = vadd.f32 %v6263, %v6394
  %v6396 = vpop.f32.mrb[0].mxu0
  %6397 = vdwg.mxu0
  %v6398 = vadd.f32 %v6336, %v3906
  %v6399 = vadd.f32 %v6339, %v3907
  %v6400 = vadd.f32 %v6344, %v3908
  %v6401 = vadd.f32 %v6347, %v3909
  %v6402 = vadd.f32 %v6352, %v3910
  %v6403 = vadd.f32 %v6355, %v3911
  %v6404 = vadd.f32 %v6360, %v3912
  %v6405 = vadd.f32 %v6363, %v3913
  %v6406 = vadd.f32 %v6368, %v3914
  %v6407 = vadd.f32 %v6371, %v3915
  %v6408 = vadd.f32 %v6376, %v3916
  %v6409 = vadd.f32 %v6379, %v3917
  %v6410 = vadd.f32 %v6384, %v3918
  %v6411 = vadd.f32 %v6387, %v3919
  %v6412 = vadd.f32 %v6392, %v3920
  %v6413 = vadd.f32 %v6395, %v3921
  %s6414 = scalar_lea.vmem %s9, 1
  %v6415 = vld [vmem:[%s6414] sm:$0x1]
  %s6416 = scalar_lea.vmem %s10, 1
  %v6417 = vld [vmem:[%s6416] sm:$0x1]
  %v6418 = vsel %vm188, %v6398, 0.0
  %6419 = vadd.xlane.f32.xlu0 %v6418
  %v6420 = vpop.xlane.xlu0 %6419
  %v6421 = vsel %vm188, %v6399, 0.0
  %6422 = vadd.xlane.f32.xlu0 %v6421
  %v6423 = vpop.xlane.xlu0 %6422
  %v6424 = vsel %vm188, %v6400, 0.0
  %6425 = vadd.xlane.f32.xlu0 %v6424
  %v6426 = vpop.xlane.xlu0 %6425
  %v6427 = vsel %vm188, %v6401, 0.0
  %6428 = vadd.xlane.f32.xlu0 %v6427
  %v6429 = vpop.xlane.xlu0 %6428
  %v6430 = vsel %vm188, %v6402, 0.0
  %6431 = vadd.xlane.f32.xlu0 %v6430
  %v6432 = vpop.xlane.xlu0 %6431
  %v6433 = vsel %vm188, %v6403, 0.0
  %6434 = vadd.xlane.f32.xlu0 %v6433
  %v6435 = vpop.xlane.xlu0 %6434
  %v6436 = vsel %vm188, %v6404, 0.0
  %6437 = vadd.xlane.f32.xlu0 %v6436
  %v6438 = vpop.xlane.xlu0 %6437
  %v6439 = vsel %vm188, %v6405, 0.0
  %6440 = vadd.xlane.f32.xlu0 %v6439
  %v6441 = vpop.xlane.xlu0 %6440
  %v6442 = vsel %vm188, %v6406, 0.0
  %6443 = vadd.xlane.f32.xlu0 %v6442
  %v6444 = vpop.xlane.xlu0 %6443
  %v6445 = vsel %vm188, %v6407, 0.0
  %6446 = vadd.xlane.f32.xlu0 %v6445
  %v6447 = vpop.xlane.xlu0 %6446
  %v6448 = vsel %vm188, %v6408, 0.0
  %6449 = vadd.xlane.f32.xlu0 %v6448
  %v6450 = vpop.xlane.xlu0 %6449
  %v6451 = vsel %vm188, %v6409, 0.0
  %6452 = vadd.xlane.f32.xlu0 %v6451
  %v6453 = vpop.xlane.xlu0 %6452
  %v6454 = vsel %vm188, %v6410, 0.0
  %6455 = vadd.xlane.f32.xlu0 %v6454
  %v6456 = vpop.xlane.xlu0 %6455
  %v6457 = vsel %vm188, %v6411, 0.0
  %6458 = vadd.xlane.f32.xlu0 %v6457
  %v6459 = vpop.xlane.xlu0 %6458
  %v6460 = vsel %vm188, %v6412, 0.0
  %6461 = vadd.xlane.f32.xlu0 %v6460
  %v6462 = vpop.xlane.xlu0 %6461
  %v6463 = vsel %vm188, %v6413, 0.0
  %6464 = vadd.xlane.f32.xlu0 %v6463
  %v6465 = vpop.xlane.xlu0 %6464
  %v6466 = vmul.f32 %v6420, %v237
  %v6467 = vmul.f32 %v6423, %v237
  %v6468 = vmul.f32 %v6426, %v237
  %v6469 = vmul.f32 %v6429, %v237
  %v6470 = vmul.f32 %v6432, %v237
  %v6471 = vmul.f32 %v6435, %v237
  %v6472 = vmul.f32 %v6438, %v237
  %v6473 = vmul.f32 %v6441, %v237
  %v6474 = vmul.f32 %v6444, %v237
  %v6475 = vmul.f32 %v6447, %v237
  %v6476 = vmul.f32 %v6450, %v237
  %v6477 = vmul.f32 %v6453, %v237
  %v6478 = vmul.f32 %v6456, %v237
  %v6479 = vmul.f32 %v6459, %v237
  %v6480 = vmul.f32 %v6462, %v237
  %v6481 = vmul.f32 %v6465, %v237
  %v6482 = vsub.f32 %v6398, %v6466
  %v6483 = vsub.f32 %v6399, %v6467
  %v6484 = vsub.f32 %v6400, %v6468
  %v6485 = vsub.f32 %v6401, %v6469
  %v6486 = vsub.f32 %v6402, %v6470
  %v6487 = vsub.f32 %v6403, %v6471
  %v6488 = vsub.f32 %v6404, %v6472
  %v6489 = vsub.f32 %v6405, %v6473
  %v6490 = vsub.f32 %v6406, %v6474
  %v6491 = vsub.f32 %v6407, %v6475
  %v6492 = vsub.f32 %v6408, %v6476
  %v6493 = vsub.f32 %v6409, %v6477
  %v6494 = vsub.f32 %v6410, %v6478
  %v6495 = vsub.f32 %v6411, %v6479
  %v6496 = vsub.f32 %v6412, %v6480
  %v6497 = vsub.f32 %v6413, %v6481
  %v6498 = vmul.f32 %v6482, %v6482
  %v6499 = vmul.f32 %v6483, %v6483
  %v6500 = vmul.f32 %v6484, %v6484
  %v6501 = vmul.f32 %v6485, %v6485
  %v6502 = vmul.f32 %v6486, %v6486
  %v6503 = vmul.f32 %v6487, %v6487
  %v6504 = vmul.f32 %v6488, %v6488
  %v6505 = vmul.f32 %v6489, %v6489
  %v6506 = vmul.f32 %v6490, %v6490
  %v6507 = vmul.f32 %v6491, %v6491
  %v6508 = vmul.f32 %v6492, %v6492
  %v6509 = vmul.f32 %v6493, %v6493
  %v6510 = vmul.f32 %v6494, %v6494
  %v6511 = vmul.f32 %v6495, %v6495
  %v6512 = vmul.f32 %v6496, %v6496
  %v6513 = vmul.f32 %v6497, %v6497
  %v6514 = vsel %vm188, %v6498, 0.0
  %6515 = vadd.xlane.f32.xlu0 %v6514
  %v6516 = vpop.xlane.xlu0 %6515
  %v6517 = vsel %vm188, %v6499, 0.0
  %6518 = vadd.xlane.f32.xlu0 %v6517
  %v6519 = vpop.xlane.xlu0 %6518
  %v6520 = vsel %vm188, %v6500, 0.0
  %6521 = vadd.xlane.f32.xlu0 %v6520
  %v6522 = vpop.xlane.xlu0 %6521
  %v6523 = vsel %vm188, %v6501, 0.0
  %6524 = vadd.xlane.f32.xlu0 %v6523
  %v6525 = vpop.xlane.xlu0 %6524
  %v6526 = vsel %vm188, %v6502, 0.0
  %6527 = vadd.xlane.f32.xlu0 %v6526
  %v6528 = vpop.xlane.xlu0 %6527
  %v6529 = vsel %vm188, %v6503, 0.0
  %6530 = vadd.xlane.f32.xlu0 %v6529
  %v6531 = vpop.xlane.xlu0 %6530
  %v6532 = vsel %vm188, %v6504, 0.0
  %6533 = vadd.xlane.f32.xlu0 %v6532
  %v6534 = vpop.xlane.xlu0 %6533
  %v6535 = vsel %vm188, %v6505, 0.0
  %6536 = vadd.xlane.f32.xlu0 %v6535
  %v6537 = vpop.xlane.xlu0 %6536
  %v6538 = vsel %vm188, %v6506, 0.0
  %6539 = vadd.xlane.f32.xlu0 %v6538
  %v6540 = vpop.xlane.xlu0 %6539
  %v6541 = vsel %vm188, %v6507, 0.0
  %6542 = vadd.xlane.f32.xlu0 %v6541
  %v6543 = vpop.xlane.xlu0 %6542
  %v6544 = vsel %vm188, %v6508, 0.0
  %6545 = vadd.xlane.f32.xlu0 %v6544
  %v6546 = vpop.xlane.xlu0 %6545
  %v6547 = vsel %vm188, %v6509, 0.0
  %6548 = vadd.xlane.f32.xlu0 %v6547
  %v6549 = vpop.xlane.xlu0 %6548
  %v6550 = vsel %vm188, %v6510, 0.0
  %6551 = vadd.xlane.f32.xlu0 %v6550
  %v6552 = vpop.xlane.xlu0 %6551
  %v6553 = vsel %vm188, %v6511, 0.0
  %6554 = vadd.xlane.f32.xlu0 %v6553
  %v6555 = vpop.xlane.xlu0 %6554
  %v6556 = vsel %vm188, %v6512, 0.0
  %6557 = vadd.xlane.f32.xlu0 %v6556
  %v6558 = vpop.xlane.xlu0 %6557
  %v6559 = vsel %vm188, %v6513, 0.0
  %6560 = vadd.xlane.f32.xlu0 %v6559
  %v6561 = vpop.xlane.xlu0 %6560
  %v6562 = vmul.f32 %v6516, %v237
  %v6563 = vmul.f32 %v6519, %v237
  %v6564 = vmul.f32 %v6522, %v237
  %v6565 = vmul.f32 %v6525, %v237
  %v6566 = vmul.f32 %v6528, %v237
  %v6567 = vmul.f32 %v6531, %v237
  %v6568 = vmul.f32 %v6534, %v237
  %v6569 = vmul.f32 %v6537, %v237
  %v6570 = vmul.f32 %v6540, %v237
  %v6571 = vmul.f32 %v6543, %v237
  %v6572 = vmul.f32 %v6546, %v237
  %v6573 = vmul.f32 %v6549, %v237
  %v6574 = vmul.f32 %v6552, %v237
  %v6575 = vmul.f32 %v6555, %v237
  %v6576 = vmul.f32 %v6558, %v237
  %v6577 = vmul.f32 %v6561, %v237
  %v6578 = vadd.f32 %v6562, 1e-12
  %v6579 = vadd.f32 %v6563, 1e-12
  %v6580 = vadd.f32 %v6564, 1e-12
  %v6581 = vadd.f32 %v6565, 1e-12
  %v6582 = vadd.f32 %v6566, 1e-12
  %v6583 = vadd.f32 %v6567, 1e-12
  %v6584 = vadd.f32 %v6568, 1e-12
  %v6585 = vadd.f32 %v6569, 1e-12
  %v6586 = vadd.f32 %v6570, 1e-12
  %v6587 = vadd.f32 %v6571, 1e-12
  %v6588 = vadd.f32 %v6572, 1e-12
  %v6589 = vadd.f32 %v6573, 1e-12
  %v6590 = vadd.f32 %v6574, 1e-12
  %v6591 = vadd.f32 %v6575, 1e-12
  %v6592 = vadd.f32 %v6576, 1e-12
  %v6593 = vadd.f32 %v6577, 1e-12
  %v6594 = vrsqrt.pop %v6578
  %v6595 = vrsqrt.pop %v6579
  %v6596 = vrsqrt.pop %v6580
  %v6597 = vrsqrt.pop %v6581
  %v6598 = vrsqrt.pop %v6582
  %v6599 = vrsqrt.pop %v6583
  %v6600 = vrsqrt.pop %v6584
  %v6601 = vrsqrt.pop %v6585
  %v6602 = vrsqrt.pop %v6586
  %v6603 = vrsqrt.pop %v6587
  %v6604 = vrsqrt.pop %v6588
  %v6605 = vrsqrt.pop %v6589
  %v6606 = vrsqrt.pop %v6590
  %v6607 = vrsqrt.pop %v6591
  %v6608 = vrsqrt.pop %v6592
  %v6609 = vrsqrt.pop %v6593
  %v6610 = vmul.f32 %v6482, %v6594
  %v6611 = vmul.f32 %v6483, %v6595
  %v6612 = vmul.f32 %v6484, %v6596
  %v6613 = vmul.f32 %v6485, %v6597
  %v6614 = vmul.f32 %v6486, %v6598
  %v6615 = vmul.f32 %v6487, %v6599
  %v6616 = vmul.f32 %v6488, %v6600
  %v6617 = vmul.f32 %v6489, %v6601
  %v6618 = vmul.f32 %v6490, %v6602
  %v6619 = vmul.f32 %v6491, %v6603
  %v6620 = vmul.f32 %v6492, %v6604
  %v6621 = vmul.f32 %v6493, %v6605
  %v6622 = vmul.f32 %v6494, %v6606
  %v6623 = vmul.f32 %v6495, %v6607
  %v6624 = vmul.f32 %v6496, %v6608
  %v6625 = vmul.f32 %v6497, %v6609
  %v6627 = vlaneseq
  %v6628 = vshrl.u32 %v6627, 7
  %v6629 = vsub.s32 0, %v6628
  %v6630 = vrot.slane %v6415, %v6629
  %v6632 = vmul.f32 %v6610, %v6630
  %v6633 = vmul.f32 %v6611, %v6630
  %v6634 = vmul.f32 %v6612, %v6630
  %v6635 = vmul.f32 %v6613, %v6630
  %v6636 = vmul.f32 %v6614, %v6630
  %v6637 = vmul.f32 %v6615, %v6630
  %v6638 = vmul.f32 %v6616, %v6630
  %v6639 = vmul.f32 %v6617, %v6630
  %v6640 = vmul.f32 %v6618, %v6630
  %v6641 = vmul.f32 %v6619, %v6630
  %v6642 = vmul.f32 %v6620, %v6630
  %v6643 = vmul.f32 %v6621, %v6630
  %v6644 = vmul.f32 %v6622, %v6630
  %v6645 = vmul.f32 %v6623, %v6630
  %v6646 = vmul.f32 %v6624, %v6630
  %v6647 = vmul.f32 %v6625, %v6630
  %v6649 = vlaneseq
  %v6650 = vshrl.u32 %v6649, 7
  %v6651 = vsub.s32 0, %v6650
  %v6652 = vrot.slane %v6417, %v6651
  %v6654 = vadd.f32 %v6632, %v6652
  %v6655 = vadd.f32 %v6633, %v6652
  %v6656 = vadd.f32 %v6634, %v6652
  %v6657 = vadd.f32 %v6635, %v6652
  %v6658 = vadd.f32 %v6636, %v6652
  %v6659 = vadd.f32 %v6637, %v6652
  %v6660 = vadd.f32 %v6638, %v6652
  %v6661 = vadd.f32 %v6639, %v6652
  %v6662 = vadd.f32 %v6640, %v6652
  %v6663 = vadd.f32 %v6641, %v6652
  %v6664 = vadd.f32 %v6642, %v6652
  %v6665 = vadd.f32 %v6643, %v6652
  %v6666 = vadd.f32 %v6644, %v6652
  %v6667 = vadd.f32 %v6645, %v6652
  %v6668 = vadd.f32 %v6646, %v6652
  %v6669 = vadd.f32 %v6647, %v6652
  %v6670 = vpack.c.bf16 %v6655, %v6654
  %v6671 = vpack.c.bf16 %v6657, %v6656
  %v6672 = vpack.c.bf16 %v6659, %v6658
  %v6673 = vpack.c.bf16 %v6661, %v6660
  %v6674 = vpack.c.bf16 %v6663, %v6662
  %v6675 = vpack.c.bf16 %v6665, %v6664
  %v6676 = vpack.c.bf16 %v6667, %v6666
  %v6677 = vpack.c.bf16 %v6669, %v6668
  %s6678 = scalar_lea.vmem %s11, 16
  %v6679 = vld [vmem:[%s6678] sm:$0xf]
  %v6680 = vld [vmem:[%s6678 + $0x4] sm:$0xf]
  %v6681 = vld [vmem:[%s6678 + $0x8] sm:$0xf]
  %v6682 = vld [vmem:[%s6678 + $0xc] sm:$0xf]
  %s6683 = scalar_lea.vmem %s12, 1
  %v6684 = vld [vmem:[%s6683] sm:$0x1]
  %v6686 = vlaneseq
  %v6687 = vshrl.u32 %v6686, 7
  %v6688 = vsub.s32 0, %v6687
  %v6689 = vrot.slane %v6684, %v6688
  %v6695 = vunpack.c.l.b16 %v6679
  %v6696 = vunpack.c.l.b16 %v6680
  %v6697 = vunpack.c.l.b16 %v6681
  %v6698 = vunpack.c.l.b16 %v6682
  %v6699 = vpack.c.b16 %v6696, %v6695
  %v6700 = vpack.c.b16 %v6698, %v6697
  %v6704 = vsel %vm188, %v6670, 0
  %v6707 = vsel %vm188, %v6671, 0
  %v6710 = vsel %vm188, %v6672, 0
  %v6713 = vsel %vm188, %v6673, 0
  %v6716 = vsel %vm188, %v6674, 0
  %v6719 = vsel %vm188, %v6675, 0
  %v6722 = vsel %vm188, %v6676, 0
  %v6725 = vsel %vm188, %v6677, 0
  %6727 = vmatprep.subr.bf16.mxu0 0
  %6728 = vmatpush1.bf16.msra.mxu0 %v6699
  %6729 = vmatprep.subr.bf16.mxu0 0
  %6730 = vmatpush1.bf16.msra.mxu0 %v6700
  %6731 = vmatprep.subr.bf16.mxu0 0
  %6732 = vmatpush1.bf16.msra.mxu0 0
  %6733 = vmatprep.subr.bf16.mxu0 0
  %6734 = vmatpush1.bf16.msra.mxu0 0
  %6735 = vmatprep.subr.bf16.mxu0 0
  %6736 = vmatpush1.bf16.msra.mxu0 0
  %6737 = vmatprep.subr.bf16.mxu0 0
  %6738 = vmatpush1.bf16.msra.mxu0 0
  %6739 = vmatprep.subr.bf16.mxu0 0
  %6740 = vmatpush1.bf16.msra.mxu0 0
  %6741 = vmatprep.subr.bf16.mxu0 0
  %6742 = vmatpush1.bf16.msra.mxu0 0
  %6743 = vmatprep.subr.bf16.mxu0 0
  %6744 = vmatpush1.bf16.msra.mxu0 0
  %6745 = vmatprep.subr.bf16.mxu0 0
  %6746 = vmatpush1.bf16.msra.mxu0 0
  %6747 = vmatprep.subr.bf16.mxu0 0
  %6748 = vmatpush1.bf16.msra.mxu0 0
  %6749 = vmatprep.subr.bf16.mxu0 0
  %6750 = vmatpush1.bf16.msra.mxu0 0
  %6751 = vmatprep.subr.bf16.mxu0 0
  %6752 = vmatpush1.bf16.msra.mxu0 0
  %6753 = vmatprep.subr.bf16.mxu0 0
  %6754 = vmatpush1.bf16.msra.mxu0 0
  %6755 = vmatprep.subr.bf16.mxu0 0
  %6756 = vmatpush1.bf16.msra.mxu0 0
  %6757 = vmatprep.subr.bf16.mxu0 0
  %6758 = vmatpush1.bf16.msra.mxu0 0
  %6759 = vmatprep.mubr.bf16.mxu0 0
  %6760 = vmatmul.mubr.bf16.gmra.mrb[0].mxu0 %v6704
  %v6761 = vpop.f32.mrb[0].mxu0
  %v6762 = vadd.f32 %v6689, %v6761
  %v6763 = vpop.f32.mrb[0].mxu0
  %v6764 = vpop.f32.mrb[0].mxu0
  %v6765 = vadd.f32 %v6689, %v6764
  %v6766 = vpop.f32.mrb[0].mxu0
  %6767 = vmatprep.mubr.bf16.mxu0 0
  %6768 = vmatmul.mubr.bf16.gmra.mrb[0].mxu0 %v6707
  %v6769 = vpop.f32.mrb[0].mxu0
  %v6770 = vadd.f32 %v6689, %v6769
  %v6771 = vpop.f32.mrb[0].mxu0
  %v6772 = vpop.f32.mrb[0].mxu0
  %v6773 = vadd.f32 %v6689, %v6772
  %v6774 = vpop.f32.mrb[0].mxu0
  %6775 = vmatprep.mubr.bf16.mxu0 0
  %6776 = vmatmul.mubr.bf16.gmra.mrb[0].mxu0 %v6710
  %v6777 = vpop.f32.mrb[0].mxu0
  %v6778 = vadd.f32 %v6689, %v6777
  %v6779 = vpop.f32.mrb[0].mxu0
  %v6780 = vpop.f32.mrb[0].mxu0
  %v6781 = vadd.f32 %v6689, %v6780
  %v6782 = vpop.f32.mrb[0].mxu0
  %6783 = vmatprep.mubr.bf16.mxu0 0
  %6784 = vmatmul.mubr.bf16.gmra.mrb[0].mxu0 %v6713
  %v6785 = vpop.f32.mrb[0].mxu0
  %v6786 = vadd.f32 %v6689, %v6785
  %v6787 = vpop.f32.mrb[0].mxu0
  %v6788 = vpop.f32.mrb[0].mxu0
  %v6789 = vadd.f32 %v6689, %v6788
  %v6790 = vpop.f32.mrb[0].mxu0
  %6791 = vmatprep.mubr.bf16.mxu0 0
  %6792 = vmatmul.mubr.bf16.gmra.mrb[0].mxu0 %v6716
  %v6793 = vpop.f32.mrb[0].mxu0
  %v6794 = vadd.f32 %v6689, %v6793
  %v6795 = vpop.f32.mrb[0].mxu0
  %v6796 = vpop.f32.mrb[0].mxu0
  %v6797 = vadd.f32 %v6689, %v6796
  %v6798 = vpop.f32.mrb[0].mxu0
  %6799 = vmatprep.mubr.bf16.mxu0 0
  %6800 = vmatmul.mubr.bf16.gmra.mrb[0].mxu0 %v6719
  %v6801 = vpop.f32.mrb[0].mxu0
  %v6802 = vadd.f32 %v6689, %v6801
  %v6803 = vpop.f32.mrb[0].mxu0
  %v6804 = vpop.f32.mrb[0].mxu0
  %v6805 = vadd.f32 %v6689, %v6804
  %v6806 = vpop.f32.mrb[0].mxu0
  %6807 = vmatprep.mubr.bf16.mxu0 0
  %6808 = vmatmul.mubr.bf16.gmra.mrb[0].mxu0 %v6722
  %v6809 = vpop.f32.mrb[0].mxu0
  %v6810 = vadd.f32 %v6689, %v6809
  %v6811 = vpop.f32.mrb[0].mxu0
  %v6812 = vpop.f32.mrb[0].mxu0
  %v6813 = vadd.f32 %v6689, %v6812
  %v6814 = vpop.f32.mrb[0].mxu0
  %6815 = vmatprep.mubr.bf16.mxu0 0
  %6816 = vmatmul.mubr.bf16.gmra.mrb[0].mxu0 %v6725
  %v6817 = vpop.f32.mrb[0].mxu0
  %v6818 = vadd.f32 %v6689, %v6817
  %v6819 = vpop.f32.mrb[0].mxu0
  %v6820 = vpop.f32.mrb[0].mxu0
  %v6821 = vadd.f32 %v6689, %v6820
  %v6822 = vpop.f32.mrb[0].mxu0
  %6823 = vdwg.mxu0
  %v6824 = vmul.f32 %v6762, 0.5
  %v6825 = vmul.f32 %v6765, 0.5
  %v6826 = vmul.f32 %v6770, 0.5
  %v6827 = vmul.f32 %v6773, 0.5
  %v6828 = vmul.f32 %v6778, 0.5
  %v6829 = vmul.f32 %v6781, 0.5
  %v6830 = vmul.f32 %v6786, 0.5
  %v6831 = vmul.f32 %v6789, 0.5
  %v6832 = vmul.f32 %v6794, 0.5
  %v6833 = vmul.f32 %v6797, 0.5
  %v6834 = vmul.f32 %v6802, 0.5
  %v6835 = vmul.f32 %v6805, 0.5
  %v6836 = vmul.f32 %v6810, 0.5
  %v6837 = vmul.f32 %v6813, 0.5
  %v6838 = vmul.f32 %v6818, 0.5
  %v6839 = vmul.f32 %v6821, 0.5
  %v6840 = vmul.f32 %v6762, 0.044715
  %v6841 = vmul.f32 %v6765, 0.044715
  %v6842 = vmul.f32 %v6770, 0.044715
  %v6843 = vmul.f32 %v6773, 0.044715
  %v6844 = vmul.f32 %v6778, 0.044715
  %v6845 = vmul.f32 %v6781, 0.044715
  %v6846 = vmul.f32 %v6786, 0.044715
  %v6847 = vmul.f32 %v6789, 0.044715
  %v6848 = vmul.f32 %v6794, 0.044715
  %v6849 = vmul.f32 %v6797, 0.044715
  %v6850 = vmul.f32 %v6802, 0.044715
  %v6851 = vmul.f32 %v6805, 0.044715
  %v6852 = vmul.f32 %v6810, 0.044715
  %v6853 = vmul.f32 %v6813, 0.044715
  %v6854 = vmul.f32 %v6818, 0.044715
  %v6855 = vmul.f32 %v6821, 0.044715
  %v6856 = vmul.f32 %v6840, %v6762
  %v6857 = vmul.f32 %v6841, %v6765
  %v6858 = vmul.f32 %v6842, %v6770
  %v6859 = vmul.f32 %v6843, %v6773
  %v6860 = vmul.f32 %v6844, %v6778
  %v6861 = vmul.f32 %v6845, %v6781
  %v6862 = vmul.f32 %v6846, %v6786
  %v6863 = vmul.f32 %v6847, %v6789
  %v6864 = vmul.f32 %v6848, %v6794
  %v6865 = vmul.f32 %v6849, %v6797
  %v6866 = vmul.f32 %v6850, %v6802
  %v6867 = vmul.f32 %v6851, %v6805
  %v6868 = vmul.f32 %v6852, %v6810
  %v6869 = vmul.f32 %v6853, %v6813
  %v6870 = vmul.f32 %v6854, %v6818
  %v6871 = vmul.f32 %v6855, %v6821
  %v6872 = vmul.f32 %v6856, %v6762
  %v6873 = vmul.f32 %v6857, %v6765
  %v6874 = vmul.f32 %v6858, %v6770
  %v6875 = vmul.f32 %v6859, %v6773
  %v6876 = vmul.f32 %v6860, %v6778
  %v6877 = vmul.f32 %v6861, %v6781
  %v6878 = vmul.f32 %v6862, %v6786
  %v6879 = vmul.f32 %v6863, %v6789
  %v6880 = vmul.f32 %v6864, %v6794
  %v6881 = vmul.f32 %v6865, %v6797
  %v6882 = vmul.f32 %v6866, %v6802
  %v6883 = vmul.f32 %v6867, %v6805
  %v6884 = vmul.f32 %v6868, %v6810
  %v6885 = vmul.f32 %v6869, %v6813
  %v6886 = vmul.f32 %v6870, %v6818
  %v6887 = vmul.f32 %v6871, %v6821
  %v6888 = vadd.f32 %v6762, %v6872
  %v6889 = vadd.f32 %v6765, %v6873
  %v6890 = vadd.f32 %v6770, %v6874
  %v6891 = vadd.f32 %v6773, %v6875
  %v6892 = vadd.f32 %v6778, %v6876
  %v6893 = vadd.f32 %v6781, %v6877
  %v6894 = vadd.f32 %v6786, %v6878
  %v6895 = vadd.f32 %v6789, %v6879
  %v6896 = vadd.f32 %v6794, %v6880
  %v6897 = vadd.f32 %v6797, %v6881
  %v6898 = vadd.f32 %v6802, %v6882
  %v6899 = vadd.f32 %v6805, %v6883
  %v6900 = vadd.f32 %v6810, %v6884
  %v6901 = vadd.f32 %v6813, %v6885
  %v6902 = vadd.f32 %v6818, %v6886
  %v6903 = vadd.f32 %v6821, %v6887
  %v6904 = vmul.f32 %v6888, 0.7978846
  %v6905 = vmul.f32 %v6889, 0.7978846
  %v6906 = vmul.f32 %v6890, 0.7978846
  %v6907 = vmul.f32 %v6891, 0.7978846
  %v6908 = vmul.f32 %v6892, 0.7978846
  %v6909 = vmul.f32 %v6893, 0.7978846
  %v6910 = vmul.f32 %v6894, 0.7978846
  %v6911 = vmul.f32 %v6895, 0.7978846
  %v6912 = vmul.f32 %v6896, 0.7978846
  %v6913 = vmul.f32 %v6897, 0.7978846
  %v6914 = vmul.f32 %v6898, 0.7978846
  %v6915 = vmul.f32 %v6899, 0.7978846
  %v6916 = vmul.f32 %v6900, 0.7978846
  %v6917 = vmul.f32 %v6901, 0.7978846
  %v6918 = vmul.f32 %v6902, 0.7978846
  %v6919 = vmul.f32 %v6903, 0.7978846
  %v6920 = vtanh.pop %v6904
  %v6921 = vtanh.pop %v6905
  %v6922 = vtanh.pop %v6906
  %v6923 = vtanh.pop %v6907
  %v6924 = vtanh.pop %v6908
  %v6925 = vtanh.pop %v6909
  %v6926 = vtanh.pop %v6910
  %v6927 = vtanh.pop %v6911
  %v6928 = vtanh.pop %v6912
  %v6929 = vtanh.pop %v6913
  %v6930 = vtanh.pop %v6914
  %v6931 = vtanh.pop %v6915
  %v6932 = vtanh.pop %v6916
  %v6933 = vtanh.pop %v6917
  %v6934 = vtanh.pop %v6918
  %v6935 = vtanh.pop %v6919
  %v6936 = vadd.f32 %v6920, 1.0
  %v6937 = vadd.f32 %v6921, 1.0
  %v6938 = vadd.f32 %v6922, 1.0
  %v6939 = vadd.f32 %v6923, 1.0
  %v6940 = vadd.f32 %v6924, 1.0
  %v6941 = vadd.f32 %v6925, 1.0
  %v6942 = vadd.f32 %v6926, 1.0
  %v6943 = vadd.f32 %v6927, 1.0
  %v6944 = vadd.f32 %v6928, 1.0
  %v6945 = vadd.f32 %v6929, 1.0
  %v6946 = vadd.f32 %v6930, 1.0
  %v6947 = vadd.f32 %v6931, 1.0
  %v6948 = vadd.f32 %v6932, 1.0
  %v6949 = vadd.f32 %v6933, 1.0
  %v6950 = vadd.f32 %v6934, 1.0
  %v6951 = vadd.f32 %v6935, 1.0
  %v6952 = vmul.f32 %v6824, %v6936
  %v6953 = vmul.f32 %v6825, %v6937
  %v6954 = vmul.f32 %v6826, %v6938
  %v6955 = vmul.f32 %v6827, %v6939
  %v6956 = vmul.f32 %v6828, %v6940
  %v6957 = vmul.f32 %v6829, %v6941
  %v6958 = vmul.f32 %v6830, %v6942
  %v6959 = vmul.f32 %v6831, %v6943
  %v6960 = vmul.f32 %v6832, %v6944
  %v6961 = vmul.f32 %v6833, %v6945
  %v6962 = vmul.f32 %v6834, %v6946
  %v6963 = vmul.f32 %v6835, %v6947
  %v6964 = vmul.f32 %v6836, %v6948
  %v6965 = vmul.f32 %v6837, %v6949
  %v6966 = vmul.f32 %v6838, %v6950
  %v6967 = vmul.f32 %v6839, %v6951
  %v6968 = vpack.c.bf16 %v6953, %v6952
  %v6969 = vpack.c.bf16 %v6955, %v6954
  %v6970 = vpack.c.bf16 %v6957, %v6956
  %v6971 = vpack.c.bf16 %v6959, %v6958
  %v6972 = vpack.c.bf16 %v6961, %v6960
  %v6973 = vpack.c.bf16 %v6963, %v6962
  %v6974 = vpack.c.bf16 %v6965, %v6964
  %v6975 = vpack.c.bf16 %v6967, %v6966
  %s6976 = scalar_lea.vmem %s13, 32
  %v6977 = vld [vmem:[%s6976] sm:$0xf]
  %v6978 = vld [vmem:[%s6976 + $0x4] sm:$0xf]
  %v6979 = vld [vmem:[%s6976 + $0x8] sm:$0xf]
  %v6980 = vld [vmem:[%s6976 + $0xc] sm:$0xf]
  %v6981 = vld [vmem:[%s6976 + $0x10] sm:$0xf]
  %v6982 = vld [vmem:[%s6976 + $0x14] sm:$0xf]
  %v6983 = vld [vmem:[%s6976 + $0x18] sm:$0xf]
  %v6984 = vld [vmem:[%s6976 + $0x1c] sm:$0xf]
  %s6985 = scalar_lea.vmem %s14, 1
  %v6986 = vld [vmem:[%s6985] sm:$0x1]
  %v6988 = vlaneseq
  %v6989 = vshrl.u32 %v6988, 7
  %v6990 = vsub.s32 0, %v6989
  %v6991 = vrot.slane %v6986, %v6990
  %v7001 = vunpack.c.l.b16 %v6977
  %v7002 = vunpack.c.l.b16 %v6978
  %v7003 = vunpack.c.l.b16 %v6979
  %v7004 = vunpack.c.l.b16 %v6980
  %v7005 = vunpack.c.l.b16 %v6981
  %v7006 = vunpack.c.l.b16 %v6982
  %v7007 = vunpack.c.l.b16 %v6983
  %v7008 = vunpack.c.l.b16 %v6984
  %v7009 = vpack.c.b16 %v7002, %v7001
  %v7010 = vpack.c.b16 %v7004, %v7003
  %v7011 = vpack.c.b16 %v7006, %v7005
  %v7012 = vpack.c.b16 %v7008, %v7007
  %v7018 = vsel %vm3530, %v6968, 0
  %v7021 = vsel %vm3530, %v6969, 0
  %v7024 = vsel %vm3530, %v6970, 0
  %v7027 = vsel %vm3530, %v6971, 0
  %v7030 = vsel %vm3530, %v6972, 0
  %v7033 = vsel %vm3530, %v6973, 0
  %v7036 = vsel %vm3530, %v6974, 0
  %v7039 = vsel %vm3530, %v6975, 0
  %7041 = vmatprep.subr.bf16.mxu0 0
  %7042 = vmatpush1.bf16.msra.mxu0 %v7009
  %7043 = vmatprep.subr.bf16.mxu0 0
  %7044 = vmatpush1.bf16.msra.mxu0 %v7010
  %7045 = vmatprep.subr.bf16.mxu0 0
  %7046 = vmatpush1.bf16.msra.mxu0 %v7011
  %7047 = vmatprep.subr.bf16.mxu0 0
  %7048 = vmatpush1.bf16.msra.mxu0 %v7012
  %7049 = vmatprep.subr.bf16.mxu0 0
  %7050 = vmatpush1.bf16.msra.mxu0 0
  %7051 = vmatprep.subr.bf16.mxu0 0
  %7052 = vmatpush1.bf16.msra.mxu0 0
  %7053 = vmatprep.subr.bf16.mxu0 0
  %7054 = vmatpush1.bf16.msra.mxu0 0
  %7055 = vmatprep.subr.bf16.mxu0 0
  %7056 = vmatpush1.bf16.msra.mxu0 0
  %7057 = vmatprep.subr.bf16.mxu0 0
  %7058 = vmatpush1.bf16.msra.mxu0 0
  %7059 = vmatprep.subr.bf16.mxu0 0
  %7060 = vmatpush1.bf16.msra.mxu0 0
  %7061 = vmatprep.subr.bf16.mxu0 0
  %7062 = vmatpush1.bf16.msra.mxu0 0
  %7063 = vmatprep.subr.bf16.mxu0 0
  %7064 = vmatpush1.bf16.msra.mxu0 0
  %7065 = vmatprep.subr.bf16.mxu0 0
  %7066 = vmatpush1.bf16.msra.mxu0 0
  %7067 = vmatprep.subr.bf16.mxu0 0
  %7068 = vmatpush1.bf16.msra.mxu0 0
  %7069 = vmatprep.subr.bf16.mxu0 0
  %7070 = vmatpush1.bf16.msra.mxu0 0
  %7071 = vmatprep.subr.bf16.mxu0 0
  %7072 = vmatpush1.bf16.msra.mxu0 0
  %7073 = vmatprep.mubr.bf16.mxu0 0
  %7074 = vmatmul.mubr.bf16.gmra.mrb[0].mxu0 %v7018
  %v7075 = vpop.f32.mrb[0].mxu0
  %v7076 = vadd.f32 %v6991, %v7075
  %v7077 = vpop.f32.mrb[0].mxu0
  %v7078 = vpop.f32.mrb[0].mxu0
  %v7079 = vadd.f32 %v6991, %v7078
  %v7080 = vpop.f32.mrb[0].mxu0
  %7081 = vmatprep.mubr.bf16.mxu0 0
  %7082 = vmatmul.mubr.bf16.gmra.mrb[0].mxu0 %v7021
  %v7083 = vpop.f32.mrb[0].mxu0
  %v7084 = vadd.f32 %v6991, %v7083
  %v7085 = vpop.f32.mrb[0].mxu0
  %v7086 = vpop.f32.mrb[0].mxu0
  %v7087 = vadd.f32 %v6991, %v7086
  %v7088 = vpop.f32.mrb[0].mxu0
  %7089 = vmatprep.mubr.bf16.mxu0 0
  %7090 = vmatmul.mubr.bf16.gmra.mrb[0].mxu0 %v7024
  %v7091 = vpop.f32.mrb[0].mxu0
  %v7092 = vadd.f32 %v6991, %v7091
  %v7093 = vpop.f32.mrb[0].mxu0
  %v7094 = vpop.f32.mrb[0].mxu0
  %v7095 = vadd.f32 %v6991, %v7094
  %v7096 = vpop.f32.mrb[0].mxu0
  %7097 = vmatprep.mubr.bf16.mxu0 0
  %7098 = vmatmul.mubr.bf16.gmra.mrb[0].mxu0 %v7027
  %v7099 = vpop.f32.mrb[0].mxu0
  %v7100 = vadd.f32 %v6991, %v7099
  %v7101 = vpop.f32.mrb[0].mxu0
  %v7102 = vpop.f32.mrb[0].mxu0
  %v7103 = vadd.f32 %v6991, %v7102
  %v7104 = vpop.f32.mrb[0].mxu0
  %7105 = vmatprep.mubr.bf16.mxu0 0
  %7106 = vmatmul.mubr.bf16.gmra.mrb[0].mxu0 %v7030
  %v7107 = vpop.f32.mrb[0].mxu0
  %v7108 = vadd.f32 %v6991, %v7107
  %v7109 = vpop.f32.mrb[0].mxu0
  %v7110 = vpop.f32.mrb[0].mxu0
  %v7111 = vadd.f32 %v6991, %v7110
  %v7112 = vpop.f32.mrb[0].mxu0
  %7113 = vmatprep.mubr.bf16.mxu0 0
  %7114 = vmatmul.mubr.bf16.gmra.mrb[0].mxu0 %v7033
  %v7115 = vpop.f32.mrb[0].mxu0
  %v7116 = vadd.f32 %v6991, %v7115
  %v7117 = vpop.f32.mrb[0].mxu0
  %v7118 = vpop.f32.mrb[0].mxu0
  %v7119 = vadd.f32 %v6991, %v7118
  %v7120 = vpop.f32.mrb[0].mxu0
  %7121 = vmatprep.mubr.bf16.mxu0 0
  %7122 = vmatmul.mubr.bf16.gmra.mrb[0].mxu0 %v7036
  %v7123 = vpop.f32.mrb[0].mxu0
  %v7124 = vadd.f32 %v6991, %v7123
  %v7125 = vpop.f32.mrb[0].mxu0
  %v7126 = vpop.f32.mrb[0].mxu0
  %v7127 = vadd.f32 %v6991, %v7126
  %v7128 = vpop.f32.mrb[0].mxu0
  %7129 = vmatprep.mubr.bf16.mxu0 0
  %7130 = vmatmul.mubr.bf16.gmra.mrb[0].mxu0 %v7039
  %v7131 = vpop.f32.mrb[0].mxu0
  %v7132 = vadd.f32 %v6991, %v7131
  %v7133 = vpop.f32.mrb[0].mxu0
  %v7134 = vpop.f32.mrb[0].mxu0
  %v7135 = vadd.f32 %v6991, %v7134
  %v7136 = vpop.f32.mrb[0].mxu0
  %7137 = vdwg.mxu0
  %v7138 = vadd.f32 %v7076, %v6654
  %v7139 = vadd.f32 %v7079, %v6655
  %v7140 = vadd.f32 %v7084, %v6656
  %v7141 = vadd.f32 %v7087, %v6657
  %v7142 = vadd.f32 %v7092, %v6658
  %v7143 = vadd.f32 %v7095, %v6659
  %v7144 = vadd.f32 %v7100, %v6660
  %v7145 = vadd.f32 %v7103, %v6661
  %v7146 = vadd.f32 %v7108, %v6662
  %v7147 = vadd.f32 %v7111, %v6663
  %v7148 = vadd.f32 %v7116, %v6664
  %v7149 = vadd.f32 %v7119, %v6665
  %v7150 = vadd.f32 %v7124, %v6666
  %v7151 = vadd.f32 %v7127, %v6667
  %v7152 = vadd.f32 %v7132, %v6668
  %v7153 = vadd.f32 %v7135, %v6669
  %s7154 = scalar_lea.vmem %s15, 1
  %v7155 = vld [vmem:[%s7154] sm:$0x1]
  %s7156 = scalar_lea.vmem %s16, 1
  %v7157 = vld [vmem:[%s7156] sm:$0x1]
  %v7158 = vsel %vm188, %v7138, 0.0
  %7159 = vadd.xlane.f32.xlu0 %v7158
  %v7160 = vpop.xlane.xlu0 %7159
  %v7161 = vsel %vm188, %v7139, 0.0
  %7162 = vadd.xlane.f32.xlu0 %v7161
  %v7163 = vpop.xlane.xlu0 %7162
  %v7164 = vsel %vm188, %v7140, 0.0
  %7165 = vadd.xlane.f32.xlu0 %v7164
  %v7166 = vpop.xlane.xlu0 %7165
  %v7167 = vsel %vm188, %v7141, 0.0
  %7168 = vadd.xlane.f32.xlu0 %v7167
  %v7169 = vpop.xlane.xlu0 %7168
  %v7170 = vsel %vm188, %v7142, 0.0
  %7171 = vadd.xlane.f32.xlu0 %v7170
  %v7172 = vpop.xlane.xlu0 %7171
  %v7173 = vsel %vm188, %v7143, 0.0
  %7174 = vadd.xlane.f32.xlu0 %v7173
  %v7175 = vpop.xlane.xlu0 %7174
  %v7176 = vsel %vm188, %v7144, 0.0
  %7177 = vadd.xlane.f32.xlu0 %v7176
  %v7178 = vpop.xlane.xlu0 %7177
  %v7179 = vsel %vm188, %v7145, 0.0
  %7180 = vadd.xlane.f32.xlu0 %v7179
  %v7181 = vpop.xlane.xlu0 %7180
  %v7182 = vsel %vm188, %v7146, 0.0
  %7183 = vadd.xlane.f32.xlu0 %v7182
  %v7184 = vpop.xlane.xlu0 %7183
  %v7185 = vsel %vm188, %v7147, 0.0
  %7186 = vadd.xlane.f32.xlu0 %v7185
  %v7187 = vpop.xlane.xlu0 %7186
  %v7188 = vsel %vm188, %v7148, 0.0
  %7189 = vadd.xlane.f32.xlu0 %v7188
  %v7190 = vpop.xlane.xlu0 %7189
  %v7191 = vsel %vm188, %v7149, 0.0
  %7192 = vadd.xlane.f32.xlu0 %v7191
  %v7193 = vpop.xlane.xlu0 %7192
  %v7194 = vsel %vm188, %v7150, 0.0
  %7195 = vadd.xlane.f32.xlu0 %v7194
  %v7196 = vpop.xlane.xlu0 %7195
  %v7197 = vsel %vm188, %v7151, 0.0
  %7198 = vadd.xlane.f32.xlu0 %v7197
  %v7199 = vpop.xlane.xlu0 %7198
  %v7200 = vsel %vm188, %v7152, 0.0
  %7201 = vadd.xlane.f32.xlu0 %v7200
  %v7202 = vpop.xlane.xlu0 %7201
  %v7203 = vsel %vm188, %v7153, 0.0
  %7204 = vadd.xlane.f32.xlu0 %v7203
  %v7205 = vpop.xlane.xlu0 %7204
  %v7206 = vmul.f32 %v7160, %v237
  %v7207 = vmul.f32 %v7163, %v237
  %v7208 = vmul.f32 %v7166, %v237
  %v7209 = vmul.f32 %v7169, %v237
  %v7210 = vmul.f32 %v7172, %v237
  %v7211 = vmul.f32 %v7175, %v237
  %v7212 = vmul.f32 %v7178, %v237
  %v7213 = vmul.f32 %v7181, %v237
  %v7214 = vmul.f32 %v7184, %v237
  %v7215 = vmul.f32 %v7187, %v237
  %v7216 = vmul.f32 %v7190, %v237
  %v7217 = vmul.f32 %v7193, %v237
  %v7218 = vmul.f32 %v7196, %v237
  %v7219 = vmul.f32 %v7199, %v237
  %v7220 = vmul.f32 %v7202, %v237
  %v7221 = vmul.f32 %v7205, %v237
  %v7222 = vsub.f32 %v7138, %v7206
  %v7223 = vsub.f32 %v7139, %v7207
  %v7224 = vsub.f32 %v7140, %v7208
  %v7225 = vsub.f32 %v7141, %v7209
  %v7226 = vsub.f32 %v7142, %v7210
  %v7227 = vsub.f32 %v7143, %v7211
  %v7228 = vsub.f32 %v7144, %v7212
  %v7229 = vsub.f32 %v7145, %v7213
  %v7230 = vsub.f32 %v7146, %v7214
  %v7231 = vsub.f32 %v7147, %v7215
  %v7232 = vsub.f32 %v7148, %v7216
  %v7233 = vsub.f32 %v7149, %v7217
  %v7234 = vsub.f32 %v7150, %v7218
  %v7235 = vsub.f32 %v7151, %v7219
  %v7236 = vsub.f32 %v7152, %v7220
  %v7237 = vsub.f32 %v7153, %v7221
  %v7238 = vmul.f32 %v7222, %v7222
  %v7239 = vmul.f32 %v7223, %v7223
  %v7240 = vmul.f32 %v7224, %v7224
  %v7241 = vmul.f32 %v7225, %v7225
  %v7242 = vmul.f32 %v7226, %v7226
  %v7243 = vmul.f32 %v7227, %v7227
  %v7244 = vmul.f32 %v7228, %v7228
  %v7245 = vmul.f32 %v7229, %v7229
  %v7246 = vmul.f32 %v7230, %v7230
  %v7247 = vmul.f32 %v7231, %v7231
  %v7248 = vmul.f32 %v7232, %v7232
  %v7249 = vmul.f32 %v7233, %v7233
  %v7250 = vmul.f32 %v7234, %v7234
  %v7251 = vmul.f32 %v7235, %v7235
  %v7252 = vmul.f32 %v7236, %v7236
  %v7253 = vmul.f32 %v7237, %v7237
  %v7254 = vsel %vm188, %v7238, 0.0
  %7255 = vadd.xlane.f32.xlu0 %v7254
  %v7256 = vpop.xlane.xlu0 %7255
  %v7257 = vsel %vm188, %v7239, 0.0
  %7258 = vadd.xlane.f32.xlu0 %v7257
  %v7259 = vpop.xlane.xlu0 %7258
  %v7260 = vsel %vm188, %v7240, 0.0
  %7261 = vadd.xlane.f32.xlu0 %v7260
  %v7262 = vpop.xlane.xlu0 %7261
  %v7263 = vsel %vm188, %v7241, 0.0
  %7264 = vadd.xlane.f32.xlu0 %v7263
  %v7265 = vpop.xlane.xlu0 %7264
  %v7266 = vsel %vm188, %v7242, 0.0
  %7267 = vadd.xlane.f32.xlu0 %v7266
  %v7268 = vpop.xlane.xlu0 %7267
  %v7269 = vsel %vm188, %v7243, 0.0
  %7270 = vadd.xlane.f32.xlu0 %v7269
  %v7271 = vpop.xlane.xlu0 %7270
  %v7272 = vsel %vm188, %v7244, 0.0
  %7273 = vadd.xlane.f32.xlu0 %v7272
  %v7274 = vpop.xlane.xlu0 %7273
  %v7275 = vsel %vm188, %v7245, 0.0
  %7276 = vadd.xlane.f32.xlu0 %v7275
  %v7277 = vpop.xlane.xlu0 %7276
  %v7278 = vsel %vm188, %v7246, 0.0
  %7279 = vadd.xlane.f32.xlu0 %v7278
  %v7280 = vpop.xlane.xlu0 %7279
  %v7281 = vsel %vm188, %v7247, 0.0
  %7282 = vadd.xlane.f32.xlu0 %v7281
  %v7283 = vpop.xlane.xlu0 %7282
  %v7284 = vsel %vm188, %v7248, 0.0
  %7285 = vadd.xlane.f32.xlu0 %v7284
  %v7286 = vpop.xlane.xlu0 %7285
  %v7287 = vsel %vm188, %v7249, 0.0
  %7288 = vadd.xlane.f32.xlu0 %v7287
  %v7289 = vpop.xlane.xlu0 %7288
  %v7290 = vsel %vm188, %v7250, 0.0
  %7291 = vadd.xlane.f32.xlu0 %v7290
  %v7292 = vpop.xlane.xlu0 %7291
  %v7293 = vsel %vm188, %v7251, 0.0
  %7294 = vadd.xlane.f32.xlu0 %v7293
  %v7295 = vpop.xlane.xlu0 %7294
  %v7296 = vsel %vm188, %v7252, 0.0
  %7297 = vadd.xlane.f32.xlu0 %v7296
  %v7298 = vpop.xlane.xlu0 %7297
  %v7299 = vsel %vm188, %v7253, 0.0
  %7300 = vadd.xlane.f32.xlu0 %v7299
  %v7301 = vpop.xlane.xlu0 %7300
  %v7302 = vmul.f32 %v7256, %v237
  %v7303 = vmul.f32 %v7259, %v237
  %v7304 = vmul.f32 %v7262, %v237
  %v7305 = vmul.f32 %v7265, %v237
  %v7306 = vmul.f32 %v7268, %v237
  %v7307 = vmul.f32 %v7271, %v237
  %v7308 = vmul.f32 %v7274, %v237
  %v7309 = vmul.f32 %v7277, %v237
  %v7310 = vmul.f32 %v7280, %v237
  %v7311 = vmul.f32 %v7283, %v237
  %v7312 = vmul.f32 %v7286, %v237
  %v7313 = vmul.f32 %v7289, %v237
  %v7314 = vmul.f32 %v7292, %v237
  %v7315 = vmul.f32 %v7295, %v237
  %v7316 = vmul.f32 %v7298, %v237
  %v7317 = vmul.f32 %v7301, %v237
  %v7318 = vadd.f32 %v7302, 1e-12
  %v7319 = vadd.f32 %v7303, 1e-12
  %v7320 = vadd.f32 %v7304, 1e-12
  %v7321 = vadd.f32 %v7305, 1e-12
  %v7322 = vadd.f32 %v7306, 1e-12
  %v7323 = vadd.f32 %v7307, 1e-12
  %v7324 = vadd.f32 %v7308, 1e-12
  %v7325 = vadd.f32 %v7309, 1e-12
  %v7326 = vadd.f32 %v7310, 1e-12
  %v7327 = vadd.f32 %v7311, 1e-12
  %v7328 = vadd.f32 %v7312, 1e-12
  %v7329 = vadd.f32 %v7313, 1e-12
  %v7330 = vadd.f32 %v7314, 1e-12
  %v7331 = vadd.f32 %v7315, 1e-12
  %v7332 = vadd.f32 %v7316, 1e-12
  %v7333 = vadd.f32 %v7317, 1e-12
  %v7334 = vrsqrt.pop %v7318
  %v7335 = vrsqrt.pop %v7319
  %v7336 = vrsqrt.pop %v7320
  %v7337 = vrsqrt.pop %v7321
  %v7338 = vrsqrt.pop %v7322
  %v7339 = vrsqrt.pop %v7323
  %v7340 = vrsqrt.pop %v7324
  %v7341 = vrsqrt.pop %v7325
  %v7342 = vrsqrt.pop %v7326
  %v7343 = vrsqrt.pop %v7327
  %v7344 = vrsqrt.pop %v7328
  %v7345 = vrsqrt.pop %v7329
  %v7346 = vrsqrt.pop %v7330
  %v7347 = vrsqrt.pop %v7331
  %v7348 = vrsqrt.pop %v7332
  %v7349 = vrsqrt.pop %v7333
  %v7350 = vmul.f32 %v7222, %v7334
  %v7351 = vmul.f32 %v7223, %v7335
  %v7352 = vmul.f32 %v7224, %v7336
  %v7353 = vmul.f32 %v7225, %v7337
  %v7354 = vmul.f32 %v7226, %v7338
  %v7355 = vmul.f32 %v7227, %v7339
  %v7356 = vmul.f32 %v7228, %v7340
  %v7357 = vmul.f32 %v7229, %v7341
  %v7358 = vmul.f32 %v7230, %v7342
  %v7359 = vmul.f32 %v7231, %v7343
  %v7360 = vmul.f32 %v7232, %v7344
  %v7361 = vmul.f32 %v7233, %v7345
  %v7362 = vmul.f32 %v7234, %v7346
  %v7363 = vmul.f32 %v7235, %v7347
  %v7364 = vmul.f32 %v7236, %v7348
  %v7365 = vmul.f32 %v7237, %v7349
  %v7367 = vlaneseq
  %v7368 = vshrl.u32 %v7367, 7
  %v7369 = vsub.s32 0, %v7368
  %v7370 = vrot.slane %v7155, %v7369
  %v7372 = vmul.f32 %v7350, %v7370
  %v7373 = vmul.f32 %v7351, %v7370
  %v7374 = vmul.f32 %v7352, %v7370
  %v7375 = vmul.f32 %v7353, %v7370
  %v7376 = vmul.f32 %v7354, %v7370
  %v7377 = vmul.f32 %v7355, %v7370
  %v7378 = vmul.f32 %v7356, %v7370
  %v7379 = vmul.f32 %v7357, %v7370
  %v7380 = vmul.f32 %v7358, %v7370
  %v7381 = vmul.f32 %v7359, %v7370
  %v7382 = vmul.f32 %v7360, %v7370
  %v7383 = vmul.f32 %v7361, %v7370
  %v7384 = vmul.f32 %v7362, %v7370
  %v7385 = vmul.f32 %v7363, %v7370
  %v7386 = vmul.f32 %v7364, %v7370
  %v7387 = vmul.f32 %v7365, %v7370
  %v7389 = vlaneseq
  %v7390 = vshrl.u32 %v7389, 7
  %v7391 = vsub.s32 0, %v7390
  %v7392 = vrot.slane %v7157, %v7391
  %v7394 = vadd.f32 %v7372, %v7392
  %v7395 = vadd.f32 %v7373, %v7392
  %v7396 = vadd.f32 %v7374, %v7392
  %v7397 = vadd.f32 %v7375, %v7392
  %v7398 = vadd.f32 %v7376, %v7392
  %v7399 = vadd.f32 %v7377, %v7392
  %v7400 = vadd.f32 %v7378, %v7392
  %v7401 = vadd.f32 %v7379, %v7392
  %v7402 = vadd.f32 %v7380, %v7392
  %v7403 = vadd.f32 %v7381, %v7392
  %v7404 = vadd.f32 %v7382, %v7392
  %v7405 = vadd.f32 %v7383, %v7392
  %v7406 = vadd.f32 %v7384, %v7392
  %v7407 = vadd.f32 %v7385, %v7392
  %v7408 = vadd.f32 %v7386, %v7392
  %v7409 = vadd.f32 %v7387, %v7392
  %v7410 = vpack.c.bf16 %v7395, %v7394
  %v7411 = vpack.c.bf16 %v7397, %v7396
  %v7412 = vpack.c.bf16 %v7399, %v7398
  %v7413 = vpack.c.bf16 %v7401, %v7400
  %v7414 = vpack.c.bf16 %v7403, %v7402
  %v7415 = vpack.c.bf16 %v7405, %v7404
  %v7416 = vpack.c.bf16 %v7407, %v7406
  %v7417 = vpack.c.bf16 %v7409, %v7408
  %v7418 = vld [vmem:[%s17] sm:$0xf]
  %v7419 = vld [vmem:[%s17 + $0x4] sm:$0xf]
  %v7420 = vld [vmem:[%s17 + $0x8] sm:$0xf]
  %v7421 = vld [vmem:[%s17 + $0xc] sm:$0xf]
  %v7422 = vld [vmem:[%s18] sm:$0x1]
  %v7424 = vlaneseq
  %v7425 = vshrl.u32 %v7424, 7
  %v7426 = vsub.s32 0, %v7425
  %v7427 = vrot.slane %v7422, %v7426
  %v7433 = vunpack.c.l.b16 %v7418
  %v7434 = vunpack.c.l.b16 %v7419
  %v7435 = vunpack.c.l.b16 %v7420
  %v7436 = vunpack.c.l.b16 %v7421
  %v7437 = vpack.c.b16 %v7434, %v7433
  %v7438 = vpack.c.b16 %v7436, %v7435
  %v7442 = vsel %vm188, %v7410, 0
  %v7445 = vsel %vm188, %v7411, 0
  %v7448 = vsel %vm188, %v7412, 0
  %v7451 = vsel %vm188, %v7413, 0
  %v7454 = vsel %vm188, %v7414, 0
  %v7457 = vsel %vm188, %v7415, 0
  %v7460 = vsel %vm188, %v7416, 0
  %v7463 = vsel %vm188, %v7417, 0
  %7465 = vmatprep.subr.bf16.mxu0 0
  %7466 = vmatpush1.bf16.msra.mxu0 %v7437
  %7467 = vmatprep.subr.bf16.mxu0 0
  %7468 = vmatpush1.bf16.msra.mxu0 %v7438
  %7469 = vmatprep.subr.bf16.mxu0 0
  %7470 = vmatpush1.bf16.msra.mxu0 0
  %7471 = vmatprep.subr.bf16.mxu0 0
  %7472 = vmatpush1.bf16.msra.mxu0 0
  %7473 = vmatprep.subr.bf16.mxu0 0
  %7474 = vmatpush1.bf16.msra.mxu0 0
  %7475 = vmatprep.subr.bf16.mxu0 0
  %7476 = vmatpush1.bf16.msra.mxu0 0
  %7477 = vmatprep.subr.bf16.mxu0 0
  %7478 = vmatpush1.bf16.msra.mxu0 0
  %7479 = vmatprep.subr.bf16.mxu0 0
  %7480 = vmatpush1.bf16.msra.mxu0 0
  %7481 = vmatprep.subr.bf16.mxu0 0
  %7482 = vmatpush1.bf16.msra.mxu0 0
  %7483 = vmatprep.subr.bf16.mxu0 0
  %7484 = vmatpush1.bf16.msra.mxu0 0
  %7485 = vmatprep.subr.bf16.mxu0 0
  %7486 = vmatpush1.bf16.msra.mxu0 0
  %7487 = vmatprep.subr.bf16.mxu0 0
  %7488 = vmatpush1.bf16.msra.mxu0 0
  %7489 = vmatprep.subr.bf16.mxu0 0
  %7490 = vmatpush1.bf16.msra.mxu0 0
  %7491 = vmatprep.subr.bf16.mxu0 0
  %7492 = vmatpush1.bf16.msra.mxu0 0
  %7493 = vmatprep.subr.bf16.mxu0 0
  %7494 = vmatpush1.bf16.msra.mxu0 0
  %7495 = vmatprep.subr.bf16.mxu0 0
  %7496 = vmatpush1.bf16.msra.mxu0 0
  %7497 = vmatprep.mubr.bf16.mxu0 0
  %7498 = vmatmul.mubr.bf16.gmra.mrb[0].mxu0 %v7442
  %v7499 = vpop.f32.mrb[0].mxu0
  %v7500 = vadd.f32 %v7427, %v7499
  %v7501 = vpop.f32.mrb[0].mxu0
  %v7502 = vpop.f32.mrb[0].mxu0
  %v7503 = vadd.f32 %v7427, %v7502
  %v7504 = vpop.f32.mrb[0].mxu0
  %7505 = vmatprep.mubr.bf16.mxu0 0
  %7506 = vmatmul.mubr.bf16.gmra.mrb[0].mxu0 %v7445
  %v7507 = vpop.f32.mrb[0].mxu0
  %v7508 = vadd.f32 %v7427, %v7507
  %v7509 = vpop.f32.mrb[0].mxu0
  %v7510 = vpop.f32.mrb[0].mxu0
  %v7511 = vadd.f32 %v7427, %v7510
  %v7512 = vpop.f32.mrb[0].mxu0
  %7513 = vmatprep.mubr.bf16.mxu0 0
  %7514 = vmatmul.mubr.bf16.gmra.mrb[0].mxu0 %v7448
  %v7515 = vpop.f32.mrb[0].mxu0
  %v7516 = vadd.f32 %v7427, %v7515
  %v7517 = vpop.f32.mrb[0].mxu0
  %v7518 = vpop.f32.mrb[0].mxu0
  %v7519 = vadd.f32 %v7427, %v7518
  %v7520 = vpop.f32.mrb[0].mxu0
  %7521 = vmatprep.mubr.bf16.mxu0 0
  %7522 = vmatmul.mubr.bf16.gmra.mrb[0].mxu0 %v7451
  %v7523 = vpop.f32.mrb[0].mxu0
  %v7524 = vadd.f32 %v7427, %v7523
  %v7525 = vpop.f32.mrb[0].mxu0
  %v7526 = vpop.f32.mrb[0].mxu0
  %v7527 = vadd.f32 %v7427, %v7526
  %v7528 = vpop.f32.mrb[0].mxu0
  %7529 = vmatprep.mubr.bf16.mxu0 0
  %7530 = vmatmul.mubr.bf16.gmra.mrb[0].mxu0 %v7454
  %v7531 = vpop.f32.mrb[0].mxu0
  %v7532 = vadd.f32 %v7427, %v7531
  %v7533 = vpop.f32.mrb[0].mxu0
  %v7534 = vpop.f32.mrb[0].mxu0
  %v7535 = vadd.f32 %v7427, %v7534
  %v7536 = vpop.f32.mrb[0].mxu0
  %7537 = vmatprep.mubr.bf16.mxu0 0
  %7538 = vmatmul.mubr.bf16.gmra.mrb[0].mxu0 %v7457
  %v7539 = vpop.f32.mrb[0].mxu0
  %v7540 = vadd.f32 %v7427, %v7539
  %v7541 = vpop.f32.mrb[0].mxu0
  %v7542 = vpop.f32.mrb[0].mxu0
  %v7543 = vadd.f32 %v7427, %v7542
  %v7544 = vpop.f32.mrb[0].mxu0
  %7545 = vmatprep.mubr.bf16.mxu0 0
  %7546 = vmatmul.mubr.bf16.gmra.mrb[0].mxu0 %v7460
  %v7547 = vpop.f32.mrb[0].mxu0
  %v7548 = vadd.f32 %v7427, %v7547
  %v7549 = vpop.f32.mrb[0].mxu0
  %v7550 = vpop.f32.mrb[0].mxu0
  %v7551 = vadd.f32 %v7427, %v7550
  %v7552 = vpop.f32.mrb[0].mxu0
  %7553 = vmatprep.mubr.bf16.mxu0 0
  %7554 = vmatmul.mubr.bf16.gmra.mrb[0].mxu0 %v7463
  %v7555 = vpop.f32.mrb[0].mxu0
  %v7556 = vadd.f32 %v7427, %v7555
  %v7557 = vpop.f32.mrb[0].mxu0
  %v7558 = vpop.f32.mrb[0].mxu0
  %v7559 = vadd.f32 %v7427, %v7558
  %v7560 = vpop.f32.mrb[0].mxu0
  %7561 = vdwg.mxu0
  %v7562 = vtanh.pop %v7500
  %v7563 = vtanh.pop %v7503
  %v7564 = vtanh.pop %v7508
  %v7565 = vtanh.pop %v7511
  %v7566 = vtanh.pop %v7516
  %v7567 = vtanh.pop %v7519
  %v7568 = vtanh.pop %v7524
  %v7569 = vtanh.pop %v7527
  %v7570 = vtanh.pop %v7532
  %v7571 = vtanh.pop %v7535
  %v7572 = vtanh.pop %v7540
  %v7573 = vtanh.pop %v7543
  %v7574 = vtanh.pop %v7548
  %v7575 = vtanh.pop %v7551
  %v7576 = vtanh.pop %v7556
  %v7577 = vtanh.pop %v7559
  %v7578 = vpack.c.bf16 %v7563, %v7562
  %v7579 = vpack.c.bf16 %v7565, %v7564
  %v7580 = vpack.c.bf16 %v7567, %v7566
  %v7581 = vpack.c.bf16 %v7569, %v7568
  %v7582 = vpack.c.bf16 %v7571, %v7570
  %v7583 = vpack.c.bf16 %v7573, %v7572
  %v7584 = vpack.c.bf16 %v7575, %v7574
  %v7585 = vpack.c.bf16 %v7577, %v7576
  %v7586 = vld [vmem:[%s19] sm:$0xf]
  %v7587 = vld [vmem:[%s19 + $0x4] sm:$0xf]
  %v7588 = vld [vmem:[%s19 + $0x8] sm:$0xf]
  %v7589 = vld [vmem:[%s19 + $0xc] sm:$0xf]
  %v7590 = vld [vmem:[%s20] sm:$0x1]
  %v7592 = vlaneseq
  %v7593 = vshrl.u32 %v7592, 7
  %v7594 = vsub.s32 0, %v7593
  %v7595 = vrot.slane %v7590, %v7594
  %v7601 = vunpack.c.l.b16 %v7586
  %v7602 = vunpack.c.l.b16 %v7587
  %v7603 = vunpack.c.l.b16 %v7588
  %v7604 = vunpack.c.l.b16 %v7589
  %v7605 = vpack.c.b16 %v7602, %v7601
  %v7606 = vpack.c.b16 %v7604, %v7603
  %v7610 = vsel %vm188, %v7578, 0
  %v7613 = vsel %vm188, %v7579, 0
  %v7616 = vsel %vm188, %v7580, 0
  %v7619 = vsel %vm188, %v7581, 0
  %v7622 = vsel %vm188, %v7582, 0
  %v7625 = vsel %vm188, %v7583, 0
  %v7628 = vsel %vm188, %v7584, 0
  %v7631 = vsel %vm188, %v7585, 0
  %7633 = vmatprep.subr.bf16.mxu0 0
  %7634 = vmatpush1.bf16.msra.mxu0 %v7605
  %7635 = vmatprep.subr.bf16.mxu0 0
  %7636 = vmatpush1.bf16.msra.mxu0 %v7606
  %7637 = vmatprep.subr.bf16.mxu0 0
  %7638 = vmatpush1.bf16.msra.mxu0 0
  %7639 = vmatprep.subr.bf16.mxu0 0
  %7640 = vmatpush1.bf16.msra.mxu0 0
  %7641 = vmatprep.subr.bf16.mxu0 0
  %7642 = vmatpush1.bf16.msra.mxu0 0
  %7643 = vmatprep.subr.bf16.mxu0 0
  %7644 = vmatpush1.bf16.msra.mxu0 0
  %7645 = vmatprep.subr.bf16.mxu0 0
  %7646 = vmatpush1.bf16.msra.mxu0 0
  %7647 = vmatprep.subr.bf16.mxu0 0
  %7648 = vmatpush1.bf16.msra.mxu0 0
  %7649 = vmatprep.subr.bf16.mxu0 0
  %7650 = vmatpush1.bf16.msra.mxu0 0
  %7651 = vmatprep.subr.bf16.mxu0 0
  %7652 = vmatpush1.bf16.msra.mxu0 0
  %7653 = vmatprep.subr.bf16.mxu0 0
  %7654 = vmatpush1.bf16.msra.mxu0 0
  %7655 = vmatprep.subr.bf16.mxu0 0
  %7656 = vmatpush1.bf16.msra.mxu0 0
  %7657 = vmatprep.subr.bf16.mxu0 0
  %7658 = vmatpush1.bf16.msra.mxu0 0
  %7659 = vmatprep.subr.bf16.mxu0 0
  %7660 = vmatpush1.bf16.msra.mxu0 0
  %7661 = vmatprep.subr.bf16.mxu0 0
  %7662 = vmatpush1.bf16.msra.mxu0 0
  %7663 = vmatprep.subr.bf16.mxu0 0
  %7664 = vmatpush1.bf16.msra.mxu0 0
  %7665 = vmatprep.mubr.bf16.mxu0 0
  %7666 = vmatmul.mubr.bf16.gmra.mrb[0].mxu0 %v7610
  %v7667 = vpop.f32.mrb[0].mxu0
  %v7668 = vadd.f32 %v7595, %v7667
  %v7669 = vpop.f32.mrb[0].mxu0
  %v7670 = vpop.f32.mrb[0].mxu0
  %v7671 = vadd.f32 %v7595, %v7670
  %v7672 = vpop.f32.mrb[0].mxu0
  %7673 = vmatprep.mubr.bf16.mxu0 0
  %7674 = vmatmul.mubr.bf16.gmra.mrb[0].mxu0 %v7613
  %v7675 = vpop.f32.mrb[0].mxu0
  %v7676 = vadd.f32 %v7595, %v7675
  %v7677 = vpop.f32.mrb[0].mxu0
  %v7678 = vpop.f32.mrb[0].mxu0
  %v7679 = vadd.f32 %v7595, %v7678
  %v7680 = vpop.f32.mrb[0].mxu0
  %7681 = vmatprep.mubr.bf16.mxu0 0
  %7682 = vmatmul.mubr.bf16.gmra.mrb[0].mxu0 %v7616
  %v7683 = vpop.f32.mrb[0].mxu0
  %v7684 = vadd.f32 %v7595, %v7683
  %v7685 = vpop.f32.mrb[0].mxu0
  %v7686 = vpop.f32.mrb[0].mxu0
  %v7687 = vadd.f32 %v7595, %v7686
  %v7688 = vpop.f32.mrb[0].mxu0
  %7689 = vmatprep.mubr.bf16.mxu0 0
  %7690 = vmatmul.mubr.bf16.gmra.mrb[0].mxu0 %v7619
  %v7691 = vpop.f32.mrb[0].mxu0
  %v7692 = vadd.f32 %v7595, %v7691
  %v7693 = vpop.f32.mrb[0].mxu0
  %v7694 = vpop.f32.mrb[0].mxu0
  %v7695 = vadd.f32 %v7595, %v7694
  %v7696 = vpop.f32.mrb[0].mxu0
  %7697 = vmatprep.mubr.bf16.mxu0 0
  %7698 = vmatmul.mubr.bf16.gmra.mrb[0].mxu0 %v7622
  %v7699 = vpop.f32.mrb[0].mxu0
  %v7700 = vadd.f32 %v7595, %v7699
  %v7701 = vpop.f32.mrb[0].mxu0
  %v7702 = vpop.f32.mrb[0].mxu0
  %v7703 = vadd.f32 %v7595, %v7702
  %v7704 = vpop.f32.mrb[0].mxu0
  %7705 = vmatprep.mubr.bf16.mxu0 0
  %7706 = vmatmul.mubr.bf16.gmra.mrb[0].mxu0 %v7625
  %v7707 = vpop.f32.mrb[0].mxu0
  %v7708 = vadd.f32 %v7595, %v7707
  %v7709 = vpop.f32.mrb[0].mxu0
  %v7710 = vpop.f32.mrb[0].mxu0
  %v7711 = vadd.f32 %v7595, %v7710
  %v7712 = vpop.f32.mrb[0].mxu0
  %7713 = vmatprep.mubr.bf16.mxu0 0
  %7714 = vmatmul.mubr.bf16.gmra.mrb[0].mxu0 %v7628
  %v7715 = vpop.f32.mrb[0].mxu0
  %v7716 = vadd.f32 %v7595, %v7715
  %v7717 = vpop.f32.mrb[0].mxu0
  %v7718 = vpop.f32.mrb[0].mxu0
  %v7719 = vadd.f32 %v7595, %v7718
  %v7720 = vpop.f32.mrb[0].mxu0
  %7721 = vmatprep.mubr.bf16.mxu0 0
  %7722 = vmatmul.mubr.bf16.gmra.mrb[0].mxu0 %v7631
  %v7723 = vpop.f32.mrb[0].mxu0
  %v7724 = vadd.f32 %v7595, %v7723
  %v7725 = vpop.f32.mrb[0].mxu0
  %v7726 = vpop.f32.mrb[0].mxu0
  %v7727 = vadd.f32 %v7595, %v7726
  %v7728 = vpop.f32.mrb[0].mxu0
  %7729 = vdwg.mxu0
  %7746 = vrot.lane.b32.xlu0 %v7562, 32
  %v7747 = vpop.permute.xlu0 %7746
  %7748 = vrot.lane.b32.xlu0 %v7563, 32
  %v7749 = vpop.permute.xlu0 %7748
  %7750 = vrot.lane.b32.xlu0 %v7564, 32
  %v7751 = vpop.permute.xlu0 %7750
  %7752 = vrot.lane.b32.xlu0 %v7565, 32
  %v7753 = vpop.permute.xlu0 %7752
  %7754 = vrot.lane.b32.xlu0 %v7566, 32
  %v7755 = vpop.permute.xlu0 %7754
  %7756 = vrot.lane.b32.xlu0 %v7567, 32
  %v7757 = vpop.permute.xlu0 %7756
  %7758 = vrot.lane.b32.xlu0 %v7568, 32
  %v7759 = vpop.permute.xlu0 %7758
  %7760 = vrot.lane.b32.xlu0 %v7569, 32
  %v7761 = vpop.permute.xlu0 %7760
  %7762 = vrot.lane.b32.xlu0 %v7570, 32
  %v7763 = vpop.permute.xlu0 %7762
  %7764 = vrot.lane.b32.xlu0 %v7571, 32
  %v7765 = vpop.permute.xlu0 %7764
  %7766 = vrot.lane.b32.xlu0 %v7572, 32
  %v7767 = vpop.permute.xlu0 %7766
  %7768 = vrot.lane.b32.xlu0 %v7573, 32
  %v7769 = vpop.permute.xlu0 %7768
  %7770 = vrot.lane.b32.xlu0 %v7574, 32
  %v7771 = vpop.permute.xlu0 %7770
  %7772 = vrot.lane.b32.xlu0 %v7575, 32
  %v7773 = vpop.permute.xlu0 %7772
  %7774 = vrot.lane.b32.xlu0 %v7576, 32
  %v7775 = vpop.permute.xlu0 %7774
  %7776 = vrot.lane.b32.xlu0 %v7577, 32
  %v7777 = vpop.permute.xlu0 %7776
  %7810 = vrot.lane.b32.xlu0 %v7668, 64
  %v7811 = vpop.permute.xlu0 %7810
  %7812 = vrot.lane.b32.xlu0 %v7671, 64
  %v7813 = vpop.permute.xlu0 %7812
  %7814 = vrot.lane.b32.xlu0 %v7676, 64
  %v7815 = vpop.permute.xlu0 %7814
  %7816 = vrot.lane.b32.xlu0 %v7679, 64
  %v7817 = vpop.permute.xlu0 %7816
  %7818 = vrot.lane.b32.xlu0 %v7684, 64
  %v7819 = vpop.permute.xlu0 %7818
  %7820 = vrot.lane.b32.xlu0 %v7687, 64
  %v7821 = vpop.permute.xlu0 %7820
  %7822 = vrot.lane.b32.xlu0 %v7692, 64
  %v7823 = vpop.permute.xlu0 %7822
  %7824 = vrot.lane.b32.xlu0 %v7695, 64
  %v7825 = vpop.permute.xlu0 %7824
  %7826 = vrot.lane.b32.xlu0 %v7700, 64
  %v7827 = vpop.permute.xlu0 %7826
  %7828 = vrot.lane.b32.xlu0 %v7703, 64
  %v7829 = vpop.permute.xlu0 %7828
  %7830 = vrot.lane.b32.xlu0 %v7708, 64
  %v7831 = vpop.permute.xlu0 %7830
  %7832 = vrot.lane.b32.xlu0 %v7711, 64
  %v7833 = vpop.permute.xlu0 %7832
  %7834 = vrot.lane.b32.xlu0 %v7716, 64
  %v7835 = vpop.permute.xlu0 %7834
  %7836 = vrot.lane.b32.xlu0 %v7719, 64
  %v7837 = vpop.permute.xlu0 %7836
  %7838 = vrot.lane.b32.xlu0 %v7724, 64
  %v7839 = vpop.permute.xlu0 %7838
  %7840 = vrot.lane.b32.xlu0 %v7727, 64
  %v7841 = vpop.permute.xlu0 %7840
  %v7858 = vsel %vm188, %v7394, %v7747
  %v7859 = vsel %vm188, %v7395, %v7749
  %v7860 = vsel %vm188, %v7396, %v7751
  %v7861 = vsel %vm188, %v7397, %v7753
  %v7862 = vsel %vm188, %v7398, %v7755
  %v7863 = vsel %vm188, %v7399, %v7757
  %v7864 = vsel %vm188, %v7400, %v7759
  %v7865 = vsel %vm188, %v7401, %v7761
  %v7866 = vsel %vm188, %v7402, %v7763
  %v7867 = vsel %vm188, %v7403, %v7765
  %v7868 = vsel %vm188, %v7404, %v7767
  %v7869 = vsel %vm188, %v7405, %v7769
  %v7870 = vsel %vm188, %v7406, %v7771
  %v7871 = vsel %vm188, %v7407, %v7773
  %v7872 = vsel %vm188, %v7408, %v7775
  %v7873 = vsel %vm188, %v7409, %v7777
  %v7874 = vsel %vm3530, %v7858, %v7811
  %v7875 = vsel %vm3530, %v7859, %v7813
  %v7876 = vsel %vm3530, %v7860, %v7815
  %v7877 = vsel %vm3530, %v7861, %v7817
  %v7878 = vsel %vm3530, %v7862, %v7819
  %v7879 = vsel %vm3530, %v7863, %v7821
  %v7880 = vsel %vm3530, %v7864, %v7823
  %v7881 = vsel %vm3530, %v7865, %v7825
  %v7882 = vsel %vm3530, %v7866, %v7827
  %v7883 = vsel %vm3530, %v7867, %v7829
  %v7884 = vsel %vm3530, %v7868, %v7831
  %v7885 = vsel %vm3530, %v7869, %v7833
  %v7886 = vsel %vm3530, %v7870, %v7835
  %v7887 = vsel %vm3530, %v7871, %v7837
  %v7888 = vsel %vm3530, %v7872, %v7839
  %v7889 = vsel %vm3530, %v7873, %v7841
  %7890 = vst [vmem:[%s21] sm:$0xff] %v7874
  %7891 = vst [vmem:[%s21 + $0x8] sm:$0xff] %v7875
  %7892 = vst [vmem:[%s21 + $0x10] sm:$0xff] %v7876
  %7893 = vst [vmem:[%s21 + $0x18] sm:$0xff] %v7877
  %7894 = vst [vmem:[%s21 + $0x20] sm:$0xff] %v7878
  %7895 = vst [vmem:[%s21 + $0x28] sm:$0xff] %v7879
  %7896 = vst [vmem:[%s21 + $0x30] sm:$0xff] %v7880
  %7897 = vst [vmem:[%s21 + $0x38] sm:$0xff] %v7881
  %7898 = vst [vmem:[%s21 + $0x40] sm:$0xff] %v7882
  %7899 = vst [vmem:[%s21 + $0x48] sm:$0xff] %v7883
  %7900 = vst [vmem:[%s21 + $0x50] sm:$0xff] %v7884
  %7901 = vst [vmem:[%s21 + $0x58] sm:$0xff] %v7885
  %7902 = vst [vmem:[%s21 + $0x60] sm:$0xff] %v7886
  %7903 = vst [vmem:[%s21 + $0x68] sm:$0xff] %v7887
  %7904 = vst [vmem:[%s21 + $0x70] sm:$0xff] %v7888
  %7905 = vst [vmem:[%s21 + $0x78] sm:$0xff] %v7889
  // Predicated region
  $region86: #{fused_forward.1} parent=0 // pred_check
    _
  $region87: #{fused_forward.1} parent=0 // pred_check_branch
    %7907 = sbr.rel (0) target = $region89
  $region88: #{fused_forward.1} parent=0 // pred_region
    _
  $region89: #{fused_forward.1} parent=0 // pred_fallthru
    _
  // Predicated region
  $region90: #{fused_forward.1} parent=0 // pred_check
    _
  $region91: #{fused_forward.1} parent=0 // pred_check_branch
    %7909 = sbr.rel (0) target = $region93
  $region92: #{fused_forward.1} parent=0 // pred_region
    _
  $region93: #{fused_forward.1} parent=0 // pred_fallthru
    _

</llo_original>
